<compile_context>
chip_gen: v6e
topology: v6e:2x2x1
jax: 0.10.0
libtpu: 0.0.40
codegen_flags: <defaults>
</compile_context>

<pallas_src>
import numpy as np
import jax
import jax.numpy as jnp
from jax.experimental import pallas as pl
from jax.experimental.pallas import tpu as pltpu

rawwords = ['cat', 'bat', 'dog', 'bog', 'rat', 'fog', 'log', 'sat', 'mat', 'pat',
            'dot', 'hot', 'moon', 'spoon', 'sun', 'fun', 'day', 'play', 'night',
            'light', 'star', 'car', 'blue', 'shoe', 'tree', 'bee', 'rain', 'train',
            'snow', 'glow', 'road', 'toad', 'seat', 'beat', 'man', 'tan', 'fly',
            'sky', 'wave', 'cave', 'hill', 'grill', 'fan', 'van', 'jam', 'clam',
            'bear', 'hair', 'food', 'mood', 'boat', 'coat', 'fish', 'dish', 'bed',
            'red', 'cow', 'plow', 'tie', 'pie', 'ring', 'sing', 'horse', 'course',
            'whale', 'pale', 'duck', 'truck', 'far', 'bar', 'mice', 'rice', 'pen',
            'hen', 'phone', 'cone', 'seat', 'feet', 'wall', 'ball', 'bat', 'hat',
            'cake', 'lake', 'time', 'lime', 'plan', 'tan', 'mug', 'bug', 'door',
            'floor', 'tail', 'pail', 'mail', 'sail', 'nose', 'rose', 'pool', 'cool',
            'read', 'lead', 'rock', 'sock', 'dream', 'cream', 'card', 'yard',
            'leaf', 'beef', 'burn', 'turn', 'steer', 'peer', 'stream', 'beam',
            'float', 'coat', 'prize', 'eyes', 'street', 'fleet', 'loud', 'cloud',
            'brace', 'face', 'bliss', 'kiss', 'pray', 'stay', 'flame', 'game',
            'glare', 'stare', 'snore', 'bore', 'plight', 'kite', 'steak', 'cake',
            'fleece', 'peace', 'clue', 'blue', 'stone', 'phone']

MAX_LENGTH = max(len(w) for w in rawwords)            # 6
VOCAB_SIZE = len(set('abcdefghijklmnopqrstuvwxyz '))  # 27
INPUT_DIM = MAX_LENGTH * VOCAB_SIZE                   # 162

# True layer widths (as in the PyTorch module) and lane-padded widths.
L1, L2, L3, L4 = 64, 32, 16, 1
L1P = L2P = L3P = 128                                 # zero-padded to 128 lanes

MAX_TB = 1024                                         # max batch rows per grid step


def rhyme_mlp_kernel(x1_ref, x2_ref, w1a_ref, w1b_ref, b1_ref,
                     w2_ref, b2_ref, w3_ref, b3_ref, w4_ref, b4_ref, o_ref):
    cdt = w2_ref.dtype  # compute dtype for MXU operands (f32 or bf16)
    # fc1 on the two input halves (identical math to concat + single matmul).
    z1 = (jnp.dot(x1_ref[...], w1a_ref[...], preferred_element_type=jnp.float32)
          + jnp.dot(x2_ref[...], w1b_ref[...], preferred_element_type=jnp.float32)
          + b1_ref[...])
    h1 = jnp.maximum(z1, 0.0).astype(cdt)                              # (TB, 128)
    z2 = jnp.dot(h1, w2_ref[...], preferred_element_type=jnp.float32) + b2_ref[...]
    h2 = jnp.maximum(z2, 0.0).astype(cdt)                              # (TB, 128)
    z3 = jnp.dot(h2, w3_ref[...], preferred_element_type=jnp.float32) + b3_ref[...]
    h3 = jnp.maximum(z3, 0.0)                                          # (TB, 128) f32
    # fc4 (out_features == 1): VPU broadcast-multiply + XLU lane reduce.
    # No MXU push and no (TB, 128) transpose; result is lane-dense.
    z4 = jnp.sum(h3 * w4_ref[...].astype(jnp.float32), axis=-1)        # (TB,)
    s = jax.nn.sigmoid(z4 + b4_ref[0])                                 # (TB,)
    o_ref[...] = s.astype(o_ref.dtype).reshape(o_ref.shape)            # (1, 1, TB)


def init_params(key, input_dim):
    """PyTorch-style Linear init, torch (out, in) layout; used by the reference."""
    sizes = [(L1, input_dim * 2), (L2, L1), (L3, L2), (L4, L3)]
    params = []
    for (out_f, in_f) in sizes:
        key, kw, kb = jax.random.split(key, 3)
        bound = 1.0 / np.sqrt(in_f)
        w = jax.random.uniform(kw, (out_f, in_f), jnp.float32, -bound, bound)
        b = jax.random.uniform(kb, (out_f,), jnp.float32, -bound, bound)
        params += [w, b]
    return params


def prepare_params(params, compute_dtype=jnp.float32):
    """One-time prep: transpose to (in, out), split fc1 per input half, zero-pad
    hidden widths to 128 lanes, cast MXU weights to compute_dtype (f32 or bf16).
    Biases and the fc4 row/bias stay f32 (added after f32 accumulation)."""
    w1, b1, w2, b2, w3, b3, w4, b4 = params
    w1t = w1.T                                               # (2*INPUT_DIM, 64)
    w1a = jnp.pad(w1t[:INPUT_DIM], ((0, 0), (0, L1P - L1))).astype(compute_dtype)
    w1b = jnp.pad(w1t[INPUT_DIM:], ((0, 0), (0, L1P - L1))).astype(compute_dtype)
    b1p = jnp.pad(b1, (0, L1P - L1)).reshape(1, L1P)
    w2p = jnp.pad(w2.T, ((0, L1P - L1), (0, L2P - L2))).astype(compute_dtype)
    b2p = jnp.pad(b2, (0, L2P - L2)).reshape(1, L2P)
    w3p = jnp.pad(w3.T, ((0, L2P - L2), (0, L3P - L3))).astype(compute_dtype)
    b3p = jnp.pad(b3, (0, L3P - L3)).reshape(1, L3P)
    w4p = jnp.pad(w4, ((0, 0), (0, L3P - L3))).astype(jnp.float32)   # (1, 128) row
    b4p = b4.reshape(1).astype(jnp.float32)                          # (1,) SMEM scalar
    return (w1a, w1b, b1p, w2p, b2p, w3p, b3p, w4p, b4p)


def _choose_tiling(batch):
    """Adaptive batch tile. Small batches round up to 128 rows only; large
    batches use up to MAX_TB rows per step but always >= 2 grid steps so both
    v7x TensorCores get work on the 'parallel' grid axis."""
    rows128 = pl.cdiv(batch, 128)
    if rows128 >= 2:
        target_tiles = max(2, pl.cdiv(rows128 * 128, MAX_TB))
    else:
        target_tiles = 1
    rows_per_tile = pl.cdiv(rows128, target_tiles)
    tb = 128 * rows_per_tile
    num_tiles = pl.cdiv(rows128, rows_per_tile)
    return tb, num_tiles


def rhyme_nn_forward(x1, x2, kparams):
    """Pallas forward. x1, x2: (B, INPUT_DIM) batched or (INPUT_DIM,) single pair.
    Returns (B,) scores, or (1,) for 1-D inputs (matching RhymeNN.forward)."""
    single = (x1.ndim == 1)
    if single:
        x1, x2 = x1[None, :], x2[None, :]

    w1a, w1b, b1p, w2p, b2p, w3p, b3p, w4p, b4p = kparams
    cdt = w1a.dtype
    x1 = x1.astype(cdt)
    x2 = x2.astype(cdt)

    B = x1.shape[0]
    tb, num_tiles = _choose_tiling(B)
    B_pad = tb * num_tiles
    if B_pad != B:
        x1 = jnp.pad(x1, ((0, B_pad - B), (0, 0)))
        x2 = jnp.pad(x2, ((0, B_pad - B), (0, 0)))

    def resident(shape):
        # Same block every grid step -> weight/bias stays VMEM-resident.
        return pl.BlockSpec(shape, lambda i: (0, 0))

    grid_spec = pltpu.PrefetchScalarGridSpec(
        num_scalar_prefetch=0,
        grid=(num_tiles,),
        in_specs=[
            pl.BlockSpec((tb, INPUT_DIM), lambda i: (i, 0)),   # x1 tile (streamed)
            pl.BlockSpec((tb, INPUT_DIM), lambda i: (i, 0)),   # x2 tile (streamed)
            resident((INPUT_DIM, L1P)),                        # W1a
            resident((INPUT_DIM, L1P)),                        # W1b
            resident((1, L1P)),                                # b1
            resident((L1P, L2P)),                              # W2
            resident((1, L2P)),                                # b2
            resident((L2P, L3P)),                              # W3
            resident((1, L3P)),                                # b3
            resident((1, L3P)),                                # W4 row
            pl.BlockSpec(memory_space=pltpu.MemorySpace.SMEM),  # b4 scalar
        ],
        out_specs=pl.BlockSpec((1, 1, tb), lambda i: (i, 0, 0)),
    )

    in_bytes = jnp.dtype(cdt).itemsize
    flops = 2 * B_pad * (2 * INPUT_DIM * L1P + L1P * L2P + L2P * L3P + L3P)
    bytes_accessed = (2 * B_pad * INPUT_DIM * in_bytes
                      + (2 * INPUT_DIM * L1P + L1P * L2P + L2P * L3P) * in_bytes
                      + 4 * (L1P + L2P + L3P + L3P + 1 + B_pad))

    out = pl.pallas_call(
        rhyme_mlp_kernel,
        out_shape=jax.ShapeDtypeStruct((num_tiles, 1, tb), jnp.float32),
        grid_spec=grid_spec,
        compiler_params=pltpu.CompilerParams(
            dimension_semantics=("parallel",),
            vmem_limit_bytes=32 * 1024 * 1024),
        cost_estimate=pl.CostEstimate(
            flops=flops, transcendentals=B_pad, bytes_accessed=bytes_accessed),
    )(x1, x2, w1a, w1b, b1p, w2p, b2p, w3p, b3p, w4p, b4p)

    scores = out.reshape(B_pad)[:B]
    return scores  # (1,) for single-pair inputs, (B,) for batched


def reference_forward(x1, x2, params):
    w1, b1, w2, b2, w3, b3, w4, b4 = params
    axis = 0 if x1.ndim == 1 else -1
    x = jnp.concatenate([x1, x2], axis=axis)
    h = jnp.maximum(x @ w1.T + b1, 0.0)
    h = jnp.maximum(h @ w2.T + b2, 0.0)
    h = jnp.maximum(h @ w3.T + b3, 0.0)
    return jax.nn.sigmoid(h @ w4.T + b4)


if __name__ == "__main__":
    key = jax.random.PRNGKey(0)
    kp, k1, k2 = jax.random.split(key, 3)

    params = init_params(kp, INPUT_DIM)      # torch-layout params (reference)

    # Batched demo: 1000 word pairs (exercises tb=512, 2 grid tiles, row padding).
    B = 1000
    x1 = jax.random.uniform(k1, (B, INPUT_DIM), jnp.float32)
    x2 = jax.random.uniform(k2, (B, INPUT_DIM), jnp.float32)
    ref = reference_forward(x1, x2, params).reshape(-1)

    # f32 path: exact parity with the PyTorch-style reference.
    kparams_f32 = prepare_params(params, jnp.float32)
    out = jax.block_until_ready(rhyme_nn_forward(x1, x2, kparams_f32))
    assert out.shape == (B,)
    np.testing.assert_allclose(np.asarray(out), np.asarray(ref),
                               rtol=1e-5, atol=2e-5)

    # Single-pair path: exact RhymeNN.forward semantics (1-D inputs -> (1,)).
    out1 = jax.block_until_ready(rhyme_nn_forward(x1[0], x2[0], kparams_f32))
    assert out1.shape == (1,)
    ref1 = reference_forward(x1[0], x2[0], params)
    np.testing.assert_allclose(np.asarray(out1), np.asarray(ref1),
                               rtol=1e-5, atol=2e-5)

    # bf16 fast path (native MXU rate + halved HBM input stream on v6e/v7x).
    kparams_bf16 = prepare_params(params, jnp.bfloat16)
    out_bf16 = jax.block_until_ready(rhyme_nn_forward(x1, x2, kparams_bf16))
    assert out_bf16.shape == (B,)
    np.testing.assert_allclose(np.asarray(out_bf16), np.asarray(ref),
                               rtol=0.0, atol=3e-2)

    print("KERNEL_OK")
</pallas_src>

<mosaic_0001>
module attributes {stable_mosaic.version = 11 : i64} {
  func.func @rhyme_mlp_kernel(%arg0: i32, %arg1: memref<512x162xf32, #tpu.memory_space<vmem>>, %arg2: memref<512x162xf32, #tpu.memory_space<vmem>>, %arg3: memref<162x128xf32, #tpu.memory_space<vmem>>, %arg4: memref<162x128xf32, #tpu.memory_space<vmem>>, %arg5: memref<1x128xf32, #tpu.memory_space<vmem>>, %arg6: memref<128x128xf32, #tpu.memory_space<vmem>>, %arg7: memref<1x128xf32, #tpu.memory_space<vmem>>, %arg8: memref<128x128xf32, #tpu.memory_space<vmem>>, %arg9: memref<1x128xf32, #tpu.memory_space<vmem>>, %arg10: memref<1x128xf32, #tpu.memory_space<vmem>>, %arg11: memref<1xf32, #tpu.memory_space<smem>>, %arg12: memref<1x1x512xf32, #tpu.memory_space<vmem>>) attributes {dimension_semantics = [#tpu.dimension_semantics<parallel>], iteration_bounds = array<i64: 2>, scalar_prefetch = 0 : i64, scratch_operands = 0 : i64, tpu.core_type = #tpu.core_type<tc>, window_params = [{transform_indices = @transform_0, window_bounds = array<i64: 512, 162>}, {transform_indices = @transform_1, window_bounds = array<i64: 512, 162>}, {pipeline_mode = #tpu.pipeline_mode<synchronous>, transform_indices = @transform_2, window_bounds = array<i64: 162, 128>}, {pipeline_mode = #tpu.pipeline_mode<synchronous>, transform_indices = @transform_3, window_bounds = array<i64: 162, 128>}, {pipeline_mode = #tpu.pipeline_mode<synchronous>, transform_indices = @transform_4, window_bounds = array<i64: 1, 128>}, {pipeline_mode = #tpu.pipeline_mode<synchronous>, transform_indices = @transform_5, window_bounds = array<i64: 128, 128>}, {pipeline_mode = #tpu.pipeline_mode<synchronous>, transform_indices = @transform_6, window_bounds = array<i64: 1, 128>}, {pipeline_mode = #tpu.pipeline_mode<synchronous>, transform_indices = @transform_7, window_bounds = array<i64: 128, 128>}, {pipeline_mode = #tpu.pipeline_mode<synchronous>, transform_indices = @transform_8, window_bounds = array<i64: 1, 128>}, {pipeline_mode = #tpu.pipeline_mode<synchronous>, transform_indices = @transform_9, window_bounds = array<i64: 1, 128>}, {transform_indices = @transform_10, window_bounds = array<i64: 1>}, {transform_indices = @transform_11, window_bounds = array<i64: 1, 1, 512>}]} {
    %c0 = arith.constant 0 : index
    %c0_0 = arith.constant 0 : index
    %0 = vector.load %arg1[%c0, %c0_0] : memref<512x162xf32, #tpu.memory_space<vmem>>, vector<512x162xf32>
    %c0_1 = arith.constant 0 : index
    %c0_2 = arith.constant 0 : index
    %1 = vector.load %arg3[%c0_1, %c0_2] : memref<162x128xf32, #tpu.memory_space<vmem>>, vector<162x128xf32>
    %cst = arith.constant dense<0.000000e+00> : vector<512x128xf32>
    %2 = tpu.matmul %0, %1, %cst {dimension_numbers = #tpu.dot_dimension_numbers<[1], [0], [0], [1], [0, 0, 1, 1], [], []>} : vector<512x162xf32>, vector<162x128xf32>, vector<512x128xf32> -> vector<512x128xf32>
    %c0_3 = arith.constant 0 : index
    %c0_4 = arith.constant 0 : index
    %3 = vector.load %arg2[%c0_3, %c0_4] : memref<512x162xf32, #tpu.memory_space<vmem>>, vector<512x162xf32>
    %c0_5 = arith.constant 0 : index
    %c0_6 = arith.constant 0 : index
    %4 = vector.load %arg4[%c0_5, %c0_6] : memref<162x128xf32, #tpu.memory_space<vmem>>, vector<162x128xf32>
    %cst_7 = arith.constant dense<0.000000e+00> : vector<512x128xf32>
    %5 = tpu.matmul %3, %4, %cst_7 {dimension_numbers = #tpu.dot_dimension_numbers<[1], [0], [0], [1], [0, 0, 1, 1], [], []>} : vector<512x162xf32>, vector<162x128xf32>, vector<512x128xf32> -> vector<512x128xf32>
    %6 = arith.addf %2, %5 : vector<512x128xf32>
    %c0_8 = arith.constant 0 : index
    %c0_9 = arith.constant 0 : index
    %7 = vector.load %arg5[%c0_8, %c0_9] : memref<1x128xf32, #tpu.memory_space<vmem>>, vector<1x128xf32>
    %8 = vector.broadcast %7 : vector<1x128xf32> to vector<512x128xf32>
    %9 = arith.addf %6, %8 : vector<512x128xf32>
    %cst_10 = arith.constant 0.000000e+00 : f32
    %10 = vector.broadcast %cst_10 : f32 to vector<512x128xf32>
    %11 = arith.maximumf %9, %10 : vector<512x128xf32>
    %c0_11 = arith.constant 0 : index
    %c0_12 = arith.constant 0 : index
    %12 = vector.load %arg6[%c0_11, %c0_12] : memref<128x128xf32, #tpu.memory_space<vmem>>, vector<128x128xf32>
    %cst_13 = arith.constant dense<0.000000e+00> : vector<512x128xf32>
    %13 = tpu.matmul %11, %12, %cst_13 {dimension_numbers = #tpu.dot_dimension_numbers<[1], [0], [0], [1], [0, 0, 1, 1], [], []>} : vector<512x128xf32>, vector<128x128xf32>, vector<512x128xf32> -> vector<512x128xf32>
    %c0_14 = arith.constant 0 : index
    %c0_15 = arith.constant 0 : index
    %14 = vector.load %arg7[%c0_14, %c0_15] : memref<1x128xf32, #tpu.memory_space<vmem>>, vector<1x128xf32>
    %15 = vector.broadcast %14 : vector<1x128xf32> to vector<512x128xf32>
    %16 = arith.addf %13, %15 : vector<512x128xf32>
    %cst_16 = arith.constant 0.000000e+00 : f32
    %17 = vector.broadcast %cst_16 : f32 to vector<512x128xf32>
    %18 = arith.maximumf %16, %17 : vector<512x128xf32>
    %c0_17 = arith.constant 0 : index
    %c0_18 = arith.constant 0 : index
    %19 = vector.load %arg8[%c0_17, %c0_18] : memref<128x128xf32, #tpu.memory_space<vmem>>, vector<128x128xf32>
    %cst_19 = arith.constant dense<0.000000e+00> : vector<512x128xf32>
    %20 = tpu.matmul %18, %19, %cst_19 {dimension_numbers = #tpu.dot_dimension_numbers<[1], [0], [0], [1], [0, 0, 1, 1], [], []>} : vector<512x128xf32>, vector<128x128xf32>, vector<512x128xf32> -> vector<512x128xf32>
    %c0_20 = arith.constant 0 : index
    %c0_21 = arith.constant 0 : index
    %21 = vector.load %arg9[%c0_20, %c0_21] : memref<1x128xf32, #tpu.memory_space<vmem>>, vector<1x128xf32>
    %22 = vector.broadcast %21 : vector<1x128xf32> to vector<512x128xf32>
    %23 = arith.addf %20, %22 : vector<512x128xf32>
    %cst_22 = arith.constant 0.000000e+00 : f32
    %24 = vector.broadcast %cst_22 : f32 to vector<512x128xf32>
    %25 = arith.maximumf %23, %24 : vector<512x128xf32>
    %c0_23 = arith.constant 0 : index
    %c0_24 = arith.constant 0 : index
    %26 = vector.load %arg10[%c0_23, %c0_24] : memref<1x128xf32, #tpu.memory_space<vmem>>, vector<1x128xf32>
    %27 = vector.broadcast %26 : vector<1x128xf32> to vector<512x128xf32>
    %28 = arith.mulf %25, %27 : vector<512x128xf32>
    %cst_25 = arith.constant dense<0.000000e+00> : vector<512xf32>
    %29 = vector.multi_reduction <add>, %28, %cst_25 [1] : vector<512x128xf32> to vector<512xf32>
    %c0_26 = arith.constant 0 : index
    %30 = memref.load %arg11[%c0_26] : memref<1xf32, #tpu.memory_space<smem>>
    %31 = vector.broadcast %30 : f32 to vector<512xf32>
    %32 = arith.addf %29, %31 : vector<512xf32>
    %33 = arith.negf %32 : vector<512xf32>
    %34 = math.exp %33 : vector<512xf32>
    %cst_27 = arith.constant 1.000000e+00 : f32
    %35 = vector.broadcast %cst_27 : f32 to vector<512xf32>
    %36 = arith.addf %35, %34 : vector<512xf32>
    %37 = arith.divf %35, %36 : vector<512xf32>
    %38 = vector.shape_cast %37 : vector<512xf32> to vector<1x1x512xf32>
    %c0_28 = arith.constant 0 : index
    %c0_29 = arith.constant 0 : index
    %c0_30 = arith.constant 0 : index
    %39 = vector.load %arg12[%c0_28, %c0_29, %c0_30] : memref<1x1x512xf32, #tpu.memory_space<vmem>>, vector<1x1x512xf32>
    tpu.vector_store %arg12[%c0_28, %c0_29, %c0_30], %38 {strides = array<i32>} : memref<1x1x512xf32, #tpu.memory_space<vmem>>, vector<1x1x512xf32>,
    return
  }
  func.func @transform_0(%arg0: i32) -> (i32, i32) {
    %c0_i32 = arith.constant 0 : i32
    %c0_i32_0 = arith.constant 0 : i32
    return %arg0, %c0_i32 : i32, i32
  }
  func.func @transform_1(%arg0: i32) -> (i32, i32) {
    %c0_i32 = arith.constant 0 : i32
    %c0_i32_0 = arith.constant 0 : i32
    return %arg0, %c0_i32 : i32, i32
  }
  func.func @transform_2(%arg0: i32) -> (i32, i32) {
    %c0_i32 = arith.constant 0 : i32
    %c0_i32_0 = arith.constant 0 : i32
    %c0_i32_1 = arith.constant 0 : i32
    return %c0_i32, %c0_i32_0 : i32, i32
  }
  func.func @transform_3(%arg0: i32) -> (i32, i32) {
    %c0_i32 = arith.constant 0 : i32
    %c0_i32_0 = arith.constant 0 : i32
    %c0_i32_1 = arith.constant 0 : i32
    return %c0_i32, %c0_i32_0 : i32, i32
  }
  func.func @transform_4(%arg0: i32) -> (i32, i32) {
    %c0_i32 = arith.constant 0 : i32
    %c0_i32_0 = arith.constant 0 : i32
    %c0_i32_1 = arith.constant 0 : i32
    return %c0_i32, %c0_i32_0 : i32, i32
  }
  func.func @transform_5(%arg0: i32) -> (i32, i32) {
    %c0_i32 = arith.constant 0 : i32
    %c0_i32_0 = arith.constant 0 : i32
    %c0_i32_1 = arith.constant 0 : i32
    return %c0_i32, %c0_i32_0 : i32, i32
  }
  func.func @transform_6(%arg0: i32) -> (i32, i32) {
    %c0_i32 = arith.constant 0 : i32
    %c0_i32_0 = arith.constant 0 : i32
    %c0_i32_1 = arith.constant 0 : i32
    return %c0_i32, %c0_i32_0 : i32, i32
  }
  func.func @transform_7(%arg0: i32) -> (i32, i32) {
    %c0_i32 = arith.constant 0 : i32
    %c0_i32_0 = arith.constant 0 : i32
    %c0_i32_1 = arith.constant 0 : i32
    return %c0_i32, %c0_i32_0 : i32, i32
  }
  func.func @transform_8(%arg0: i32) -> (i32, i32) {
    %c0_i32 = arith.constant 0 : i32
    %c0_i32_0 = arith.constant 0 : i32
    %c0_i32_1 = arith.constant 0 : i32
    return %c0_i32, %c0_i32_0 : i32, i32
  }
  func.func @transform_9(%arg0: i32) -> (i32, i32) {
    %c0_i32 = arith.constant 0 : i32
    %c0_i32_0 = arith.constant 0 : i32
    %c0_i32_1 = arith.constant 0 : i32
    return %c0_i32, %c0_i32_0 : i32, i32
  }
  func.func @transform_10(%arg0: i32) -> i32 {
    %c0_i32 = arith.constant 0 : i32
    %c0_i32_0 = arith.constant 0 : i32
    return %c0_i32 : i32
  }
  func.func @transform_11(%arg0: i32) -> (i32, i32, i32) {
    %c0_i32 = arith.constant 0 : i32
    %c0_i32_0 = arith.constant 0 : i32
    %c0_i32_1 = arith.constant 0 : i32
    return %arg0, %c0_i32, %c0_i32_0 : i32, i32, i32
  }
}

</mosaic_0001>

<llo_original>
// kernel: tpu_custom_call.1
$region0: #{tpu_custom_call.1}
  #allocation0 [shape = 'u32[]', space=smem, size = 0x4, offset = 0x4, fixed_abs, tag = 'smem constant byte address 0x4 - core index']
  #allocation1 [shape = 'u32[144,128]{1,0:T(1,128)}', space=vmem, size = 0x12000, scoped, tag = 'internal scratch']
  #allocation2 [shape = 'f32[1]{0:T(128)S(6)}', space=smem, size = 0x200, scoped, tag = 'scoped memory for tpu_custom_call.1']
  %s0 = inlined_call_operand.vmem [shape: f32[1024,162], index: 0, kind: input, shape index: {}]
  %s1 = inlined_call_operand.vmem [shape: f32[1024,162], index: 1, kind: input, shape index: {}]
  %s2 = inlined_call_operand.vmem [shape: f32[162,128], index: 2, kind: input, shape index: {}]
  %s3 = inlined_call_operand.vmem [shape: f32[162,128], index: 3, kind: input, shape index: {}]
  %s4 = inlined_call_operand.vmem [shape: f32[1,128], index: 4, kind: input, shape index: {}]
  %s5 = inlined_call_operand.vmem [shape: f32[128,128], index: 5, kind: input, shape index: {}]
  %s6 = inlined_call_operand.vmem [shape: f32[1,128], index: 6, kind: input, shape index: {}]
  %s7 = inlined_call_operand.vmem [shape: f32[128,128], index: 7, kind: input, shape index: {}]
  %s8 = inlined_call_operand.vmem [shape: f32[1,128], index: 8, kind: input, shape index: {}]
  %s9 = inlined_call_operand.vmem [shape: f32[1,128], index: 9, kind: input, shape index: {}]
  %s10 = inlined_call_operand.<no memory space> [shape: f32[1], index: 10, kind: input, shape index: {}]
  %s11 = inlined_call_operand.hbm [shape: f32[2,1,512], index: 11, kind: output, shape index: {}]
  %s12 = sld [smem:[#allocation0]]
  $region77: #{tpu_custom_call.1} parent=0
    _
  %s14 = ssub.s32 1, %s12
  %s15 = scalar_select 0, %s14, %s12
  %16 = sst [smem:[#allocation2]] %s10
  $region1: #{tpu_custom_call.1} parent=0
    #allocation3 [shape = 'u8[4096]{0}', space=vmem, size = 0x1000, scoped, tag = 'output window, operand 0']
    #allocation4 [shape = 's32[2]{0}', space=sflag, size = 0x8, scoped, tag = 'scoped memory for tpu_custom_call.1']
    %17 = vsyncpa [#allocation4], 0
    %s18 = scalar_lea.sflag [#allocation4], 1
    %19 = vsyncpa %s18, 0
    loop: start=0, step=1, limit=4
    $region2: #{tpu_custom_call.1} parent=1 // loop_pre_header
      _
    $region3: #{tpu_custom_call.1} parent=1 // loop_header
      %s21 = sphi 0, %s25
      %p22 = scmp.ge.s32.totalorder %s21, 4
      %s31 = sphi 0, %s33
      %s34 = sphi 0, %s31
      %s35 = sphi 0, %s34
      %s51 = sphi 0, %s35
      %s57 = sphi 0, %s59
      %s60 = sphi 0, %s57
      %s61 = sphi 0, %s60
      %s77 = sphi 0, %s61
      %s81 = sphi 0, %s81
      %s83 = sphi 0, %s81
      %s84 = sphi 0, %s83
      %s98 = sphi 0, %s84
      %s102 = sphi 0, %s102
      %s104 = sphi 0, %s102
      %s105 = sphi 0, %s104
      %s119 = sphi 0, %s105
      %s123 = sphi 0, %s123
      %s125 = sphi 0, %s123
      %s126 = sphi 0, %s125
      %s140 = sphi 0, %s126
      %s144 = sphi 0, %s144
      %s146 = sphi 0, %s144
      %s147 = sphi 0, %s146
      %s161 = sphi 0, %s147
      %s165 = sphi 0, %s165
      %s167 = sphi 0, %s165
      %s168 = sphi 0, %s167
      %s182 = sphi 0, %s168
      %s186 = sphi 0, %s186
      %s188 = sphi 0, %s186
      %s189 = sphi 0, %s188
      %s203 = sphi 0, %s189
      %s207 = sphi 0, %s207
      %s209 = sphi 0, %s207
      %s210 = sphi 0, %s209
      %s224 = sphi 0, %s210
      %s228 = sphi 0, %s228
      %s230 = sphi 0, %s228
      %s231 = sphi 0, %s230
      %s245 = sphi 0, %s231
      %s249 = sphi 0, %s249
      %s251 = sphi 0, %s249
      %s252 = sphi 0, %s251
      %s266 = sphi 0, %s252
      %s272 = sphi 0, %s274
      %s275 = sphi 0, %s272
      %s276 = sphi 0, %s275
      %s292 = sphi 0, %s276
    $region4: #{tpu_custom_call.1} parent=1 // loop_header_branch
      %24 = sbr.rel (%p22) target = $region8
    $region5: #{tpu_custom_call.1} parent=1 // loop_body
      %s26 = ssub.s32 %s21, 1
      %s27 = ssub.s32 %s21, 2
      %s28 = sadd.s32 %s21, 1
      %s29 = ssub.s32 %s21, %s28
      %p30 = scmp.eq.s32.totalorder %s29, 0
      %s32 = sadd.s32 %s31, 1
      %s33 = scalar_select %p30, %s31, %s32
      %p36 = pneg %p30
      %p37 = scmp.eq.s32.totalorder %s21, 1
      %p38 = por %p36, %p37
      %p39 = scmp.ne.s32.totalorder %s31, %s34
      %p40 = scmp.eq.s32.totalorder %s21, 0
      %p41 = por %p39, %p40
      %p42 = scmp.ne.s32.totalorder %s31, %s34
      %p43 = scmp.eq.s32.totalorder %s26, 1
      %p44 = por %p42, %p43
      %p45 = scmp.ne.s32.totalorder %s34, %s35
      %p46 = scmp.eq.s32.totalorder %s26, 0
      %p47 = por %p45, %p46
      %p48 = scmp.ne.s32.totalorder %s34, %s35
      %p49 = scmp.eq.s32.totalorder %s27, 1
      %p50 = por %p48, %p49
      %p52 = scmp.ne.s32.totalorder %s35, %s51
      %p53 = scmp.eq.s32.totalorder %s27, 0
      %p54 = por %p52, %p53
      %s55 = ssub.s32 %s21, %s28
      %p56 = scmp.eq.s32.totalorder %s55, 0
      %s58 = sadd.s32 %s57, 1
      %s59 = scalar_select %p56, %s57, %s58
      %p62 = pneg %p56
      %p63 = scmp.eq.s32.totalorder %s21, 1
      %p64 = por %p62, %p63
      %p65 = scmp.ne.s32.totalorder %s57, %s60
      %p66 = scmp.eq.s32.totalorder %s21, 0
      %p67 = por %p65, %p66
      %p68 = scmp.ne.s32.totalorder %s57, %s60
      %p69 = scmp.eq.s32.totalorder %s26, 1
      %p70 = por %p68, %p69
      %p71 = scmp.ne.s32.totalorder %s60, %s61
      %p72 = scmp.eq.s32.totalorder %s26, 0
      %p73 = por %p71, %p72
      %p74 = scmp.ne.s32.totalorder %s60, %s61
      %p75 = scmp.eq.s32.totalorder %s27, 1
      %p76 = por %p74, %p75
      %p78 = scmp.ne.s32.totalorder %s61, %s77
      %p79 = scmp.eq.s32.totalorder %s27, 0
      %p80 = por %p78, %p79
      %s82 = sadd.s32 %s81, 1
      %p85 = scmp.eq.s32.totalorder %s21, 1
      %p86 = scmp.ne.s32.totalorder %s81, %s83
      %p87 = scmp.eq.s32.totalorder %s21, 0
      %p88 = por %p86, %p87
      %p89 = scmp.ne.s32.totalorder %s81, %s83
      %p90 = scmp.eq.s32.totalorder %s26, 1
      %p91 = por %p89, %p90
      %p92 = scmp.ne.s32.totalorder %s83, %s84
      %p93 = scmp.eq.s32.totalorder %s26, 0
      %p94 = por %p92, %p93
      %p95 = scmp.ne.s32.totalorder %s83, %s84
      %p96 = scmp.eq.s32.totalorder %s27, 1
      %p97 = por %p95, %p96
      %p99 = scmp.ne.s32.totalorder %s84, %s98
      %p100 = scmp.eq.s32.totalorder %s27, 0
      %p101 = por %p99, %p100
      %s103 = sadd.s32 %s102, 1
      %p106 = scmp.eq.s32.totalorder %s21, 1
      %p107 = scmp.ne.s32.totalorder %s102, %s104
      %p108 = scmp.eq.s32.totalorder %s21, 0
      %p109 = por %p107, %p108
      %p110 = scmp.ne.s32.totalorder %s102, %s104
      %p111 = scmp.eq.s32.totalorder %s26, 1
      %p112 = por %p110, %p111
      %p113 = scmp.ne.s32.totalorder %s104, %s105
      %p114 = scmp.eq.s32.totalorder %s26, 0
      %p115 = por %p113, %p114
      %p116 = scmp.ne.s32.totalorder %s104, %s105
      %p117 = scmp.eq.s32.totalorder %s27, 1
      %p118 = por %p116, %p117
      %p120 = scmp.ne.s32.totalorder %s105, %s119
      %p121 = scmp.eq.s32.totalorder %s27, 0
      %p122 = por %p120, %p121
      %s124 = sadd.s32 %s123, 1
      %p127 = scmp.eq.s32.totalorder %s21, 1
      %p128 = scmp.ne.s32.totalorder %s123, %s125
      %p129 = scmp.eq.s32.totalorder %s21, 0
      %p130 = por %p128, %p129
      %p131 = scmp.ne.s32.totalorder %s123, %s125
      %p132 = scmp.eq.s32.totalorder %s26, 1
      %p133 = por %p131, %p132
      %p134 = scmp.ne.s32.totalorder %s125, %s126
      %p135 = scmp.eq.s32.totalorder %s26, 0
      %p136 = por %p134, %p135
      %p137 = scmp.ne.s32.totalorder %s125, %s126
      %p138 = scmp.eq.s32.totalorder %s27, 1
      %p139 = por %p137, %p138
      %p141 = scmp.ne.s32.totalorder %s126, %s140
      %p142 = scmp.eq.s32.totalorder %s27, 0
      %p143 = por %p141, %p142
      %s145 = sadd.s32 %s144, 1
      %p148 = scmp.eq.s32.totalorder %s21, 1
      %p149 = scmp.ne.s32.totalorder %s144, %s146
      %p150 = scmp.eq.s32.totalorder %s21, 0
      %p151 = por %p149, %p150
      %p152 = scmp.ne.s32.totalorder %s144, %s146
      %p153 = scmp.eq.s32.totalorder %s26, 1
      %p154 = por %p152, %p153
      %p155 = scmp.ne.s32.totalorder %s146, %s147
      %p156 = scmp.eq.s32.totalorder %s26, 0
      %p157 = por %p155, %p156
      %p158 = scmp.ne.s32.totalorder %s146, %s147
      %p159 = scmp.eq.s32.totalorder %s27, 1
      %p160 = por %p158, %p159
      %p162 = scmp.ne.s32.totalorder %s147, %s161
      %p163 = scmp.eq.s32.totalorder %s27, 0
      %p164 = por %p162, %p163
      %s166 = sadd.s32 %s165, 1
      %p169 = scmp.eq.s32.totalorder %s21, 1
      %p170 = scmp.ne.s32.totalorder %s165, %s167
      %p171 = scmp.eq.s32.totalorder %s21, 0
      %p172 = por %p170, %p171
      %p173 = scmp.ne.s32.totalorder %s165, %s167
      %p174 = scmp.eq.s32.totalorder %s26, 1
      %p175 = por %p173, %p174
      %p176 = scmp.ne.s32.totalorder %s167, %s168
      %p177 = scmp.eq.s32.totalorder %s26, 0
      %p178 = por %p176, %p177
      %p179 = scmp.ne.s32.totalorder %s167, %s168
      %p180 = scmp.eq.s32.totalorder %s27, 1
      %p181 = por %p179, %p180
      %p183 = scmp.ne.s32.totalorder %s168, %s182
      %p184 = scmp.eq.s32.totalorder %s27, 0
      %p185 = por %p183, %p184
      %s187 = sadd.s32 %s186, 1
      %p190 = scmp.eq.s32.totalorder %s21, 1
      %p191 = scmp.ne.s32.totalorder %s186, %s188
      %p192 = scmp.eq.s32.totalorder %s21, 0
      %p193 = por %p191, %p192
      %p194 = scmp.ne.s32.totalorder %s186, %s188
      %p195 = scmp.eq.s32.totalorder %s26, 1
      %p196 = por %p194, %p195
      %p197 = scmp.ne.s32.totalorder %s188, %s189
      %p198 = scmp.eq.s32.totalorder %s26, 0
      %p199 = por %p197, %p198
      %p200 = scmp.ne.s32.totalorder %s188, %s189
      %p201 = scmp.eq.s32.totalorder %s27, 1
      %p202 = por %p200, %p201
      %p204 = scmp.ne.s32.totalorder %s189, %s203
      %p205 = scmp.eq.s32.totalorder %s27, 0
      %p206 = por %p204, %p205
      %s208 = sadd.s32 %s207, 1
      %p211 = scmp.eq.s32.totalorder %s21, 1
      %p212 = scmp.ne.s32.totalorder %s207, %s209
      %p213 = scmp.eq.s32.totalorder %s21, 0
      %p214 = por %p212, %p213
      %p215 = scmp.ne.s32.totalorder %s207, %s209
      %p216 = scmp.eq.s32.totalorder %s26, 1
      %p217 = por %p215, %p216
      %p218 = scmp.ne.s32.totalorder %s209, %s210
      %p219 = scmp.eq.s32.totalorder %s26, 0
      %p220 = por %p218, %p219
      %p221 = scmp.ne.s32.totalorder %s209, %s210
      %p222 = scmp.eq.s32.totalorder %s27, 1
      %p223 = por %p221, %p222
      %p225 = scmp.ne.s32.totalorder %s210, %s224
      %p226 = scmp.eq.s32.totalorder %s27, 0
      %p227 = por %p225, %p226
      %s229 = sadd.s32 %s228, 1
      %p232 = scmp.eq.s32.totalorder %s21, 1
      %p233 = scmp.ne.s32.totalorder %s228, %s230
      %p234 = scmp.eq.s32.totalorder %s21, 0
      %p235 = por %p233, %p234
      %p236 = scmp.ne.s32.totalorder %s228, %s230
      %p237 = scmp.eq.s32.totalorder %s26, 1
      %p238 = por %p236, %p237
      %p239 = scmp.ne.s32.totalorder %s230, %s231
      %p240 = scmp.eq.s32.totalorder %s26, 0
      %p241 = por %p239, %p240
      %p242 = scmp.ne.s32.totalorder %s230, %s231
      %p243 = scmp.eq.s32.totalorder %s27, 1
      %p244 = por %p242, %p243
      %p246 = scmp.ne.s32.totalorder %s231, %s245
      %p247 = scmp.eq.s32.totalorder %s27, 0
      %p248 = por %p246, %p247
      %s250 = sadd.s32 %s249, 1
      %p253 = scmp.eq.s32.totalorder %s21, 1
      %p254 = scmp.ne.s32.totalorder %s249, %s251
      %p255 = scmp.eq.s32.totalorder %s21, 0
      %p256 = por %p254, %p255
      %p257 = scmp.ne.s32.totalorder %s249, %s251
      %p258 = scmp.eq.s32.totalorder %s26, 1
      %p259 = por %p257, %p258
      %p260 = scmp.ne.s32.totalorder %s251, %s252
      %p261 = scmp.eq.s32.totalorder %s26, 0
      %p262 = por %p260, %p261
      %p263 = scmp.ne.s32.totalorder %s251, %s252
      %p264 = scmp.eq.s32.totalorder %s27, 1
      %p265 = por %p263, %p264
      %p267 = scmp.ne.s32.totalorder %s252, %s266
      %p268 = scmp.eq.s32.totalorder %s27, 0
      %p269 = por %p267, %p268
      %s270 = ssub.s32 %s21, %s28
      %p271 = scmp.eq.s32.totalorder %s270, 0
      %s273 = sadd.s32 %s272, 1
      %s274 = scalar_select %p271, %s272, %s273
      %p277 = pneg %p271
      %p278 = scmp.eq.s32.totalorder %s21, 1
      %p279 = por %p277, %p278
      %p280 = scmp.ne.s32.totalorder %s272, %s275
      %p281 = scmp.eq.s32.totalorder %s21, 0
      %p282 = por %p280, %p281
      %p283 = scmp.ne.s32.totalorder %s272, %s275
      %p284 = scmp.eq.s32.totalorder %s26, 1
      %p285 = por %p283, %p284
      %p286 = scmp.ne.s32.totalorder %s275, %s276
      %p287 = scmp.eq.s32.totalorder %s26, 0
      %p288 = por %p286, %p287
      %p289 = scmp.ne.s32.totalorder %s275, %s276
      %p290 = scmp.eq.s32.totalorder %s27, 1
      %p291 = por %p289, %p290
      %p293 = scmp.ne.s32.totalorder %s276, %s292
      %p294 = scmp.eq.s32.totalorder %s27, 0
      %p295 = por %p293, %p294
      %p296 = scmp.le.s32.totalorder 1, %s21
      %p297 = scmp.lt.s32.totalorder %s21, 3
      %p298 = pnand %p296, %p297
      %p299 = pneg %p298
      // Predicated region
      $region9: #{tpu_custom_call.1} parent=5 // pred_check
        _
      $region10: #{tpu_custom_call.1} parent=5 // pred_check_branch
        %301 = sbr.rel (%p298) target = $region12
      $region11: #{tpu_custom_call.1} parent=5 // pred_region
        %s302 = ssub.s32 %s21, 1
        // Predicated region
        $region13: #{tpu_custom_call.1} parent=11 // pred_check
          %p303 = pneg %p94
        $region14: #{tpu_custom_call.1} parent=11 // pred_check_branch
          %305 = sbr.rel (%p303) target = $region16
        $region15: #{tpu_custom_call.1} parent=11 // pred_region
          _
        $region16: #{tpu_custom_call.1} parent=11 // pred_fallthru
          _
        // Predicated region
        $region17: #{tpu_custom_call.1} parent=11 // pred_check
          %p306 = pneg %p115
        $region18: #{tpu_custom_call.1} parent=11 // pred_check_branch
          %308 = sbr.rel (%p306) target = $region20
        $region19: #{tpu_custom_call.1} parent=11 // pred_region
          _
        $region20: #{tpu_custom_call.1} parent=11 // pred_fallthru
          _
        // Predicated region
        $region21: #{tpu_custom_call.1} parent=11 // pred_check
          %p309 = pneg %p136
        $region22: #{tpu_custom_call.1} parent=11 // pred_check_branch
          %311 = sbr.rel (%p309) target = $region24
        $region23: #{tpu_custom_call.1} parent=11 // pred_region
          _
        $region24: #{tpu_custom_call.1} parent=11 // pred_fallthru
          _
        // Predicated region
        $region25: #{tpu_custom_call.1} parent=11 // pred_check
          %p312 = pneg %p157
        $region26: #{tpu_custom_call.1} parent=11 // pred_check_branch
          %314 = sbr.rel (%p312) target = $region28
        $region27: #{tpu_custom_call.1} parent=11 // pred_region
          _
        $region28: #{tpu_custom_call.1} parent=11 // pred_fallthru
          _
        // Predicated region
        $region29: #{tpu_custom_call.1} parent=11 // pred_check
          %p315 = pneg %p178
        $region30: #{tpu_custom_call.1} parent=11 // pred_check_branch
          %317 = sbr.rel (%p315) target = $region32
        $region31: #{tpu_custom_call.1} parent=11 // pred_region
          _
        $region32: #{tpu_custom_call.1} parent=11 // pred_fallthru
          _
        // Predicated region
        $region33: #{tpu_custom_call.1} parent=11 // pred_check
          %p318 = pneg %p199
        $region34: #{tpu_custom_call.1} parent=11 // pred_check_branch
          %320 = sbr.rel (%p318) target = $region36
        $region35: #{tpu_custom_call.1} parent=11 // pred_region
          _
        $region36: #{tpu_custom_call.1} parent=11 // pred_fallthru
          _
        // Predicated region
        $region37: #{tpu_custom_call.1} parent=11 // pred_check
          %p321 = pneg %p220
        $region38: #{tpu_custom_call.1} parent=11 // pred_check_branch
          %323 = sbr.rel (%p321) target = $region40
        $region39: #{tpu_custom_call.1} parent=11 // pred_region
          _
        $region40: #{tpu_custom_call.1} parent=11 // pred_fallthru
          _
        // Predicated region
        $region41: #{tpu_custom_call.1} parent=11 // pred_check
          %p324 = pneg %p241
        $region42: #{tpu_custom_call.1} parent=11 // pred_check_branch
          %326 = sbr.rel (%p324) target = $region44
        $region43: #{tpu_custom_call.1} parent=11 // pred_region
          _
        $region44: #{tpu_custom_call.1} parent=11 // pred_fallthru
          _
        // Predicated region
        $region45: #{tpu_custom_call.1} parent=11 // pred_check
          %p327 = pneg %p262
        $region46: #{tpu_custom_call.1} parent=11 // pred_check_branch
          %329 = sbr.rel (%p327) target = $region48
        $region47: #{tpu_custom_call.1} parent=11 // pred_region
          _
        $region48: #{tpu_custom_call.1} parent=11 // pred_fallthru
          _
      $region12: #{tpu_custom_call.1} parent=5 // pred_fallthru
        _
      %p330 = scmp.lt.s32.totalorder %s21, 2
      // Predicated region
      $region49: #{tpu_custom_call.1} parent=5 // pred_check
        %p331 = pneg %p330
      $region50: #{tpu_custom_call.1} parent=5 // pred_check_branch
        %333 = sbr.rel (%p331) target = $region52
      $region51: #{tpu_custom_call.1} parent=5 // pred_region
        // Predicated region
        $region53: #{tpu_custom_call.1} parent=51 // pred_check
          %p334 = pneg %p41
        $region54: #{tpu_custom_call.1} parent=51 // pred_check_branch
          %336 = sbr.rel (%p334) target = $region56
        $region55: #{tpu_custom_call.1} parent=51 // pred_region
          %s337 = smul.u32 64, %s21
          %p338 = scmp.lt.s32.totalorder %s337, 127
          %s339 = scalar_select %p338, %s337, 127
          %s340 = smul.addr %s339, 2
          %s341 = smul.addr %s340, 8
          %s342 = scalar_lea.vmem %s0, %s341
          %s343 = smul.u32 64, %s21
        $region56: #{tpu_custom_call.1} parent=51 // pred_fallthru
          _
        // Predicated region
        $region57: #{tpu_custom_call.1} parent=51 // pred_check
          %p344 = pneg %p67
        $region58: #{tpu_custom_call.1} parent=51 // pred_check_branch
          %346 = sbr.rel (%p344) target = $region60
        $region59: #{tpu_custom_call.1} parent=51 // pred_region
          %s347 = smul.u32 64, %s21
          %p348 = scmp.lt.s32.totalorder %s347, 127
          %s349 = scalar_select %p348, %s347, 127
          %s350 = smul.addr %s349, 2
          %s351 = smul.addr %s350, 8
          %s352 = scalar_lea.vmem %s1, %s351
          %s353 = smul.u32 64, %s21
        $region60: #{tpu_custom_call.1} parent=51 // pred_fallthru
          _
      $region52: #{tpu_custom_call.1} parent=5 // pred_fallthru
        _
      %p354 = scmp.le.s32.totalorder 1, %s21
      %p355 = scmp.lt.s32.totalorder %s21, 3
      %p356 = pnand %p354, %p355
      %p357 = pneg %p356
      // Predicated region
      $region61: #{tpu_custom_call.1} parent=5 // pred_check
        _
      $region62: #{tpu_custom_call.1} parent=5 // pred_check_branch
        %359 = sbr.rel (%p356) target = $region64
      $region63: #{tpu_custom_call.1} parent=5 // pred_region
        %s360 = ssub.s32 %s21, 1
        %s361 = smul.u32 64, %s26
        %p362 = scmp.lt.s32.totalorder %s361, 127
        %s363 = scalar_select %p362, %s361, 127
        %s364 = smul.addr %s363, 2
        %s365 = smul.addr %s364, 8
        %s366 = scalar_lea.vmem %s0, %s365
        %p367 = pneg %p47
        %p368 = pneg %p44
        %s369 = smul.u32 64, %s26
        %p370 = scmp.lt.s32.totalorder %s369, 127
        %s371 = scalar_select %p370, %s369, 127
        %s372 = smul.addr %s371, 2
        %s373 = smul.addr %s372, 8
        %s374 = scalar_lea.vmem %s1, %s373
        %p375 = pneg %p73
        %p376 = pneg %p70
        %p377 = pneg %p94
        %p378 = pneg %p91
        %p379 = pneg %p115
        %p380 = pneg %p112
        %p381 = pneg %p136
        %p382 = pneg %p133
        %p383 = pneg %p157
        %p384 = pneg %p154
        %p385 = pneg %p178
        %p386 = pneg %p175
        %p387 = pneg %p199
        %p388 = pneg %p196
        %p389 = pneg %p220
        %p390 = pneg %p217
        %p391 = pneg %p241
        %p392 = pneg %p238
        %p393 = pneg %p262
        %p394 = pneg %p259
        %p395 = pneg %p288
        %p396 = pneg %p285
        %s397 = sand.u32 %s275, 1
        %s398 = scalar_lea.sflag [#allocation4], %s397
        %s399 = sand.u32 %s275, 1
        %s400 = smul.addr %s399, 4
        %s401 = scalar_lea.vmem [#allocation3], %s400
        %s402 = smul.u32 64, %s26
        %p403 = scmp.lt.s32.totalorder %s402, 127
        %s404 = scalar_select %p403, %s402, 127
        %s405 = smul.addr %s404, 2
        %s406 = smul.addr %s405, 8
        %s407 = scalar_lea.vmem %s0, %s406
        %s408 = smul.u32 64, %s26
        %s409 = smul.u32 64, %s26
        %p410 = scmp.lt.s32.totalorder %s409, 127
        %s411 = scalar_select %p410, %s409, 127
        %s412 = smul.addr %s411, 2
        %s413 = smul.addr %s412, 8
        %s414 = scalar_lea.vmem %s1, %s413
        %s415 = smul.u32 64, %s26
        %v416 = vld [vmem:[%s407] sm:$0xff]
        %v417 = vld [vmem:[%s407 + $0x8] sm:$0xff]
        %v418 = vld [vmem:[%s407 + $0x10] sm:$0xff]
        %v419 = vld [vmem:[%s407 + $0x18] sm:$0xff]
        %v420 = vld [vmem:[%s407 + $0x20] sm:$0xff]
        %v421 = vld [vmem:[%s407 + $0x28] sm:$0xff]
        %v422 = vld [vmem:[%s407 + $0x30] sm:$0xff]
        %v423 = vld [vmem:[%s407 + $0x38] sm:$0xff]
        %v424 = vld [vmem:[%s407 + $0x40] sm:$0xff]
        %v425 = vld [vmem:[%s407 + $0x48] sm:$0xff]
        %v426 = vld [vmem:[%s407 + $0x50] sm:$0xff]
        %v427 = vld [vmem:[%s407 + $0x58] sm:$0xff]
        %v428 = vld [vmem:[%s407 + $0x60] sm:$0xff]
        %v429 = vld [vmem:[%s407 + $0x68] sm:$0xff]
        %v430 = vld [vmem:[%s407 + $0x70] sm:$0xff]
        %v431 = vld [vmem:[%s407 + $0x78] sm:$0xff]
        %v432 = vld [vmem:[%s407 + $0x80] sm:$0xff]
        %v433 = vld [vmem:[%s407 + $0x88] sm:$0xff]
        %v434 = vld [vmem:[%s407 + $0x90] sm:$0xff]
        %v435 = vld [vmem:[%s407 + $0x98] sm:$0xff]
        %v436 = vld [vmem:[%s407 + $0xa0] sm:$0xff]
        %v437 = vld [vmem:[%s407 + $0xa8] sm:$0xff]
        %v438 = vld [vmem:[%s407 + $0xb0] sm:$0xff]
        %v439 = vld [vmem:[%s407 + $0xb8] sm:$0xff]
        %v440 = vld [vmem:[%s407 + $0xc0] sm:$0xff]
        %v441 = vld [vmem:[%s407 + $0xc8] sm:$0xff]
        %v442 = vld [vmem:[%s407 + $0xd0] sm:$0xff]
        %v443 = vld [vmem:[%s407 + $0xd8] sm:$0xff]
        %v444 = vld [vmem:[%s407 + $0xe0] sm:$0xff]
        %v445 = vld [vmem:[%s407 + $0xe8] sm:$0xff]
        %v446 = vld [vmem:[%s407 + $0xf0] sm:$0xff]
        %v447 = vld [vmem:[%s407 + $0xf8] sm:$0xff]
        %v448 = vld [vmem:[%s407 + $0x100] sm:$0xff]
        %v449 = vld [vmem:[%s407 + $0x108] sm:$0xff]
        %v450 = vld [vmem:[%s407 + $0x110] sm:$0xff]
        %v451 = vld [vmem:[%s407 + $0x118] sm:$0xff]
        %v452 = vld [vmem:[%s407 + $0x120] sm:$0xff]
        %v453 = vld [vmem:[%s407 + $0x128] sm:$0xff]
        %v454 = vld [vmem:[%s407 + $0x130] sm:$0xff]
        %v455 = vld [vmem:[%s407 + $0x138] sm:$0xff]
        %v456 = vld [vmem:[%s407 + $0x140] sm:$0xff]
        %v457 = vld [vmem:[%s407 + $0x148] sm:$0xff]
        %v458 = vld [vmem:[%s407 + $0x150] sm:$0xff]
        %v459 = vld [vmem:[%s407 + $0x158] sm:$0xff]
        %v460 = vld [vmem:[%s407 + $0x160] sm:$0xff]
        %v461 = vld [vmem:[%s407 + $0x168] sm:$0xff]
        %v462 = vld [vmem:[%s407 + $0x170] sm:$0xff]
        %v463 = vld [vmem:[%s407 + $0x178] sm:$0xff]
        %v464 = vld [vmem:[%s407 + $0x180] sm:$0xff]
        %v465 = vld [vmem:[%s407 + $0x188] sm:$0xff]
        %v466 = vld [vmem:[%s407 + $0x190] sm:$0xff]
        %v467 = vld [vmem:[%s407 + $0x198] sm:$0xff]
        %v468 = vld [vmem:[%s407 + $0x1a0] sm:$0xff]
        %v469 = vld [vmem:[%s407 + $0x1a8] sm:$0xff]
        %v470 = vld [vmem:[%s407 + $0x1b0] sm:$0xff]
        %v471 = vld [vmem:[%s407 + $0x1b8] sm:$0xff]
        %v472 = vld [vmem:[%s407 + $0x1c0] sm:$0xff]
        %v473 = vld [vmem:[%s407 + $0x1c8] sm:$0xff]
        %v474 = vld [vmem:[%s407 + $0x1d0] sm:$0xff]
        %v475 = vld [vmem:[%s407 + $0x1d8] sm:$0xff]
        %v476 = vld [vmem:[%s407 + $0x1e0] sm:$0xff]
        %v477 = vld [vmem:[%s407 + $0x1e8] sm:$0xff]
        %v478 = vld [vmem:[%s407 + $0x1f0] sm:$0xff]
        %v479 = vld [vmem:[%s407 + $0x1f8] sm:$0xff]
        %v480 = vld [vmem:[%s407 + $0x200] sm:$0xff]
        %v481 = vld [vmem:[%s407 + $0x208] sm:$0xff]
        %v482 = vld [vmem:[%s407 + $0x210] sm:$0xff]
        %v483 = vld [vmem:[%s407 + $0x218] sm:$0xff]
        %v484 = vld [vmem:[%s407 + $0x220] sm:$0xff]
        %v485 = vld [vmem:[%s407 + $0x228] sm:$0xff]
        %v486 = vld [vmem:[%s407 + $0x230] sm:$0xff]
        %v487 = vld [vmem:[%s407 + $0x238] sm:$0xff]
        %v488 = vld [vmem:[%s407 + $0x240] sm:$0xff]
        %v489 = vld [vmem:[%s407 + $0x248] sm:$0xff]
        %v490 = vld [vmem:[%s407 + $0x250] sm:$0xff]
        %v491 = vld [vmem:[%s407 + $0x258] sm:$0xff]
        %v492 = vld [vmem:[%s407 + $0x260] sm:$0xff]
        %v493 = vld [vmem:[%s407 + $0x268] sm:$0xff]
        %v494 = vld [vmem:[%s407 + $0x270] sm:$0xff]
        %v495 = vld [vmem:[%s407 + $0x278] sm:$0xff]
        %v496 = vld [vmem:[%s407 + $0x280] sm:$0xff]
        %v497 = vld [vmem:[%s407 + $0x288] sm:$0xff]
        %v498 = vld [vmem:[%s407 + $0x290] sm:$0xff]
        %v499 = vld [vmem:[%s407 + $0x298] sm:$0xff]
        %v500 = vld [vmem:[%s407 + $0x2a0] sm:$0xff]
        %v501 = vld [vmem:[%s407 + $0x2a8] sm:$0xff]
        %v502 = vld [vmem:[%s407 + $0x2b0] sm:$0xff]
        %v503 = vld [vmem:[%s407 + $0x2b8] sm:$0xff]
        %v504 = vld [vmem:[%s407 + $0x2c0] sm:$0xff]
        %v505 = vld [vmem:[%s407 + $0x2c8] sm:$0xff]
        %v506 = vld [vmem:[%s407 + $0x2d0] sm:$0xff]
        %v507 = vld [vmem:[%s407 + $0x2d8] sm:$0xff]
        %v508 = vld [vmem:[%s407 + $0x2e0] sm:$0xff]
        %v509 = vld [vmem:[%s407 + $0x2e8] sm:$0xff]
        %v510 = vld [vmem:[%s407 + $0x2f0] sm:$0xff]
        %v511 = vld [vmem:[%s407 + $0x2f8] sm:$0xff]
        %v512 = vld [vmem:[%s407 + $0x300] sm:$0xff]
        %v513 = vld [vmem:[%s407 + $0x308] sm:$0xff]
        %v514 = vld [vmem:[%s407 + $0x310] sm:$0xff]
        %v515 = vld [vmem:[%s407 + $0x318] sm:$0xff]
        %v516 = vld [vmem:[%s407 + $0x320] sm:$0xff]
        %v517 = vld [vmem:[%s407 + $0x328] sm:$0xff]
        %v518 = vld [vmem:[%s407 + $0x330] sm:$0xff]
        %v519 = vld [vmem:[%s407 + $0x338] sm:$0xff]
        %v520 = vld [vmem:[%s407 + $0x340] sm:$0xff]
        %v521 = vld [vmem:[%s407 + $0x348] sm:$0xff]
        %v522 = vld [vmem:[%s407 + $0x350] sm:$0xff]
        %v523 = vld [vmem:[%s407 + $0x358] sm:$0xff]
        %v524 = vld [vmem:[%s407 + $0x360] sm:$0xff]
        %v525 = vld [vmem:[%s407 + $0x368] sm:$0xff]
        %v526 = vld [vmem:[%s407 + $0x370] sm:$0xff]
        %v527 = vld [vmem:[%s407 + $0x378] sm:$0xff]
        %v528 = vld [vmem:[%s407 + $0x380] sm:$0xff]
        %v529 = vld [vmem:[%s407 + $0x388] sm:$0xff]
        %v530 = vld [vmem:[%s407 + $0x390] sm:$0xff]
        %v531 = vld [vmem:[%s407 + $0x398] sm:$0xff]
        %v532 = vld [vmem:[%s407 + $0x3a0] sm:$0xff]
        %v533 = vld [vmem:[%s407 + $0x3a8] sm:$0xff]
        %v534 = vld [vmem:[%s407 + $0x3b0] sm:$0xff]
        %v535 = vld [vmem:[%s407 + $0x3b8] sm:$0xff]
        %v536 = vld [vmem:[%s407 + $0x3c0] sm:$0xff]
        %v537 = vld [vmem:[%s407 + $0x3c8] sm:$0xff]
        %v538 = vld [vmem:[%s407 + $0x3d0] sm:$0xff]
        %v539 = vld [vmem:[%s407 + $0x3d8] sm:$0xff]
        %v540 = vld [vmem:[%s407 + $0x3e0] sm:$0xff]
        %v541 = vld [vmem:[%s407 + $0x3e8] sm:$0xff]
        %v542 = vld [vmem:[%s407 + $0x3f0] sm:$0xff]
        %v543 = vld [vmem:[%s407 + $0x3f8] sm:$0xff]
        %v544 = vld [vmem:[%s2] sm:$0xff]
        %v545 = vld [vmem:[%s2 + $0x8] sm:$0xff]
        %v546 = vld [vmem:[%s2 + $0x10] sm:$0xff]
        %v547 = vld [vmem:[%s2 + $0x18] sm:$0xff]
        %v548 = vld [vmem:[%s2 + $0x20] sm:$0xff]
        %v549 = vld [vmem:[%s2 + $0x28] sm:$0xff]
        %v550 = vld [vmem:[%s2 + $0x30] sm:$0xff]
        %v551 = vld [vmem:[%s2 + $0x38] sm:$0xff]
        %v552 = vld [vmem:[%s2 + $0x40] sm:$0xff]
        %v553 = vld [vmem:[%s2 + $0x48] sm:$0xff]
        %v554 = vld [vmem:[%s2 + $0x50] sm:$0xff]
        %v555 = vld [vmem:[%s2 + $0x58] sm:$0xff]
        %v556 = vld [vmem:[%s2 + $0x60] sm:$0xff]
        %v557 = vld [vmem:[%s2 + $0x68] sm:$0xff]
        %v558 = vld [vmem:[%s2 + $0x70] sm:$0xff]
        %v559 = vld [vmem:[%s2 + $0x78] sm:$0xff]
        %v560 = vld [vmem:[%s2 + $0x80] sm:$0xff]
        %v561 = vld [vmem:[%s2 + $0x88] sm:$0xff]
        %v562 = vld [vmem:[%s2 + $0x90] sm:$0xff]
        %v563 = vld [vmem:[%s2 + $0x98] sm:$0xff]
        %v564 = vld [vmem:[%s2 + $0xa0] sm:$0x3]
        %v565 = vld [vmem:[%s414] sm:$0xff]
        %v566 = vld [vmem:[%s414 + $0x8] sm:$0xff]
        %v567 = vld [vmem:[%s414 + $0x10] sm:$0xff]
        %v568 = vld [vmem:[%s414 + $0x18] sm:$0xff]
        %v569 = vld [vmem:[%s414 + $0x20] sm:$0xff]
        %v570 = vld [vmem:[%s414 + $0x28] sm:$0xff]
        %v571 = vld [vmem:[%s414 + $0x30] sm:$0xff]
        %v572 = vld [vmem:[%s414 + $0x38] sm:$0xff]
        %v573 = vld [vmem:[%s414 + $0x40] sm:$0xff]
        %v574 = vld [vmem:[%s414 + $0x48] sm:$0xff]
        %v575 = vld [vmem:[%s414 + $0x50] sm:$0xff]
        %v576 = vld [vmem:[%s414 + $0x58] sm:$0xff]
        %v577 = vld [vmem:[%s414 + $0x60] sm:$0xff]
        %v578 = vld [vmem:[%s414 + $0x68] sm:$0xff]
        %v579 = vld [vmem:[%s414 + $0x70] sm:$0xff]
        %v580 = vld [vmem:[%s414 + $0x78] sm:$0xff]
        %v581 = vld [vmem:[%s414 + $0x80] sm:$0xff]
        %v582 = vld [vmem:[%s414 + $0x88] sm:$0xff]
        %v583 = vld [vmem:[%s414 + $0x90] sm:$0xff]
        %v584 = vld [vmem:[%s414 + $0x98] sm:$0xff]
        %v585 = vld [vmem:[%s414 + $0xa0] sm:$0xff]
        %v586 = vld [vmem:[%s414 + $0xa8] sm:$0xff]
        %v587 = vld [vmem:[%s414 + $0xb0] sm:$0xff]
        %v588 = vld [vmem:[%s414 + $0xb8] sm:$0xff]
        %v589 = vld [vmem:[%s414 + $0xc0] sm:$0xff]
        %v590 = vld [vmem:[%s414 + $0xc8] sm:$0xff]
        %v591 = vld [vmem:[%s414 + $0xd0] sm:$0xff]
        %v592 = vld [vmem:[%s414 + $0xd8] sm:$0xff]
        %v593 = vld [vmem:[%s414 + $0xe0] sm:$0xff]
        %v594 = vld [vmem:[%s414 + $0xe8] sm:$0xff]
        %v595 = vld [vmem:[%s414 + $0xf0] sm:$0xff]
        %v596 = vld [vmem:[%s414 + $0xf8] sm:$0xff]
        %v597 = vld [vmem:[%s414 + $0x100] sm:$0xff]
        %v598 = vld [vmem:[%s414 + $0x108] sm:$0xff]
        %v599 = vld [vmem:[%s414 + $0x110] sm:$0xff]
        %v600 = vld [vmem:[%s414 + $0x118] sm:$0xff]
        %v601 = vld [vmem:[%s414 + $0x120] sm:$0xff]
        %v602 = vld [vmem:[%s414 + $0x128] sm:$0xff]
        %v603 = vld [vmem:[%s414 + $0x130] sm:$0xff]
        %v604 = vld [vmem:[%s414 + $0x138] sm:$0xff]
        %v605 = vld [vmem:[%s414 + $0x140] sm:$0xff]
        %v606 = vld [vmem:[%s414 + $0x148] sm:$0xff]
        %v607 = vld [vmem:[%s414 + $0x150] sm:$0xff]
        %v608 = vld [vmem:[%s414 + $0x158] sm:$0xff]
        %v609 = vld [vmem:[%s414 + $0x160] sm:$0xff]
        %v610 = vld [vmem:[%s414 + $0x168] sm:$0xff]
        %v611 = vld [vmem:[%s414 + $0x170] sm:$0xff]
        %v612 = vld [vmem:[%s414 + $0x178] sm:$0xff]
        %v613 = vld [vmem:[%s414 + $0x180] sm:$0xff]
        %v614 = vld [vmem:[%s414 + $0x188] sm:$0xff]
        %v615 = vld [vmem:[%s414 + $0x190] sm:$0xff]
        %v616 = vld [vmem:[%s414 + $0x198] sm:$0xff]
        %v617 = vld [vmem:[%s414 + $0x1a0] sm:$0xff]
        %v618 = vld [vmem:[%s414 + $0x1a8] sm:$0xff]
        %v619 = vld [vmem:[%s414 + $0x1b0] sm:$0xff]
        %v620 = vld [vmem:[%s414 + $0x1b8] sm:$0xff]
        %v621 = vld [vmem:[%s414 + $0x1c0] sm:$0xff]
        %v622 = vld [vmem:[%s414 + $0x1c8] sm:$0xff]
        %v623 = vld [vmem:[%s414 + $0x1d0] sm:$0xff]
        %v624 = vld [vmem:[%s414 + $0x1d8] sm:$0xff]
        %v625 = vld [vmem:[%s414 + $0x1e0] sm:$0xff]
        %v626 = vld [vmem:[%s414 + $0x1e8] sm:$0xff]
        %v627 = vld [vmem:[%s414 + $0x1f0] sm:$0xff]
        %v628 = vld [vmem:[%s414 + $0x1f8] sm:$0xff]
        %v629 = vld [vmem:[%s414 + $0x200] sm:$0xff]
        %v630 = vld [vmem:[%s414 + $0x208] sm:$0xff]
        %v631 = vld [vmem:[%s414 + $0x210] sm:$0xff]
        %v632 = vld [vmem:[%s414 + $0x218] sm:$0xff]
        %v633 = vld [vmem:[%s414 + $0x220] sm:$0xff]
        %v634 = vld [vmem:[%s414 + $0x228] sm:$0xff]
        %v635 = vld [vmem:[%s414 + $0x230] sm:$0xff]
        %v636 = vld [vmem:[%s414 + $0x238] sm:$0xff]
        %v637 = vld [vmem:[%s414 + $0x240] sm:$0xff]
        %v638 = vld [vmem:[%s414 + $0x248] sm:$0xff]
        %v639 = vld [vmem:[%s414 + $0x250] sm:$0xff]
        %v640 = vld [vmem:[%s414 + $0x258] sm:$0xff]
        %v641 = vld [vmem:[%s414 + $0x260] sm:$0xff]
        %v642 = vld [vmem:[%s414 + $0x268] sm:$0xff]
        %v643 = vld [vmem:[%s414 + $0x270] sm:$0xff]
        %v644 = vld [vmem:[%s414 + $0x278] sm:$0xff]
        %v645 = vld [vmem:[%s414 + $0x280] sm:$0xff]
        %v646 = vld [vmem:[%s414 + $0x288] sm:$0xff]
        %v647 = vld [vmem:[%s414 + $0x290] sm:$0xff]
        %v648 = vld [vmem:[%s414 + $0x298] sm:$0xff]
        %v649 = vld [vmem:[%s414 + $0x2a0] sm:$0xff]
        %v650 = vld [vmem:[%s414 + $0x2a8] sm:$0xff]
        %v651 = vld [vmem:[%s414 + $0x2b0] sm:$0xff]
        %v652 = vld [vmem:[%s414 + $0x2b8] sm:$0xff]
        %v653 = vld [vmem:[%s414 + $0x2c0] sm:$0xff]
        %v654 = vld [vmem:[%s414 + $0x2c8] sm:$0xff]
        %v655 = vld [vmem:[%s414 + $0x2d0] sm:$0xff]
        %v656 = vld [vmem:[%s414 + $0x2d8] sm:$0xff]
        %v657 = vld [vmem:[%s414 + $0x2e0] sm:$0xff]
        %v658 = vld [vmem:[%s414 + $0x2e8] sm:$0xff]
        %v659 = vld [vmem:[%s414 + $0x2f0] sm:$0xff]
        %v660 = vld [vmem:[%s414 + $0x2f8] sm:$0xff]
        %v661 = vld [vmem:[%s414 + $0x300] sm:$0xff]
        %v662 = vld [vmem:[%s414 + $0x308] sm:$0xff]
        %v663 = vld [vmem:[%s414 + $0x310] sm:$0xff]
        %v664 = vld [vmem:[%s414 + $0x318] sm:$0xff]
        %v665 = vld [vmem:[%s414 + $0x320] sm:$0xff]
        %v666 = vld [vmem:[%s414 + $0x328] sm:$0xff]
        %v667 = vld [vmem:[%s414 + $0x330] sm:$0xff]
        %v668 = vld [vmem:[%s414 + $0x338] sm:$0xff]
        %v669 = vld [vmem:[%s414 + $0x340] sm:$0xff]
        %v670 = vld [vmem:[%s414 + $0x348] sm:$0xff]
        %v671 = vld [vmem:[%s414 + $0x350] sm:$0xff]
        %v672 = vld [vmem:[%s414 + $0x358] sm:$0xff]
        %v673 = vld [vmem:[%s414 + $0x360] sm:$0xff]
        %v674 = vld [vmem:[%s414 + $0x368] sm:$0xff]
        %v675 = vld [vmem:[%s414 + $0x370] sm:$0xff]
        %v676 = vld [vmem:[%s414 + $0x378] sm:$0xff]
        %v677 = vld [vmem:[%s414 + $0x380] sm:$0xff]
        %v678 = vld [vmem:[%s414 + $0x388] sm:$0xff]
        %v679 = vld [vmem:[%s414 + $0x390] sm:$0xff]
        %v680 = vld [vmem:[%s414 + $0x398] sm:$0xff]
        %v681 = vld [vmem:[%s414 + $0x3a0] sm:$0xff]
        %v682 = vld [vmem:[%s414 + $0x3a8] sm:$0xff]
        %v683 = vld [vmem:[%s414 + $0x3b0] sm:$0xff]
        %v684 = vld [vmem:[%s414 + $0x3b8] sm:$0xff]
        %v685 = vld [vmem:[%s414 + $0x3c0] sm:$0xff]
        %v686 = vld [vmem:[%s414 + $0x3c8] sm:$0xff]
        %v687 = vld [vmem:[%s414 + $0x3d0] sm:$0xff]
        %v688 = vld [vmem:[%s414 + $0x3d8] sm:$0xff]
        %v689 = vld [vmem:[%s414 + $0x3e0] sm:$0xff]
        %v690 = vld [vmem:[%s414 + $0x3e8] sm:$0xff]
        %v691 = vld [vmem:[%s414 + $0x3f0] sm:$0xff]
        %v692 = vld [vmem:[%s414 + $0x3f8] sm:$0xff]
        %v693 = vld [vmem:[%s3] sm:$0xff]
        %v694 = vld [vmem:[%s3 + $0x8] sm:$0xff]
        %v695 = vld [vmem:[%s3 + $0x10] sm:$0xff]
        %v696 = vld [vmem:[%s3 + $0x18] sm:$0xff]
        %v697 = vld [vmem:[%s3 + $0x20] sm:$0xff]
        %v698 = vld [vmem:[%s3 + $0x28] sm:$0xff]
        %v699 = vld [vmem:[%s3 + $0x30] sm:$0xff]
        %v700 = vld [vmem:[%s3 + $0x38] sm:$0xff]
        %v701 = vld [vmem:[%s3 + $0x40] sm:$0xff]
        %v702 = vld [vmem:[%s3 + $0x48] sm:$0xff]
        %v703 = vld [vmem:[%s3 + $0x50] sm:$0xff]
        %v704 = vld [vmem:[%s3 + $0x58] sm:$0xff]
        %v705 = vld [vmem:[%s3 + $0x60] sm:$0xff]
        %v706 = vld [vmem:[%s3 + $0x68] sm:$0xff]
        %v707 = vld [vmem:[%s3 + $0x70] sm:$0xff]
        %v708 = vld [vmem:[%s3 + $0x78] sm:$0xff]
        %v709 = vld [vmem:[%s3 + $0x80] sm:$0xff]
        %v710 = vld [vmem:[%s3 + $0x88] sm:$0xff]
        %v711 = vld [vmem:[%s3 + $0x90] sm:$0xff]
        %v712 = vld [vmem:[%s3 + $0x98] sm:$0xff]
        %v713 = vld [vmem:[%s3 + $0xa0] sm:$0x3]
        %vm714 = vcmask 277504
        %v716 = vsel %vm714, %v566, 0
        %v719 = vsel %vm714, %v568, 0
        %v722 = vsel %vm714, %v570, 0
        %v725 = vsel %vm714, %v572, 0
        %v728 = vsel %vm714, %v574, 0
        %v731 = vsel %vm714, %v576, 0
        %v734 = vsel %vm714, %v578, 0
        %v737 = vsel %vm714, %v580, 0
        %v740 = vsel %vm714, %v582, 0
        %v743 = vsel %vm714, %v584, 0
        %v746 = vsel %vm714, %v586, 0
        %v749 = vsel %vm714, %v588, 0
        %v752 = vsel %vm714, %v590, 0
        %v755 = vsel %vm714, %v592, 0
        %v758 = vsel %vm714, %v594, 0
        %v761 = vsel %vm714, %v596, 0
        %v764 = vsel %vm714, %v598, 0
        %v767 = vsel %vm714, %v600, 0
        %v770 = vsel %vm714, %v602, 0
        %v773 = vsel %vm714, %v604, 0
        %v776 = vsel %vm714, %v606, 0
        %v779 = vsel %vm714, %v608, 0
        %v782 = vsel %vm714, %v610, 0
        %v785 = vsel %vm714, %v612, 0
        %v788 = vsel %vm714, %v614, 0
        %v791 = vsel %vm714, %v616, 0
        %v794 = vsel %vm714, %v618, 0
        %v797 = vsel %vm714, %v620, 0
        %v800 = vsel %vm714, %v622, 0
        %v803 = vsel %vm714, %v624, 0
        %v806 = vsel %vm714, %v626, 0
        %v809 = vsel %vm714, %v628, 0
        %v812 = vsel %vm714, %v630, 0
        %v815 = vsel %vm714, %v632, 0
        %v818 = vsel %vm714, %v634, 0
        %v821 = vsel %vm714, %v636, 0
        %v824 = vsel %vm714, %v638, 0
        %v827 = vsel %vm714, %v640, 0
        %v830 = vsel %vm714, %v642, 0
        %v833 = vsel %vm714, %v644, 0
        %v836 = vsel %vm714, %v646, 0
        %v839 = vsel %vm714, %v648, 0
        %v842 = vsel %vm714, %v650, 0
        %v845 = vsel %vm714, %v652, 0
        %v848 = vsel %vm714, %v654, 0
        %v851 = vsel %vm714, %v656, 0
        %v854 = vsel %vm714, %v658, 0
        %v857 = vsel %vm714, %v660, 0
        %v860 = vsel %vm714, %v662, 0
        %v863 = vsel %vm714, %v664, 0
        %v866 = vsel %vm714, %v666, 0
        %v869 = vsel %vm714, %v668, 0
        %v872 = vsel %vm714, %v670, 0
        %v875 = vsel %vm714, %v672, 0
        %v878 = vsel %vm714, %v674, 0
        %v881 = vsel %vm714, %v676, 0
        %v884 = vsel %vm714, %v678, 0
        %v887 = vsel %vm714, %v680, 0
        %v890 = vsel %vm714, %v682, 0
        %v893 = vsel %vm714, %v684, 0
        %v896 = vsel %vm714, %v686, 0
        %v899 = vsel %vm714, %v688, 0
        %v902 = vsel %vm714, %v690, 0
        %v905 = vsel %vm714, %v692, 0
        %vm907 = vcmask 1041408
        %v909 = vsel %vm907, %v713, 0
        %911 = vmatprep.subr.mxu0 0.0
        %912 = vmatpush1.msra.mxu0 %v708
        %913 = vmatprep.subr.mxu0 0.0
        %914 = vmatpush1.msra.mxu0 %v707
        %915 = vmatprep.subr.mxu0 0.0
        %916 = vmatpush1.msra.mxu0 %v706
        %917 = vmatprep.subr.mxu0 0.0
        %918 = vmatpush1.msra.mxu0 %v705
        %919 = vmatprep.subr.mxu0 0.0
        %920 = vmatpush1.msra.mxu0 %v704
        %921 = vmatprep.subr.mxu0 0.0
        %922 = vmatpush1.msra.mxu0 %v703
        %923 = vmatprep.subr.mxu0 0.0
        %924 = vmatpush1.msra.mxu0 %v702
        %925 = vmatprep.subr.mxu0 0.0
        %926 = vmatpush1.msra.mxu0 %v701
        %927 = vmatprep.subr.mxu0 0.0
        %928 = vmatpush1.msra.mxu0 %v700
        %929 = vmatprep.subr.mxu0 0.0
        %930 = vmatpush1.msra.mxu0 %v699
        %931 = vmatprep.subr.mxu0 0.0
        %932 = vmatpush1.msra.mxu0 %v698
        %933 = vmatprep.subr.mxu0 0.0
        %934 = vmatpush1.msra.mxu0 %v697
        %935 = vmatprep.subr.mxu0 0.0
        %936 = vmatpush1.msra.mxu0 %v696
        %937 = vmatprep.subr.mxu0 0.0
        %938 = vmatpush1.msra.mxu0 %v695
        %939 = vmatprep.subr.mxu0 0.0
        %940 = vmatpush1.msra.mxu0 %v694
        %941 = vmatprep.subr.mxu0 0.0
        %942 = vmatpush1.msra.mxu0 %v693
        %943 = vmatprep.subr.mxu0 0.0
        %944 = vmatpush2.msra.mxu0 0.0
        %945 = vmatprep.subr.mxu0 0.0
        %946 = vmatpush2.msra.mxu0 0.0
        %947 = vmatprep.subr.mxu0 0.0
        %948 = vmatpush2.msra.mxu0 0.0
        %949 = vmatprep.subr.mxu0 0.0
        %950 = vmatpush2.msra.mxu0 0.0
        %951 = vmatprep.subr.mxu0 0.0
        %952 = vmatpush2.msra.mxu0 0.0
        %953 = vmatprep.subr.mxu0 0.0
        %954 = vmatpush2.msra.mxu0 0.0
        %955 = vmatprep.subr.mxu0 0.0
        %956 = vmatpush2.msra.mxu0 0.0
        %957 = vmatprep.subr.mxu0 0.0
        %958 = vmatpush2.msra.mxu0 0.0
        %959 = vmatprep.subr.mxu0 0.0
        %960 = vmatpush2.msra.mxu0 0.0
        %961 = vmatprep.subr.mxu0 0.0
        %962 = vmatpush2.msra.mxu0 0.0
        %963 = vmatprep.subr.mxu0 0.0
        %964 = vmatpush2.msra.mxu0 0.0
        %965 = vmatprep.subr.mxu0 0.0
        %966 = vmatpush2.msra.mxu0 %v909
        %967 = vmatprep.subr.mxu0 0.0
        %968 = vmatpush2.msra.mxu0 %v712
        %969 = vmatprep.subr.mxu0 0.0
        %970 = vmatpush2.msra.mxu0 %v711
        %971 = vmatprep.subr.mxu0 0.0
        %972 = vmatpush2.msra.mxu0 %v710
        %973 = vmatprep.subr.mxu0 0.0
        %974 = vmatpush2.msra.mxu0 %v709
        %975 = vmatprep.mubr.f32.mxu0 %v716
        %976 = vmatmul.mubr.f32.gmra.mxu0 %v565
        %v977 = vpop.f32.mrf.mxu0
        %v978 = vadd.f32 0.0, %v977
        %v979 = vpop.f32.mrf.mxu0
        %980 = vmatprep.mubr.f32.mxu0 %v719
        %981 = vmatmul.mubr.f32.gmra.mxu0 %v567
        %v982 = vpop.f32.mrf.mxu0
        %v983 = vadd.f32 0.0, %v982
        %v984 = vpop.f32.mrf.mxu0
        %985 = vmatprep.mubr.f32.mxu0 %v722
        %986 = vmatmul.mubr.f32.gmra.mxu0 %v569
        %v987 = vpop.f32.mrf.mxu0
        %v988 = vadd.f32 0.0, %v987
        %v989 = vpop.f32.mrf.mxu0
        %990 = vmatprep.mubr.f32.mxu0 %v725
        %991 = vmatmul.mubr.f32.gmra.mxu0 %v571
        %v992 = vpop.f32.mrf.mxu0
        %v993 = vadd.f32 0.0, %v992
        %v994 = vpop.f32.mrf.mxu0
        %995 = vmatprep.mubr.f32.mxu0 %v728
        %996 = vmatmul.mubr.f32.gmra.mxu0 %v573
        %v997 = vpop.f32.mrf.mxu0
        %v998 = vadd.f32 0.0, %v997
        %v999 = vpop.f32.mrf.mxu0
        %1000 = vmatprep.mubr.f32.mxu0 %v731
        %1001 = vmatmul.mubr.f32.gmra.mxu0 %v575
        %v1002 = vpop.f32.mrf.mxu0
        %v1003 = vadd.f32 0.0, %v1002
        %v1004 = vpop.f32.mrf.mxu0
        %1005 = vmatprep.mubr.f32.mxu0 %v734
        %1006 = vmatmul.mubr.f32.gmra.mxu0 %v577
        %v1007 = vpop.f32.mrf.mxu0
        %v1008 = vadd.f32 0.0, %v1007
        %v1009 = vpop.f32.mrf.mxu0
        %1010 = vmatprep.mubr.f32.mxu0 %v737
        %1011 = vmatmul.mubr.f32.gmra.mxu0 %v579
        %v1012 = vpop.f32.mrf.mxu0
        %v1013 = vadd.f32 0.0, %v1012
        %v1014 = vpop.f32.mrf.mxu0
        %1015 = vmatprep.mubr.f32.mxu0 %v740
        %1016 = vmatmul.mubr.f32.gmra.mxu0 %v581
        %v1017 = vpop.f32.mrf.mxu0
        %v1018 = vadd.f32 0.0, %v1017
        %v1019 = vpop.f32.mrf.mxu0
        %1020 = vmatprep.mubr.f32.mxu0 %v743
        %1021 = vmatmul.mubr.f32.gmra.mxu0 %v583
        %v1022 = vpop.f32.mrf.mxu0
        %v1023 = vadd.f32 0.0, %v1022
        %v1024 = vpop.f32.mrf.mxu0
        %1025 = vmatprep.mubr.f32.mxu0 %v746
        %1026 = vmatmul.mubr.f32.gmra.mxu0 %v585
        %v1027 = vpop.f32.mrf.mxu0
        %v1028 = vadd.f32 0.0, %v1027
        %v1029 = vpop.f32.mrf.mxu0
        %1030 = vmatprep.mubr.f32.mxu0 %v749
        %1031 = vmatmul.mubr.f32.gmra.mxu0 %v587
        %v1032 = vpop.f32.mrf.mxu0
        %v1033 = vadd.f32 0.0, %v1032
        %v1034 = vpop.f32.mrf.mxu0
        %1035 = vmatprep.mubr.f32.mxu0 %v752
        %1036 = vmatmul.mubr.f32.gmra.mxu0 %v589
        %v1037 = vpop.f32.mrf.mxu0
        %v1038 = vadd.f32 0.0, %v1037
        %v1039 = vpop.f32.mrf.mxu0
        %1040 = vmatprep.mubr.f32.mxu0 %v755
        %1041 = vmatmul.mubr.f32.gmra.mxu0 %v591
        %v1042 = vpop.f32.mrf.mxu0
        %v1043 = vadd.f32 0.0, %v1042
        %v1044 = vpop.f32.mrf.mxu0
        %1045 = vmatprep.mubr.f32.mxu0 %v758
        %1046 = vmatmul.mubr.f32.gmra.mxu0 %v593
        %v1047 = vpop.f32.mrf.mxu0
        %v1048 = vadd.f32 0.0, %v1047
        %v1049 = vpop.f32.mrf.mxu0
        %1050 = vmatprep.mubr.f32.mxu0 %v761
        %1051 = vmatmul.mubr.f32.gmra.mxu0 %v595
        %v1052 = vpop.f32.mrf.mxu0
        %v1053 = vadd.f32 0.0, %v1052
        %v1054 = vpop.f32.mrf.mxu0
        %1055 = vmatprep.mubr.f32.mxu0 %v764
        %1056 = vmatmul.mubr.f32.gmra.mxu0 %v597
        %v1057 = vpop.f32.mrf.mxu0
        %v1058 = vadd.f32 0.0, %v1057
        %v1059 = vpop.f32.mrf.mxu0
        %1060 = vmatprep.mubr.f32.mxu0 %v767
        %1061 = vmatmul.mubr.f32.gmra.mxu0 %v599
        %v1062 = vpop.f32.mrf.mxu0
        %v1063 = vadd.f32 0.0, %v1062
        %v1064 = vpop.f32.mrf.mxu0
        %1065 = vmatprep.mubr.f32.mxu0 %v770
        %1066 = vmatmul.mubr.f32.gmra.mxu0 %v601
        %v1067 = vpop.f32.mrf.mxu0
        %v1068 = vadd.f32 0.0, %v1067
        %v1069 = vpop.f32.mrf.mxu0
        %1070 = vmatprep.mubr.f32.mxu0 %v773
        %1071 = vmatmul.mubr.f32.gmra.mxu0 %v603
        %v1072 = vpop.f32.mrf.mxu0
        %v1073 = vadd.f32 0.0, %v1072
        %v1074 = vpop.f32.mrf.mxu0
        %1075 = vmatprep.mubr.f32.mxu0 %v776
        %1076 = vmatmul.mubr.f32.gmra.mxu0 %v605
        %v1077 = vpop.f32.mrf.mxu0
        %v1078 = vadd.f32 0.0, %v1077
        %v1079 = vpop.f32.mrf.mxu0
        %1080 = vmatprep.mubr.f32.mxu0 %v779
        %1081 = vmatmul.mubr.f32.gmra.mxu0 %v607
        %v1082 = vpop.f32.mrf.mxu0
        %v1083 = vadd.f32 0.0, %v1082
        %v1084 = vpop.f32.mrf.mxu0
        %1085 = vmatprep.mubr.f32.mxu0 %v782
        %1086 = vmatmul.mubr.f32.gmra.mxu0 %v609
        %v1087 = vpop.f32.mrf.mxu0
        %v1088 = vadd.f32 0.0, %v1087
        %v1089 = vpop.f32.mrf.mxu0
        %1090 = vmatprep.mubr.f32.mxu0 %v785
        %1091 = vmatmul.mubr.f32.gmra.mxu0 %v611
        %v1092 = vpop.f32.mrf.mxu0
        %v1093 = vadd.f32 0.0, %v1092
        %v1094 = vpop.f32.mrf.mxu0
        %1095 = vmatprep.mubr.f32.mxu0 %v788
        %1096 = vmatmul.mubr.f32.gmra.mxu0 %v613
        %v1097 = vpop.f32.mrf.mxu0
        %v1098 = vadd.f32 0.0, %v1097
        %v1099 = vpop.f32.mrf.mxu0
        %1100 = vmatprep.mubr.f32.mxu0 %v791
        %1101 = vmatmul.mubr.f32.gmra.mxu0 %v615
        %v1102 = vpop.f32.mrf.mxu0
        %v1103 = vadd.f32 0.0, %v1102
        %v1104 = vpop.f32.mrf.mxu0
        %1105 = vmatprep.mubr.f32.mxu0 %v794
        %1106 = vmatmul.mubr.f32.gmra.mxu0 %v617
        %v1107 = vpop.f32.mrf.mxu0
        %v1108 = vadd.f32 0.0, %v1107
        %v1109 = vpop.f32.mrf.mxu0
        %1110 = vmatprep.mubr.f32.mxu0 %v797
        %1111 = vmatmul.mubr.f32.gmra.mxu0 %v619
        %v1112 = vpop.f32.mrf.mxu0
        %v1113 = vadd.f32 0.0, %v1112
        %v1114 = vpop.f32.mrf.mxu0
        %1115 = vmatprep.mubr.f32.mxu0 %v800
        %1116 = vmatmul.mubr.f32.gmra.mxu0 %v621
        %v1117 = vpop.f32.mrf.mxu0
        %v1118 = vadd.f32 0.0, %v1117
        %v1119 = vpop.f32.mrf.mxu0
        %1120 = vmatprep.mubr.f32.mxu0 %v803
        %1121 = vmatmul.mubr.f32.gmra.mxu0 %v623
        %v1122 = vpop.f32.mrf.mxu0
        %v1123 = vadd.f32 0.0, %v1122
        %v1124 = vpop.f32.mrf.mxu0
        %1125 = vmatprep.mubr.f32.mxu0 %v806
        %1126 = vmatmul.mubr.f32.gmra.mxu0 %v625
        %v1127 = vpop.f32.mrf.mxu0
        %v1128 = vadd.f32 0.0, %v1127
        %v1129 = vpop.f32.mrf.mxu0
        %1130 = vmatprep.mubr.f32.mxu0 %v809
        %1131 = vmatmul.mubr.f32.gmra.mxu0 %v627
        %v1132 = vpop.f32.mrf.mxu0
        %v1133 = vadd.f32 0.0, %v1132
        %v1134 = vpop.f32.mrf.mxu0
        %1135 = vmatprep.mubr.f32.mxu0 %v812
        %1136 = vmatmul.mubr.f32.gmra.mxu0 %v629
        %v1137 = vpop.f32.mrf.mxu0
        %v1138 = vadd.f32 0.0, %v1137
        %v1139 = vpop.f32.mrf.mxu0
        %1140 = vmatprep.mubr.f32.mxu0 %v815
        %1141 = vmatmul.mubr.f32.gmra.mxu0 %v631
        %v1142 = vpop.f32.mrf.mxu0
        %v1143 = vadd.f32 0.0, %v1142
        %v1144 = vpop.f32.mrf.mxu0
        %1145 = vmatprep.mubr.f32.mxu0 %v818
        %1146 = vmatmul.mubr.f32.gmra.mxu0 %v633
        %v1147 = vpop.f32.mrf.mxu0
        %v1148 = vadd.f32 0.0, %v1147
        %v1149 = vpop.f32.mrf.mxu0
        %1150 = vmatprep.mubr.f32.mxu0 %v821
        %1151 = vmatmul.mubr.f32.gmra.mxu0 %v635
        %v1152 = vpop.f32.mrf.mxu0
        %v1153 = vadd.f32 0.0, %v1152
        %v1154 = vpop.f32.mrf.mxu0
        %1155 = vmatprep.mubr.f32.mxu0 %v824
        %1156 = vmatmul.mubr.f32.gmra.mxu0 %v637
        %v1157 = vpop.f32.mrf.mxu0
        %v1158 = vadd.f32 0.0, %v1157
        %v1159 = vpop.f32.mrf.mxu0
        %1160 = vmatprep.mubr.f32.mxu0 %v827
        %1161 = vmatmul.mubr.f32.gmra.mxu0 %v639
        %v1162 = vpop.f32.mrf.mxu0
        %v1163 = vadd.f32 0.0, %v1162
        %v1164 = vpop.f32.mrf.mxu0
        %1165 = vmatprep.mubr.f32.mxu0 %v830
        %1166 = vmatmul.mubr.f32.gmra.mxu0 %v641
        %v1167 = vpop.f32.mrf.mxu0
        %v1168 = vadd.f32 0.0, %v1167
        %v1169 = vpop.f32.mrf.mxu0
        %1170 = vmatprep.mubr.f32.mxu0 %v833
        %1171 = vmatmul.mubr.f32.gmra.mxu0 %v643
        %v1172 = vpop.f32.mrf.mxu0
        %v1173 = vadd.f32 0.0, %v1172
        %v1174 = vpop.f32.mrf.mxu0
        %1175 = vmatprep.mubr.f32.mxu0 %v836
        %1176 = vmatmul.mubr.f32.gmra.mxu0 %v645
        %v1177 = vpop.f32.mrf.mxu0
        %v1178 = vadd.f32 0.0, %v1177
        %v1179 = vpop.f32.mrf.mxu0
        %1180 = vmatprep.mubr.f32.mxu0 %v839
        %1181 = vmatmul.mubr.f32.gmra.mxu0 %v647
        %v1182 = vpop.f32.mrf.mxu0
        %v1183 = vadd.f32 0.0, %v1182
        %v1184 = vpop.f32.mrf.mxu0
        %1185 = vmatprep.mubr.f32.mxu0 %v842
        %1186 = vmatmul.mubr.f32.gmra.mxu0 %v649
        %v1187 = vpop.f32.mrf.mxu0
        %v1188 = vadd.f32 0.0, %v1187
        %v1189 = vpop.f32.mrf.mxu0
        %1190 = vmatprep.mubr.f32.mxu0 %v845
        %1191 = vmatmul.mubr.f32.gmra.mxu0 %v651
        %v1192 = vpop.f32.mrf.mxu0
        %v1193 = vadd.f32 0.0, %v1192
        %v1194 = vpop.f32.mrf.mxu0
        %1195 = vmatprep.mubr.f32.mxu0 %v848
        %1196 = vmatmul.mubr.f32.gmra.mxu0 %v653
        %v1197 = vpop.f32.mrf.mxu0
        %v1198 = vadd.f32 0.0, %v1197
        %v1199 = vpop.f32.mrf.mxu0
        %1200 = vmatprep.mubr.f32.mxu0 %v851
        %1201 = vmatmul.mubr.f32.gmra.mxu0 %v655
        %v1202 = vpop.f32.mrf.mxu0
        %v1203 = vadd.f32 0.0, %v1202
        %v1204 = vpop.f32.mrf.mxu0
        %1205 = vmatprep.mubr.f32.mxu0 %v854
        %1206 = vmatmul.mubr.f32.gmra.mxu0 %v657
        %v1207 = vpop.f32.mrf.mxu0
        %v1208 = vadd.f32 0.0, %v1207
        %v1209 = vpop.f32.mrf.mxu0
        %1210 = vmatprep.mubr.f32.mxu0 %v857
        %1211 = vmatmul.mubr.f32.gmra.mxu0 %v659
        %v1212 = vpop.f32.mrf.mxu0
        %v1213 = vadd.f32 0.0, %v1212
        %v1214 = vpop.f32.mrf.mxu0
        %1215 = vmatprep.mubr.f32.mxu0 %v860
        %1216 = vmatmul.mubr.f32.gmra.mxu0 %v661
        %v1217 = vpop.f32.mrf.mxu0
        %v1218 = vadd.f32 0.0, %v1217
        %v1219 = vpop.f32.mrf.mxu0
        %1220 = vmatprep.mubr.f32.mxu0 %v863
        %1221 = vmatmul.mubr.f32.gmra.mxu0 %v663
        %v1222 = vpop.f32.mrf.mxu0
        %v1223 = vadd.f32 0.0, %v1222
        %v1224 = vpop.f32.mrf.mxu0
        %1225 = vmatprep.mubr.f32.mxu0 %v866
        %1226 = vmatmul.mubr.f32.gmra.mxu0 %v665
        %v1227 = vpop.f32.mrf.mxu0
        %v1228 = vadd.f32 0.0, %v1227
        %v1229 = vpop.f32.mrf.mxu0
        %1230 = vmatprep.mubr.f32.mxu0 %v869
        %1231 = vmatmul.mubr.f32.gmra.mxu0 %v667
        %v1232 = vpop.f32.mrf.mxu0
        %v1233 = vadd.f32 0.0, %v1232
        %v1234 = vpop.f32.mrf.mxu0
        %1235 = vmatprep.mubr.f32.mxu0 %v872
        %1236 = vmatmul.mubr.f32.gmra.mxu0 %v669
        %v1237 = vpop.f32.mrf.mxu0
        %v1238 = vadd.f32 0.0, %v1237
        %v1239 = vpop.f32.mrf.mxu0
        %1240 = vmatprep.mubr.f32.mxu0 %v875
        %1241 = vmatmul.mubr.f32.gmra.mxu0 %v671
        %v1242 = vpop.f32.mrf.mxu0
        %v1243 = vadd.f32 0.0, %v1242
        %v1244 = vpop.f32.mrf.mxu0
        %1245 = vmatprep.mubr.f32.mxu0 %v878
        %1246 = vmatmul.mubr.f32.gmra.mxu0 %v673
        %v1247 = vpop.f32.mrf.mxu0
        %v1248 = vadd.f32 0.0, %v1247
        %v1249 = vpop.f32.mrf.mxu0
        %1250 = vmatprep.mubr.f32.mxu0 %v881
        %1251 = vmatmul.mubr.f32.gmra.mxu0 %v675
        %v1252 = vpop.f32.mrf.mxu0
        %v1253 = vadd.f32 0.0, %v1252
        %v1254 = vpop.f32.mrf.mxu0
        %1255 = vmatprep.mubr.f32.mxu0 %v884
        %1256 = vmatmul.mubr.f32.gmra.mxu0 %v677
        %v1257 = vpop.f32.mrf.mxu0
        %v1258 = vadd.f32 0.0, %v1257
        %v1259 = vpop.f32.mrf.mxu0
        %1260 = vmatprep.mubr.f32.mxu0 %v887
        %1261 = vmatmul.mubr.f32.gmra.mxu0 %v679
        %v1262 = vpop.f32.mrf.mxu0
        %v1263 = vadd.f32 0.0, %v1262
        %v1264 = vpop.f32.mrf.mxu0
        %1265 = vmatprep.mubr.f32.mxu0 %v890
        %1266 = vmatmul.mubr.f32.gmra.mxu0 %v681
        %v1267 = vpop.f32.mrf.mxu0
        %v1268 = vadd.f32 0.0, %v1267
        %v1269 = vpop.f32.mrf.mxu0
        %1270 = vmatprep.mubr.f32.mxu0 %v893
        %1271 = vmatmul.mubr.f32.gmra.mxu0 %v683
        %v1272 = vpop.f32.mrf.mxu0
        %v1273 = vadd.f32 0.0, %v1272
        %v1274 = vpop.f32.mrf.mxu0
        %1275 = vmatprep.mubr.f32.mxu0 %v896
        %1276 = vmatmul.mubr.f32.gmra.mxu0 %v685
        %v1277 = vpop.f32.mrf.mxu0
        %v1278 = vadd.f32 0.0, %v1277
        %v1279 = vpop.f32.mrf.mxu0
        %1280 = vmatprep.mubr.f32.mxu0 %v899
        %1281 = vmatmul.mubr.f32.gmra.mxu0 %v687
        %v1282 = vpop.f32.mrf.mxu0
        %v1283 = vadd.f32 0.0, %v1282
        %v1284 = vpop.f32.mrf.mxu0
        %1285 = vmatprep.mubr.f32.mxu0 %v902
        %1286 = vmatmul.mubr.f32.gmra.mxu0 %v689
        %v1287 = vpop.f32.mrf.mxu0
        %v1288 = vadd.f32 0.0, %v1287
        %v1289 = vpop.f32.mrf.mxu0
        %1290 = vmatprep.mubr.f32.mxu0 %v905
        %1291 = vmatmul.mubr.f32.gmra.mxu0 %v691
        %v1292 = vpop.f32.mrf.mxu0
        %v1293 = vadd.f32 0.0, %v1292
        %v1294 = vpop.f32.mrf.mxu0
        %1295 = vdwg.mxu0
        %v1297 = vsel %vm714, %v417, 0
        %v1300 = vsel %vm714, %v419, 0
        %v1303 = vsel %vm714, %v421, 0
        %v1306 = vsel %vm714, %v423, 0
        %v1309 = vsel %vm714, %v425, 0
        %v1312 = vsel %vm714, %v427, 0
        %v1315 = vsel %vm714, %v429, 0
        %v1318 = vsel %vm714, %v431, 0
        %v1321 = vsel %vm714, %v433, 0
        %v1324 = vsel %vm714, %v435, 0
        %v1327 = vsel %vm714, %v437, 0
        %v1330 = vsel %vm714, %v439, 0
        %v1333 = vsel %vm714, %v441, 0
        %v1336 = vsel %vm714, %v443, 0
        %v1339 = vsel %vm714, %v445, 0
        %v1342 = vsel %vm714, %v447, 0
        %v1345 = vsel %vm714, %v449, 0
        %v1348 = vsel %vm714, %v451, 0
        %v1351 = vsel %vm714, %v453, 0
        %v1354 = vsel %vm714, %v455, 0
        %v1357 = vsel %vm714, %v457, 0
        %v1360 = vsel %vm714, %v459, 0
        %v1363 = vsel %vm714, %v461, 0
        %v1366 = vsel %vm714, %v463, 0
        %v1369 = vsel %vm714, %v465, 0
        %v1372 = vsel %vm714, %v467, 0
        %v1375 = vsel %vm714, %v469, 0
        %v1378 = vsel %vm714, %v471, 0
        %v1381 = vsel %vm714, %v473, 0
        %v1384 = vsel %vm714, %v475, 0
        %v1387 = vsel %vm714, %v477, 0
        %v1390 = vsel %vm714, %v479, 0
        %v1393 = vsel %vm714, %v481, 0
        %v1396 = vsel %vm714, %v483, 0
        %v1399 = vsel %vm714, %v485, 0
        %v1402 = vsel %vm714, %v487, 0
        %v1405 = vsel %vm714, %v489, 0
        %v1408 = vsel %vm714, %v491, 0
        %v1411 = vsel %vm714, %v493, 0
        %v1414 = vsel %vm714, %v495, 0
        %v1417 = vsel %vm714, %v497, 0
        %v1420 = vsel %vm714, %v499, 0
        %v1423 = vsel %vm714, %v501, 0
        %v1426 = vsel %vm714, %v503, 0
        %v1429 = vsel %vm714, %v505, 0
        %v1432 = vsel %vm714, %v507, 0
        %v1435 = vsel %vm714, %v509, 0
        %v1438 = vsel %vm714, %v511, 0
        %v1441 = vsel %vm714, %v513, 0
        %v1444 = vsel %vm714, %v515, 0
        %v1447 = vsel %vm714, %v517, 0
        %v1450 = vsel %vm714, %v519, 0
        %v1453 = vsel %vm714, %v521, 0
        %v1456 = vsel %vm714, %v523, 0
        %v1459 = vsel %vm714, %v525, 0
        %v1462 = vsel %vm714, %v527, 0
        %v1465 = vsel %vm714, %v529, 0
        %v1468 = vsel %vm714, %v531, 0
        %v1471 = vsel %vm714, %v533, 0
        %v1474 = vsel %vm714, %v535, 0
        %v1477 = vsel %vm714, %v537, 0
        %v1480 = vsel %vm714, %v539, 0
        %v1483 = vsel %vm714, %v541, 0
        %v1486 = vsel %vm714, %v543, 0
        %v1489 = vsel %vm907, %v564, 0
        %1491 = vmatprep.subr.mxu0 0.0
        %1492 = vmatpush1.msra.mxu0 %v559
        %1493 = vmatprep.subr.mxu0 0.0
        %1494 = vmatpush1.msra.mxu0 %v558
        %1495 = vmatprep.subr.mxu0 0.0
        %1496 = vmatpush1.msra.mxu0 %v557
        %1497 = vmatprep.subr.mxu0 0.0
        %1498 = vmatpush1.msra.mxu0 %v556
        %1499 = vmatprep.subr.mxu0 0.0
        %1500 = vmatpush1.msra.mxu0 %v555
        %1501 = vmatprep.subr.mxu0 0.0
        %1502 = vmatpush1.msra.mxu0 %v554
        %1503 = vmatprep.subr.mxu0 0.0
        %1504 = vmatpush1.msra.mxu0 %v553
        %1505 = vmatprep.subr.mxu0 0.0
        %1506 = vmatpush1.msra.mxu0 %v552
        %1507 = vmatprep.subr.mxu0 0.0
        %1508 = vmatpush1.msra.mxu0 %v551
        %1509 = vmatprep.subr.mxu0 0.0
        %1510 = vmatpush1.msra.mxu0 %v550
        %1511 = vmatprep.subr.mxu0 0.0
        %1512 = vmatpush1.msra.mxu0 %v549
        %1513 = vmatprep.subr.mxu0 0.0
        %1514 = vmatpush1.msra.mxu0 %v548
        %1515 = vmatprep.subr.mxu0 0.0
        %1516 = vmatpush1.msra.mxu0 %v547
        %1517 = vmatprep.subr.mxu0 0.0
        %1518 = vmatpush1.msra.mxu0 %v546
        %1519 = vmatprep.subr.mxu0 0.0
        %1520 = vmatpush1.msra.mxu0 %v545
        %1521 = vmatprep.subr.mxu0 0.0
        %1522 = vmatpush1.msra.mxu0 %v544
        %1523 = vmatprep.subr.mxu0 0.0
        %1524 = vmatpush2.msra.mxu0 0.0
        %1525 = vmatprep.subr.mxu0 0.0
        %1526 = vmatpush2.msra.mxu0 0.0
        %1527 = vmatprep.subr.mxu0 0.0
        %1528 = vmatpush2.msra.mxu0 0.0
        %1529 = vmatprep.subr.mxu0 0.0
        %1530 = vmatpush2.msra.mxu0 0.0
        %1531 = vmatprep.subr.mxu0 0.0
        %1532 = vmatpush2.msra.mxu0 0.0
        %1533 = vmatprep.subr.mxu0 0.0
        %1534 = vmatpush2.msra.mxu0 0.0
        %1535 = vmatprep.subr.mxu0 0.0
        %1536 = vmatpush2.msra.mxu0 0.0
        %1537 = vmatprep.subr.mxu0 0.0
        %1538 = vmatpush2.msra.mxu0 0.0
        %1539 = vmatprep.subr.mxu0 0.0
        %1540 = vmatpush2.msra.mxu0 0.0
        %1541 = vmatprep.subr.mxu0 0.0
        %1542 = vmatpush2.msra.mxu0 0.0
        %1543 = vmatprep.subr.mxu0 0.0
        %1544 = vmatpush2.msra.mxu0 0.0
        %1545 = vmatprep.subr.mxu0 0.0
        %1546 = vmatpush2.msra.mxu0 %v1489
        %1547 = vmatprep.subr.mxu0 0.0
        %1548 = vmatpush2.msra.mxu0 %v563
        %1549 = vmatprep.subr.mxu0 0.0
        %1550 = vmatpush2.msra.mxu0 %v562
        %1551 = vmatprep.subr.mxu0 0.0
        %1552 = vmatpush2.msra.mxu0 %v561
        %1553 = vmatprep.subr.mxu0 0.0
        %1554 = vmatpush2.msra.mxu0 %v560
        %1555 = vmatprep.mubr.f32.mxu0 %v1297
        %1556 = vmatmul.mubr.f32.gmra.mxu0 %v416
        %v1557 = vpop.f32.mrf.mxu0
        %v1558 = vadd.f32 %v978, %v1557
        %v1559 = vpop.f32.mrf.mxu0
        %1560 = vmatprep.mubr.f32.mxu0 %v1300
        %1561 = vmatmul.mubr.f32.gmra.mxu0 %v418
        %v1562 = vpop.f32.mrf.mxu0
        %v1563 = vadd.f32 %v983, %v1562
        %v1564 = vpop.f32.mrf.mxu0
        %1565 = vmatprep.mubr.f32.mxu0 %v1303
        %1566 = vmatmul.mubr.f32.gmra.mxu0 %v420
        %v1567 = vpop.f32.mrf.mxu0
        %v1568 = vadd.f32 %v988, %v1567
        %v1569 = vpop.f32.mrf.mxu0
        %1570 = vmatprep.mubr.f32.mxu0 %v1306
        %1571 = vmatmul.mubr.f32.gmra.mxu0 %v422
        %v1572 = vpop.f32.mrf.mxu0
        %v1573 = vadd.f32 %v993, %v1572
        %v1574 = vpop.f32.mrf.mxu0
        %1575 = vmatprep.mubr.f32.mxu0 %v1309
        %1576 = vmatmul.mubr.f32.gmra.mxu0 %v424
        %v1577 = vpop.f32.mrf.mxu0
        %v1578 = vadd.f32 %v998, %v1577
        %v1579 = vpop.f32.mrf.mxu0
        %1580 = vmatprep.mubr.f32.mxu0 %v1312
        %1581 = vmatmul.mubr.f32.gmra.mxu0 %v426
        %v1582 = vpop.f32.mrf.mxu0
        %v1583 = vadd.f32 %v1003, %v1582
        %v1584 = vpop.f32.mrf.mxu0
        %1585 = vmatprep.mubr.f32.mxu0 %v1315
        %1586 = vmatmul.mubr.f32.gmra.mxu0 %v428
        %v1587 = vpop.f32.mrf.mxu0
        %v1588 = vadd.f32 %v1008, %v1587
        %v1589 = vpop.f32.mrf.mxu0
        %1590 = vmatprep.mubr.f32.mxu0 %v1318
        %1591 = vmatmul.mubr.f32.gmra.mxu0 %v430
        %v1592 = vpop.f32.mrf.mxu0
        %v1593 = vadd.f32 %v1013, %v1592
        %v1594 = vpop.f32.mrf.mxu0
        %1595 = vmatprep.mubr.f32.mxu0 %v1321
        %1596 = vmatmul.mubr.f32.gmra.mxu0 %v432
        %v1597 = vpop.f32.mrf.mxu0
        %v1598 = vadd.f32 %v1018, %v1597
        %v1599 = vpop.f32.mrf.mxu0
        %1600 = vmatprep.mubr.f32.mxu0 %v1324
        %1601 = vmatmul.mubr.f32.gmra.mxu0 %v434
        %v1602 = vpop.f32.mrf.mxu0
        %v1603 = vadd.f32 %v1023, %v1602
        %v1604 = vpop.f32.mrf.mxu0
        %1605 = vmatprep.mubr.f32.mxu0 %v1327
        %1606 = vmatmul.mubr.f32.gmra.mxu0 %v436
        %v1607 = vpop.f32.mrf.mxu0
        %v1608 = vadd.f32 %v1028, %v1607
        %v1609 = vpop.f32.mrf.mxu0
        %1610 = vmatprep.mubr.f32.mxu0 %v1330
        %1611 = vmatmul.mubr.f32.gmra.mxu0 %v438
        %v1612 = vpop.f32.mrf.mxu0
        %v1613 = vadd.f32 %v1033, %v1612
        %v1614 = vpop.f32.mrf.mxu0
        %1615 = vmatprep.mubr.f32.mxu0 %v1333
        %1616 = vmatmul.mubr.f32.gmra.mxu0 %v440
        %v1617 = vpop.f32.mrf.mxu0
        %v1618 = vadd.f32 %v1038, %v1617
        %v1619 = vpop.f32.mrf.mxu0
        %1620 = vmatprep.mubr.f32.mxu0 %v1336
        %1621 = vmatmul.mubr.f32.gmra.mxu0 %v442
        %v1622 = vpop.f32.mrf.mxu0
        %v1623 = vadd.f32 %v1043, %v1622
        %v1624 = vpop.f32.mrf.mxu0
        %1625 = vmatprep.mubr.f32.mxu0 %v1339
        %1626 = vmatmul.mubr.f32.gmra.mxu0 %v444
        %v1627 = vpop.f32.mrf.mxu0
        %v1628 = vadd.f32 %v1048, %v1627
        %v1629 = vpop.f32.mrf.mxu0
        %1630 = vmatprep.mubr.f32.mxu0 %v1342
        %1631 = vmatmul.mubr.f32.gmra.mxu0 %v446
        %v1632 = vpop.f32.mrf.mxu0
        %v1633 = vadd.f32 %v1053, %v1632
        %v1634 = vpop.f32.mrf.mxu0
        %1635 = vmatprep.mubr.f32.mxu0 %v1345
        %1636 = vmatmul.mubr.f32.gmra.mxu0 %v448
        %v1637 = vpop.f32.mrf.mxu0
        %v1638 = vadd.f32 %v1058, %v1637
        %v1639 = vpop.f32.mrf.mxu0
        %1640 = vmatprep.mubr.f32.mxu0 %v1348
        %1641 = vmatmul.mubr.f32.gmra.mxu0 %v450
        %v1642 = vpop.f32.mrf.mxu0
        %v1643 = vadd.f32 %v1063, %v1642
        %v1644 = vpop.f32.mrf.mxu0
        %1645 = vmatprep.mubr.f32.mxu0 %v1351
        %1646 = vmatmul.mubr.f32.gmra.mxu0 %v452
        %v1647 = vpop.f32.mrf.mxu0
        %v1648 = vadd.f32 %v1068, %v1647
        %v1649 = vpop.f32.mrf.mxu0
        %1650 = vmatprep.mubr.f32.mxu0 %v1354
        %1651 = vmatmul.mubr.f32.gmra.mxu0 %v454
        %v1652 = vpop.f32.mrf.mxu0
        %v1653 = vadd.f32 %v1073, %v1652
        %v1654 = vpop.f32.mrf.mxu0
        %1655 = vmatprep.mubr.f32.mxu0 %v1357
        %1656 = vmatmul.mubr.f32.gmra.mxu0 %v456
        %v1657 = vpop.f32.mrf.mxu0
        %v1658 = vadd.f32 %v1078, %v1657
        %v1659 = vpop.f32.mrf.mxu0
        %1660 = vmatprep.mubr.f32.mxu0 %v1360
        %1661 = vmatmul.mubr.f32.gmra.mxu0 %v458
        %v1662 = vpop.f32.mrf.mxu0
        %v1663 = vadd.f32 %v1083, %v1662
        %v1664 = vpop.f32.mrf.mxu0
        %1665 = vmatprep.mubr.f32.mxu0 %v1363
        %1666 = vmatmul.mubr.f32.gmra.mxu0 %v460
        %v1667 = vpop.f32.mrf.mxu0
        %v1668 = vadd.f32 %v1088, %v1667
        %v1669 = vpop.f32.mrf.mxu0
        %1670 = vmatprep.mubr.f32.mxu0 %v1366
        %1671 = vmatmul.mubr.f32.gmra.mxu0 %v462
        %v1672 = vpop.f32.mrf.mxu0
        %v1673 = vadd.f32 %v1093, %v1672
        %v1674 = vpop.f32.mrf.mxu0
        %1675 = vmatprep.mubr.f32.mxu0 %v1369
        %1676 = vmatmul.mubr.f32.gmra.mxu0 %v464
        %v1677 = vpop.f32.mrf.mxu0
        %v1678 = vadd.f32 %v1098, %v1677
        %v1679 = vpop.f32.mrf.mxu0
        %1680 = vmatprep.mubr.f32.mxu0 %v1372
        %1681 = vmatmul.mubr.f32.gmra.mxu0 %v466
        %v1682 = vpop.f32.mrf.mxu0
        %v1683 = vadd.f32 %v1103, %v1682
        %v1684 = vpop.f32.mrf.mxu0
        %1685 = vmatprep.mubr.f32.mxu0 %v1375
        %1686 = vmatmul.mubr.f32.gmra.mxu0 %v468
        %v1687 = vpop.f32.mrf.mxu0
        %v1688 = vadd.f32 %v1108, %v1687
        %v1689 = vpop.f32.mrf.mxu0
        %1690 = vmatprep.mubr.f32.mxu0 %v1378
        %1691 = vmatmul.mubr.f32.gmra.mxu0 %v470
        %v1692 = vpop.f32.mrf.mxu0
        %v1693 = vadd.f32 %v1113, %v1692
        %v1694 = vpop.f32.mrf.mxu0
        %1695 = vmatprep.mubr.f32.mxu0 %v1381
        %1696 = vmatmul.mubr.f32.gmra.mxu0 %v472
        %v1697 = vpop.f32.mrf.mxu0
        %v1698 = vadd.f32 %v1118, %v1697
        %v1699 = vpop.f32.mrf.mxu0
        %1700 = vmatprep.mubr.f32.mxu0 %v1384
        %1701 = vmatmul.mubr.f32.gmra.mxu0 %v474
        %v1702 = vpop.f32.mrf.mxu0
        %v1703 = vadd.f32 %v1123, %v1702
        %v1704 = vpop.f32.mrf.mxu0
        %1705 = vmatprep.mubr.f32.mxu0 %v1387
        %1706 = vmatmul.mubr.f32.gmra.mxu0 %v476
        %v1707 = vpop.f32.mrf.mxu0
        %v1708 = vadd.f32 %v1128, %v1707
        %v1709 = vpop.f32.mrf.mxu0
        %1710 = vmatprep.mubr.f32.mxu0 %v1390
        %1711 = vmatmul.mubr.f32.gmra.mxu0 %v478
        %v1712 = vpop.f32.mrf.mxu0
        %v1713 = vadd.f32 %v1133, %v1712
        %v1714 = vpop.f32.mrf.mxu0
        %1715 = vmatprep.mubr.f32.mxu0 %v1393
        %1716 = vmatmul.mubr.f32.gmra.mxu0 %v480
        %v1717 = vpop.f32.mrf.mxu0
        %v1718 = vadd.f32 %v1138, %v1717
        %v1719 = vpop.f32.mrf.mxu0
        %1720 = vmatprep.mubr.f32.mxu0 %v1396
        %1721 = vmatmul.mubr.f32.gmra.mxu0 %v482
        %v1722 = vpop.f32.mrf.mxu0
        %v1723 = vadd.f32 %v1143, %v1722
        %v1724 = vpop.f32.mrf.mxu0
        %1725 = vmatprep.mubr.f32.mxu0 %v1399
        %1726 = vmatmul.mubr.f32.gmra.mxu0 %v484
        %v1727 = vpop.f32.mrf.mxu0
        %v1728 = vadd.f32 %v1148, %v1727
        %v1729 = vpop.f32.mrf.mxu0
        %1730 = vmatprep.mubr.f32.mxu0 %v1402
        %1731 = vmatmul.mubr.f32.gmra.mxu0 %v486
        %v1732 = vpop.f32.mrf.mxu0
        %v1733 = vadd.f32 %v1153, %v1732
        %v1734 = vpop.f32.mrf.mxu0
        %1735 = vmatprep.mubr.f32.mxu0 %v1405
        %1736 = vmatmul.mubr.f32.gmra.mxu0 %v488
        %v1737 = vpop.f32.mrf.mxu0
        %v1738 = vadd.f32 %v1158, %v1737
        %v1739 = vpop.f32.mrf.mxu0
        %1740 = vmatprep.mubr.f32.mxu0 %v1408
        %1741 = vmatmul.mubr.f32.gmra.mxu0 %v490
        %v1742 = vpop.f32.mrf.mxu0
        %v1743 = vadd.f32 %v1163, %v1742
        %v1744 = vpop.f32.mrf.mxu0
        %1745 = vmatprep.mubr.f32.mxu0 %v1411
        %1746 = vmatmul.mubr.f32.gmra.mxu0 %v492
        %v1747 = vpop.f32.mrf.mxu0
        %v1748 = vadd.f32 %v1168, %v1747
        %v1749 = vpop.f32.mrf.mxu0
        %1750 = vmatprep.mubr.f32.mxu0 %v1414
        %1751 = vmatmul.mubr.f32.gmra.mxu0 %v494
        %v1752 = vpop.f32.mrf.mxu0
        %v1753 = vadd.f32 %v1173, %v1752
        %v1754 = vpop.f32.mrf.mxu0
        %1755 = vmatprep.mubr.f32.mxu0 %v1417
        %1756 = vmatmul.mubr.f32.gmra.mxu0 %v496
        %v1757 = vpop.f32.mrf.mxu0
        %v1758 = vadd.f32 %v1178, %v1757
        %v1759 = vpop.f32.mrf.mxu0
        %1760 = vmatprep.mubr.f32.mxu0 %v1420
        %1761 = vmatmul.mubr.f32.gmra.mxu0 %v498
        %v1762 = vpop.f32.mrf.mxu0
        %v1763 = vadd.f32 %v1183, %v1762
        %v1764 = vpop.f32.mrf.mxu0
        %1765 = vmatprep.mubr.f32.mxu0 %v1423
        %1766 = vmatmul.mubr.f32.gmra.mxu0 %v500
        %v1767 = vpop.f32.mrf.mxu0
        %v1768 = vadd.f32 %v1188, %v1767
        %v1769 = vpop.f32.mrf.mxu0
        %1770 = vmatprep.mubr.f32.mxu0 %v1426
        %1771 = vmatmul.mubr.f32.gmra.mxu0 %v502
        %v1772 = vpop.f32.mrf.mxu0
        %v1773 = vadd.f32 %v1193, %v1772
        %v1774 = vpop.f32.mrf.mxu0
        %1775 = vmatprep.mubr.f32.mxu0 %v1429
        %1776 = vmatmul.mubr.f32.gmra.mxu0 %v504
        %v1777 = vpop.f32.mrf.mxu0
        %v1778 = vadd.f32 %v1198, %v1777
        %v1779 = vpop.f32.mrf.mxu0
        %1780 = vmatprep.mubr.f32.mxu0 %v1432
        %1781 = vmatmul.mubr.f32.gmra.mxu0 %v506
        %v1782 = vpop.f32.mrf.mxu0
        %v1783 = vadd.f32 %v1203, %v1782
        %v1784 = vpop.f32.mrf.mxu0
        %1785 = vmatprep.mubr.f32.mxu0 %v1435
        %1786 = vmatmul.mubr.f32.gmra.mxu0 %v508
        %v1787 = vpop.f32.mrf.mxu0
        %v1788 = vadd.f32 %v1208, %v1787
        %v1789 = vpop.f32.mrf.mxu0
        %1790 = vmatprep.mubr.f32.mxu0 %v1438
        %1791 = vmatmul.mubr.f32.gmra.mxu0 %v510
        %v1792 = vpop.f32.mrf.mxu0
        %v1793 = vadd.f32 %v1213, %v1792
        %v1794 = vpop.f32.mrf.mxu0
        %1795 = vmatprep.mubr.f32.mxu0 %v1441
        %1796 = vmatmul.mubr.f32.gmra.mxu0 %v512
        %v1797 = vpop.f32.mrf.mxu0
        %v1798 = vadd.f32 %v1218, %v1797
        %v1799 = vpop.f32.mrf.mxu0
        %1800 = vmatprep.mubr.f32.mxu0 %v1444
        %1801 = vmatmul.mubr.f32.gmra.mxu0 %v514
        %v1802 = vpop.f32.mrf.mxu0
        %v1803 = vadd.f32 %v1223, %v1802
        %v1804 = vpop.f32.mrf.mxu0
        %1805 = vmatprep.mubr.f32.mxu0 %v1447
        %1806 = vmatmul.mubr.f32.gmra.mxu0 %v516
        %v1807 = vpop.f32.mrf.mxu0
        %v1808 = vadd.f32 %v1228, %v1807
        %v1809 = vpop.f32.mrf.mxu0
        %1810 = vmatprep.mubr.f32.mxu0 %v1450
        %1811 = vmatmul.mubr.f32.gmra.mxu0 %v518
        %v1812 = vpop.f32.mrf.mxu0
        %v1813 = vadd.f32 %v1233, %v1812
        %v1814 = vpop.f32.mrf.mxu0
        %1815 = vmatprep.mubr.f32.mxu0 %v1453
        %1816 = vmatmul.mubr.f32.gmra.mxu0 %v520
        %v1817 = vpop.f32.mrf.mxu0
        %v1818 = vadd.f32 %v1238, %v1817
        %v1819 = vpop.f32.mrf.mxu0
        %1820 = vmatprep.mubr.f32.mxu0 %v1456
        %1821 = vmatmul.mubr.f32.gmra.mxu0 %v522
        %v1822 = vpop.f32.mrf.mxu0
        %v1823 = vadd.f32 %v1243, %v1822
        %v1824 = vpop.f32.mrf.mxu0
        %1825 = vmatprep.mubr.f32.mxu0 %v1459
        %1826 = vmatmul.mubr.f32.gmra.mxu0 %v524
        %v1827 = vpop.f32.mrf.mxu0
        %v1828 = vadd.f32 %v1248, %v1827
        %v1829 = vpop.f32.mrf.mxu0
        %1830 = vmatprep.mubr.f32.mxu0 %v1462
        %1831 = vmatmul.mubr.f32.gmra.mxu0 %v526
        %v1832 = vpop.f32.mrf.mxu0
        %v1833 = vadd.f32 %v1253, %v1832
        %v1834 = vpop.f32.mrf.mxu0
        %1835 = vmatprep.mubr.f32.mxu0 %v1465
        %1836 = vmatmul.mubr.f32.gmra.mxu0 %v528
        %v1837 = vpop.f32.mrf.mxu0
        %v1838 = vadd.f32 %v1258, %v1837
        %v1839 = vpop.f32.mrf.mxu0
        %1840 = vmatprep.mubr.f32.mxu0 %v1468
        %1841 = vmatmul.mubr.f32.gmra.mxu0 %v530
        %v1842 = vpop.f32.mrf.mxu0
        %v1843 = vadd.f32 %v1263, %v1842
        %v1844 = vpop.f32.mrf.mxu0
        %1845 = vmatprep.mubr.f32.mxu0 %v1471
        %1846 = vmatmul.mubr.f32.gmra.mxu0 %v532
        %v1847 = vpop.f32.mrf.mxu0
        %v1848 = vadd.f32 %v1268, %v1847
        %v1849 = vpop.f32.mrf.mxu0
        %1850 = vmatprep.mubr.f32.mxu0 %v1474
        %1851 = vmatmul.mubr.f32.gmra.mxu0 %v534
        %v1852 = vpop.f32.mrf.mxu0
        %v1853 = vadd.f32 %v1273, %v1852
        %v1854 = vpop.f32.mrf.mxu0
        %1855 = vmatprep.mubr.f32.mxu0 %v1477
        %1856 = vmatmul.mubr.f32.gmra.mxu0 %v536
        %v1857 = vpop.f32.mrf.mxu0
        %v1858 = vadd.f32 %v1278, %v1857
        %v1859 = vpop.f32.mrf.mxu0
        %1860 = vmatprep.mubr.f32.mxu0 %v1480
        %1861 = vmatmul.mubr.f32.gmra.mxu0 %v538
        %v1862 = vpop.f32.mrf.mxu0
        %v1863 = vadd.f32 %v1283, %v1862
        %v1864 = vpop.f32.mrf.mxu0
        %1865 = vmatprep.mubr.f32.mxu0 %v1483
        %1866 = vmatmul.mubr.f32.gmra.mxu0 %v540
        %v1867 = vpop.f32.mrf.mxu0
        %v1868 = vadd.f32 %v1288, %v1867
        %v1869 = vpop.f32.mrf.mxu0
        %1870 = vmatprep.mubr.f32.mxu0 %v1486
        %1871 = vmatmul.mubr.f32.gmra.mxu0 %v542
        %v1872 = vpop.f32.mrf.mxu0
        %v1873 = vadd.f32 %v1293, %v1872
        %v1874 = vpop.f32.mrf.mxu0
        %1875 = vdwg.mxu0
        %v1876 = vld [vmem:[%s4] sm:$0x1]
        %v1878 = vlaneseq
        %v1879 = vshrl.u32 %v1878, 7
        %v1880 = vsub.s32 0, %v1879
        %v1881 = vrot.slane %v1876, %v1880
        %v1883 = vadd.f32 %v1558, %v1881
        %v1884 = vadd.f32 %v1563, %v1881
        %v1885 = vadd.f32 %v1568, %v1881
        %v1886 = vadd.f32 %v1573, %v1881
        %v1887 = vadd.f32 %v1578, %v1881
        %v1888 = vadd.f32 %v1583, %v1881
        %v1889 = vadd.f32 %v1588, %v1881
        %v1890 = vadd.f32 %v1593, %v1881
        %v1891 = vadd.f32 %v1598, %v1881
        %v1892 = vadd.f32 %v1603, %v1881
        %v1893 = vadd.f32 %v1608, %v1881
        %v1894 = vadd.f32 %v1613, %v1881
        %v1895 = vadd.f32 %v1618, %v1881
        %v1896 = vadd.f32 %v1623, %v1881
        %v1897 = vadd.f32 %v1628, %v1881
        %v1898 = vadd.f32 %v1633, %v1881
        %v1899 = vadd.f32 %v1638, %v1881
        %v1900 = vadd.f32 %v1643, %v1881
        %v1901 = vadd.f32 %v1648, %v1881
        %v1902 = vadd.f32 %v1653, %v1881
        %v1903 = vadd.f32 %v1658, %v1881
        %v1904 = vadd.f32 %v1663, %v1881
        %v1905 = vadd.f32 %v1668, %v1881
        %v1906 = vadd.f32 %v1673, %v1881
        %v1907 = vadd.f32 %v1678, %v1881
        %v1908 = vadd.f32 %v1683, %v1881
        %v1909 = vadd.f32 %v1688, %v1881
        %v1910 = vadd.f32 %v1693, %v1881
        %v1911 = vadd.f32 %v1698, %v1881
        %v1912 = vadd.f32 %v1703, %v1881
        %v1913 = vadd.f32 %v1708, %v1881
        %v1914 = vadd.f32 %v1713, %v1881
        %v1915 = vadd.f32 %v1718, %v1881
        %v1916 = vadd.f32 %v1723, %v1881
        %v1917 = vadd.f32 %v1728, %v1881
        %v1918 = vadd.f32 %v1733, %v1881
        %v1919 = vadd.f32 %v1738, %v1881
        %v1920 = vadd.f32 %v1743, %v1881
        %v1921 = vadd.f32 %v1748, %v1881
        %v1922 = vadd.f32 %v1753, %v1881
        %v1923 = vadd.f32 %v1758, %v1881
        %v1924 = vadd.f32 %v1763, %v1881
        %v1925 = vadd.f32 %v1768, %v1881
        %v1926 = vadd.f32 %v1773, %v1881
        %v1927 = vadd.f32 %v1778, %v1881
        %v1928 = vadd.f32 %v1783, %v1881
        %v1929 = vadd.f32 %v1788, %v1881
        %v1930 = vadd.f32 %v1793, %v1881
        %v1931 = vadd.f32 %v1798, %v1881
        %v1932 = vadd.f32 %v1803, %v1881
        %v1933 = vadd.f32 %v1808, %v1881
        %v1934 = vadd.f32 %v1813, %v1881
        %v1935 = vadd.f32 %v1818, %v1881
        %v1936 = vadd.f32 %v1823, %v1881
        %v1937 = vadd.f32 %v1828, %v1881
        %v1938 = vadd.f32 %v1833, %v1881
        %v1939 = vadd.f32 %v1838, %v1881
        %v1940 = vadd.f32 %v1843, %v1881
        %v1941 = vadd.f32 %v1848, %v1881
        %v1942 = vadd.f32 %v1853, %v1881
        %v1943 = vadd.f32 %v1858, %v1881
        %v1944 = vadd.f32 %v1863, %v1881
        %v1945 = vadd.f32 %v1868, %v1881
        %v1946 = vadd.f32 %v1873, %v1881
        %v1947 = vmax.f32 %v1883, 0.0
        %v1948 = vmax.f32 %v1884, 0.0
        %v1949 = vmax.f32 %v1885, 0.0
        %v1950 = vmax.f32 %v1886, 0.0
        %v1951 = vmax.f32 %v1887, 0.0
        %v1952 = vmax.f32 %v1888, 0.0
        %v1953 = vmax.f32 %v1889, 0.0
        %v1954 = vmax.f32 %v1890, 0.0
        %v1955 = vmax.f32 %v1891, 0.0
        %v1956 = vmax.f32 %v1892, 0.0
        %v1957 = vmax.f32 %v1893, 0.0
        %v1958 = vmax.f32 %v1894, 0.0
        %v1959 = vmax.f32 %v1895, 0.0
        %v1960 = vmax.f32 %v1896, 0.0
        %v1961 = vmax.f32 %v1897, 0.0
        %v1962 = vmax.f32 %v1898, 0.0
        %v1963 = vmax.f32 %v1899, 0.0
        %v1964 = vmax.f32 %v1900, 0.0
        %v1965 = vmax.f32 %v1901, 0.0
        %v1966 = vmax.f32 %v1902, 0.0
        %v1967 = vmax.f32 %v1903, 0.0
        %v1968 = vmax.f32 %v1904, 0.0
        %v1969 = vmax.f32 %v1905, 0.0
        %v1970 = vmax.f32 %v1906, 0.0
        %v1971 = vmax.f32 %v1907, 0.0
        %v1972 = vmax.f32 %v1908, 0.0
        %v1973 = vmax.f32 %v1909, 0.0
        %v1974 = vmax.f32 %v1910, 0.0
        %v1975 = vmax.f32 %v1911, 0.0
        %v1976 = vmax.f32 %v1912, 0.0
        %v1977 = vmax.f32 %v1913, 0.0
        %v1978 = vmax.f32 %v1914, 0.0
        %v1979 = vmax.f32 %v1915, 0.0
        %v1980 = vmax.f32 %v1916, 0.0
        %v1981 = vmax.f32 %v1917, 0.0
        %v1982 = vmax.f32 %v1918, 0.0
        %v1983 = vmax.f32 %v1919, 0.0
        %v1984 = vmax.f32 %v1920, 0.0
        %v1985 = vmax.f32 %v1921, 0.0
        %v1986 = vmax.f32 %v1922, 0.0
        %v1987 = vmax.f32 %v1923, 0.0
        %v1988 = vmax.f32 %v1924, 0.0
        %v1989 = vmax.f32 %v1925, 0.0
        %v1990 = vmax.f32 %v1926, 0.0
        %v1991 = vmax.f32 %v1927, 0.0
        %v1992 = vmax.f32 %v1928, 0.0
        %v1993 = vmax.f32 %v1929, 0.0
        %v1994 = vmax.f32 %v1930, 0.0
        %v1995 = vmax.f32 %v1931, 0.0
        %v1996 = vmax.f32 %v1932, 0.0
        %v1997 = vmax.f32 %v1933, 0.0
        %v1998 = vmax.f32 %v1934, 0.0
        %v1999 = vmax.f32 %v1935, 0.0
        %v2000 = vmax.f32 %v1936, 0.0
        %v2001 = vmax.f32 %v1937, 0.0
        %v2002 = vmax.f32 %v1938, 0.0
        %v2003 = vmax.f32 %v1939, 0.0
        %v2004 = vmax.f32 %v1940, 0.0
        %v2005 = vmax.f32 %v1941, 0.0
        %v2006 = vmax.f32 %v1942, 0.0
        %v2007 = vmax.f32 %v1943, 0.0
        %v2008 = vmax.f32 %v1944, 0.0
        %v2009 = vmax.f32 %v1945, 0.0
        %v2010 = vmax.f32 %v1946, 0.0
        %v2011 = vld [vmem:[%s5] sm:$0xff]
        %v2012 = vld [vmem:[%s5 + $0x8] sm:$0xff]
        %v2013 = vld [vmem:[%s5 + $0x10] sm:$0xff]
        %v2014 = vld [vmem:[%s5 + $0x18] sm:$0xff]
        %v2015 = vld [vmem:[%s5 + $0x20] sm:$0xff]
        %v2016 = vld [vmem:[%s5 + $0x28] sm:$0xff]
        %v2017 = vld [vmem:[%s5 + $0x30] sm:$0xff]
        %v2018 = vld [vmem:[%s5 + $0x38] sm:$0xff]
        %v2019 = vld [vmem:[%s5 + $0x40] sm:$0xff]
        %v2020 = vld [vmem:[%s5 + $0x48] sm:$0xff]
        %v2021 = vld [vmem:[%s5 + $0x50] sm:$0xff]
        %v2022 = vld [vmem:[%s5 + $0x58] sm:$0xff]
        %v2023 = vld [vmem:[%s5 + $0x60] sm:$0xff]
        %v2024 = vld [vmem:[%s5 + $0x68] sm:$0xff]
        %v2025 = vld [vmem:[%s5 + $0x70] sm:$0xff]
        %v2026 = vld [vmem:[%s5 + $0x78] sm:$0xff]
        %v2027 = vld [vmem:[%s6] sm:$0x1]
        %v2029 = vlaneseq
        %v2030 = vshrl.u32 %v2029, 7
        %v2031 = vsub.s32 0, %v2030
        %v2032 = vrot.slane %v2027, %v2031
        %2034 = vmatprep.subr.mxu0 0.0
        %2035 = vmatpush1.msra.mxu0 %v2026
        %2036 = vmatprep.subr.mxu0 0.0
        %2037 = vmatpush1.msra.mxu0 %v2025
        %2038 = vmatprep.subr.mxu0 0.0
        %2039 = vmatpush1.msra.mxu0 %v2024
        %2040 = vmatprep.subr.mxu0 0.0
        %2041 = vmatpush1.msra.mxu0 %v2023
        %2042 = vmatprep.subr.mxu0 0.0
        %2043 = vmatpush1.msra.mxu0 %v2022
        %2044 = vmatprep.subr.mxu0 0.0
        %2045 = vmatpush1.msra.mxu0 %v2021
        %2046 = vmatprep.subr.mxu0 0.0
        %2047 = vmatpush1.msra.mxu0 %v2020
        %2048 = vmatprep.subr.mxu0 0.0
        %2049 = vmatpush1.msra.mxu0 %v2019
        %2050 = vmatprep.subr.mxu0 0.0
        %2051 = vmatpush1.msra.mxu0 %v2018
        %2052 = vmatprep.subr.mxu0 0.0
        %2053 = vmatpush1.msra.mxu0 %v2017
        %2054 = vmatprep.subr.mxu0 0.0
        %2055 = vmatpush1.msra.mxu0 %v2016
        %2056 = vmatprep.subr.mxu0 0.0
        %2057 = vmatpush1.msra.mxu0 %v2015
        %2058 = vmatprep.subr.mxu0 0.0
        %2059 = vmatpush1.msra.mxu0 %v2014
        %2060 = vmatprep.subr.mxu0 0.0
        %2061 = vmatpush1.msra.mxu0 %v2013
        %2062 = vmatprep.subr.mxu0 0.0
        %2063 = vmatpush1.msra.mxu0 %v2012
        %2064 = vmatprep.subr.mxu0 0.0
        %2065 = vmatpush1.msra.mxu0 %v2011
        %2066 = vmatprep.subr.mxu0 0.0
        %2067 = vmatpush2.msra.mxu0 0.0
        %2068 = vmatprep.subr.mxu0 0.0
        %2069 = vmatpush2.msra.mxu0 0.0
        %2070 = vmatprep.subr.mxu0 0.0
        %2071 = vmatpush2.msra.mxu0 0.0
        %2072 = vmatprep.subr.mxu0 0.0
        %2073 = vmatpush2.msra.mxu0 0.0
        %2074 = vmatprep.subr.mxu0 0.0
        %2075 = vmatpush2.msra.mxu0 0.0
        %2076 = vmatprep.subr.mxu0 0.0
        %2077 = vmatpush2.msra.mxu0 0.0
        %2078 = vmatprep.subr.mxu0 0.0
        %2079 = vmatpush2.msra.mxu0 0.0
        %2080 = vmatprep.subr.mxu0 0.0
        %2081 = vmatpush2.msra.mxu0 0.0
        %2082 = vmatprep.subr.mxu0 0.0
        %2083 = vmatpush2.msra.mxu0 0.0
        %2084 = vmatprep.subr.mxu0 0.0
        %2085 = vmatpush2.msra.mxu0 0.0
        %2086 = vmatprep.subr.mxu0 0.0
        %2087 = vmatpush2.msra.mxu0 0.0
        %2088 = vmatprep.subr.mxu0 0.0
        %2089 = vmatpush2.msra.mxu0 0.0
        %2090 = vmatprep.subr.mxu0 0.0
        %2091 = vmatpush2.msra.mxu0 0.0
        %2092 = vmatprep.subr.mxu0 0.0
        %2093 = vmatpush2.msra.mxu0 0.0
        %2094 = vmatprep.subr.mxu0 0.0
        %2095 = vmatpush2.msra.mxu0 0.0
        %2096 = vmatprep.subr.mxu0 0.0
        %2097 = vmatpush2.msra.mxu0 0.0
        %2098 = vmatprep.mubr.f32.mxu0 0.0
        %2099 = vmatmul.mubr.f32.gmra.mxu0 %v1947
        %v2100 = vpop.f32.mrf.mxu0
        %v2101 = vadd.f32 %v2032, %v2100
        %v2102 = vpop.f32.mrf.mxu0
        %2103 = vmatprep.mubr.f32.mxu0 0.0
        %2104 = vmatmul.mubr.f32.gmra.mxu0 %v1948
        %v2105 = vpop.f32.mrf.mxu0
        %v2106 = vadd.f32 %v2032, %v2105
        %v2107 = vpop.f32.mrf.mxu0
        %2108 = vmatprep.mubr.f32.mxu0 0.0
        %2109 = vmatmul.mubr.f32.gmra.mxu0 %v1949
        %v2110 = vpop.f32.mrf.mxu0
        %v2111 = vadd.f32 %v2032, %v2110
        %v2112 = vpop.f32.mrf.mxu0
        %2113 = vmatprep.mubr.f32.mxu0 0.0
        %2114 = vmatmul.mubr.f32.gmra.mxu0 %v1950
        %v2115 = vpop.f32.mrf.mxu0
        %v2116 = vadd.f32 %v2032, %v2115
        %v2117 = vpop.f32.mrf.mxu0
        %2118 = vmatprep.mubr.f32.mxu0 0.0
        %2119 = vmatmul.mubr.f32.gmra.mxu0 %v1951
        %v2120 = vpop.f32.mrf.mxu0
        %v2121 = vadd.f32 %v2032, %v2120
        %v2122 = vpop.f32.mrf.mxu0
        %2123 = vmatprep.mubr.f32.mxu0 0.0
        %2124 = vmatmul.mubr.f32.gmra.mxu0 %v1952
        %v2125 = vpop.f32.mrf.mxu0
        %v2126 = vadd.f32 %v2032, %v2125
        %v2127 = vpop.f32.mrf.mxu0
        %2128 = vmatprep.mubr.f32.mxu0 0.0
        %2129 = vmatmul.mubr.f32.gmra.mxu0 %v1953
        %v2130 = vpop.f32.mrf.mxu0
        %v2131 = vadd.f32 %v2032, %v2130
        %v2132 = vpop.f32.mrf.mxu0
        %2133 = vmatprep.mubr.f32.mxu0 0.0
        %2134 = vmatmul.mubr.f32.gmra.mxu0 %v1954
        %v2135 = vpop.f32.mrf.mxu0
        %v2136 = vadd.f32 %v2032, %v2135
        %v2137 = vpop.f32.mrf.mxu0
        %2138 = vmatprep.mubr.f32.mxu0 0.0
        %2139 = vmatmul.mubr.f32.gmra.mxu0 %v1955
        %v2140 = vpop.f32.mrf.mxu0
        %v2141 = vadd.f32 %v2032, %v2140
        %v2142 = vpop.f32.mrf.mxu0
        %2143 = vmatprep.mubr.f32.mxu0 0.0
        %2144 = vmatmul.mubr.f32.gmra.mxu0 %v1956
        %v2145 = vpop.f32.mrf.mxu0
        %v2146 = vadd.f32 %v2032, %v2145
        %v2147 = vpop.f32.mrf.mxu0
        %2148 = vmatprep.mubr.f32.mxu0 0.0
        %2149 = vmatmul.mubr.f32.gmra.mxu0 %v1957
        %v2150 = vpop.f32.mrf.mxu0
        %v2151 = vadd.f32 %v2032, %v2150
        %v2152 = vpop.f32.mrf.mxu0
        %2153 = vmatprep.mubr.f32.mxu0 0.0
        %2154 = vmatmul.mubr.f32.gmra.mxu0 %v1958
        %v2155 = vpop.f32.mrf.mxu0
        %v2156 = vadd.f32 %v2032, %v2155
        %v2157 = vpop.f32.mrf.mxu0
        %2158 = vmatprep.mubr.f32.mxu0 0.0
        %2159 = vmatmul.mubr.f32.gmra.mxu0 %v1959
        %v2160 = vpop.f32.mrf.mxu0
        %v2161 = vadd.f32 %v2032, %v2160
        %v2162 = vpop.f32.mrf.mxu0
        %2163 = vmatprep.mubr.f32.mxu0 0.0
        %2164 = vmatmul.mubr.f32.gmra.mxu0 %v1960
        %v2165 = vpop.f32.mrf.mxu0
        %v2166 = vadd.f32 %v2032, %v2165
        %v2167 = vpop.f32.mrf.mxu0
        %2168 = vmatprep.mubr.f32.mxu0 0.0
        %2169 = vmatmul.mubr.f32.gmra.mxu0 %v1961
        %v2170 = vpop.f32.mrf.mxu0
        %v2171 = vadd.f32 %v2032, %v2170
        %v2172 = vpop.f32.mrf.mxu0
        %2173 = vmatprep.mubr.f32.mxu0 0.0
        %2174 = vmatmul.mubr.f32.gmra.mxu0 %v1962
        %v2175 = vpop.f32.mrf.mxu0
        %v2176 = vadd.f32 %v2032, %v2175
        %v2177 = vpop.f32.mrf.mxu0
        %2178 = vmatprep.mubr.f32.mxu0 0.0
        %2179 = vmatmul.mubr.f32.gmra.mxu0 %v1963
        %v2180 = vpop.f32.mrf.mxu0
        %v2181 = vadd.f32 %v2032, %v2180
        %v2182 = vpop.f32.mrf.mxu0
        %2183 = vmatprep.mubr.f32.mxu0 0.0
        %2184 = vmatmul.mubr.f32.gmra.mxu0 %v1964
        %v2185 = vpop.f32.mrf.mxu0
        %v2186 = vadd.f32 %v2032, %v2185
        %v2187 = vpop.f32.mrf.mxu0
        %2188 = vmatprep.mubr.f32.mxu0 0.0
        %2189 = vmatmul.mubr.f32.gmra.mxu0 %v1965
        %v2190 = vpop.f32.mrf.mxu0
        %v2191 = vadd.f32 %v2032, %v2190
        %v2192 = vpop.f32.mrf.mxu0
        %2193 = vmatprep.mubr.f32.mxu0 0.0
        %2194 = vmatmul.mubr.f32.gmra.mxu0 %v1966
        %v2195 = vpop.f32.mrf.mxu0
        %v2196 = vadd.f32 %v2032, %v2195
        %v2197 = vpop.f32.mrf.mxu0
        %2198 = vmatprep.mubr.f32.mxu0 0.0
        %2199 = vmatmul.mubr.f32.gmra.mxu0 %v1967
        %v2200 = vpop.f32.mrf.mxu0
        %v2201 = vadd.f32 %v2032, %v2200
        %v2202 = vpop.f32.mrf.mxu0
        %2203 = vmatprep.mubr.f32.mxu0 0.0
        %2204 = vmatmul.mubr.f32.gmra.mxu0 %v1968
        %v2205 = vpop.f32.mrf.mxu0
        %v2206 = vadd.f32 %v2032, %v2205
        %v2207 = vpop.f32.mrf.mxu0
        %2208 = vmatprep.mubr.f32.mxu0 0.0
        %2209 = vmatmul.mubr.f32.gmra.mxu0 %v1969
        %v2210 = vpop.f32.mrf.mxu0
        %v2211 = vadd.f32 %v2032, %v2210
        %v2212 = vpop.f32.mrf.mxu0
        %2213 = vmatprep.mubr.f32.mxu0 0.0
        %2214 = vmatmul.mubr.f32.gmra.mxu0 %v1970
        %v2215 = vpop.f32.mrf.mxu0
        %v2216 = vadd.f32 %v2032, %v2215
        %v2217 = vpop.f32.mrf.mxu0
        %2218 = vmatprep.mubr.f32.mxu0 0.0
        %2219 = vmatmul.mubr.f32.gmra.mxu0 %v1971
        %v2220 = vpop.f32.mrf.mxu0
        %v2221 = vadd.f32 %v2032, %v2220
        %v2222 = vpop.f32.mrf.mxu0
        %2223 = vmatprep.mubr.f32.mxu0 0.0
        %2224 = vmatmul.mubr.f32.gmra.mxu0 %v1972
        %v2225 = vpop.f32.mrf.mxu0
        %v2226 = vadd.f32 %v2032, %v2225
        %v2227 = vpop.f32.mrf.mxu0
        %2228 = vmatprep.mubr.f32.mxu0 0.0
        %2229 = vmatmul.mubr.f32.gmra.mxu0 %v1973
        %v2230 = vpop.f32.mrf.mxu0
        %v2231 = vadd.f32 %v2032, %v2230
        %v2232 = vpop.f32.mrf.mxu0
        %2233 = vmatprep.mubr.f32.mxu0 0.0
        %2234 = vmatmul.mubr.f32.gmra.mxu0 %v1974
        %v2235 = vpop.f32.mrf.mxu0
        %v2236 = vadd.f32 %v2032, %v2235
        %v2237 = vpop.f32.mrf.mxu0
        %2238 = vmatprep.mubr.f32.mxu0 0.0
        %2239 = vmatmul.mubr.f32.gmra.mxu0 %v1975
        %v2240 = vpop.f32.mrf.mxu0
        %v2241 = vadd.f32 %v2032, %v2240
        %v2242 = vpop.f32.mrf.mxu0
        %2243 = vmatprep.mubr.f32.mxu0 0.0
        %2244 = vmatmul.mubr.f32.gmra.mxu0 %v1976
        %v2245 = vpop.f32.mrf.mxu0
        %v2246 = vadd.f32 %v2032, %v2245
        %v2247 = vpop.f32.mrf.mxu0
        %2248 = vmatprep.mubr.f32.mxu0 0.0
        %2249 = vmatmul.mubr.f32.gmra.mxu0 %v1977
        %v2250 = vpop.f32.mrf.mxu0
        %v2251 = vadd.f32 %v2032, %v2250
        %v2252 = vpop.f32.mrf.mxu0
        %2253 = vmatprep.mubr.f32.mxu0 0.0
        %2254 = vmatmul.mubr.f32.gmra.mxu0 %v1978
        %v2255 = vpop.f32.mrf.mxu0
        %v2256 = vadd.f32 %v2032, %v2255
        %v2257 = vpop.f32.mrf.mxu0
        %2258 = vmatprep.mubr.f32.mxu0 0.0
        %2259 = vmatmul.mubr.f32.gmra.mxu0 %v1979
        %v2260 = vpop.f32.mrf.mxu0
        %v2261 = vadd.f32 %v2032, %v2260
        %v2262 = vpop.f32.mrf.mxu0
        %2263 = vmatprep.mubr.f32.mxu0 0.0
        %2264 = vmatmul.mubr.f32.gmra.mxu0 %v1980
        %v2265 = vpop.f32.mrf.mxu0
        %v2266 = vadd.f32 %v2032, %v2265
        %v2267 = vpop.f32.mrf.mxu0
        %2268 = vmatprep.mubr.f32.mxu0 0.0
        %2269 = vmatmul.mubr.f32.gmra.mxu0 %v1981
        %v2270 = vpop.f32.mrf.mxu0
        %v2271 = vadd.f32 %v2032, %v2270
        %v2272 = vpop.f32.mrf.mxu0
        %2273 = vmatprep.mubr.f32.mxu0 0.0
        %2274 = vmatmul.mubr.f32.gmra.mxu0 %v1982
        %v2275 = vpop.f32.mrf.mxu0
        %v2276 = vadd.f32 %v2032, %v2275
        %v2277 = vpop.f32.mrf.mxu0
        %2278 = vmatprep.mubr.f32.mxu0 0.0
        %2279 = vmatmul.mubr.f32.gmra.mxu0 %v1983
        %v2280 = vpop.f32.mrf.mxu0
        %v2281 = vadd.f32 %v2032, %v2280
        %v2282 = vpop.f32.mrf.mxu0
        %2283 = vmatprep.mubr.f32.mxu0 0.0
        %2284 = vmatmul.mubr.f32.gmra.mxu0 %v1984
        %v2285 = vpop.f32.mrf.mxu0
        %v2286 = vadd.f32 %v2032, %v2285
        %v2287 = vpop.f32.mrf.mxu0
        %2288 = vmatprep.mubr.f32.mxu0 0.0
        %2289 = vmatmul.mubr.f32.gmra.mxu0 %v1985
        %v2290 = vpop.f32.mrf.mxu0
        %v2291 = vadd.f32 %v2032, %v2290
        %v2292 = vpop.f32.mrf.mxu0
        %2293 = vmatprep.mubr.f32.mxu0 0.0
        %2294 = vmatmul.mubr.f32.gmra.mxu0 %v1986
        %v2295 = vpop.f32.mrf.mxu0
        %v2296 = vadd.f32 %v2032, %v2295
        %v2297 = vpop.f32.mrf.mxu0
        %2298 = vmatprep.mubr.f32.mxu0 0.0
        %2299 = vmatmul.mubr.f32.gmra.mxu0 %v1987
        %v2300 = vpop.f32.mrf.mxu0
        %v2301 = vadd.f32 %v2032, %v2300
        %v2302 = vpop.f32.mrf.mxu0
        %2303 = vmatprep.mubr.f32.mxu0 0.0
        %2304 = vmatmul.mubr.f32.gmra.mxu0 %v1988
        %v2305 = vpop.f32.mrf.mxu0
        %v2306 = vadd.f32 %v2032, %v2305
        %v2307 = vpop.f32.mrf.mxu0
        %2308 = vmatprep.mubr.f32.mxu0 0.0
        %2309 = vmatmul.mubr.f32.gmra.mxu0 %v1989
        %v2310 = vpop.f32.mrf.mxu0
        %v2311 = vadd.f32 %v2032, %v2310
        %v2312 = vpop.f32.mrf.mxu0
        %2313 = vmatprep.mubr.f32.mxu0 0.0
        %2314 = vmatmul.mubr.f32.gmra.mxu0 %v1990
        %v2315 = vpop.f32.mrf.mxu0
        %v2316 = vadd.f32 %v2032, %v2315
        %v2317 = vpop.f32.mrf.mxu0
        %2318 = vmatprep.mubr.f32.mxu0 0.0
        %2319 = vmatmul.mubr.f32.gmra.mxu0 %v1991
        %v2320 = vpop.f32.mrf.mxu0
        %v2321 = vadd.f32 %v2032, %v2320
        %v2322 = vpop.f32.mrf.mxu0
        %2323 = vmatprep.mubr.f32.mxu0 0.0
        %2324 = vmatmul.mubr.f32.gmra.mxu0 %v1992
        %v2325 = vpop.f32.mrf.mxu0
        %v2326 = vadd.f32 %v2032, %v2325
        %v2327 = vpop.f32.mrf.mxu0
        %2328 = vmatprep.mubr.f32.mxu0 0.0
        %2329 = vmatmul.mubr.f32.gmra.mxu0 %v1993
        %v2330 = vpop.f32.mrf.mxu0
        %v2331 = vadd.f32 %v2032, %v2330
        %v2332 = vpop.f32.mrf.mxu0
        %2333 = vmatprep.mubr.f32.mxu0 0.0
        %2334 = vmatmul.mubr.f32.gmra.mxu0 %v1994
        %v2335 = vpop.f32.mrf.mxu0
        %v2336 = vadd.f32 %v2032, %v2335
        %v2337 = vpop.f32.mrf.mxu0
        %2338 = vmatprep.mubr.f32.mxu0 0.0
        %2339 = vmatmul.mubr.f32.gmra.mxu0 %v1995
        %v2340 = vpop.f32.mrf.mxu0
        %v2341 = vadd.f32 %v2032, %v2340
        %v2342 = vpop.f32.mrf.mxu0
        %2343 = vmatprep.mubr.f32.mxu0 0.0
        %2344 = vmatmul.mubr.f32.gmra.mxu0 %v1996
        %v2345 = vpop.f32.mrf.mxu0
        %v2346 = vadd.f32 %v2032, %v2345
        %v2347 = vpop.f32.mrf.mxu0
        %2348 = vmatprep.mubr.f32.mxu0 0.0
        %2349 = vmatmul.mubr.f32.gmra.mxu0 %v1997
        %v2350 = vpop.f32.mrf.mxu0
        %v2351 = vadd.f32 %v2032, %v2350
        %v2352 = vpop.f32.mrf.mxu0
        %2353 = vmatprep.mubr.f32.mxu0 0.0
        %2354 = vmatmul.mubr.f32.gmra.mxu0 %v1998
        %v2355 = vpop.f32.mrf.mxu0
        %v2356 = vadd.f32 %v2032, %v2355
        %v2357 = vpop.f32.mrf.mxu0
        %2358 = vmatprep.mubr.f32.mxu0 0.0
        %2359 = vmatmul.mubr.f32.gmra.mxu0 %v1999
        %v2360 = vpop.f32.mrf.mxu0
        %v2361 = vadd.f32 %v2032, %v2360
        %v2362 = vpop.f32.mrf.mxu0
        %2363 = vmatprep.mubr.f32.mxu0 0.0
        %2364 = vmatmul.mubr.f32.gmra.mxu0 %v2000
        %v2365 = vpop.f32.mrf.mxu0
        %v2366 = vadd.f32 %v2032, %v2365
        %v2367 = vpop.f32.mrf.mxu0
        %2368 = vmatprep.mubr.f32.mxu0 0.0
        %2369 = vmatmul.mubr.f32.gmra.mxu0 %v2001
        %v2370 = vpop.f32.mrf.mxu0
        %v2371 = vadd.f32 %v2032, %v2370
        %v2372 = vpop.f32.mrf.mxu0
        %2373 = vmatprep.mubr.f32.mxu0 0.0
        %2374 = vmatmul.mubr.f32.gmra.mxu0 %v2002
        %v2375 = vpop.f32.mrf.mxu0
        %v2376 = vadd.f32 %v2032, %v2375
        %v2377 = vpop.f32.mrf.mxu0
        %2378 = vmatprep.mubr.f32.mxu0 0.0
        %2379 = vmatmul.mubr.f32.gmra.mxu0 %v2003
        %v2380 = vpop.f32.mrf.mxu0
        %v2381 = vadd.f32 %v2032, %v2380
        %v2382 = vpop.f32.mrf.mxu0
        %2383 = vmatprep.mubr.f32.mxu0 0.0
        %2384 = vmatmul.mubr.f32.gmra.mxu0 %v2004
        %v2385 = vpop.f32.mrf.mxu0
        %v2386 = vadd.f32 %v2032, %v2385
        %v2387 = vpop.f32.mrf.mxu0
        %2388 = vmatprep.mubr.f32.mxu0 0.0
        %2389 = vmatmul.mubr.f32.gmra.mxu0 %v2005
        %v2390 = vpop.f32.mrf.mxu0
        %v2391 = vadd.f32 %v2032, %v2390
        %v2392 = vpop.f32.mrf.mxu0
        %2393 = vmatprep.mubr.f32.mxu0 0.0
        %2394 = vmatmul.mubr.f32.gmra.mxu0 %v2006
        %v2395 = vpop.f32.mrf.mxu0
        %v2396 = vadd.f32 %v2032, %v2395
        %v2397 = vpop.f32.mrf.mxu0
        %2398 = vmatprep.mubr.f32.mxu0 0.0
        %2399 = vmatmul.mubr.f32.gmra.mxu0 %v2007
        %v2400 = vpop.f32.mrf.mxu0
        %v2401 = vadd.f32 %v2032, %v2400
        %v2402 = vpop.f32.mrf.mxu0
        %2403 = vmatprep.mubr.f32.mxu0 0.0
        %2404 = vmatmul.mubr.f32.gmra.mxu0 %v2008
        %v2405 = vpop.f32.mrf.mxu0
        %v2406 = vadd.f32 %v2032, %v2405
        %v2407 = vpop.f32.mrf.mxu0
        %2408 = vmatprep.mubr.f32.mxu0 0.0
        %2409 = vmatmul.mubr.f32.gmra.mxu0 %v2009
        %v2410 = vpop.f32.mrf.mxu0
        %v2411 = vadd.f32 %v2032, %v2410
        %v2412 = vpop.f32.mrf.mxu0
        %2413 = vmatprep.mubr.f32.mxu0 0.0
        %2414 = vmatmul.mubr.f32.gmra.mxu0 %v2010
        %v2415 = vpop.f32.mrf.mxu0
        %v2416 = vadd.f32 %v2032, %v2415
        %v2417 = vpop.f32.mrf.mxu0
        %2418 = vdwg.mxu0
        %v2419 = vmax.f32 %v2101, 0.0
        %v2420 = vmax.f32 %v2106, 0.0
        %v2421 = vmax.f32 %v2111, 0.0
        %v2422 = vmax.f32 %v2116, 0.0
        %v2423 = vmax.f32 %v2121, 0.0
        %v2424 = vmax.f32 %v2126, 0.0
        %v2425 = vmax.f32 %v2131, 0.0
        %v2426 = vmax.f32 %v2136, 0.0
        %v2427 = vmax.f32 %v2141, 0.0
        %v2428 = vmax.f32 %v2146, 0.0
        %v2429 = vmax.f32 %v2151, 0.0
        %v2430 = vmax.f32 %v2156, 0.0
        %v2431 = vmax.f32 %v2161, 0.0
        %v2432 = vmax.f32 %v2166, 0.0
        %v2433 = vmax.f32 %v2171, 0.0
        %v2434 = vmax.f32 %v2176, 0.0
        %v2435 = vmax.f32 %v2181, 0.0
        %v2436 = vmax.f32 %v2186, 0.0
        %v2437 = vmax.f32 %v2191, 0.0
        %v2438 = vmax.f32 %v2196, 0.0
        %v2439 = vmax.f32 %v2201, 0.0
        %v2440 = vmax.f32 %v2206, 0.0
        %v2441 = vmax.f32 %v2211, 0.0
        %v2442 = vmax.f32 %v2216, 0.0
        %v2443 = vmax.f32 %v2221, 0.0
        %v2444 = vmax.f32 %v2226, 0.0
        %v2445 = vmax.f32 %v2231, 0.0
        %v2446 = vmax.f32 %v2236, 0.0
        %v2447 = vmax.f32 %v2241, 0.0
        %v2448 = vmax.f32 %v2246, 0.0
        %v2449 = vmax.f32 %v2251, 0.0
        %v2450 = vmax.f32 %v2256, 0.0
        %v2451 = vmax.f32 %v2261, 0.0
        %v2452 = vmax.f32 %v2266, 0.0
        %v2453 = vmax.f32 %v2271, 0.0
        %v2454 = vmax.f32 %v2276, 0.0
        %v2455 = vmax.f32 %v2281, 0.0
        %v2456 = vmax.f32 %v2286, 0.0
        %v2457 = vmax.f32 %v2291, 0.0
        %v2458 = vmax.f32 %v2296, 0.0
        %v2459 = vmax.f32 %v2301, 0.0
        %v2460 = vmax.f32 %v2306, 0.0
        %v2461 = vmax.f32 %v2311, 0.0
        %v2462 = vmax.f32 %v2316, 0.0
        %v2463 = vmax.f32 %v2321, 0.0
        %v2464 = vmax.f32 %v2326, 0.0
        %v2465 = vmax.f32 %v2331, 0.0
        %v2466 = vmax.f32 %v2336, 0.0
        %v2467 = vmax.f32 %v2341, 0.0
        %v2468 = vmax.f32 %v2346, 0.0
        %v2469 = vmax.f32 %v2351, 0.0
        %v2470 = vmax.f32 %v2356, 0.0
        %v2471 = vmax.f32 %v2361, 0.0
        %v2472 = vmax.f32 %v2366, 0.0
        %v2473 = vmax.f32 %v2371, 0.0
        %v2474 = vmax.f32 %v2376, 0.0
        %v2475 = vmax.f32 %v2381, 0.0
        %v2476 = vmax.f32 %v2386, 0.0
        %v2477 = vmax.f32 %v2391, 0.0
        %v2478 = vmax.f32 %v2396, 0.0
        %v2479 = vmax.f32 %v2401, 0.0
        %v2480 = vmax.f32 %v2406, 0.0
        %v2481 = vmax.f32 %v2411, 0.0
        %v2482 = vmax.f32 %v2416, 0.0
        %v2483 = vld [vmem:[%s7] sm:$0xff]
        %v2484 = vld [vmem:[%s7 + $0x8] sm:$0xff]
        %v2485 = vld [vmem:[%s7 + $0x10] sm:$0xff]
        %v2486 = vld [vmem:[%s7 + $0x18] sm:$0xff]
        %v2487 = vld [vmem:[%s7 + $0x20] sm:$0xff]
        %v2488 = vld [vmem:[%s7 + $0x28] sm:$0xff]
        %v2489 = vld [vmem:[%s7 + $0x30] sm:$0xff]
        %v2490 = vld [vmem:[%s7 + $0x38] sm:$0xff]
        %v2491 = vld [vmem:[%s7 + $0x40] sm:$0xff]
        %v2492 = vld [vmem:[%s7 + $0x48] sm:$0xff]
        %v2493 = vld [vmem:[%s7 + $0x50] sm:$0xff]
        %v2494 = vld [vmem:[%s7 + $0x58] sm:$0xff]
        %v2495 = vld [vmem:[%s7 + $0x60] sm:$0xff]
        %v2496 = vld [vmem:[%s7 + $0x68] sm:$0xff]
        %v2497 = vld [vmem:[%s7 + $0x70] sm:$0xff]
        %v2498 = vld [vmem:[%s7 + $0x78] sm:$0xff]
        %v2499 = vld [vmem:[%s8] sm:$0x1]
        %v2501 = vlaneseq
        %v2502 = vshrl.u32 %v2501, 7
        %v2503 = vsub.s32 0, %v2502
        %v2504 = vrot.slane %v2499, %v2503
        %2506 = vmatprep.subr.mxu0 0.0
        %2507 = vmatpush1.msra.mxu0 %v2498
        %2508 = vmatprep.subr.mxu0 0.0
        %2509 = vmatpush1.msra.mxu0 %v2497
        %2510 = vmatprep.subr.mxu0 0.0
        %2511 = vmatpush1.msra.mxu0 %v2496
        %2512 = vmatprep.subr.mxu0 0.0
        %2513 = vmatpush1.msra.mxu0 %v2495
        %2514 = vmatprep.subr.mxu0 0.0
        %2515 = vmatpush1.msra.mxu0 %v2494
        %2516 = vmatprep.subr.mxu0 0.0
        %2517 = vmatpush1.msra.mxu0 %v2493
        %2518 = vmatprep.subr.mxu0 0.0
        %2519 = vmatpush1.msra.mxu0 %v2492
        %2520 = vmatprep.subr.mxu0 0.0
        %2521 = vmatpush1.msra.mxu0 %v2491
        %2522 = vmatprep.subr.mxu0 0.0
        %2523 = vmatpush1.msra.mxu0 %v2490
        %2524 = vmatprep.subr.mxu0 0.0
        %2525 = vmatpush1.msra.mxu0 %v2489
        %2526 = vmatprep.subr.mxu0 0.0
        %2527 = vmatpush1.msra.mxu0 %v2488
        %2528 = vmatprep.subr.mxu0 0.0
        %2529 = vmatpush1.msra.mxu0 %v2487
        %2530 = vmatprep.subr.mxu0 0.0
        %2531 = vmatpush1.msra.mxu0 %v2486
        %2532 = vmatprep.subr.mxu0 0.0
        %2533 = vmatpush1.msra.mxu0 %v2485
        %2534 = vmatprep.subr.mxu0 0.0
        %2535 = vmatpush1.msra.mxu0 %v2484
        %2536 = vmatprep.subr.mxu0 0.0
        %2537 = vmatpush1.msra.mxu0 %v2483
        %2538 = vmatprep.subr.mxu0 0.0
        %2539 = vmatpush2.msra.mxu0 0.0
        %2540 = vmatprep.subr.mxu0 0.0
        %2541 = vmatpush2.msra.mxu0 0.0
        %2542 = vmatprep.subr.mxu0 0.0
        %2543 = vmatpush2.msra.mxu0 0.0
        %2544 = vmatprep.subr.mxu0 0.0
        %2545 = vmatpush2.msra.mxu0 0.0
        %2546 = vmatprep.subr.mxu0 0.0
        %2547 = vmatpush2.msra.mxu0 0.0
        %2548 = vmatprep.subr.mxu0 0.0
        %2549 = vmatpush2.msra.mxu0 0.0
        %2550 = vmatprep.subr.mxu0 0.0
        %2551 = vmatpush2.msra.mxu0 0.0
        %2552 = vmatprep.subr.mxu0 0.0
        %2553 = vmatpush2.msra.mxu0 0.0
        %2554 = vmatprep.subr.mxu0 0.0
        %2555 = vmatpush2.msra.mxu0 0.0
        %2556 = vmatprep.subr.mxu0 0.0
        %2557 = vmatpush2.msra.mxu0 0.0
        %2558 = vmatprep.subr.mxu0 0.0
        %2559 = vmatpush2.msra.mxu0 0.0
        %2560 = vmatprep.subr.mxu0 0.0
        %2561 = vmatpush2.msra.mxu0 0.0
        %2562 = vmatprep.subr.mxu0 0.0
        %2563 = vmatpush2.msra.mxu0 0.0
        %2564 = vmatprep.subr.mxu0 0.0
        %2565 = vmatpush2.msra.mxu0 0.0
        %2566 = vmatprep.subr.mxu0 0.0
        %2567 = vmatpush2.msra.mxu0 0.0
        %2568 = vmatprep.subr.mxu0 0.0
        %2569 = vmatpush2.msra.mxu0 0.0
        %2570 = vmatprep.mubr.f32.mxu0 0.0
        %2571 = vmatmul.mubr.f32.gmra.mxu0 %v2419
        %v2572 = vpop.f32.mrf.mxu0
        %v2573 = vadd.f32 %v2504, %v2572
        %v2574 = vpop.f32.mrf.mxu0
        %2575 = vmatprep.mubr.f32.mxu0 0.0
        %2576 = vmatmul.mubr.f32.gmra.mxu0 %v2420
        %v2577 = vpop.f32.mrf.mxu0
        %v2578 = vadd.f32 %v2504, %v2577
        %v2579 = vpop.f32.mrf.mxu0
        %2580 = vmatprep.mubr.f32.mxu0 0.0
        %2581 = vmatmul.mubr.f32.gmra.mxu0 %v2421
        %v2582 = vpop.f32.mrf.mxu0
        %v2583 = vadd.f32 %v2504, %v2582
        %v2584 = vpop.f32.mrf.mxu0
        %2585 = vmatprep.mubr.f32.mxu0 0.0
        %2586 = vmatmul.mubr.f32.gmra.mxu0 %v2422
        %v2587 = vpop.f32.mrf.mxu0
        %v2588 = vadd.f32 %v2504, %v2587
        %v2589 = vpop.f32.mrf.mxu0
        %2590 = vmatprep.mubr.f32.mxu0 0.0
        %2591 = vmatmul.mubr.f32.gmra.mxu0 %v2423
        %v2592 = vpop.f32.mrf.mxu0
        %v2593 = vadd.f32 %v2504, %v2592
        %v2594 = vpop.f32.mrf.mxu0
        %2595 = vmatprep.mubr.f32.mxu0 0.0
        %2596 = vmatmul.mubr.f32.gmra.mxu0 %v2424
        %v2597 = vpop.f32.mrf.mxu0
        %v2598 = vadd.f32 %v2504, %v2597
        %v2599 = vpop.f32.mrf.mxu0
        %2600 = vmatprep.mubr.f32.mxu0 0.0
        %2601 = vmatmul.mubr.f32.gmra.mxu0 %v2425
        %v2602 = vpop.f32.mrf.mxu0
        %v2603 = vadd.f32 %v2504, %v2602
        %v2604 = vpop.f32.mrf.mxu0
        %2605 = vmatprep.mubr.f32.mxu0 0.0
        %2606 = vmatmul.mubr.f32.gmra.mxu0 %v2426
        %v2607 = vpop.f32.mrf.mxu0
        %v2608 = vadd.f32 %v2504, %v2607
        %v2609 = vpop.f32.mrf.mxu0
        %2610 = vmatprep.mubr.f32.mxu0 0.0
        %2611 = vmatmul.mubr.f32.gmra.mxu0 %v2427
        %v2612 = vpop.f32.mrf.mxu0
        %v2613 = vadd.f32 %v2504, %v2612
        %v2614 = vpop.f32.mrf.mxu0
        %2615 = vmatprep.mubr.f32.mxu0 0.0
        %2616 = vmatmul.mubr.f32.gmra.mxu0 %v2428
        %v2617 = vpop.f32.mrf.mxu0
        %v2618 = vadd.f32 %v2504, %v2617
        %v2619 = vpop.f32.mrf.mxu0
        %2620 = vmatprep.mubr.f32.mxu0 0.0
        %2621 = vmatmul.mubr.f32.gmra.mxu0 %v2429
        %v2622 = vpop.f32.mrf.mxu0
        %v2623 = vadd.f32 %v2504, %v2622
        %v2624 = vpop.f32.mrf.mxu0
        %2625 = vmatprep.mubr.f32.mxu0 0.0
        %2626 = vmatmul.mubr.f32.gmra.mxu0 %v2430
        %v2627 = vpop.f32.mrf.mxu0
        %v2628 = vadd.f32 %v2504, %v2627
        %v2629 = vpop.f32.mrf.mxu0
        %2630 = vmatprep.mubr.f32.mxu0 0.0
        %2631 = vmatmul.mubr.f32.gmra.mxu0 %v2431
        %v2632 = vpop.f32.mrf.mxu0
        %v2633 = vadd.f32 %v2504, %v2632
        %v2634 = vpop.f32.mrf.mxu0
        %2635 = vmatprep.mubr.f32.mxu0 0.0
        %2636 = vmatmul.mubr.f32.gmra.mxu0 %v2432
        %v2637 = vpop.f32.mrf.mxu0
        %v2638 = vadd.f32 %v2504, %v2637
        %v2639 = vpop.f32.mrf.mxu0
        %2640 = vmatprep.mubr.f32.mxu0 0.0
        %2641 = vmatmul.mubr.f32.gmra.mxu0 %v2433
        %v2642 = vpop.f32.mrf.mxu0
        %v2643 = vadd.f32 %v2504, %v2642
        %v2644 = vpop.f32.mrf.mxu0
        %2645 = vmatprep.mubr.f32.mxu0 0.0
        %2646 = vmatmul.mubr.f32.gmra.mxu0 %v2434
        %v2647 = vpop.f32.mrf.mxu0
        %v2648 = vadd.f32 %v2504, %v2647
        %v2649 = vpop.f32.mrf.mxu0
        %2650 = vmatprep.mubr.f32.mxu0 0.0
        %2651 = vmatmul.mubr.f32.gmra.mxu0 %v2435
        %v2652 = vpop.f32.mrf.mxu0
        %v2653 = vadd.f32 %v2504, %v2652
        %v2654 = vpop.f32.mrf.mxu0
        %2655 = vmatprep.mubr.f32.mxu0 0.0
        %2656 = vmatmul.mubr.f32.gmra.mxu0 %v2436
        %v2657 = vpop.f32.mrf.mxu0
        %v2658 = vadd.f32 %v2504, %v2657
        %v2659 = vpop.f32.mrf.mxu0
        %2660 = vmatprep.mubr.f32.mxu0 0.0
        %2661 = vmatmul.mubr.f32.gmra.mxu0 %v2437
        %v2662 = vpop.f32.mrf.mxu0
        %v2663 = vadd.f32 %v2504, %v2662
        %v2664 = vpop.f32.mrf.mxu0
        %2665 = vmatprep.mubr.f32.mxu0 0.0
        %2666 = vmatmul.mubr.f32.gmra.mxu0 %v2438
        %v2667 = vpop.f32.mrf.mxu0
        %v2668 = vadd.f32 %v2504, %v2667
        %v2669 = vpop.f32.mrf.mxu0
        %2670 = vmatprep.mubr.f32.mxu0 0.0
        %2671 = vmatmul.mubr.f32.gmra.mxu0 %v2439
        %v2672 = vpop.f32.mrf.mxu0
        %v2673 = vadd.f32 %v2504, %v2672
        %v2674 = vpop.f32.mrf.mxu0
        %2675 = vmatprep.mubr.f32.mxu0 0.0
        %2676 = vmatmul.mubr.f32.gmra.mxu0 %v2440
        %v2677 = vpop.f32.mrf.mxu0
        %v2678 = vadd.f32 %v2504, %v2677
        %v2679 = vpop.f32.mrf.mxu0
        %2680 = vmatprep.mubr.f32.mxu0 0.0
        %2681 = vmatmul.mubr.f32.gmra.mxu0 %v2441
        %v2682 = vpop.f32.mrf.mxu0
        %v2683 = vadd.f32 %v2504, %v2682
        %v2684 = vpop.f32.mrf.mxu0
        %2685 = vmatprep.mubr.f32.mxu0 0.0
        %2686 = vmatmul.mubr.f32.gmra.mxu0 %v2442
        %v2687 = vpop.f32.mrf.mxu0
        %v2688 = vadd.f32 %v2504, %v2687
        %v2689 = vpop.f32.mrf.mxu0
        %2690 = vmatprep.mubr.f32.mxu0 0.0
        %2691 = vmatmul.mubr.f32.gmra.mxu0 %v2443
        %v2692 = vpop.f32.mrf.mxu0
        %v2693 = vadd.f32 %v2504, %v2692
        %v2694 = vpop.f32.mrf.mxu0
        %2695 = vmatprep.mubr.f32.mxu0 0.0
        %2696 = vmatmul.mubr.f32.gmra.mxu0 %v2444
        %v2697 = vpop.f32.mrf.mxu0
        %v2698 = vadd.f32 %v2504, %v2697
        %v2699 = vpop.f32.mrf.mxu0
        %2700 = vmatprep.mubr.f32.mxu0 0.0
        %2701 = vmatmul.mubr.f32.gmra.mxu0 %v2445
        %v2702 = vpop.f32.mrf.mxu0
        %v2703 = vadd.f32 %v2504, %v2702
        %v2704 = vpop.f32.mrf.mxu0
        %2705 = vmatprep.mubr.f32.mxu0 0.0
        %2706 = vmatmul.mubr.f32.gmra.mxu0 %v2446
        %v2707 = vpop.f32.mrf.mxu0
        %v2708 = vadd.f32 %v2504, %v2707
        %v2709 = vpop.f32.mrf.mxu0
        %2710 = vmatprep.mubr.f32.mxu0 0.0
        %2711 = vmatmul.mubr.f32.gmra.mxu0 %v2447
        %v2712 = vpop.f32.mrf.mxu0
        %v2713 = vadd.f32 %v2504, %v2712
        %v2714 = vpop.f32.mrf.mxu0
        %2715 = vmatprep.mubr.f32.mxu0 0.0
        %2716 = vmatmul.mubr.f32.gmra.mxu0 %v2448
        %v2717 = vpop.f32.mrf.mxu0
        %v2718 = vadd.f32 %v2504, %v2717
        %v2719 = vpop.f32.mrf.mxu0
        %2720 = vmatprep.mubr.f32.mxu0 0.0
        %2721 = vmatmul.mubr.f32.gmra.mxu0 %v2449
        %v2722 = vpop.f32.mrf.mxu0
        %v2723 = vadd.f32 %v2504, %v2722
        %v2724 = vpop.f32.mrf.mxu0
        %2725 = vmatprep.mubr.f32.mxu0 0.0
        %2726 = vmatmul.mubr.f32.gmra.mxu0 %v2450
        %v2727 = vpop.f32.mrf.mxu0
        %v2728 = vadd.f32 %v2504, %v2727
        %v2729 = vpop.f32.mrf.mxu0
        %2730 = vmatprep.mubr.f32.mxu0 0.0
        %2731 = vmatmul.mubr.f32.gmra.mxu0 %v2451
        %v2732 = vpop.f32.mrf.mxu0
        %v2733 = vadd.f32 %v2504, %v2732
        %v2734 = vpop.f32.mrf.mxu0
        %2735 = vmatprep.mubr.f32.mxu0 0.0
        %2736 = vmatmul.mubr.f32.gmra.mxu0 %v2452
        %v2737 = vpop.f32.mrf.mxu0
        %v2738 = vadd.f32 %v2504, %v2737
        %v2739 = vpop.f32.mrf.mxu0
        %2740 = vmatprep.mubr.f32.mxu0 0.0
        %2741 = vmatmul.mubr.f32.gmra.mxu0 %v2453
        %v2742 = vpop.f32.mrf.mxu0
        %v2743 = vadd.f32 %v2504, %v2742
        %v2744 = vpop.f32.mrf.mxu0
        %2745 = vmatprep.mubr.f32.mxu0 0.0
        %2746 = vmatmul.mubr.f32.gmra.mxu0 %v2454
        %v2747 = vpop.f32.mrf.mxu0
        %v2748 = vadd.f32 %v2504, %v2747
        %v2749 = vpop.f32.mrf.mxu0
        %2750 = vmatprep.mubr.f32.mxu0 0.0
        %2751 = vmatmul.mubr.f32.gmra.mxu0 %v2455
        %v2752 = vpop.f32.mrf.mxu0
        %v2753 = vadd.f32 %v2504, %v2752
        %v2754 = vpop.f32.mrf.mxu0
        %2755 = vmatprep.mubr.f32.mxu0 0.0
        %2756 = vmatmul.mubr.f32.gmra.mxu0 %v2456
        %v2757 = vpop.f32.mrf.mxu0
        %v2758 = vadd.f32 %v2504, %v2757
        %v2759 = vpop.f32.mrf.mxu0
        %2760 = vmatprep.mubr.f32.mxu0 0.0
        %2761 = vmatmul.mubr.f32.gmra.mxu0 %v2457
        %v2762 = vpop.f32.mrf.mxu0
        %v2763 = vadd.f32 %v2504, %v2762
        %v2764 = vpop.f32.mrf.mxu0
        %2765 = vmatprep.mubr.f32.mxu0 0.0
        %2766 = vmatmul.mubr.f32.gmra.mxu0 %v2458
        %v2767 = vpop.f32.mrf.mxu0
        %v2768 = vadd.f32 %v2504, %v2767
        %v2769 = vpop.f32.mrf.mxu0
        %2770 = vmatprep.mubr.f32.mxu0 0.0
        %2771 = vmatmul.mubr.f32.gmra.mxu0 %v2459
        %v2772 = vpop.f32.mrf.mxu0
        %v2773 = vadd.f32 %v2504, %v2772
        %v2774 = vpop.f32.mrf.mxu0
        %2775 = vmatprep.mubr.f32.mxu0 0.0
        %2776 = vmatmul.mubr.f32.gmra.mxu0 %v2460
        %v2777 = vpop.f32.mrf.mxu0
        %v2778 = vadd.f32 %v2504, %v2777
        %v2779 = vpop.f32.mrf.mxu0
        %2780 = vmatprep.mubr.f32.mxu0 0.0
        %2781 = vmatmul.mubr.f32.gmra.mxu0 %v2461
        %v2782 = vpop.f32.mrf.mxu0
        %v2783 = vadd.f32 %v2504, %v2782
        %v2784 = vpop.f32.mrf.mxu0
        %2785 = vmatprep.mubr.f32.mxu0 0.0
        %2786 = vmatmul.mubr.f32.gmra.mxu0 %v2462
        %v2787 = vpop.f32.mrf.mxu0
        %v2788 = vadd.f32 %v2504, %v2787
        %v2789 = vpop.f32.mrf.mxu0
        %2790 = vmatprep.mubr.f32.mxu0 0.0
        %2791 = vmatmul.mubr.f32.gmra.mxu0 %v2463
        %v2792 = vpop.f32.mrf.mxu0
        %v2793 = vadd.f32 %v2504, %v2792
        %v2794 = vpop.f32.mrf.mxu0
        %2795 = vmatprep.mubr.f32.mxu0 0.0
        %2796 = vmatmul.mubr.f32.gmra.mxu0 %v2464
        %v2797 = vpop.f32.mrf.mxu0
        %v2798 = vadd.f32 %v2504, %v2797
        %v2799 = vpop.f32.mrf.mxu0
        %2800 = vmatprep.mubr.f32.mxu0 0.0
        %2801 = vmatmul.mubr.f32.gmra.mxu0 %v2465
        %v2802 = vpop.f32.mrf.mxu0
        %v2803 = vadd.f32 %v2504, %v2802
        %v2804 = vpop.f32.mrf.mxu0
        %2805 = vmatprep.mubr.f32.mxu0 0.0
        %2806 = vmatmul.mubr.f32.gmra.mxu0 %v2466
        %v2807 = vpop.f32.mrf.mxu0
        %v2808 = vadd.f32 %v2504, %v2807
        %v2809 = vpop.f32.mrf.mxu0
        %2810 = vmatprep.mubr.f32.mxu0 0.0
        %2811 = vmatmul.mubr.f32.gmra.mxu0 %v2467
        %v2812 = vpop.f32.mrf.mxu0
        %v2813 = vadd.f32 %v2504, %v2812
        %v2814 = vpop.f32.mrf.mxu0
        %2815 = vmatprep.mubr.f32.mxu0 0.0
        %2816 = vmatmul.mubr.f32.gmra.mxu0 %v2468
        %v2817 = vpop.f32.mrf.mxu0
        %v2818 = vadd.f32 %v2504, %v2817
        %v2819 = vpop.f32.mrf.mxu0
        %2820 = vmatprep.mubr.f32.mxu0 0.0
        %2821 = vmatmul.mubr.f32.gmra.mxu0 %v2469
        %v2822 = vpop.f32.mrf.mxu0
        %v2823 = vadd.f32 %v2504, %v2822
        %v2824 = vpop.f32.mrf.mxu0
        %2825 = vmatprep.mubr.f32.mxu0 0.0
        %2826 = vmatmul.mubr.f32.gmra.mxu0 %v2470
        %v2827 = vpop.f32.mrf.mxu0
        %v2828 = vadd.f32 %v2504, %v2827
        %v2829 = vpop.f32.mrf.mxu0
        %2830 = vmatprep.mubr.f32.mxu0 0.0
        %2831 = vmatmul.mubr.f32.gmra.mxu0 %v2471
        %v2832 = vpop.f32.mrf.mxu0
        %v2833 = vadd.f32 %v2504, %v2832
        %v2834 = vpop.f32.mrf.mxu0
        %2835 = vmatprep.mubr.f32.mxu0 0.0
        %2836 = vmatmul.mubr.f32.gmra.mxu0 %v2472
        %v2837 = vpop.f32.mrf.mxu0
        %v2838 = vadd.f32 %v2504, %v2837
        %v2839 = vpop.f32.mrf.mxu0
        %2840 = vmatprep.mubr.f32.mxu0 0.0
        %2841 = vmatmul.mubr.f32.gmra.mxu0 %v2473
        %v2842 = vpop.f32.mrf.mxu0
        %v2843 = vadd.f32 %v2504, %v2842
        %v2844 = vpop.f32.mrf.mxu0
        %2845 = vmatprep.mubr.f32.mxu0 0.0
        %2846 = vmatmul.mubr.f32.gmra.mxu0 %v2474
        %v2847 = vpop.f32.mrf.mxu0
        %v2848 = vadd.f32 %v2504, %v2847
        %v2849 = vpop.f32.mrf.mxu0
        %2850 = vmatprep.mubr.f32.mxu0 0.0
        %2851 = vmatmul.mubr.f32.gmra.mxu0 %v2475
        %v2852 = vpop.f32.mrf.mxu0
        %v2853 = vadd.f32 %v2504, %v2852
        %v2854 = vpop.f32.mrf.mxu0
        %2855 = vmatprep.mubr.f32.mxu0 0.0
        %2856 = vmatmul.mubr.f32.gmra.mxu0 %v2476
        %v2857 = vpop.f32.mrf.mxu0
        %v2858 = vadd.f32 %v2504, %v2857
        %v2859 = vpop.f32.mrf.mxu0
        %2860 = vmatprep.mubr.f32.mxu0 0.0
        %2861 = vmatmul.mubr.f32.gmra.mxu0 %v2477
        %v2862 = vpop.f32.mrf.mxu0
        %v2863 = vadd.f32 %v2504, %v2862
        %v2864 = vpop.f32.mrf.mxu0
        %2865 = vmatprep.mubr.f32.mxu0 0.0
        %2866 = vmatmul.mubr.f32.gmra.mxu0 %v2478
        %v2867 = vpop.f32.mrf.mxu0
        %v2868 = vadd.f32 %v2504, %v2867
        %v2869 = vpop.f32.mrf.mxu0
        %2870 = vmatprep.mubr.f32.mxu0 0.0
        %2871 = vmatmul.mubr.f32.gmra.mxu0 %v2479
        %v2872 = vpop.f32.mrf.mxu0
        %v2873 = vadd.f32 %v2504, %v2872
        %v2874 = vpop.f32.mrf.mxu0
        %2875 = vmatprep.mubr.f32.mxu0 0.0
        %2876 = vmatmul.mubr.f32.gmra.mxu0 %v2480
        %v2877 = vpop.f32.mrf.mxu0
        %v2878 = vadd.f32 %v2504, %v2877
        %v2879 = vpop.f32.mrf.mxu0
        %2880 = vmatprep.mubr.f32.mxu0 0.0
        %2881 = vmatmul.mubr.f32.gmra.mxu0 %v2481
        %v2882 = vpop.f32.mrf.mxu0
        %v2883 = vadd.f32 %v2504, %v2882
        %v2884 = vpop.f32.mrf.mxu0
        %2885 = vmatprep.mubr.f32.mxu0 0.0
        %2886 = vmatmul.mubr.f32.gmra.mxu0 %v2482
        %v2887 = vpop.f32.mrf.mxu0
        %v2888 = vadd.f32 %v2504, %v2887
        %v2889 = vpop.f32.mrf.mxu0
        %2890 = vdwg.mxu0
        %v2891 = vmax.f32 %v2573, 0.0
        %v2892 = vmax.f32 %v2578, 0.0
        %v2893 = vmax.f32 %v2583, 0.0
        %v2894 = vmax.f32 %v2588, 0.0
        %v2895 = vmax.f32 %v2593, 0.0
        %v2896 = vmax.f32 %v2598, 0.0
        %v2897 = vmax.f32 %v2603, 0.0
        %v2898 = vmax.f32 %v2608, 0.0
        %v2899 = vmax.f32 %v2613, 0.0
        %v2900 = vmax.f32 %v2618, 0.0
        %v2901 = vmax.f32 %v2623, 0.0
        %v2902 = vmax.f32 %v2628, 0.0
        %v2903 = vmax.f32 %v2633, 0.0
        %v2904 = vmax.f32 %v2638, 0.0
        %v2905 = vmax.f32 %v2643, 0.0
        %v2906 = vmax.f32 %v2648, 0.0
        %v2907 = vmax.f32 %v2653, 0.0
        %v2908 = vmax.f32 %v2658, 0.0
        %v2909 = vmax.f32 %v2663, 0.0
        %v2910 = vmax.f32 %v2668, 0.0
        %v2911 = vmax.f32 %v2673, 0.0
        %v2912 = vmax.f32 %v2678, 0.0
        %v2913 = vmax.f32 %v2683, 0.0
        %v2914 = vmax.f32 %v2688, 0.0
        %v2915 = vmax.f32 %v2693, 0.0
        %v2916 = vmax.f32 %v2698, 0.0
        %v2917 = vmax.f32 %v2703, 0.0
        %v2918 = vmax.f32 %v2708, 0.0
        %v2919 = vmax.f32 %v2713, 0.0
        %v2920 = vmax.f32 %v2718, 0.0
        %v2921 = vmax.f32 %v2723, 0.0
        %v2922 = vmax.f32 %v2728, 0.0
        %v2923 = vmax.f32 %v2733, 0.0
        %v2924 = vmax.f32 %v2738, 0.0
        %v2925 = vmax.f32 %v2743, 0.0
        %v2926 = vmax.f32 %v2748, 0.0
        %v2927 = vmax.f32 %v2753, 0.0
        %v2928 = vmax.f32 %v2758, 0.0
        %v2929 = vmax.f32 %v2763, 0.0
        %v2930 = vmax.f32 %v2768, 0.0
        %v2931 = vmax.f32 %v2773, 0.0
        %v2932 = vmax.f32 %v2778, 0.0
        %v2933 = vmax.f32 %v2783, 0.0
        %v2934 = vmax.f32 %v2788, 0.0
        %v2935 = vmax.f32 %v2793, 0.0
        %v2936 = vmax.f32 %v2798, 0.0
        %v2937 = vmax.f32 %v2803, 0.0
        %v2938 = vmax.f32 %v2808, 0.0
        %v2939 = vmax.f32 %v2813, 0.0
        %v2940 = vmax.f32 %v2818, 0.0
        %v2941 = vmax.f32 %v2823, 0.0
        %v2942 = vmax.f32 %v2828, 0.0
        %v2943 = vmax.f32 %v2833, 0.0
        %v2944 = vmax.f32 %v2838, 0.0
        %v2945 = vmax.f32 %v2843, 0.0
        %v2946 = vmax.f32 %v2848, 0.0
        %v2947 = vmax.f32 %v2853, 0.0
        %v2948 = vmax.f32 %v2858, 0.0
        %v2949 = vmax.f32 %v2863, 0.0
        %v2950 = vmax.f32 %v2868, 0.0
        %v2951 = vmax.f32 %v2873, 0.0
        %v2952 = vmax.f32 %v2878, 0.0
        %v2953 = vmax.f32 %v2883, 0.0
        %v2954 = vmax.f32 %v2888, 0.0
        %v2955 = vld [vmem:[%s9] sm:$0x1]
        %v2957 = vlaneseq
        %v2958 = vshrl.u32 %v2957, 7
        %v2959 = vsub.s32 0, %v2958
        %v2960 = vrot.slane %v2955, %v2959
        %v2962 = vmul.f32 %v2891, %v2960
        %v2963 = vmul.f32 %v2892, %v2960
        %v2964 = vmul.f32 %v2893, %v2960
        %v2965 = vmul.f32 %v2894, %v2960
        %v2966 = vmul.f32 %v2895, %v2960
        %v2967 = vmul.f32 %v2896, %v2960
        %v2968 = vmul.f32 %v2897, %v2960
        %v2969 = vmul.f32 %v2898, %v2960
        %v2970 = vmul.f32 %v2899, %v2960
        %v2971 = vmul.f32 %v2900, %v2960
        %v2972 = vmul.f32 %v2901, %v2960
        %v2973 = vmul.f32 %v2902, %v2960
        %v2974 = vmul.f32 %v2903, %v2960
        %v2975 = vmul.f32 %v2904, %v2960
        %v2976 = vmul.f32 %v2905, %v2960
        %v2977 = vmul.f32 %v2906, %v2960
        %v2978 = vmul.f32 %v2907, %v2960
        %v2979 = vmul.f32 %v2908, %v2960
        %v2980 = vmul.f32 %v2909, %v2960
        %v2981 = vmul.f32 %v2910, %v2960
        %v2982 = vmul.f32 %v2911, %v2960
        %v2983 = vmul.f32 %v2912, %v2960
        %v2984 = vmul.f32 %v2913, %v2960
        %v2985 = vmul.f32 %v2914, %v2960
        %v2986 = vmul.f32 %v2915, %v2960
        %v2987 = vmul.f32 %v2916, %v2960
        %v2988 = vmul.f32 %v2917, %v2960
        %v2989 = vmul.f32 %v2918, %v2960
        %v2990 = vmul.f32 %v2919, %v2960
        %v2991 = vmul.f32 %v2920, %v2960
        %v2992 = vmul.f32 %v2921, %v2960
        %v2993 = vmul.f32 %v2922, %v2960
        %v2994 = vmul.f32 %v2923, %v2960
        %v2995 = vmul.f32 %v2924, %v2960
        %v2996 = vmul.f32 %v2925, %v2960
        %v2997 = vmul.f32 %v2926, %v2960
        %v2998 = vmul.f32 %v2927, %v2960
        %v2999 = vmul.f32 %v2928, %v2960
        %v3000 = vmul.f32 %v2929, %v2960
        %v3001 = vmul.f32 %v2930, %v2960
        %v3002 = vmul.f32 %v2931, %v2960
        %v3003 = vmul.f32 %v2932, %v2960
        %v3004 = vmul.f32 %v2933, %v2960
        %v3005 = vmul.f32 %v2934, %v2960
        %v3006 = vmul.f32 %v2935, %v2960
        %v3007 = vmul.f32 %v2936, %v2960
        %v3008 = vmul.f32 %v2937, %v2960
        %v3009 = vmul.f32 %v2938, %v2960
        %v3010 = vmul.f32 %v2939, %v2960
        %v3011 = vmul.f32 %v2940, %v2960
        %v3012 = vmul.f32 %v2941, %v2960
        %v3013 = vmul.f32 %v2942, %v2960
        %v3014 = vmul.f32 %v2943, %v2960
        %v3015 = vmul.f32 %v2944, %v2960
        %v3016 = vmul.f32 %v2945, %v2960
        %v3017 = vmul.f32 %v2946, %v2960
        %v3018 = vmul.f32 %v2947, %v2960
        %v3019 = vmul.f32 %v2948, %v2960
        %v3020 = vmul.f32 %v2949, %v2960
        %v3021 = vmul.f32 %v2950, %v2960
        %v3022 = vmul.f32 %v2951, %v2960
        %v3023 = vmul.f32 %v2952, %v2960
        %v3024 = vmul.f32 %v2953, %v2960
        %v3025 = vmul.f32 %v2954, %v2960
        %3026 = vadd.xlane.f32.xlu0 %v2962
        %v3027 = vpop.xlane.xlu0 %3026
        %3028 = vadd.xlane.f32.xlu0 %v2963
        %v3029 = vpop.xlane.xlu0 %3028
        %3030 = vadd.xlane.f32.xlu0 %v2964
        %v3031 = vpop.xlane.xlu0 %3030
        %3032 = vadd.xlane.f32.xlu0 %v2965
        %v3033 = vpop.xlane.xlu0 %3032
        %3034 = vadd.xlane.f32.xlu0 %v2966
        %v3035 = vpop.xlane.xlu0 %3034
        %3036 = vadd.xlane.f32.xlu0 %v2967
        %v3037 = vpop.xlane.xlu0 %3036
        %3038 = vadd.xlane.f32.xlu0 %v2968
        %v3039 = vpop.xlane.xlu0 %3038
        %3040 = vadd.xlane.f32.xlu0 %v2969
        %v3041 = vpop.xlane.xlu0 %3040
        %3042 = vadd.xlane.f32.xlu0 %v2970
        %v3043 = vpop.xlane.xlu0 %3042
        %3044 = vadd.xlane.f32.xlu0 %v2971
        %v3045 = vpop.xlane.xlu0 %3044
        %3046 = vadd.xlane.f32.xlu0 %v2972
        %v3047 = vpop.xlane.xlu0 %3046
        %3048 = vadd.xlane.f32.xlu0 %v2973
        %v3049 = vpop.xlane.xlu0 %3048
        %3050 = vadd.xlane.f32.xlu0 %v2974
        %v3051 = vpop.xlane.xlu0 %3050
        %3052 = vadd.xlane.f32.xlu0 %v2975
        %v3053 = vpop.xlane.xlu0 %3052
        %3054 = vadd.xlane.f32.xlu0 %v2976
        %v3055 = vpop.xlane.xlu0 %3054
        %3056 = vadd.xlane.f32.xlu0 %v2977
        %v3057 = vpop.xlane.xlu0 %3056
        %3058 = vadd.xlane.f32.xlu0 %v2978
        %v3059 = vpop.xlane.xlu0 %3058
        %3060 = vadd.xlane.f32.xlu0 %v2979
        %v3061 = vpop.xlane.xlu0 %3060
        %3062 = vadd.xlane.f32.xlu0 %v2980
        %v3063 = vpop.xlane.xlu0 %3062
        %3064 = vadd.xlane.f32.xlu0 %v2981
        %v3065 = vpop.xlane.xlu0 %3064
        %3066 = vadd.xlane.f32.xlu0 %v2982
        %v3067 = vpop.xlane.xlu0 %3066
        %3068 = vadd.xlane.f32.xlu0 %v2983
        %v3069 = vpop.xlane.xlu0 %3068
        %3070 = vadd.xlane.f32.xlu0 %v2984
        %v3071 = vpop.xlane.xlu0 %3070
        %3072 = vadd.xlane.f32.xlu0 %v2985
        %v3073 = vpop.xlane.xlu0 %3072
        %3074 = vadd.xlane.f32.xlu0 %v2986
        %v3075 = vpop.xlane.xlu0 %3074
        %3076 = vadd.xlane.f32.xlu0 %v2987
        %v3077 = vpop.xlane.xlu0 %3076
        %3078 = vadd.xlane.f32.xlu0 %v2988
        %v3079 = vpop.xlane.xlu0 %3078
        %3080 = vadd.xlane.f32.xlu0 %v2989
        %v3081 = vpop.xlane.xlu0 %3080
        %3082 = vadd.xlane.f32.xlu0 %v2990
        %v3083 = vpop.xlane.xlu0 %3082
        %3084 = vadd.xlane.f32.xlu0 %v2991
        %v3085 = vpop.xlane.xlu0 %3084
        %3086 = vadd.xlane.f32.xlu0 %v2992
        %v3087 = vpop.xlane.xlu0 %3086
        %3088 = vadd.xlane.f32.xlu0 %v2993
        %v3089 = vpop.xlane.xlu0 %3088
        %3090 = vadd.xlane.f32.xlu0 %v2994
        %v3091 = vpop.xlane.xlu0 %3090
        %3092 = vadd.xlane.f32.xlu0 %v2995
        %v3093 = vpop.xlane.xlu0 %3092
        %3094 = vadd.xlane.f32.xlu0 %v2996
        %v3095 = vpop.xlane.xlu0 %3094
        %3096 = vadd.xlane.f32.xlu0 %v2997
        %v3097 = vpop.xlane.xlu0 %3096
        %3098 = vadd.xlane.f32.xlu0 %v2998
        %v3099 = vpop.xlane.xlu0 %3098
        %3100 = vadd.xlane.f32.xlu0 %v2999
        %v3101 = vpop.xlane.xlu0 %3100
        %3102 = vadd.xlane.f32.xlu0 %v3000
        %v3103 = vpop.xlane.xlu0 %3102
        %3104 = vadd.xlane.f32.xlu0 %v3001
        %v3105 = vpop.xlane.xlu0 %3104
        %3106 = vadd.xlane.f32.xlu0 %v3002
        %v3107 = vpop.xlane.xlu0 %3106
        %3108 = vadd.xlane.f32.xlu0 %v3003
        %v3109 = vpop.xlane.xlu0 %3108
        %3110 = vadd.xlane.f32.xlu0 %v3004
        %v3111 = vpop.xlane.xlu0 %3110
        %3112 = vadd.xlane.f32.xlu0 %v3005
        %v3113 = vpop.xlane.xlu0 %3112
        %3114 = vadd.xlane.f32.xlu0 %v3006
        %v3115 = vpop.xlane.xlu0 %3114
        %3116 = vadd.xlane.f32.xlu0 %v3007
        %v3117 = vpop.xlane.xlu0 %3116
        %3118 = vadd.xlane.f32.xlu0 %v3008
        %v3119 = vpop.xlane.xlu0 %3118
        %3120 = vadd.xlane.f32.xlu0 %v3009
        %v3121 = vpop.xlane.xlu0 %3120
        %3122 = vadd.xlane.f32.xlu0 %v3010
        %v3123 = vpop.xlane.xlu0 %3122
        %3124 = vadd.xlane.f32.xlu0 %v3011
        %v3125 = vpop.xlane.xlu0 %3124
        %3126 = vadd.xlane.f32.xlu0 %v3012
        %v3127 = vpop.xlane.xlu0 %3126
        %3128 = vadd.xlane.f32.xlu0 %v3013
        %v3129 = vpop.xlane.xlu0 %3128
        %3130 = vadd.xlane.f32.xlu0 %v3014
        %v3131 = vpop.xlane.xlu0 %3130
        %3132 = vadd.xlane.f32.xlu0 %v3015
        %v3133 = vpop.xlane.xlu0 %3132
        %3134 = vadd.xlane.f32.xlu0 %v3016
        %v3135 = vpop.xlane.xlu0 %3134
        %3136 = vadd.xlane.f32.xlu0 %v3017
        %v3137 = vpop.xlane.xlu0 %3136
        %3138 = vadd.xlane.f32.xlu0 %v3018
        %v3139 = vpop.xlane.xlu0 %3138
        %3140 = vadd.xlane.f32.xlu0 %v3019
        %v3141 = vpop.xlane.xlu0 %3140
        %3142 = vadd.xlane.f32.xlu0 %v3020
        %v3143 = vpop.xlane.xlu0 %3142
        %3144 = vadd.xlane.f32.xlu0 %v3021
        %v3145 = vpop.xlane.xlu0 %3144
        %3146 = vadd.xlane.f32.xlu0 %v3022
        %v3147 = vpop.xlane.xlu0 %3146
        %3148 = vadd.xlane.f32.xlu0 %v3023
        %v3149 = vpop.xlane.xlu0 %3148
        %3150 = vadd.xlane.f32.xlu0 %v3024
        %v3151 = vpop.xlane.xlu0 %3150
        %3152 = vadd.xlane.f32.xlu0 %v3025
        %v3153 = vpop.xlane.xlu0 %3152
        %s3154 = sld [smem:[#allocation2]]
        %v3155 = vstv %s3154
        %v3156 = vadd.f32 %v3027, %v3155
        %v3157 = vadd.f32 %v3029, %v3155
        %v3158 = vadd.f32 %v3031, %v3155
        %v3159 = vadd.f32 %v3033, %v3155
        %v3160 = vadd.f32 %v3035, %v3155
        %v3161 = vadd.f32 %v3037, %v3155
        %v3162 = vadd.f32 %v3039, %v3155
        %v3163 = vadd.f32 %v3041, %v3155
        %v3164 = vadd.f32 %v3043, %v3155
        %v3165 = vadd.f32 %v3045, %v3155
        %v3166 = vadd.f32 %v3047, %v3155
        %v3167 = vadd.f32 %v3049, %v3155
        %v3168 = vadd.f32 %v3051, %v3155
        %v3169 = vadd.f32 %v3053, %v3155
        %v3170 = vadd.f32 %v3055, %v3155
        %v3171 = vadd.f32 %v3057, %v3155
        %v3172 = vadd.f32 %v3059, %v3155
        %v3173 = vadd.f32 %v3061, %v3155
        %v3174 = vadd.f32 %v3063, %v3155
        %v3175 = vadd.f32 %v3065, %v3155
        %v3176 = vadd.f32 %v3067, %v3155
        %v3177 = vadd.f32 %v3069, %v3155
        %v3178 = vadd.f32 %v3071, %v3155
        %v3179 = vadd.f32 %v3073, %v3155
        %v3180 = vadd.f32 %v3075, %v3155
        %v3181 = vadd.f32 %v3077, %v3155
        %v3182 = vadd.f32 %v3079, %v3155
        %v3183 = vadd.f32 %v3081, %v3155
        %v3184 = vadd.f32 %v3083, %v3155
        %v3185 = vadd.f32 %v3085, %v3155
        %v3186 = vadd.f32 %v3087, %v3155
        %v3187 = vadd.f32 %v3089, %v3155
        %v3188 = vadd.f32 %v3091, %v3155
        %v3189 = vadd.f32 %v3093, %v3155
        %v3190 = vadd.f32 %v3095, %v3155
        %v3191 = vadd.f32 %v3097, %v3155
        %v3192 = vadd.f32 %v3099, %v3155
        %v3193 = vadd.f32 %v3101, %v3155
        %v3194 = vadd.f32 %v3103, %v3155
        %v3195 = vadd.f32 %v3105, %v3155
        %v3196 = vadd.f32 %v3107, %v3155
        %v3197 = vadd.f32 %v3109, %v3155
        %v3198 = vadd.f32 %v3111, %v3155
        %v3199 = vadd.f32 %v3113, %v3155
        %v3200 = vadd.f32 %v3115, %v3155
        %v3201 = vadd.f32 %v3117, %v3155
        %v3202 = vadd.f32 %v3119, %v3155
        %v3203 = vadd.f32 %v3121, %v3155
        %v3204 = vadd.f32 %v3123, %v3155
        %v3205 = vadd.f32 %v3125, %v3155
        %v3206 = vadd.f32 %v3127, %v3155
        %v3207 = vadd.f32 %v3129, %v3155
        %v3208 = vadd.f32 %v3131, %v3155
        %v3209 = vadd.f32 %v3133, %v3155
        %v3210 = vadd.f32 %v3135, %v3155
        %v3211 = vadd.f32 %v3137, %v3155
        %v3212 = vadd.f32 %v3139, %v3155
        %v3213 = vadd.f32 %v3141, %v3155
        %v3214 = vadd.f32 %v3143, %v3155
        %v3215 = vadd.f32 %v3145, %v3155
        %v3216 = vadd.f32 %v3147, %v3155
        %v3217 = vadd.f32 %v3149, %v3155
        %v3218 = vadd.f32 %v3151, %v3155
        %v3219 = vadd.f32 %v3153, %v3155
        %v3220 = vxor.u32 %v3156, 2147483648
        %v3221 = vxor.u32 %v3157, 2147483648
        %v3222 = vxor.u32 %v3158, 2147483648
        %v3223 = vxor.u32 %v3159, 2147483648
        %v3224 = vxor.u32 %v3160, 2147483648
        %v3225 = vxor.u32 %v3161, 2147483648
        %v3226 = vxor.u32 %v3162, 2147483648
        %v3227 = vxor.u32 %v3163, 2147483648
        %v3228 = vxor.u32 %v3164, 2147483648
        %v3229 = vxor.u32 %v3165, 2147483648
        %v3230 = vxor.u32 %v3166, 2147483648
        %v3231 = vxor.u32 %v3167, 2147483648
        %v3232 = vxor.u32 %v3168, 2147483648
        %v3233 = vxor.u32 %v3169, 2147483648
        %v3234 = vxor.u32 %v3170, 2147483648
        %v3235 = vxor.u32 %v3171, 2147483648
        %v3236 = vxor.u32 %v3172, 2147483648
        %v3237 = vxor.u32 %v3173, 2147483648
        %v3238 = vxor.u32 %v3174, 2147483648
        %v3239 = vxor.u32 %v3175, 2147483648
        %v3240 = vxor.u32 %v3176, 2147483648
        %v3241 = vxor.u32 %v3177, 2147483648
        %v3242 = vxor.u32 %v3178, 2147483648
        %v3243 = vxor.u32 %v3179, 2147483648
        %v3244 = vxor.u32 %v3180, 2147483648
        %v3245 = vxor.u32 %v3181, 2147483648
        %v3246 = vxor.u32 %v3182, 2147483648
        %v3247 = vxor.u32 %v3183, 2147483648
        %v3248 = vxor.u32 %v3184, 2147483648
        %v3249 = vxor.u32 %v3185, 2147483648
        %v3250 = vxor.u32 %v3186, 2147483648
        %v3251 = vxor.u32 %v3187, 2147483648
        %v3252 = vxor.u32 %v3188, 2147483648
        %v3253 = vxor.u32 %v3189, 2147483648
        %v3254 = vxor.u32 %v3190, 2147483648
        %v3255 = vxor.u32 %v3191, 2147483648
        %v3256 = vxor.u32 %v3192, 2147483648
        %v3257 = vxor.u32 %v3193, 2147483648
        %v3258 = vxor.u32 %v3194, 2147483648
        %v3259 = vxor.u32 %v3195, 2147483648
        %v3260 = vxor.u32 %v3196, 2147483648
        %v3261 = vxor.u32 %v3197, 2147483648
        %v3262 = vxor.u32 %v3198, 2147483648
        %v3263 = vxor.u32 %v3199, 2147483648
        %v3264 = vxor.u32 %v3200, 2147483648
        %v3265 = vxor.u32 %v3201, 2147483648
        %v3266 = vxor.u32 %v3202, 2147483648
        %v3267 = vxor.u32 %v3203, 2147483648
        %v3268 = vxor.u32 %v3204, 2147483648
        %v3269 = vxor.u32 %v3205, 2147483648
        %v3270 = vxor.u32 %v3206, 2147483648
        %v3271 = vxor.u32 %v3207, 2147483648
        %v3272 = vxor.u32 %v3208, 2147483648
        %v3273 = vxor.u32 %v3209, 2147483648
        %v3274 = vxor.u32 %v3210, 2147483648
        %v3275 = vxor.u32 %v3211, 2147483648
        %v3276 = vxor.u32 %v3212, 2147483648
        %v3277 = vxor.u32 %v3213, 2147483648
        %v3278 = vxor.u32 %v3214, 2147483648
        %v3279 = vxor.u32 %v3215, 2147483648
        %v3280 = vxor.u32 %v3216, 2147483648
        %v3281 = vxor.u32 %v3217, 2147483648
        %v3282 = vxor.u32 %v3218, 2147483648
        %v3283 = vxor.u32 %v3219, 2147483648
        %v3284 = vmul.f32 %v3220, 1.442695
        %v3285 = vpow.pop %v3284
        %v3286 = vmul.f32 %v3221, 1.442695
        %v3287 = vpow.pop %v3286
        %v3288 = vmul.f32 %v3222, 1.442695
        %v3289 = vpow.pop %v3288
        %v3290 = vmul.f32 %v3223, 1.442695
        %v3291 = vpow.pop %v3290
        %v3292 = vmul.f32 %v3224, 1.442695
        %v3293 = vpow.pop %v3292
        %v3294 = vmul.f32 %v3225, 1.442695
        %v3295 = vpow.pop %v3294
        %v3296 = vmul.f32 %v3226, 1.442695
        %v3297 = vpow.pop %v3296
        %v3298 = vmul.f32 %v3227, 1.442695
        %v3299 = vpow.pop %v3298
        %v3300 = vmul.f32 %v3228, 1.442695
        %v3301 = vpow.pop %v3300
        %v3302 = vmul.f32 %v3229, 1.442695
        %v3303 = vpow.pop %v3302
        %v3304 = vmul.f32 %v3230, 1.442695
        %v3305 = vpow.pop %v3304
        %v3306 = vmul.f32 %v3231, 1.442695
        %v3307 = vpow.pop %v3306
        %v3308 = vmul.f32 %v3232, 1.442695
        %v3309 = vpow.pop %v3308
        %v3310 = vmul.f32 %v3233, 1.442695
        %v3311 = vpow.pop %v3310
        %v3312 = vmul.f32 %v3234, 1.442695
        %v3313 = vpow.pop %v3312
        %v3314 = vmul.f32 %v3235, 1.442695
        %v3315 = vpow.pop %v3314
        %v3316 = vmul.f32 %v3236, 1.442695
        %v3317 = vpow.pop %v3316
        %v3318 = vmul.f32 %v3237, 1.442695
        %v3319 = vpow.pop %v3318
        %v3320 = vmul.f32 %v3238, 1.442695
        %v3321 = vpow.pop %v3320
        %v3322 = vmul.f32 %v3239, 1.442695
        %v3323 = vpow.pop %v3322
        %v3324 = vmul.f32 %v3240, 1.442695
        %v3325 = vpow.pop %v3324
        %v3326 = vmul.f32 %v3241, 1.442695
        %v3327 = vpow.pop %v3326
        %v3328 = vmul.f32 %v3242, 1.442695
        %v3329 = vpow.pop %v3328
        %v3330 = vmul.f32 %v3243, 1.442695
        %v3331 = vpow.pop %v3330
        %v3332 = vmul.f32 %v3244, 1.442695
        %v3333 = vpow.pop %v3332
        %v3334 = vmul.f32 %v3245, 1.442695
        %v3335 = vpow.pop %v3334
        %v3336 = vmul.f32 %v3246, 1.442695
        %v3337 = vpow.pop %v3336
        %v3338 = vmul.f32 %v3247, 1.442695
        %v3339 = vpow.pop %v3338
        %v3340 = vmul.f32 %v3248, 1.442695
        %v3341 = vpow.pop %v3340
        %v3342 = vmul.f32 %v3249, 1.442695
        %v3343 = vpow.pop %v3342
        %v3344 = vmul.f32 %v3250, 1.442695
        %v3345 = vpow.pop %v3344
        %v3346 = vmul.f32 %v3251, 1.442695
        %v3347 = vpow.pop %v3346
        %v3348 = vmul.f32 %v3252, 1.442695
        %v3349 = vpow.pop %v3348
        %v3350 = vmul.f32 %v3253, 1.442695
        %v3351 = vpow.pop %v3350
        %v3352 = vmul.f32 %v3254, 1.442695
        %v3353 = vpow.pop %v3352
        %v3354 = vmul.f32 %v3255, 1.442695
        %v3355 = vpow.pop %v3354
        %v3356 = vmul.f32 %v3256, 1.442695
        %v3357 = vpow.pop %v3356
        %v3358 = vmul.f32 %v3257, 1.442695
        %v3359 = vpow.pop %v3358
        %v3360 = vmul.f32 %v3258, 1.442695
        %v3361 = vpow.pop %v3360
        %v3362 = vmul.f32 %v3259, 1.442695
        %v3363 = vpow.pop %v3362
        %v3364 = vmul.f32 %v3260, 1.442695
        %v3365 = vpow.pop %v3364
        %v3366 = vmul.f32 %v3261, 1.442695
        %v3367 = vpow.pop %v3366
        %v3368 = vmul.f32 %v3262, 1.442695
        %v3369 = vpow.pop %v3368
        %v3370 = vmul.f32 %v3263, 1.442695
        %v3371 = vpow.pop %v3370
        %v3372 = vmul.f32 %v3264, 1.442695
        %v3373 = vpow.pop %v3372
        %v3374 = vmul.f32 %v3265, 1.442695
        %v3375 = vpow.pop %v3374
        %v3376 = vmul.f32 %v3266, 1.442695
        %v3377 = vpow.pop %v3376
        %v3378 = vmul.f32 %v3267, 1.442695
        %v3379 = vpow.pop %v3378
        %v3380 = vmul.f32 %v3268, 1.442695
        %v3381 = vpow.pop %v3380
        %v3382 = vmul.f32 %v3269, 1.442695
        %v3383 = vpow.pop %v3382
        %v3384 = vmul.f32 %v3270, 1.442695
        %v3385 = vpow.pop %v3384
        %v3386 = vmul.f32 %v3271, 1.442695
        %v3387 = vpow.pop %v3386
        %v3388 = vmul.f32 %v3272, 1.442695
        %v3389 = vpow.pop %v3388
        %v3390 = vmul.f32 %v3273, 1.442695
        %v3391 = vpow.pop %v3390
        %v3392 = vmul.f32 %v3274, 1.442695
        %v3393 = vpow.pop %v3392
        %v3394 = vmul.f32 %v3275, 1.442695
        %v3395 = vpow.pop %v3394
        %v3396 = vmul.f32 %v3276, 1.442695
        %v3397 = vpow.pop %v3396
        %v3398 = vmul.f32 %v3277, 1.442695
        %v3399 = vpow.pop %v3398
        %v3400 = vmul.f32 %v3278, 1.442695
        %v3401 = vpow.pop %v3400
        %v3402 = vmul.f32 %v3279, 1.442695
        %v3403 = vpow.pop %v3402
        %v3404 = vmul.f32 %v3280, 1.442695
        %v3405 = vpow.pop %v3404
        %v3406 = vmul.f32 %v3281, 1.442695
        %v3407 = vpow.pop %v3406
        %v3408 = vmul.f32 %v3282, 1.442695
        %v3409 = vpow.pop %v3408
        %v3410 = vmul.f32 %v3283, 1.442695
        %v3411 = vpow.pop %v3410
        %v3412 = vadd.f32 %v3285, 1.0
        %v3413 = vadd.f32 %v3287, 1.0
        %v3414 = vadd.f32 %v3289, 1.0
        %v3415 = vadd.f32 %v3291, 1.0
        %v3416 = vadd.f32 %v3293, 1.0
        %v3417 = vadd.f32 %v3295, 1.0
        %v3418 = vadd.f32 %v3297, 1.0
        %v3419 = vadd.f32 %v3299, 1.0
        %v3420 = vadd.f32 %v3301, 1.0
        %v3421 = vadd.f32 %v3303, 1.0
        %v3422 = vadd.f32 %v3305, 1.0
        %v3423 = vadd.f32 %v3307, 1.0
        %v3424 = vadd.f32 %v3309, 1.0
        %v3425 = vadd.f32 %v3311, 1.0
        %v3426 = vadd.f32 %v3313, 1.0
        %v3427 = vadd.f32 %v3315, 1.0
        %v3428 = vadd.f32 %v3317, 1.0
        %v3429 = vadd.f32 %v3319, 1.0
        %v3430 = vadd.f32 %v3321, 1.0
        %v3431 = vadd.f32 %v3323, 1.0
        %v3432 = vadd.f32 %v3325, 1.0
        %v3433 = vadd.f32 %v3327, 1.0
        %v3434 = vadd.f32 %v3329, 1.0
        %v3435 = vadd.f32 %v3331, 1.0
        %v3436 = vadd.f32 %v3333, 1.0
        %v3437 = vadd.f32 %v3335, 1.0
        %v3438 = vadd.f32 %v3337, 1.0
        %v3439 = vadd.f32 %v3339, 1.0
        %v3440 = vadd.f32 %v3341, 1.0
        %v3441 = vadd.f32 %v3343, 1.0
        %v3442 = vadd.f32 %v3345, 1.0
        %v3443 = vadd.f32 %v3347, 1.0
        %v3444 = vadd.f32 %v3349, 1.0
        %v3445 = vadd.f32 %v3351, 1.0
        %v3446 = vadd.f32 %v3353, 1.0
        %v3447 = vadd.f32 %v3355, 1.0
        %v3448 = vadd.f32 %v3357, 1.0
        %v3449 = vadd.f32 %v3359, 1.0
        %v3450 = vadd.f32 %v3361, 1.0
        %v3451 = vadd.f32 %v3363, 1.0
        %v3452 = vadd.f32 %v3365, 1.0
        %v3453 = vadd.f32 %v3367, 1.0
        %v3454 = vadd.f32 %v3369, 1.0
        %v3455 = vadd.f32 %v3371, 1.0
        %v3456 = vadd.f32 %v3373, 1.0
        %v3457 = vadd.f32 %v3375, 1.0
        %v3458 = vadd.f32 %v3377, 1.0
        %v3459 = vadd.f32 %v3379, 1.0
        %v3460 = vadd.f32 %v3381, 1.0
        %v3461 = vadd.f32 %v3383, 1.0
        %v3462 = vadd.f32 %v3385, 1.0
        %v3463 = vadd.f32 %v3387, 1.0
        %v3464 = vadd.f32 %v3389, 1.0
        %v3465 = vadd.f32 %v3391, 1.0
        %v3466 = vadd.f32 %v3393, 1.0
        %v3467 = vadd.f32 %v3395, 1.0
        %v3468 = vadd.f32 %v3397, 1.0
        %v3469 = vadd.f32 %v3399, 1.0
        %v3470 = vadd.f32 %v3401, 1.0
        %v3471 = vadd.f32 %v3403, 1.0
        %v3472 = vadd.f32 %v3405, 1.0
        %v3473 = vadd.f32 %v3407, 1.0
        %v3474 = vadd.f32 %v3409, 1.0
        %v3475 = vadd.f32 %v3411, 1.0
        %v3476 = vrcp.pop %v3412
        %v3477 = vmul.f32 1.0, %v3476
        %v3478 = vrcp.pop %v3413
        %v3479 = vmul.f32 1.0, %v3478
        %v3480 = vrcp.pop %v3414
        %v3481 = vmul.f32 1.0, %v3480
        %v3482 = vrcp.pop %v3415
        %v3483 = vmul.f32 1.0, %v3482
        %v3484 = vrcp.pop %v3416
        %v3485 = vmul.f32 1.0, %v3484
        %v3486 = vrcp.pop %v3417
        %v3487 = vmul.f32 1.0, %v3486
        %v3488 = vrcp.pop %v3418
        %v3489 = vmul.f32 1.0, %v3488
        %v3490 = vrcp.pop %v3419
        %v3491 = vmul.f32 1.0, %v3490
        %v3492 = vrcp.pop %v3420
        %v3493 = vmul.f32 1.0, %v3492
        %v3494 = vrcp.pop %v3421
        %v3495 = vmul.f32 1.0, %v3494
        %v3496 = vrcp.pop %v3422
        %v3497 = vmul.f32 1.0, %v3496
        %v3498 = vrcp.pop %v3423
        %v3499 = vmul.f32 1.0, %v3498
        %v3500 = vrcp.pop %v3424
        %v3501 = vmul.f32 1.0, %v3500
        %v3502 = vrcp.pop %v3425
        %v3503 = vmul.f32 1.0, %v3502
        %v3504 = vrcp.pop %v3426
        %v3505 = vmul.f32 1.0, %v3504
        %v3506 = vrcp.pop %v3427
        %v3507 = vmul.f32 1.0, %v3506
        %v3508 = vrcp.pop %v3428
        %v3509 = vmul.f32 1.0, %v3508
        %v3510 = vrcp.pop %v3429
        %v3511 = vmul.f32 1.0, %v3510
        %v3512 = vrcp.pop %v3430
        %v3513 = vmul.f32 1.0, %v3512
        %v3514 = vrcp.pop %v3431
        %v3515 = vmul.f32 1.0, %v3514
        %v3516 = vrcp.pop %v3432
        %v3517 = vmul.f32 1.0, %v3516
        %v3518 = vrcp.pop %v3433
        %v3519 = vmul.f32 1.0, %v3518
        %v3520 = vrcp.pop %v3434
        %v3521 = vmul.f32 1.0, %v3520
        %v3522 = vrcp.pop %v3435
        %v3523 = vmul.f32 1.0, %v3522
        %v3524 = vrcp.pop %v3436
        %v3525 = vmul.f32 1.0, %v3524
        %v3526 = vrcp.pop %v3437
        %v3527 = vmul.f32 1.0, %v3526
        %v3528 = vrcp.pop %v3438
        %v3529 = vmul.f32 1.0, %v3528
        %v3530 = vrcp.pop %v3439
        %v3531 = vmul.f32 1.0, %v3530
        %v3532 = vrcp.pop %v3440
        %v3533 = vmul.f32 1.0, %v3532
        %v3534 = vrcp.pop %v3441
        %v3535 = vmul.f32 1.0, %v3534
        %v3536 = vrcp.pop %v3442
        %v3537 = vmul.f32 1.0, %v3536
        %v3538 = vrcp.pop %v3443
        %v3539 = vmul.f32 1.0, %v3538
        %v3540 = vrcp.pop %v3444
        %v3541 = vmul.f32 1.0, %v3540
        %v3542 = vrcp.pop %v3445
        %v3543 = vmul.f32 1.0, %v3542
        %v3544 = vrcp.pop %v3446
        %v3545 = vmul.f32 1.0, %v3544
        %v3546 = vrcp.pop %v3447
        %v3547 = vmul.f32 1.0, %v3546
        %v3548 = vrcp.pop %v3448
        %v3549 = vmul.f32 1.0, %v3548
        %v3550 = vrcp.pop %v3449
        %v3551 = vmul.f32 1.0, %v3550
        %v3552 = vrcp.pop %v3450
        %v3553 = vmul.f32 1.0, %v3552
        %v3554 = vrcp.pop %v3451
        %v3555 = vmul.f32 1.0, %v3554
        %v3556 = vrcp.pop %v3452
        %v3557 = vmul.f32 1.0, %v3556
        %v3558 = vrcp.pop %v3453
        %v3559 = vmul.f32 1.0, %v3558
        %v3560 = vrcp.pop %v3454
        %v3561 = vmul.f32 1.0, %v3560
        %v3562 = vrcp.pop %v3455
        %v3563 = vmul.f32 1.0, %v3562
        %v3564 = vrcp.pop %v3456
        %v3565 = vmul.f32 1.0, %v3564
        %v3566 = vrcp.pop %v3457
        %v3567 = vmul.f32 1.0, %v3566
        %v3568 = vrcp.pop %v3458
        %v3569 = vmul.f32 1.0, %v3568
        %v3570 = vrcp.pop %v3459
        %v3571 = vmul.f32 1.0, %v3570
        %v3572 = vrcp.pop %v3460
        %v3573 = vmul.f32 1.0, %v3572
        %v3574 = vrcp.pop %v3461
        %v3575 = vmul.f32 1.0, %v3574
        %v3576 = vrcp.pop %v3462
        %v3577 = vmul.f32 1.0, %v3576
        %v3578 = vrcp.pop %v3463
        %v3579 = vmul.f32 1.0, %v3578
        %v3580 = vrcp.pop %v3464
        %v3581 = vmul.f32 1.0, %v3580
        %v3582 = vrcp.pop %v3465
        %v3583 = vmul.f32 1.0, %v3582
        %v3584 = vrcp.pop %v3466
        %v3585 = vmul.f32 1.0, %v3584
        %v3586 = vrcp.pop %v3467
        %v3587 = vmul.f32 1.0, %v3586
        %v3588 = vrcp.pop %v3468
        %v3589 = vmul.f32 1.0, %v3588
        %v3590 = vrcp.pop %v3469
        %v3591 = vmul.f32 1.0, %v3590
        %v3592 = vrcp.pop %v3470
        %v3593 = vmul.f32 1.0, %v3592
        %v3594 = vrcp.pop %v3471
        %v3595 = vmul.f32 1.0, %v3594
        %v3596 = vrcp.pop %v3472
        %v3597 = vmul.f32 1.0, %v3596
        %v3598 = vrcp.pop %v3473
        %v3599 = vmul.f32 1.0, %v3598
        %v3600 = vrcp.pop %v3474
        %v3601 = vmul.f32 1.0, %v3600
        %v3602 = vrcp.pop %v3475
        %v3603 = vmul.f32 1.0, %v3602
        %v3668 = vlaneseq
        %v3669 = vshrl.u32 %v3668, 7
        %v3670 = vsub.s32 0, %v3669
        %v3671 = vrot.slane %v3477, %v3670
        %v3672 = vlaneseq
        %v3673 = vshrl.u32 %v3672, 7
        %v3674 = vsub.s32 1, %v3673
        %v3675 = vrot.slane %v3477, %v3674
        %v3676 = vlaneseq
        %v3677 = vshrl.u32 %v3676, 7
        %v3678 = vsub.s32 2, %v3677
        %v3679 = vrot.slane %v3477, %v3678
        %v3680 = vlaneseq
        %v3681 = vshrl.u32 %v3680, 7
        %v3682 = vsub.s32 3, %v3681
        %v3683 = vrot.slane %v3477, %v3682
        %v3684 = vlaneseq
        %v3685 = vshrl.u32 %v3684, 7
        %v3686 = vsub.s32 4, %v3685
        %v3687 = vrot.slane %v3477, %v3686
        %v3688 = vlaneseq
        %v3689 = vshrl.u32 %v3688, 7
        %v3690 = vsub.s32 5, %v3689
        %v3691 = vrot.slane %v3477, %v3690
        %v3692 = vlaneseq
        %v3693 = vshrl.u32 %v3692, 7
        %v3694 = vsub.s32 6, %v3693
        %v3695 = vrot.slane %v3477, %v3694
        %v3696 = vlaneseq
        %v3697 = vshrl.u32 %v3696, 7
        %v3698 = vsub.s32 7, %v3697
        %v3699 = vrot.slane %v3477, %v3698
        %v3700 = vlaneseq
        %v3701 = vshrl.u32 %v3700, 7
        %v3702 = vsub.s32 0, %v3701
        %v3703 = vrot.slane %v3479, %v3702
        %v3704 = vlaneseq
        %v3705 = vshrl.u32 %v3704, 7
        %v3706 = vsub.s32 1, %v3705
        %v3707 = vrot.slane %v3479, %v3706
        %v3708 = vlaneseq
        %v3709 = vshrl.u32 %v3708, 7
        %v3710 = vsub.s32 2, %v3709
        %v3711 = vrot.slane %v3479, %v3710
        %v3712 = vlaneseq
        %v3713 = vshrl.u32 %v3712, 7
        %v3714 = vsub.s32 3, %v3713
        %v3715 = vrot.slane %v3479, %v3714
        %v3716 = vlaneseq
        %v3717 = vshrl.u32 %v3716, 7
        %v3718 = vsub.s32 4, %v3717
        %v3719 = vrot.slane %v3479, %v3718
        %v3720 = vlaneseq
        %v3721 = vshrl.u32 %v3720, 7
        %v3722 = vsub.s32 5, %v3721
        %v3723 = vrot.slane %v3479, %v3722
        %v3724 = vlaneseq
        %v3725 = vshrl.u32 %v3724, 7
        %v3726 = vsub.s32 6, %v3725
        %v3727 = vrot.slane %v3479, %v3726
        %v3728 = vlaneseq
        %v3729 = vshrl.u32 %v3728, 7
        %v3730 = vsub.s32 7, %v3729
        %v3731 = vrot.slane %v3479, %v3730
        %v3732 = vlaneseq
        %v3733 = vshrl.u32 %v3732, 7
        %v3734 = vsub.s32 0, %v3733
        %v3735 = vrot.slane %v3481, %v3734
        %v3736 = vlaneseq
        %v3737 = vshrl.u32 %v3736, 7
        %v3738 = vsub.s32 1, %v3737
        %v3739 = vrot.slane %v3481, %v3738
        %v3740 = vlaneseq
        %v3741 = vshrl.u32 %v3740, 7
        %v3742 = vsub.s32 2, %v3741
        %v3743 = vrot.slane %v3481, %v3742
        %v3744 = vlaneseq
        %v3745 = vshrl.u32 %v3744, 7
        %v3746 = vsub.s32 3, %v3745
        %v3747 = vrot.slane %v3481, %v3746
        %v3748 = vlaneseq
        %v3749 = vshrl.u32 %v3748, 7
        %v3750 = vsub.s32 4, %v3749
        %v3751 = vrot.slane %v3481, %v3750
        %v3752 = vlaneseq
        %v3753 = vshrl.u32 %v3752, 7
        %v3754 = vsub.s32 5, %v3753
        %v3755 = vrot.slane %v3481, %v3754
        %v3756 = vlaneseq
        %v3757 = vshrl.u32 %v3756, 7
        %v3758 = vsub.s32 6, %v3757
        %v3759 = vrot.slane %v3481, %v3758
        %v3760 = vlaneseq
        %v3761 = vshrl.u32 %v3760, 7
        %v3762 = vsub.s32 7, %v3761
        %v3763 = vrot.slane %v3481, %v3762
        %v3764 = vlaneseq
        %v3765 = vshrl.u32 %v3764, 7
        %v3766 = vsub.s32 0, %v3765
        %v3767 = vrot.slane %v3483, %v3766
        %v3768 = vlaneseq
        %v3769 = vshrl.u32 %v3768, 7
        %v3770 = vsub.s32 1, %v3769
        %v3771 = vrot.slane %v3483, %v3770
        %v3772 = vlaneseq
        %v3773 = vshrl.u32 %v3772, 7
        %v3774 = vsub.s32 2, %v3773
        %v3775 = vrot.slane %v3483, %v3774
        %v3776 = vlaneseq
        %v3777 = vshrl.u32 %v3776, 7
        %v3778 = vsub.s32 3, %v3777
        %v3779 = vrot.slane %v3483, %v3778
        %v3780 = vlaneseq
        %v3781 = vshrl.u32 %v3780, 7
        %v3782 = vsub.s32 4, %v3781
        %v3783 = vrot.slane %v3483, %v3782
        %v3784 = vlaneseq
        %v3785 = vshrl.u32 %v3784, 7
        %v3786 = vsub.s32 5, %v3785
        %v3787 = vrot.slane %v3483, %v3786
        %v3788 = vlaneseq
        %v3789 = vshrl.u32 %v3788, 7
        %v3790 = vsub.s32 6, %v3789
        %v3791 = vrot.slane %v3483, %v3790
        %v3792 = vlaneseq
        %v3793 = vshrl.u32 %v3792, 7
        %v3794 = vsub.s32 7, %v3793
        %v3795 = vrot.slane %v3483, %v3794
        %v3796 = vlaneseq
        %v3797 = vshrl.u32 %v3796, 7
        %v3798 = vsub.s32 0, %v3797
        %v3799 = vrot.slane %v3485, %v3798
        %v3800 = vlaneseq
        %v3801 = vshrl.u32 %v3800, 7
        %v3802 = vsub.s32 1, %v3801
        %v3803 = vrot.slane %v3485, %v3802
        %v3804 = vlaneseq
        %v3805 = vshrl.u32 %v3804, 7
        %v3806 = vsub.s32 2, %v3805
        %v3807 = vrot.slane %v3485, %v3806
        %v3808 = vlaneseq
        %v3809 = vshrl.u32 %v3808, 7
        %v3810 = vsub.s32 3, %v3809
        %v3811 = vrot.slane %v3485, %v3810
        %v3812 = vlaneseq
        %v3813 = vshrl.u32 %v3812, 7
        %v3814 = vsub.s32 4, %v3813
        %v3815 = vrot.slane %v3485, %v3814
        %v3816 = vlaneseq
        %v3817 = vshrl.u32 %v3816, 7
        %v3818 = vsub.s32 5, %v3817
        %v3819 = vrot.slane %v3485, %v3818
        %v3820 = vlaneseq
        %v3821 = vshrl.u32 %v3820, 7
        %v3822 = vsub.s32 6, %v3821
        %v3823 = vrot.slane %v3485, %v3822
        %v3824 = vlaneseq
        %v3825 = vshrl.u32 %v3824, 7
        %v3826 = vsub.s32 7, %v3825
        %v3827 = vrot.slane %v3485, %v3826
        %v3828 = vlaneseq
        %v3829 = vshrl.u32 %v3828, 7
        %v3830 = vsub.s32 0, %v3829
        %v3831 = vrot.slane %v3487, %v3830
        %v3832 = vlaneseq
        %v3833 = vshrl.u32 %v3832, 7
        %v3834 = vsub.s32 1, %v3833
        %v3835 = vrot.slane %v3487, %v3834
        %v3836 = vlaneseq
        %v3837 = vshrl.u32 %v3836, 7
        %v3838 = vsub.s32 2, %v3837
        %v3839 = vrot.slane %v3487, %v3838
        %v3840 = vlaneseq
        %v3841 = vshrl.u32 %v3840, 7
        %v3842 = vsub.s32 3, %v3841
        %v3843 = vrot.slane %v3487, %v3842
        %v3844 = vlaneseq
        %v3845 = vshrl.u32 %v3844, 7
        %v3846 = vsub.s32 4, %v3845
        %v3847 = vrot.slane %v3487, %v3846
        %v3848 = vlaneseq
        %v3849 = vshrl.u32 %v3848, 7
        %v3850 = vsub.s32 5, %v3849
        %v3851 = vrot.slane %v3487, %v3850
        %v3852 = vlaneseq
        %v3853 = vshrl.u32 %v3852, 7
        %v3854 = vsub.s32 6, %v3853
        %v3855 = vrot.slane %v3487, %v3854
        %v3856 = vlaneseq
        %v3857 = vshrl.u32 %v3856, 7
        %v3858 = vsub.s32 7, %v3857
        %v3859 = vrot.slane %v3487, %v3858
        %v3860 = vlaneseq
        %v3861 = vshrl.u32 %v3860, 7
        %v3862 = vsub.s32 0, %v3861
        %v3863 = vrot.slane %v3489, %v3862
        %v3864 = vlaneseq
        %v3865 = vshrl.u32 %v3864, 7
        %v3866 = vsub.s32 1, %v3865
        %v3867 = vrot.slane %v3489, %v3866
        %v3868 = vlaneseq
        %v3869 = vshrl.u32 %v3868, 7
        %v3870 = vsub.s32 2, %v3869
        %v3871 = vrot.slane %v3489, %v3870
        %v3872 = vlaneseq
        %v3873 = vshrl.u32 %v3872, 7
        %v3874 = vsub.s32 3, %v3873
        %v3875 = vrot.slane %v3489, %v3874
        %v3876 = vlaneseq
        %v3877 = vshrl.u32 %v3876, 7
        %v3878 = vsub.s32 4, %v3877
        %v3879 = vrot.slane %v3489, %v3878
        %v3880 = vlaneseq
        %v3881 = vshrl.u32 %v3880, 7
        %v3882 = vsub.s32 5, %v3881
        %v3883 = vrot.slane %v3489, %v3882
        %v3884 = vlaneseq
        %v3885 = vshrl.u32 %v3884, 7
        %v3886 = vsub.s32 6, %v3885
        %v3887 = vrot.slane %v3489, %v3886
        %v3888 = vlaneseq
        %v3889 = vshrl.u32 %v3888, 7
        %v3890 = vsub.s32 7, %v3889
        %v3891 = vrot.slane %v3489, %v3890
        %v3892 = vlaneseq
        %v3893 = vshrl.u32 %v3892, 7
        %v3894 = vsub.s32 0, %v3893
        %v3895 = vrot.slane %v3491, %v3894
        %v3896 = vlaneseq
        %v3897 = vshrl.u32 %v3896, 7
        %v3898 = vsub.s32 1, %v3897
        %v3899 = vrot.slane %v3491, %v3898
        %v3900 = vlaneseq
        %v3901 = vshrl.u32 %v3900, 7
        %v3902 = vsub.s32 2, %v3901
        %v3903 = vrot.slane %v3491, %v3902
        %v3904 = vlaneseq
        %v3905 = vshrl.u32 %v3904, 7
        %v3906 = vsub.s32 3, %v3905
        %v3907 = vrot.slane %v3491, %v3906
        %v3908 = vlaneseq
        %v3909 = vshrl.u32 %v3908, 7
        %v3910 = vsub.s32 4, %v3909
        %v3911 = vrot.slane %v3491, %v3910
        %v3912 = vlaneseq
        %v3913 = vshrl.u32 %v3912, 7
        %v3914 = vsub.s32 5, %v3913
        %v3915 = vrot.slane %v3491, %v3914
        %v3916 = vlaneseq
        %v3917 = vshrl.u32 %v3916, 7
        %v3918 = vsub.s32 6, %v3917
        %v3919 = vrot.slane %v3491, %v3918
        %v3920 = vlaneseq
        %v3921 = vshrl.u32 %v3920, 7
        %v3922 = vsub.s32 7, %v3921
        %v3923 = vrot.slane %v3491, %v3922
        %v3924 = vlaneseq
        %v3925 = vshrl.u32 %v3924, 7
        %v3926 = vsub.s32 0, %v3925
        %v3927 = vrot.slane %v3493, %v3926
        %v3928 = vlaneseq
        %v3929 = vshrl.u32 %v3928, 7
        %v3930 = vsub.s32 1, %v3929
        %v3931 = vrot.slane %v3493, %v3930
        %v3932 = vlaneseq
        %v3933 = vshrl.u32 %v3932, 7
        %v3934 = vsub.s32 2, %v3933
        %v3935 = vrot.slane %v3493, %v3934
        %v3936 = vlaneseq
        %v3937 = vshrl.u32 %v3936, 7
        %v3938 = vsub.s32 3, %v3937
        %v3939 = vrot.slane %v3493, %v3938
        %v3940 = vlaneseq
        %v3941 = vshrl.u32 %v3940, 7
        %v3942 = vsub.s32 4, %v3941
        %v3943 = vrot.slane %v3493, %v3942
        %v3944 = vlaneseq
        %v3945 = vshrl.u32 %v3944, 7
        %v3946 = vsub.s32 5, %v3945
        %v3947 = vrot.slane %v3493, %v3946
        %v3948 = vlaneseq
        %v3949 = vshrl.u32 %v3948, 7
        %v3950 = vsub.s32 6, %v3949
        %v3951 = vrot.slane %v3493, %v3950
        %v3952 = vlaneseq
        %v3953 = vshrl.u32 %v3952, 7
        %v3954 = vsub.s32 7, %v3953
        %v3955 = vrot.slane %v3493, %v3954
        %v3956 = vlaneseq
        %v3957 = vshrl.u32 %v3956, 7
        %v3958 = vsub.s32 0, %v3957
        %v3959 = vrot.slane %v3495, %v3958
        %v3960 = vlaneseq
        %v3961 = vshrl.u32 %v3960, 7
        %v3962 = vsub.s32 1, %v3961
        %v3963 = vrot.slane %v3495, %v3962
        %v3964 = vlaneseq
        %v3965 = vshrl.u32 %v3964, 7
        %v3966 = vsub.s32 2, %v3965
        %v3967 = vrot.slane %v3495, %v3966
        %v3968 = vlaneseq
        %v3969 = vshrl.u32 %v3968, 7
        %v3970 = vsub.s32 3, %v3969
        %v3971 = vrot.slane %v3495, %v3970
        %v3972 = vlaneseq
        %v3973 = vshrl.u32 %v3972, 7
        %v3974 = vsub.s32 4, %v3973
        %v3975 = vrot.slane %v3495, %v3974
        %v3976 = vlaneseq
        %v3977 = vshrl.u32 %v3976, 7
        %v3978 = vsub.s32 5, %v3977
        %v3979 = vrot.slane %v3495, %v3978
        %v3980 = vlaneseq
        %v3981 = vshrl.u32 %v3980, 7
        %v3982 = vsub.s32 6, %v3981
        %v3983 = vrot.slane %v3495, %v3982
        %v3984 = vlaneseq
        %v3985 = vshrl.u32 %v3984, 7
        %v3986 = vsub.s32 7, %v3985
        %v3987 = vrot.slane %v3495, %v3986
        %v3988 = vlaneseq
        %v3989 = vshrl.u32 %v3988, 7
        %v3990 = vsub.s32 0, %v3989
        %v3991 = vrot.slane %v3497, %v3990
        %v3992 = vlaneseq
        %v3993 = vshrl.u32 %v3992, 7
        %v3994 = vsub.s32 1, %v3993
        %v3995 = vrot.slane %v3497, %v3994
        %v3996 = vlaneseq
        %v3997 = vshrl.u32 %v3996, 7
        %v3998 = vsub.s32 2, %v3997
        %v3999 = vrot.slane %v3497, %v3998
        %v4000 = vlaneseq
        %v4001 = vshrl.u32 %v4000, 7
        %v4002 = vsub.s32 3, %v4001
        %v4003 = vrot.slane %v3497, %v4002
        %v4004 = vlaneseq
        %v4005 = vshrl.u32 %v4004, 7
        %v4006 = vsub.s32 4, %v4005
        %v4007 = vrot.slane %v3497, %v4006
        %v4008 = vlaneseq
        %v4009 = vshrl.u32 %v4008, 7
        %v4010 = vsub.s32 5, %v4009
        %v4011 = vrot.slane %v3497, %v4010
        %v4012 = vlaneseq
        %v4013 = vshrl.u32 %v4012, 7
        %v4014 = vsub.s32 6, %v4013
        %v4015 = vrot.slane %v3497, %v4014
        %v4016 = vlaneseq
        %v4017 = vshrl.u32 %v4016, 7
        %v4018 = vsub.s32 7, %v4017
        %v4019 = vrot.slane %v3497, %v4018
        %v4020 = vlaneseq
        %v4021 = vshrl.u32 %v4020, 7
        %v4022 = vsub.s32 0, %v4021
        %v4023 = vrot.slane %v3499, %v4022
        %v4024 = vlaneseq
        %v4025 = vshrl.u32 %v4024, 7
        %v4026 = vsub.s32 1, %v4025
        %v4027 = vrot.slane %v3499, %v4026
        %v4028 = vlaneseq
        %v4029 = vshrl.u32 %v4028, 7
        %v4030 = vsub.s32 2, %v4029
        %v4031 = vrot.slane %v3499, %v4030
        %v4032 = vlaneseq
        %v4033 = vshrl.u32 %v4032, 7
        %v4034 = vsub.s32 3, %v4033
        %v4035 = vrot.slane %v3499, %v4034
        %v4036 = vlaneseq
        %v4037 = vshrl.u32 %v4036, 7
        %v4038 = vsub.s32 4, %v4037
        %v4039 = vrot.slane %v3499, %v4038
        %v4040 = vlaneseq
        %v4041 = vshrl.u32 %v4040, 7
        %v4042 = vsub.s32 5, %v4041
        %v4043 = vrot.slane %v3499, %v4042
        %v4044 = vlaneseq
        %v4045 = vshrl.u32 %v4044, 7
        %v4046 = vsub.s32 6, %v4045
        %v4047 = vrot.slane %v3499, %v4046
        %v4048 = vlaneseq
        %v4049 = vshrl.u32 %v4048, 7
        %v4050 = vsub.s32 7, %v4049
        %v4051 = vrot.slane %v3499, %v4050
        %v4052 = vlaneseq
        %v4053 = vshrl.u32 %v4052, 7
        %v4054 = vsub.s32 0, %v4053
        %v4055 = vrot.slane %v3501, %v4054
        %v4056 = vlaneseq
        %v4057 = vshrl.u32 %v4056, 7
        %v4058 = vsub.s32 1, %v4057
        %v4059 = vrot.slane %v3501, %v4058
        %v4060 = vlaneseq
        %v4061 = vshrl.u32 %v4060, 7
        %v4062 = vsub.s32 2, %v4061
        %v4063 = vrot.slane %v3501, %v4062
        %v4064 = vlaneseq
        %v4065 = vshrl.u32 %v4064, 7
        %v4066 = vsub.s32 3, %v4065
        %v4067 = vrot.slane %v3501, %v4066
        %v4068 = vlaneseq
        %v4069 = vshrl.u32 %v4068, 7
        %v4070 = vsub.s32 4, %v4069
        %v4071 = vrot.slane %v3501, %v4070
        %v4072 = vlaneseq
        %v4073 = vshrl.u32 %v4072, 7
        %v4074 = vsub.s32 5, %v4073
        %v4075 = vrot.slane %v3501, %v4074
        %v4076 = vlaneseq
        %v4077 = vshrl.u32 %v4076, 7
        %v4078 = vsub.s32 6, %v4077
        %v4079 = vrot.slane %v3501, %v4078
        %v4080 = vlaneseq
        %v4081 = vshrl.u32 %v4080, 7
        %v4082 = vsub.s32 7, %v4081
        %v4083 = vrot.slane %v3501, %v4082
        %v4084 = vlaneseq
        %v4085 = vshrl.u32 %v4084, 7
        %v4086 = vsub.s32 0, %v4085
        %v4087 = vrot.slane %v3503, %v4086
        %v4088 = vlaneseq
        %v4089 = vshrl.u32 %v4088, 7
        %v4090 = vsub.s32 1, %v4089
        %v4091 = vrot.slane %v3503, %v4090
        %v4092 = vlaneseq
        %v4093 = vshrl.u32 %v4092, 7
        %v4094 = vsub.s32 2, %v4093
        %v4095 = vrot.slane %v3503, %v4094
        %v4096 = vlaneseq
        %v4097 = vshrl.u32 %v4096, 7
        %v4098 = vsub.s32 3, %v4097
        %v4099 = vrot.slane %v3503, %v4098
        %v4100 = vlaneseq
        %v4101 = vshrl.u32 %v4100, 7
        %v4102 = vsub.s32 4, %v4101
        %v4103 = vrot.slane %v3503, %v4102
        %v4104 = vlaneseq
        %v4105 = vshrl.u32 %v4104, 7
        %v4106 = vsub.s32 5, %v4105
        %v4107 = vrot.slane %v3503, %v4106
        %v4108 = vlaneseq
        %v4109 = vshrl.u32 %v4108, 7
        %v4110 = vsub.s32 6, %v4109
        %v4111 = vrot.slane %v3503, %v4110
        %v4112 = vlaneseq
        %v4113 = vshrl.u32 %v4112, 7
        %v4114 = vsub.s32 7, %v4113
        %v4115 = vrot.slane %v3503, %v4114
        %v4116 = vlaneseq
        %v4117 = vshrl.u32 %v4116, 7
        %v4118 = vsub.s32 0, %v4117
        %v4119 = vrot.slane %v3505, %v4118
        %v4120 = vlaneseq
        %v4121 = vshrl.u32 %v4120, 7
        %v4122 = vsub.s32 1, %v4121
        %v4123 = vrot.slane %v3505, %v4122
        %v4124 = vlaneseq
        %v4125 = vshrl.u32 %v4124, 7
        %v4126 = vsub.s32 2, %v4125
        %v4127 = vrot.slane %v3505, %v4126
        %v4128 = vlaneseq
        %v4129 = vshrl.u32 %v4128, 7
        %v4130 = vsub.s32 3, %v4129
        %v4131 = vrot.slane %v3505, %v4130
        %v4132 = vlaneseq
        %v4133 = vshrl.u32 %v4132, 7
        %v4134 = vsub.s32 4, %v4133
        %v4135 = vrot.slane %v3505, %v4134
        %v4136 = vlaneseq
        %v4137 = vshrl.u32 %v4136, 7
        %v4138 = vsub.s32 5, %v4137
        %v4139 = vrot.slane %v3505, %v4138
        %v4140 = vlaneseq
        %v4141 = vshrl.u32 %v4140, 7
        %v4142 = vsub.s32 6, %v4141
        %v4143 = vrot.slane %v3505, %v4142
        %v4144 = vlaneseq
        %v4145 = vshrl.u32 %v4144, 7
        %v4146 = vsub.s32 7, %v4145
        %v4147 = vrot.slane %v3505, %v4146
        %v4148 = vlaneseq
        %v4149 = vshrl.u32 %v4148, 7
        %v4150 = vsub.s32 0, %v4149
        %v4151 = vrot.slane %v3507, %v4150
        %v4152 = vlaneseq
        %v4153 = vshrl.u32 %v4152, 7
        %v4154 = vsub.s32 1, %v4153
        %v4155 = vrot.slane %v3507, %v4154
        %v4156 = vlaneseq
        %v4157 = vshrl.u32 %v4156, 7
        %v4158 = vsub.s32 2, %v4157
        %v4159 = vrot.slane %v3507, %v4158
        %v4160 = vlaneseq
        %v4161 = vshrl.u32 %v4160, 7
        %v4162 = vsub.s32 3, %v4161
        %v4163 = vrot.slane %v3507, %v4162
        %v4164 = vlaneseq
        %v4165 = vshrl.u32 %v4164, 7
        %v4166 = vsub.s32 4, %v4165
        %v4167 = vrot.slane %v3507, %v4166
        %v4168 = vlaneseq
        %v4169 = vshrl.u32 %v4168, 7
        %v4170 = vsub.s32 5, %v4169
        %v4171 = vrot.slane %v3507, %v4170
        %v4172 = vlaneseq
        %v4173 = vshrl.u32 %v4172, 7
        %v4174 = vsub.s32 6, %v4173
        %v4175 = vrot.slane %v3507, %v4174
        %v4176 = vlaneseq
        %v4177 = vshrl.u32 %v4176, 7
        %v4178 = vsub.s32 7, %v4177
        %v4179 = vrot.slane %v3507, %v4178
        %v4180 = vlaneseq
        %v4181 = vshrl.u32 %v4180, 7
        %v4182 = vsub.s32 0, %v4181
        %v4183 = vrot.slane %v3509, %v4182
        %v4184 = vlaneseq
        %v4185 = vshrl.u32 %v4184, 7
        %v4186 = vsub.s32 1, %v4185
        %v4187 = vrot.slane %v3509, %v4186
        %v4188 = vlaneseq
        %v4189 = vshrl.u32 %v4188, 7
        %v4190 = vsub.s32 2, %v4189
        %v4191 = vrot.slane %v3509, %v4190
        %v4192 = vlaneseq
        %v4193 = vshrl.u32 %v4192, 7
        %v4194 = vsub.s32 3, %v4193
        %v4195 = vrot.slane %v3509, %v4194
        %v4196 = vlaneseq
        %v4197 = vshrl.u32 %v4196, 7
        %v4198 = vsub.s32 4, %v4197
        %v4199 = vrot.slane %v3509, %v4198
        %v4200 = vlaneseq
        %v4201 = vshrl.u32 %v4200, 7
        %v4202 = vsub.s32 5, %v4201
        %v4203 = vrot.slane %v3509, %v4202
        %v4204 = vlaneseq
        %v4205 = vshrl.u32 %v4204, 7
        %v4206 = vsub.s32 6, %v4205
        %v4207 = vrot.slane %v3509, %v4206
        %v4208 = vlaneseq
        %v4209 = vshrl.u32 %v4208, 7
        %v4210 = vsub.s32 7, %v4209
        %v4211 = vrot.slane %v3509, %v4210
        %v4212 = vlaneseq
        %v4213 = vshrl.u32 %v4212, 7
        %v4214 = vsub.s32 0, %v4213
        %v4215 = vrot.slane %v3511, %v4214
        %v4216 = vlaneseq
        %v4217 = vshrl.u32 %v4216, 7
        %v4218 = vsub.s32 1, %v4217
        %v4219 = vrot.slane %v3511, %v4218
        %v4220 = vlaneseq
        %v4221 = vshrl.u32 %v4220, 7
        %v4222 = vsub.s32 2, %v4221
        %v4223 = vrot.slane %v3511, %v4222
        %v4224 = vlaneseq
        %v4225 = vshrl.u32 %v4224, 7
        %v4226 = vsub.s32 3, %v4225
        %v4227 = vrot.slane %v3511, %v4226
        %v4228 = vlaneseq
        %v4229 = vshrl.u32 %v4228, 7
        %v4230 = vsub.s32 4, %v4229
        %v4231 = vrot.slane %v3511, %v4230
        %v4232 = vlaneseq
        %v4233 = vshrl.u32 %v4232, 7
        %v4234 = vsub.s32 5, %v4233
        %v4235 = vrot.slane %v3511, %v4234
        %v4236 = vlaneseq
        %v4237 = vshrl.u32 %v4236, 7
        %v4238 = vsub.s32 6, %v4237
        %v4239 = vrot.slane %v3511, %v4238
        %v4240 = vlaneseq
        %v4241 = vshrl.u32 %v4240, 7
        %v4242 = vsub.s32 7, %v4241
        %v4243 = vrot.slane %v3511, %v4242
        %v4244 = vlaneseq
        %v4245 = vshrl.u32 %v4244, 7
        %v4246 = vsub.s32 0, %v4245
        %v4247 = vrot.slane %v3513, %v4246
        %v4248 = vlaneseq
        %v4249 = vshrl.u32 %v4248, 7
        %v4250 = vsub.s32 1, %v4249
        %v4251 = vrot.slane %v3513, %v4250
        %v4252 = vlaneseq
        %v4253 = vshrl.u32 %v4252, 7
        %v4254 = vsub.s32 2, %v4253
        %v4255 = vrot.slane %v3513, %v4254
        %v4256 = vlaneseq
        %v4257 = vshrl.u32 %v4256, 7
        %v4258 = vsub.s32 3, %v4257
        %v4259 = vrot.slane %v3513, %v4258
        %v4260 = vlaneseq
        %v4261 = vshrl.u32 %v4260, 7
        %v4262 = vsub.s32 4, %v4261
        %v4263 = vrot.slane %v3513, %v4262
        %v4264 = vlaneseq
        %v4265 = vshrl.u32 %v4264, 7
        %v4266 = vsub.s32 5, %v4265
        %v4267 = vrot.slane %v3513, %v4266
        %v4268 = vlaneseq
        %v4269 = vshrl.u32 %v4268, 7
        %v4270 = vsub.s32 6, %v4269
        %v4271 = vrot.slane %v3513, %v4270
        %v4272 = vlaneseq
        %v4273 = vshrl.u32 %v4272, 7
        %v4274 = vsub.s32 7, %v4273
        %v4275 = vrot.slane %v3513, %v4274
        %v4276 = vlaneseq
        %v4277 = vshrl.u32 %v4276, 7
        %v4278 = vsub.s32 0, %v4277
        %v4279 = vrot.slane %v3515, %v4278
        %v4280 = vlaneseq
        %v4281 = vshrl.u32 %v4280, 7
        %v4282 = vsub.s32 1, %v4281
        %v4283 = vrot.slane %v3515, %v4282
        %v4284 = vlaneseq
        %v4285 = vshrl.u32 %v4284, 7
        %v4286 = vsub.s32 2, %v4285
        %v4287 = vrot.slane %v3515, %v4286
        %v4288 = vlaneseq
        %v4289 = vshrl.u32 %v4288, 7
        %v4290 = vsub.s32 3, %v4289
        %v4291 = vrot.slane %v3515, %v4290
        %v4292 = vlaneseq
        %v4293 = vshrl.u32 %v4292, 7
        %v4294 = vsub.s32 4, %v4293
        %v4295 = vrot.slane %v3515, %v4294
        %v4296 = vlaneseq
        %v4297 = vshrl.u32 %v4296, 7
        %v4298 = vsub.s32 5, %v4297
        %v4299 = vrot.slane %v3515, %v4298
        %v4300 = vlaneseq
        %v4301 = vshrl.u32 %v4300, 7
        %v4302 = vsub.s32 6, %v4301
        %v4303 = vrot.slane %v3515, %v4302
        %v4304 = vlaneseq
        %v4305 = vshrl.u32 %v4304, 7
        %v4306 = vsub.s32 7, %v4305
        %v4307 = vrot.slane %v3515, %v4306
        %v4308 = vlaneseq
        %v4309 = vshrl.u32 %v4308, 7
        %v4310 = vsub.s32 0, %v4309
        %v4311 = vrot.slane %v3517, %v4310
        %v4312 = vlaneseq
        %v4313 = vshrl.u32 %v4312, 7
        %v4314 = vsub.s32 1, %v4313
        %v4315 = vrot.slane %v3517, %v4314
        %v4316 = vlaneseq
        %v4317 = vshrl.u32 %v4316, 7
        %v4318 = vsub.s32 2, %v4317
        %v4319 = vrot.slane %v3517, %v4318
        %v4320 = vlaneseq
        %v4321 = vshrl.u32 %v4320, 7
        %v4322 = vsub.s32 3, %v4321
        %v4323 = vrot.slane %v3517, %v4322
        %v4324 = vlaneseq
        %v4325 = vshrl.u32 %v4324, 7
        %v4326 = vsub.s32 4, %v4325
        %v4327 = vrot.slane %v3517, %v4326
        %v4328 = vlaneseq
        %v4329 = vshrl.u32 %v4328, 7
        %v4330 = vsub.s32 5, %v4329
        %v4331 = vrot.slane %v3517, %v4330
        %v4332 = vlaneseq
        %v4333 = vshrl.u32 %v4332, 7
        %v4334 = vsub.s32 6, %v4333
        %v4335 = vrot.slane %v3517, %v4334
        %v4336 = vlaneseq
        %v4337 = vshrl.u32 %v4336, 7
        %v4338 = vsub.s32 7, %v4337
        %v4339 = vrot.slane %v3517, %v4338
        %v4340 = vlaneseq
        %v4341 = vshrl.u32 %v4340, 7
        %v4342 = vsub.s32 0, %v4341
        %v4343 = vrot.slane %v3519, %v4342
        %v4344 = vlaneseq
        %v4345 = vshrl.u32 %v4344, 7
        %v4346 = vsub.s32 1, %v4345
        %v4347 = vrot.slane %v3519, %v4346
        %v4348 = vlaneseq
        %v4349 = vshrl.u32 %v4348, 7
        %v4350 = vsub.s32 2, %v4349
        %v4351 = vrot.slane %v3519, %v4350
        %v4352 = vlaneseq
        %v4353 = vshrl.u32 %v4352, 7
        %v4354 = vsub.s32 3, %v4353
        %v4355 = vrot.slane %v3519, %v4354
        %v4356 = vlaneseq
        %v4357 = vshrl.u32 %v4356, 7
        %v4358 = vsub.s32 4, %v4357
        %v4359 = vrot.slane %v3519, %v4358
        %v4360 = vlaneseq
        %v4361 = vshrl.u32 %v4360, 7
        %v4362 = vsub.s32 5, %v4361
        %v4363 = vrot.slane %v3519, %v4362
        %v4364 = vlaneseq
        %v4365 = vshrl.u32 %v4364, 7
        %v4366 = vsub.s32 6, %v4365
        %v4367 = vrot.slane %v3519, %v4366
        %v4368 = vlaneseq
        %v4369 = vshrl.u32 %v4368, 7
        %v4370 = vsub.s32 7, %v4369
        %v4371 = vrot.slane %v3519, %v4370
        %v4372 = vlaneseq
        %v4373 = vshrl.u32 %v4372, 7
        %v4374 = vsub.s32 0, %v4373
        %v4375 = vrot.slane %v3521, %v4374
        %v4376 = vlaneseq
        %v4377 = vshrl.u32 %v4376, 7
        %v4378 = vsub.s32 1, %v4377
        %v4379 = vrot.slane %v3521, %v4378
        %v4380 = vlaneseq
        %v4381 = vshrl.u32 %v4380, 7
        %v4382 = vsub.s32 2, %v4381
        %v4383 = vrot.slane %v3521, %v4382
        %v4384 = vlaneseq
        %v4385 = vshrl.u32 %v4384, 7
        %v4386 = vsub.s32 3, %v4385
        %v4387 = vrot.slane %v3521, %v4386
        %v4388 = vlaneseq
        %v4389 = vshrl.u32 %v4388, 7
        %v4390 = vsub.s32 4, %v4389
        %v4391 = vrot.slane %v3521, %v4390
        %v4392 = vlaneseq
        %v4393 = vshrl.u32 %v4392, 7
        %v4394 = vsub.s32 5, %v4393
        %v4395 = vrot.slane %v3521, %v4394
        %v4396 = vlaneseq
        %v4397 = vshrl.u32 %v4396, 7
        %v4398 = vsub.s32 6, %v4397
        %v4399 = vrot.slane %v3521, %v4398
        %v4400 = vlaneseq
        %v4401 = vshrl.u32 %v4400, 7
        %v4402 = vsub.s32 7, %v4401
        %v4403 = vrot.slane %v3521, %v4402
        %v4404 = vlaneseq
        %v4405 = vshrl.u32 %v4404, 7
        %v4406 = vsub.s32 0, %v4405
        %v4407 = vrot.slane %v3523, %v4406
        %v4408 = vlaneseq
        %v4409 = vshrl.u32 %v4408, 7
        %v4410 = vsub.s32 1, %v4409
        %v4411 = vrot.slane %v3523, %v4410
        %v4412 = vlaneseq
        %v4413 = vshrl.u32 %v4412, 7
        %v4414 = vsub.s32 2, %v4413
        %v4415 = vrot.slane %v3523, %v4414
        %v4416 = vlaneseq
        %v4417 = vshrl.u32 %v4416, 7
        %v4418 = vsub.s32 3, %v4417
        %v4419 = vrot.slane %v3523, %v4418
        %v4420 = vlaneseq
        %v4421 = vshrl.u32 %v4420, 7
        %v4422 = vsub.s32 4, %v4421
        %v4423 = vrot.slane %v3523, %v4422
        %v4424 = vlaneseq
        %v4425 = vshrl.u32 %v4424, 7
        %v4426 = vsub.s32 5, %v4425
        %v4427 = vrot.slane %v3523, %v4426
        %v4428 = vlaneseq
        %v4429 = vshrl.u32 %v4428, 7
        %v4430 = vsub.s32 6, %v4429
        %v4431 = vrot.slane %v3523, %v4430
        %v4432 = vlaneseq
        %v4433 = vshrl.u32 %v4432, 7
        %v4434 = vsub.s32 7, %v4433
        %v4435 = vrot.slane %v3523, %v4434
        %v4436 = vlaneseq
        %v4437 = vshrl.u32 %v4436, 7
        %v4438 = vsub.s32 0, %v4437
        %v4439 = vrot.slane %v3525, %v4438
        %v4440 = vlaneseq
        %v4441 = vshrl.u32 %v4440, 7
        %v4442 = vsub.s32 1, %v4441
        %v4443 = vrot.slane %v3525, %v4442
        %v4444 = vlaneseq
        %v4445 = vshrl.u32 %v4444, 7
        %v4446 = vsub.s32 2, %v4445
        %v4447 = vrot.slane %v3525, %v4446
        %v4448 = vlaneseq
        %v4449 = vshrl.u32 %v4448, 7
        %v4450 = vsub.s32 3, %v4449
        %v4451 = vrot.slane %v3525, %v4450
        %v4452 = vlaneseq
        %v4453 = vshrl.u32 %v4452, 7
        %v4454 = vsub.s32 4, %v4453
        %v4455 = vrot.slane %v3525, %v4454
        %v4456 = vlaneseq
        %v4457 = vshrl.u32 %v4456, 7
        %v4458 = vsub.s32 5, %v4457
        %v4459 = vrot.slane %v3525, %v4458
        %v4460 = vlaneseq
        %v4461 = vshrl.u32 %v4460, 7
        %v4462 = vsub.s32 6, %v4461
        %v4463 = vrot.slane %v3525, %v4462
        %v4464 = vlaneseq
        %v4465 = vshrl.u32 %v4464, 7
        %v4466 = vsub.s32 7, %v4465
        %v4467 = vrot.slane %v3525, %v4466
        %v4468 = vlaneseq
        %v4469 = vshrl.u32 %v4468, 7
        %v4470 = vsub.s32 0, %v4469
        %v4471 = vrot.slane %v3527, %v4470
        %v4472 = vlaneseq
        %v4473 = vshrl.u32 %v4472, 7
        %v4474 = vsub.s32 1, %v4473
        %v4475 = vrot.slane %v3527, %v4474
        %v4476 = vlaneseq
        %v4477 = vshrl.u32 %v4476, 7
        %v4478 = vsub.s32 2, %v4477
        %v4479 = vrot.slane %v3527, %v4478
        %v4480 = vlaneseq
        %v4481 = vshrl.u32 %v4480, 7
        %v4482 = vsub.s32 3, %v4481
        %v4483 = vrot.slane %v3527, %v4482
        %v4484 = vlaneseq
        %v4485 = vshrl.u32 %v4484, 7
        %v4486 = vsub.s32 4, %v4485
        %v4487 = vrot.slane %v3527, %v4486
        %v4488 = vlaneseq
        %v4489 = vshrl.u32 %v4488, 7
        %v4490 = vsub.s32 5, %v4489
        %v4491 = vrot.slane %v3527, %v4490
        %v4492 = vlaneseq
        %v4493 = vshrl.u32 %v4492, 7
        %v4494 = vsub.s32 6, %v4493
        %v4495 = vrot.slane %v3527, %v4494
        %v4496 = vlaneseq
        %v4497 = vshrl.u32 %v4496, 7
        %v4498 = vsub.s32 7, %v4497
        %v4499 = vrot.slane %v3527, %v4498
        %v4500 = vlaneseq
        %v4501 = vshrl.u32 %v4500, 7
        %v4502 = vsub.s32 0, %v4501
        %v4503 = vrot.slane %v3529, %v4502
        %v4504 = vlaneseq
        %v4505 = vshrl.u32 %v4504, 7
        %v4506 = vsub.s32 1, %v4505
        %v4507 = vrot.slane %v3529, %v4506
        %v4508 = vlaneseq
        %v4509 = vshrl.u32 %v4508, 7
        %v4510 = vsub.s32 2, %v4509
        %v4511 = vrot.slane %v3529, %v4510
        %v4512 = vlaneseq
        %v4513 = vshrl.u32 %v4512, 7
        %v4514 = vsub.s32 3, %v4513
        %v4515 = vrot.slane %v3529, %v4514
        %v4516 = vlaneseq
        %v4517 = vshrl.u32 %v4516, 7
        %v4518 = vsub.s32 4, %v4517
        %v4519 = vrot.slane %v3529, %v4518
        %v4520 = vlaneseq
        %v4521 = vshrl.u32 %v4520, 7
        %v4522 = vsub.s32 5, %v4521
        %v4523 = vrot.slane %v3529, %v4522
        %v4524 = vlaneseq
        %v4525 = vshrl.u32 %v4524, 7
        %v4526 = vsub.s32 6, %v4525
        %v4527 = vrot.slane %v3529, %v4526
        %v4528 = vlaneseq
        %v4529 = vshrl.u32 %v4528, 7
        %v4530 = vsub.s32 7, %v4529
        %v4531 = vrot.slane %v3529, %v4530
        %v4532 = vlaneseq
        %v4533 = vshrl.u32 %v4532, 7
        %v4534 = vsub.s32 0, %v4533
        %v4535 = vrot.slane %v3531, %v4534
        %v4536 = vlaneseq
        %v4537 = vshrl.u32 %v4536, 7
        %v4538 = vsub.s32 1, %v4537
        %v4539 = vrot.slane %v3531, %v4538
        %v4540 = vlaneseq
        %v4541 = vshrl.u32 %v4540, 7
        %v4542 = vsub.s32 2, %v4541
        %v4543 = vrot.slane %v3531, %v4542
        %v4544 = vlaneseq
        %v4545 = vshrl.u32 %v4544, 7
        %v4546 = vsub.s32 3, %v4545
        %v4547 = vrot.slane %v3531, %v4546
        %v4548 = vlaneseq
        %v4549 = vshrl.u32 %v4548, 7
        %v4550 = vsub.s32 4, %v4549
        %v4551 = vrot.slane %v3531, %v4550
        %v4552 = vlaneseq
        %v4553 = vshrl.u32 %v4552, 7
        %v4554 = vsub.s32 5, %v4553
        %v4555 = vrot.slane %v3531, %v4554
        %v4556 = vlaneseq
        %v4557 = vshrl.u32 %v4556, 7
        %v4558 = vsub.s32 6, %v4557
        %v4559 = vrot.slane %v3531, %v4558
        %v4560 = vlaneseq
        %v4561 = vshrl.u32 %v4560, 7
        %v4562 = vsub.s32 7, %v4561
        %v4563 = vrot.slane %v3531, %v4562
        %v4564 = vlaneseq
        %v4565 = vshrl.u32 %v4564, 7
        %v4566 = vsub.s32 0, %v4565
        %v4567 = vrot.slane %v3533, %v4566
        %v4568 = vlaneseq
        %v4569 = vshrl.u32 %v4568, 7
        %v4570 = vsub.s32 1, %v4569
        %v4571 = vrot.slane %v3533, %v4570
        %v4572 = vlaneseq
        %v4573 = vshrl.u32 %v4572, 7
        %v4574 = vsub.s32 2, %v4573
        %v4575 = vrot.slane %v3533, %v4574
        %v4576 = vlaneseq
        %v4577 = vshrl.u32 %v4576, 7
        %v4578 = vsub.s32 3, %v4577
        %v4579 = vrot.slane %v3533, %v4578
        %v4580 = vlaneseq
        %v4581 = vshrl.u32 %v4580, 7
        %v4582 = vsub.s32 4, %v4581
        %v4583 = vrot.slane %v3533, %v4582
        %v4584 = vlaneseq
        %v4585 = vshrl.u32 %v4584, 7
        %v4586 = vsub.s32 5, %v4585
        %v4587 = vrot.slane %v3533, %v4586
        %v4588 = vlaneseq
        %v4589 = vshrl.u32 %v4588, 7
        %v4590 = vsub.s32 6, %v4589
        %v4591 = vrot.slane %v3533, %v4590
        %v4592 = vlaneseq
        %v4593 = vshrl.u32 %v4592, 7
        %v4594 = vsub.s32 7, %v4593
        %v4595 = vrot.slane %v3533, %v4594
        %v4596 = vlaneseq
        %v4597 = vshrl.u32 %v4596, 7
        %v4598 = vsub.s32 0, %v4597
        %v4599 = vrot.slane %v3535, %v4598
        %v4600 = vlaneseq
        %v4601 = vshrl.u32 %v4600, 7
        %v4602 = vsub.s32 1, %v4601
        %v4603 = vrot.slane %v3535, %v4602
        %v4604 = vlaneseq
        %v4605 = vshrl.u32 %v4604, 7
        %v4606 = vsub.s32 2, %v4605
        %v4607 = vrot.slane %v3535, %v4606
        %v4608 = vlaneseq
        %v4609 = vshrl.u32 %v4608, 7
        %v4610 = vsub.s32 3, %v4609
        %v4611 = vrot.slane %v3535, %v4610
        %v4612 = vlaneseq
        %v4613 = vshrl.u32 %v4612, 7
        %v4614 = vsub.s32 4, %v4613
        %v4615 = vrot.slane %v3535, %v4614
        %v4616 = vlaneseq
        %v4617 = vshrl.u32 %v4616, 7
        %v4618 = vsub.s32 5, %v4617
        %v4619 = vrot.slane %v3535, %v4618
        %v4620 = vlaneseq
        %v4621 = vshrl.u32 %v4620, 7
        %v4622 = vsub.s32 6, %v4621
        %v4623 = vrot.slane %v3535, %v4622
        %v4624 = vlaneseq
        %v4625 = vshrl.u32 %v4624, 7
        %v4626 = vsub.s32 7, %v4625
        %v4627 = vrot.slane %v3535, %v4626
        %v4628 = vlaneseq
        %v4629 = vshrl.u32 %v4628, 7
        %v4630 = vsub.s32 0, %v4629
        %v4631 = vrot.slane %v3537, %v4630
        %v4632 = vlaneseq
        %v4633 = vshrl.u32 %v4632, 7
        %v4634 = vsub.s32 1, %v4633
        %v4635 = vrot.slane %v3537, %v4634
        %v4636 = vlaneseq
        %v4637 = vshrl.u32 %v4636, 7
        %v4638 = vsub.s32 2, %v4637
        %v4639 = vrot.slane %v3537, %v4638
        %v4640 = vlaneseq
        %v4641 = vshrl.u32 %v4640, 7
        %v4642 = vsub.s32 3, %v4641
        %v4643 = vrot.slane %v3537, %v4642
        %v4644 = vlaneseq
        %v4645 = vshrl.u32 %v4644, 7
        %v4646 = vsub.s32 4, %v4645
        %v4647 = vrot.slane %v3537, %v4646
        %v4648 = vlaneseq
        %v4649 = vshrl.u32 %v4648, 7
        %v4650 = vsub.s32 5, %v4649
        %v4651 = vrot.slane %v3537, %v4650
        %v4652 = vlaneseq
        %v4653 = vshrl.u32 %v4652, 7
        %v4654 = vsub.s32 6, %v4653
        %v4655 = vrot.slane %v3537, %v4654
        %v4656 = vlaneseq
        %v4657 = vshrl.u32 %v4656, 7
        %v4658 = vsub.s32 7, %v4657
        %v4659 = vrot.slane %v3537, %v4658
        %v4660 = vlaneseq
        %v4661 = vshrl.u32 %v4660, 7
        %v4662 = vsub.s32 0, %v4661
        %v4663 = vrot.slane %v3539, %v4662
        %v4664 = vlaneseq
        %v4665 = vshrl.u32 %v4664, 7
        %v4666 = vsub.s32 1, %v4665
        %v4667 = vrot.slane %v3539, %v4666
        %v4668 = vlaneseq
        %v4669 = vshrl.u32 %v4668, 7
        %v4670 = vsub.s32 2, %v4669
        %v4671 = vrot.slane %v3539, %v4670
        %v4672 = vlaneseq
        %v4673 = vshrl.u32 %v4672, 7
        %v4674 = vsub.s32 3, %v4673
        %v4675 = vrot.slane %v3539, %v4674
        %v4676 = vlaneseq
        %v4677 = vshrl.u32 %v4676, 7
        %v4678 = vsub.s32 4, %v4677
        %v4679 = vrot.slane %v3539, %v4678
        %v4680 = vlaneseq
        %v4681 = vshrl.u32 %v4680, 7
        %v4682 = vsub.s32 5, %v4681
        %v4683 = vrot.slane %v3539, %v4682
        %v4684 = vlaneseq
        %v4685 = vshrl.u32 %v4684, 7
        %v4686 = vsub.s32 6, %v4685
        %v4687 = vrot.slane %v3539, %v4686
        %v4688 = vlaneseq
        %v4689 = vshrl.u32 %v4688, 7
        %v4690 = vsub.s32 7, %v4689
        %v4691 = vrot.slane %v3539, %v4690
        %v4692 = vlaneseq
        %v4693 = vshrl.u32 %v4692, 7
        %v4694 = vsub.s32 0, %v4693
        %v4695 = vrot.slane %v3541, %v4694
        %v4696 = vlaneseq
        %v4697 = vshrl.u32 %v4696, 7
        %v4698 = vsub.s32 1, %v4697
        %v4699 = vrot.slane %v3541, %v4698
        %v4700 = vlaneseq
        %v4701 = vshrl.u32 %v4700, 7
        %v4702 = vsub.s32 2, %v4701
        %v4703 = vrot.slane %v3541, %v4702
        %v4704 = vlaneseq
        %v4705 = vshrl.u32 %v4704, 7
        %v4706 = vsub.s32 3, %v4705
        %v4707 = vrot.slane %v3541, %v4706
        %v4708 = vlaneseq
        %v4709 = vshrl.u32 %v4708, 7
        %v4710 = vsub.s32 4, %v4709
        %v4711 = vrot.slane %v3541, %v4710
        %v4712 = vlaneseq
        %v4713 = vshrl.u32 %v4712, 7
        %v4714 = vsub.s32 5, %v4713
        %v4715 = vrot.slane %v3541, %v4714
        %v4716 = vlaneseq
        %v4717 = vshrl.u32 %v4716, 7
        %v4718 = vsub.s32 6, %v4717
        %v4719 = vrot.slane %v3541, %v4718
        %v4720 = vlaneseq
        %v4721 = vshrl.u32 %v4720, 7
        %v4722 = vsub.s32 7, %v4721
        %v4723 = vrot.slane %v3541, %v4722
        %v4724 = vlaneseq
        %v4725 = vshrl.u32 %v4724, 7
        %v4726 = vsub.s32 0, %v4725
        %v4727 = vrot.slane %v3543, %v4726
        %v4728 = vlaneseq
        %v4729 = vshrl.u32 %v4728, 7
        %v4730 = vsub.s32 1, %v4729
        %v4731 = vrot.slane %v3543, %v4730
        %v4732 = vlaneseq
        %v4733 = vshrl.u32 %v4732, 7
        %v4734 = vsub.s32 2, %v4733
        %v4735 = vrot.slane %v3543, %v4734
        %v4736 = vlaneseq
        %v4737 = vshrl.u32 %v4736, 7
        %v4738 = vsub.s32 3, %v4737
        %v4739 = vrot.slane %v3543, %v4738
        %v4740 = vlaneseq
        %v4741 = vshrl.u32 %v4740, 7
        %v4742 = vsub.s32 4, %v4741
        %v4743 = vrot.slane %v3543, %v4742
        %v4744 = vlaneseq
        %v4745 = vshrl.u32 %v4744, 7
        %v4746 = vsub.s32 5, %v4745
        %v4747 = vrot.slane %v3543, %v4746
        %v4748 = vlaneseq
        %v4749 = vshrl.u32 %v4748, 7
        %v4750 = vsub.s32 6, %v4749
        %v4751 = vrot.slane %v3543, %v4750
        %v4752 = vlaneseq
        %v4753 = vshrl.u32 %v4752, 7
        %v4754 = vsub.s32 7, %v4753
        %v4755 = vrot.slane %v3543, %v4754
        %v4756 = vlaneseq
        %v4757 = vshrl.u32 %v4756, 7
        %v4758 = vsub.s32 0, %v4757
        %v4759 = vrot.slane %v3545, %v4758
        %v4760 = vlaneseq
        %v4761 = vshrl.u32 %v4760, 7
        %v4762 = vsub.s32 1, %v4761
        %v4763 = vrot.slane %v3545, %v4762
        %v4764 = vlaneseq
        %v4765 = vshrl.u32 %v4764, 7
        %v4766 = vsub.s32 2, %v4765
        %v4767 = vrot.slane %v3545, %v4766
        %v4768 = vlaneseq
        %v4769 = vshrl.u32 %v4768, 7
        %v4770 = vsub.s32 3, %v4769
        %v4771 = vrot.slane %v3545, %v4770
        %v4772 = vlaneseq
        %v4773 = vshrl.u32 %v4772, 7
        %v4774 = vsub.s32 4, %v4773
        %v4775 = vrot.slane %v3545, %v4774
        %v4776 = vlaneseq
        %v4777 = vshrl.u32 %v4776, 7
        %v4778 = vsub.s32 5, %v4777
        %v4779 = vrot.slane %v3545, %v4778
        %v4780 = vlaneseq
        %v4781 = vshrl.u32 %v4780, 7
        %v4782 = vsub.s32 6, %v4781
        %v4783 = vrot.slane %v3545, %v4782
        %v4784 = vlaneseq
        %v4785 = vshrl.u32 %v4784, 7
        %v4786 = vsub.s32 7, %v4785
        %v4787 = vrot.slane %v3545, %v4786
        %v4788 = vlaneseq
        %v4789 = vshrl.u32 %v4788, 7
        %v4790 = vsub.s32 0, %v4789
        %v4791 = vrot.slane %v3547, %v4790
        %v4792 = vlaneseq
        %v4793 = vshrl.u32 %v4792, 7
        %v4794 = vsub.s32 1, %v4793
        %v4795 = vrot.slane %v3547, %v4794
        %v4796 = vlaneseq
        %v4797 = vshrl.u32 %v4796, 7
        %v4798 = vsub.s32 2, %v4797
        %v4799 = vrot.slane %v3547, %v4798
        %v4800 = vlaneseq
        %v4801 = vshrl.u32 %v4800, 7
        %v4802 = vsub.s32 3, %v4801
        %v4803 = vrot.slane %v3547, %v4802
        %v4804 = vlaneseq
        %v4805 = vshrl.u32 %v4804, 7
        %v4806 = vsub.s32 4, %v4805
        %v4807 = vrot.slane %v3547, %v4806
        %v4808 = vlaneseq
        %v4809 = vshrl.u32 %v4808, 7
        %v4810 = vsub.s32 5, %v4809
        %v4811 = vrot.slane %v3547, %v4810
        %v4812 = vlaneseq
        %v4813 = vshrl.u32 %v4812, 7
        %v4814 = vsub.s32 6, %v4813
        %v4815 = vrot.slane %v3547, %v4814
        %v4816 = vlaneseq
        %v4817 = vshrl.u32 %v4816, 7
        %v4818 = vsub.s32 7, %v4817
        %v4819 = vrot.slane %v3547, %v4818
        %v4820 = vlaneseq
        %v4821 = vshrl.u32 %v4820, 7
        %v4822 = vsub.s32 0, %v4821
        %v4823 = vrot.slane %v3549, %v4822
        %v4824 = vlaneseq
        %v4825 = vshrl.u32 %v4824, 7
        %v4826 = vsub.s32 1, %v4825
        %v4827 = vrot.slane %v3549, %v4826
        %v4828 = vlaneseq
        %v4829 = vshrl.u32 %v4828, 7
        %v4830 = vsub.s32 2, %v4829
        %v4831 = vrot.slane %v3549, %v4830
        %v4832 = vlaneseq
        %v4833 = vshrl.u32 %v4832, 7
        %v4834 = vsub.s32 3, %v4833
        %v4835 = vrot.slane %v3549, %v4834
        %v4836 = vlaneseq
        %v4837 = vshrl.u32 %v4836, 7
        %v4838 = vsub.s32 4, %v4837
        %v4839 = vrot.slane %v3549, %v4838
        %v4840 = vlaneseq
        %v4841 = vshrl.u32 %v4840, 7
        %v4842 = vsub.s32 5, %v4841
        %v4843 = vrot.slane %v3549, %v4842
        %v4844 = vlaneseq
        %v4845 = vshrl.u32 %v4844, 7
        %v4846 = vsub.s32 6, %v4845
        %v4847 = vrot.slane %v3549, %v4846
        %v4848 = vlaneseq
        %v4849 = vshrl.u32 %v4848, 7
        %v4850 = vsub.s32 7, %v4849
        %v4851 = vrot.slane %v3549, %v4850
        %v4852 = vlaneseq
        %v4853 = vshrl.u32 %v4852, 7
        %v4854 = vsub.s32 0, %v4853
        %v4855 = vrot.slane %v3551, %v4854
        %v4856 = vlaneseq
        %v4857 = vshrl.u32 %v4856, 7
        %v4858 = vsub.s32 1, %v4857
        %v4859 = vrot.slane %v3551, %v4858
        %v4860 = vlaneseq
        %v4861 = vshrl.u32 %v4860, 7
        %v4862 = vsub.s32 2, %v4861
        %v4863 = vrot.slane %v3551, %v4862
        %v4864 = vlaneseq
        %v4865 = vshrl.u32 %v4864, 7
        %v4866 = vsub.s32 3, %v4865
        %v4867 = vrot.slane %v3551, %v4866
        %v4868 = vlaneseq
        %v4869 = vshrl.u32 %v4868, 7
        %v4870 = vsub.s32 4, %v4869
        %v4871 = vrot.slane %v3551, %v4870
        %v4872 = vlaneseq
        %v4873 = vshrl.u32 %v4872, 7
        %v4874 = vsub.s32 5, %v4873
        %v4875 = vrot.slane %v3551, %v4874
        %v4876 = vlaneseq
        %v4877 = vshrl.u32 %v4876, 7
        %v4878 = vsub.s32 6, %v4877
        %v4879 = vrot.slane %v3551, %v4878
        %v4880 = vlaneseq
        %v4881 = vshrl.u32 %v4880, 7
        %v4882 = vsub.s32 7, %v4881
        %v4883 = vrot.slane %v3551, %v4882
        %v4884 = vlaneseq
        %v4885 = vshrl.u32 %v4884, 7
        %v4886 = vsub.s32 0, %v4885
        %v4887 = vrot.slane %v3553, %v4886
        %v4888 = vlaneseq
        %v4889 = vshrl.u32 %v4888, 7
        %v4890 = vsub.s32 1, %v4889
        %v4891 = vrot.slane %v3553, %v4890
        %v4892 = vlaneseq
        %v4893 = vshrl.u32 %v4892, 7
        %v4894 = vsub.s32 2, %v4893
        %v4895 = vrot.slane %v3553, %v4894
        %v4896 = vlaneseq
        %v4897 = vshrl.u32 %v4896, 7
        %v4898 = vsub.s32 3, %v4897
        %v4899 = vrot.slane %v3553, %v4898
        %v4900 = vlaneseq
        %v4901 = vshrl.u32 %v4900, 7
        %v4902 = vsub.s32 4, %v4901
        %v4903 = vrot.slane %v3553, %v4902
        %v4904 = vlaneseq
        %v4905 = vshrl.u32 %v4904, 7
        %v4906 = vsub.s32 5, %v4905
        %v4907 = vrot.slane %v3553, %v4906
        %v4908 = vlaneseq
        %v4909 = vshrl.u32 %v4908, 7
        %v4910 = vsub.s32 6, %v4909
        %v4911 = vrot.slane %v3553, %v4910
        %v4912 = vlaneseq
        %v4913 = vshrl.u32 %v4912, 7
        %v4914 = vsub.s32 7, %v4913
        %v4915 = vrot.slane %v3553, %v4914
        %v4916 = vlaneseq
        %v4917 = vshrl.u32 %v4916, 7
        %v4918 = vsub.s32 0, %v4917
        %v4919 = vrot.slane %v3555, %v4918
        %v4920 = vlaneseq
        %v4921 = vshrl.u32 %v4920, 7
        %v4922 = vsub.s32 1, %v4921
        %v4923 = vrot.slane %v3555, %v4922
        %v4924 = vlaneseq
        %v4925 = vshrl.u32 %v4924, 7
        %v4926 = vsub.s32 2, %v4925
        %v4927 = vrot.slane %v3555, %v4926
        %v4928 = vlaneseq
        %v4929 = vshrl.u32 %v4928, 7
        %v4930 = vsub.s32 3, %v4929
        %v4931 = vrot.slane %v3555, %v4930
        %v4932 = vlaneseq
        %v4933 = vshrl.u32 %v4932, 7
        %v4934 = vsub.s32 4, %v4933
        %v4935 = vrot.slane %v3555, %v4934
        %v4936 = vlaneseq
        %v4937 = vshrl.u32 %v4936, 7
        %v4938 = vsub.s32 5, %v4937
        %v4939 = vrot.slane %v3555, %v4938
        %v4940 = vlaneseq
        %v4941 = vshrl.u32 %v4940, 7
        %v4942 = vsub.s32 6, %v4941
        %v4943 = vrot.slane %v3555, %v4942
        %v4944 = vlaneseq
        %v4945 = vshrl.u32 %v4944, 7
        %v4946 = vsub.s32 7, %v4945
        %v4947 = vrot.slane %v3555, %v4946
        %v4948 = vlaneseq
        %v4949 = vshrl.u32 %v4948, 7
        %v4950 = vsub.s32 0, %v4949
        %v4951 = vrot.slane %v3557, %v4950
        %v4952 = vlaneseq
        %v4953 = vshrl.u32 %v4952, 7
        %v4954 = vsub.s32 1, %v4953
        %v4955 = vrot.slane %v3557, %v4954
        %v4956 = vlaneseq
        %v4957 = vshrl.u32 %v4956, 7
        %v4958 = vsub.s32 2, %v4957
        %v4959 = vrot.slane %v3557, %v4958
        %v4960 = vlaneseq
        %v4961 = vshrl.u32 %v4960, 7
        %v4962 = vsub.s32 3, %v4961
        %v4963 = vrot.slane %v3557, %v4962
        %v4964 = vlaneseq
        %v4965 = vshrl.u32 %v4964, 7
        %v4966 = vsub.s32 4, %v4965
        %v4967 = vrot.slane %v3557, %v4966
        %v4968 = vlaneseq
        %v4969 = vshrl.u32 %v4968, 7
        %v4970 = vsub.s32 5, %v4969
        %v4971 = vrot.slane %v3557, %v4970
        %v4972 = vlaneseq
        %v4973 = vshrl.u32 %v4972, 7
        %v4974 = vsub.s32 6, %v4973
        %v4975 = vrot.slane %v3557, %v4974
        %v4976 = vlaneseq
        %v4977 = vshrl.u32 %v4976, 7
        %v4978 = vsub.s32 7, %v4977
        %v4979 = vrot.slane %v3557, %v4978
        %v4980 = vlaneseq
        %v4981 = vshrl.u32 %v4980, 7
        %v4982 = vsub.s32 0, %v4981
        %v4983 = vrot.slane %v3559, %v4982
        %v4984 = vlaneseq
        %v4985 = vshrl.u32 %v4984, 7
        %v4986 = vsub.s32 1, %v4985
        %v4987 = vrot.slane %v3559, %v4986
        %v4988 = vlaneseq
        %v4989 = vshrl.u32 %v4988, 7
        %v4990 = vsub.s32 2, %v4989
        %v4991 = vrot.slane %v3559, %v4990
        %v4992 = vlaneseq
        %v4993 = vshrl.u32 %v4992, 7
        %v4994 = vsub.s32 3, %v4993
        %v4995 = vrot.slane %v3559, %v4994
        %v4996 = vlaneseq
        %v4997 = vshrl.u32 %v4996, 7
        %v4998 = vsub.s32 4, %v4997
        %v4999 = vrot.slane %v3559, %v4998
        %v5000 = vlaneseq
        %v5001 = vshrl.u32 %v5000, 7
        %v5002 = vsub.s32 5, %v5001
        %v5003 = vrot.slane %v3559, %v5002
        %v5004 = vlaneseq
        %v5005 = vshrl.u32 %v5004, 7
        %v5006 = vsub.s32 6, %v5005
        %v5007 = vrot.slane %v3559, %v5006
        %v5008 = vlaneseq
        %v5009 = vshrl.u32 %v5008, 7
        %v5010 = vsub.s32 7, %v5009
        %v5011 = vrot.slane %v3559, %v5010
        %v5012 = vlaneseq
        %v5013 = vshrl.u32 %v5012, 7
        %v5014 = vsub.s32 0, %v5013
        %v5015 = vrot.slane %v3561, %v5014
        %v5016 = vlaneseq
        %v5017 = vshrl.u32 %v5016, 7
        %v5018 = vsub.s32 1, %v5017
        %v5019 = vrot.slane %v3561, %v5018
        %v5020 = vlaneseq
        %v5021 = vshrl.u32 %v5020, 7
        %v5022 = vsub.s32 2, %v5021
        %v5023 = vrot.slane %v3561, %v5022
        %v5024 = vlaneseq
        %v5025 = vshrl.u32 %v5024, 7
        %v5026 = vsub.s32 3, %v5025
        %v5027 = vrot.slane %v3561, %v5026
        %v5028 = vlaneseq
        %v5029 = vshrl.u32 %v5028, 7
        %v5030 = vsub.s32 4, %v5029
        %v5031 = vrot.slane %v3561, %v5030
        %v5032 = vlaneseq
        %v5033 = vshrl.u32 %v5032, 7
        %v5034 = vsub.s32 5, %v5033
        %v5035 = vrot.slane %v3561, %v5034
        %v5036 = vlaneseq
        %v5037 = vshrl.u32 %v5036, 7
        %v5038 = vsub.s32 6, %v5037
        %v5039 = vrot.slane %v3561, %v5038
        %v5040 = vlaneseq
        %v5041 = vshrl.u32 %v5040, 7
        %v5042 = vsub.s32 7, %v5041
        %v5043 = vrot.slane %v3561, %v5042
        %v5044 = vlaneseq
        %v5045 = vshrl.u32 %v5044, 7
        %v5046 = vsub.s32 0, %v5045
        %v5047 = vrot.slane %v3563, %v5046
        %v5048 = vlaneseq
        %v5049 = vshrl.u32 %v5048, 7
        %v5050 = vsub.s32 1, %v5049
        %v5051 = vrot.slane %v3563, %v5050
        %v5052 = vlaneseq
        %v5053 = vshrl.u32 %v5052, 7
        %v5054 = vsub.s32 2, %v5053
        %v5055 = vrot.slane %v3563, %v5054
        %v5056 = vlaneseq
        %v5057 = vshrl.u32 %v5056, 7
        %v5058 = vsub.s32 3, %v5057
        %v5059 = vrot.slane %v3563, %v5058
        %v5060 = vlaneseq
        %v5061 = vshrl.u32 %v5060, 7
        %v5062 = vsub.s32 4, %v5061
        %v5063 = vrot.slane %v3563, %v5062
        %v5064 = vlaneseq
        %v5065 = vshrl.u32 %v5064, 7
        %v5066 = vsub.s32 5, %v5065
        %v5067 = vrot.slane %v3563, %v5066
        %v5068 = vlaneseq
        %v5069 = vshrl.u32 %v5068, 7
        %v5070 = vsub.s32 6, %v5069
        %v5071 = vrot.slane %v3563, %v5070
        %v5072 = vlaneseq
        %v5073 = vshrl.u32 %v5072, 7
        %v5074 = vsub.s32 7, %v5073
        %v5075 = vrot.slane %v3563, %v5074
        %v5076 = vlaneseq
        %v5077 = vshrl.u32 %v5076, 7
        %v5078 = vsub.s32 0, %v5077
        %v5079 = vrot.slane %v3565, %v5078
        %v5080 = vlaneseq
        %v5081 = vshrl.u32 %v5080, 7
        %v5082 = vsub.s32 1, %v5081
        %v5083 = vrot.slane %v3565, %v5082
        %v5084 = vlaneseq
        %v5085 = vshrl.u32 %v5084, 7
        %v5086 = vsub.s32 2, %v5085
        %v5087 = vrot.slane %v3565, %v5086
        %v5088 = vlaneseq
        %v5089 = vshrl.u32 %v5088, 7
        %v5090 = vsub.s32 3, %v5089
        %v5091 = vrot.slane %v3565, %v5090
        %v5092 = vlaneseq
        %v5093 = vshrl.u32 %v5092, 7
        %v5094 = vsub.s32 4, %v5093
        %v5095 = vrot.slane %v3565, %v5094
        %v5096 = vlaneseq
        %v5097 = vshrl.u32 %v5096, 7
        %v5098 = vsub.s32 5, %v5097
        %v5099 = vrot.slane %v3565, %v5098
        %v5100 = vlaneseq
        %v5101 = vshrl.u32 %v5100, 7
        %v5102 = vsub.s32 6, %v5101
        %v5103 = vrot.slane %v3565, %v5102
        %v5104 = vlaneseq
        %v5105 = vshrl.u32 %v5104, 7
        %v5106 = vsub.s32 7, %v5105
        %v5107 = vrot.slane %v3565, %v5106
        %v5108 = vlaneseq
        %v5109 = vshrl.u32 %v5108, 7
        %v5110 = vsub.s32 0, %v5109
        %v5111 = vrot.slane %v3567, %v5110
        %v5112 = vlaneseq
        %v5113 = vshrl.u32 %v5112, 7
        %v5114 = vsub.s32 1, %v5113
        %v5115 = vrot.slane %v3567, %v5114
        %v5116 = vlaneseq
        %v5117 = vshrl.u32 %v5116, 7
        %v5118 = vsub.s32 2, %v5117
        %v5119 = vrot.slane %v3567, %v5118
        %v5120 = vlaneseq
        %v5121 = vshrl.u32 %v5120, 7
        %v5122 = vsub.s32 3, %v5121
        %v5123 = vrot.slane %v3567, %v5122
        %v5124 = vlaneseq
        %v5125 = vshrl.u32 %v5124, 7
        %v5126 = vsub.s32 4, %v5125
        %v5127 = vrot.slane %v3567, %v5126
        %v5128 = vlaneseq
        %v5129 = vshrl.u32 %v5128, 7
        %v5130 = vsub.s32 5, %v5129
        %v5131 = vrot.slane %v3567, %v5130
        %v5132 = vlaneseq
        %v5133 = vshrl.u32 %v5132, 7
        %v5134 = vsub.s32 6, %v5133
        %v5135 = vrot.slane %v3567, %v5134
        %v5136 = vlaneseq
        %v5137 = vshrl.u32 %v5136, 7
        %v5138 = vsub.s32 7, %v5137
        %v5139 = vrot.slane %v3567, %v5138
        %v5140 = vlaneseq
        %v5141 = vshrl.u32 %v5140, 7
        %v5142 = vsub.s32 0, %v5141
        %v5143 = vrot.slane %v3569, %v5142
        %v5144 = vlaneseq
        %v5145 = vshrl.u32 %v5144, 7
        %v5146 = vsub.s32 1, %v5145
        %v5147 = vrot.slane %v3569, %v5146
        %v5148 = vlaneseq
        %v5149 = vshrl.u32 %v5148, 7
        %v5150 = vsub.s32 2, %v5149
        %v5151 = vrot.slane %v3569, %v5150
        %v5152 = vlaneseq
        %v5153 = vshrl.u32 %v5152, 7
        %v5154 = vsub.s32 3, %v5153
        %v5155 = vrot.slane %v3569, %v5154
        %v5156 = vlaneseq
        %v5157 = vshrl.u32 %v5156, 7
        %v5158 = vsub.s32 4, %v5157
        %v5159 = vrot.slane %v3569, %v5158
        %v5160 = vlaneseq
        %v5161 = vshrl.u32 %v5160, 7
        %v5162 = vsub.s32 5, %v5161
        %v5163 = vrot.slane %v3569, %v5162
        %v5164 = vlaneseq
        %v5165 = vshrl.u32 %v5164, 7
        %v5166 = vsub.s32 6, %v5165
        %v5167 = vrot.slane %v3569, %v5166
        %v5168 = vlaneseq
        %v5169 = vshrl.u32 %v5168, 7
        %v5170 = vsub.s32 7, %v5169
        %v5171 = vrot.slane %v3569, %v5170
        %v5172 = vlaneseq
        %v5173 = vshrl.u32 %v5172, 7
        %v5174 = vsub.s32 0, %v5173
        %v5175 = vrot.slane %v3571, %v5174
        %v5176 = vlaneseq
        %v5177 = vshrl.u32 %v5176, 7
        %v5178 = vsub.s32 1, %v5177
        %v5179 = vrot.slane %v3571, %v5178
        %v5180 = vlaneseq
        %v5181 = vshrl.u32 %v5180, 7
        %v5182 = vsub.s32 2, %v5181
        %v5183 = vrot.slane %v3571, %v5182
        %v5184 = vlaneseq
        %v5185 = vshrl.u32 %v5184, 7
        %v5186 = vsub.s32 3, %v5185
        %v5187 = vrot.slane %v3571, %v5186
        %v5188 = vlaneseq
        %v5189 = vshrl.u32 %v5188, 7
        %v5190 = vsub.s32 4, %v5189
        %v5191 = vrot.slane %v3571, %v5190
        %v5192 = vlaneseq
        %v5193 = vshrl.u32 %v5192, 7
        %v5194 = vsub.s32 5, %v5193
        %v5195 = vrot.slane %v3571, %v5194
        %v5196 = vlaneseq
        %v5197 = vshrl.u32 %v5196, 7
        %v5198 = vsub.s32 6, %v5197
        %v5199 = vrot.slane %v3571, %v5198
        %v5200 = vlaneseq
        %v5201 = vshrl.u32 %v5200, 7
        %v5202 = vsub.s32 7, %v5201
        %v5203 = vrot.slane %v3571, %v5202
        %v5204 = vlaneseq
        %v5205 = vshrl.u32 %v5204, 7
        %v5206 = vsub.s32 0, %v5205
        %v5207 = vrot.slane %v3573, %v5206
        %v5208 = vlaneseq
        %v5209 = vshrl.u32 %v5208, 7
        %v5210 = vsub.s32 1, %v5209
        %v5211 = vrot.slane %v3573, %v5210
        %v5212 = vlaneseq
        %v5213 = vshrl.u32 %v5212, 7
        %v5214 = vsub.s32 2, %v5213
        %v5215 = vrot.slane %v3573, %v5214
        %v5216 = vlaneseq
        %v5217 = vshrl.u32 %v5216, 7
        %v5218 = vsub.s32 3, %v5217
        %v5219 = vrot.slane %v3573, %v5218
        %v5220 = vlaneseq
        %v5221 = vshrl.u32 %v5220, 7
        %v5222 = vsub.s32 4, %v5221
        %v5223 = vrot.slane %v3573, %v5222
        %v5224 = vlaneseq
        %v5225 = vshrl.u32 %v5224, 7
        %v5226 = vsub.s32 5, %v5225
        %v5227 = vrot.slane %v3573, %v5226
        %v5228 = vlaneseq
        %v5229 = vshrl.u32 %v5228, 7
        %v5230 = vsub.s32 6, %v5229
        %v5231 = vrot.slane %v3573, %v5230
        %v5232 = vlaneseq
        %v5233 = vshrl.u32 %v5232, 7
        %v5234 = vsub.s32 7, %v5233
        %v5235 = vrot.slane %v3573, %v5234
        %v5236 = vlaneseq
        %v5237 = vshrl.u32 %v5236, 7
        %v5238 = vsub.s32 0, %v5237
        %v5239 = vrot.slane %v3575, %v5238
        %v5240 = vlaneseq
        %v5241 = vshrl.u32 %v5240, 7
        %v5242 = vsub.s32 1, %v5241
        %v5243 = vrot.slane %v3575, %v5242
        %v5244 = vlaneseq
        %v5245 = vshrl.u32 %v5244, 7
        %v5246 = vsub.s32 2, %v5245
        %v5247 = vrot.slane %v3575, %v5246
        %v5248 = vlaneseq
        %v5249 = vshrl.u32 %v5248, 7
        %v5250 = vsub.s32 3, %v5249
        %v5251 = vrot.slane %v3575, %v5250
        %v5252 = vlaneseq
        %v5253 = vshrl.u32 %v5252, 7
        %v5254 = vsub.s32 4, %v5253
        %v5255 = vrot.slane %v3575, %v5254
        %v5256 = vlaneseq
        %v5257 = vshrl.u32 %v5256, 7
        %v5258 = vsub.s32 5, %v5257
        %v5259 = vrot.slane %v3575, %v5258
        %v5260 = vlaneseq
        %v5261 = vshrl.u32 %v5260, 7
        %v5262 = vsub.s32 6, %v5261
        %v5263 = vrot.slane %v3575, %v5262
        %v5264 = vlaneseq
        %v5265 = vshrl.u32 %v5264, 7
        %v5266 = vsub.s32 7, %v5265
        %v5267 = vrot.slane %v3575, %v5266
        %v5268 = vlaneseq
        %v5269 = vshrl.u32 %v5268, 7
        %v5270 = vsub.s32 0, %v5269
        %v5271 = vrot.slane %v3577, %v5270
        %v5272 = vlaneseq
        %v5273 = vshrl.u32 %v5272, 7
        %v5274 = vsub.s32 1, %v5273
        %v5275 = vrot.slane %v3577, %v5274
        %v5276 = vlaneseq
        %v5277 = vshrl.u32 %v5276, 7
        %v5278 = vsub.s32 2, %v5277
        %v5279 = vrot.slane %v3577, %v5278
        %v5280 = vlaneseq
        %v5281 = vshrl.u32 %v5280, 7
        %v5282 = vsub.s32 3, %v5281
        %v5283 = vrot.slane %v3577, %v5282
        %v5284 = vlaneseq
        %v5285 = vshrl.u32 %v5284, 7
        %v5286 = vsub.s32 4, %v5285
        %v5287 = vrot.slane %v3577, %v5286
        %v5288 = vlaneseq
        %v5289 = vshrl.u32 %v5288, 7
        %v5290 = vsub.s32 5, %v5289
        %v5291 = vrot.slane %v3577, %v5290
        %v5292 = vlaneseq
        %v5293 = vshrl.u32 %v5292, 7
        %v5294 = vsub.s32 6, %v5293
        %v5295 = vrot.slane %v3577, %v5294
        %v5296 = vlaneseq
        %v5297 = vshrl.u32 %v5296, 7
        %v5298 = vsub.s32 7, %v5297
        %v5299 = vrot.slane %v3577, %v5298
        %v5300 = vlaneseq
        %v5301 = vshrl.u32 %v5300, 7
        %v5302 = vsub.s32 0, %v5301
        %v5303 = vrot.slane %v3579, %v5302
        %v5304 = vlaneseq
        %v5305 = vshrl.u32 %v5304, 7
        %v5306 = vsub.s32 1, %v5305
        %v5307 = vrot.slane %v3579, %v5306
        %v5308 = vlaneseq
        %v5309 = vshrl.u32 %v5308, 7
        %v5310 = vsub.s32 2, %v5309
        %v5311 = vrot.slane %v3579, %v5310
        %v5312 = vlaneseq
        %v5313 = vshrl.u32 %v5312, 7
        %v5314 = vsub.s32 3, %v5313
        %v5315 = vrot.slane %v3579, %v5314
        %v5316 = vlaneseq
        %v5317 = vshrl.u32 %v5316, 7
        %v5318 = vsub.s32 4, %v5317
        %v5319 = vrot.slane %v3579, %v5318
        %v5320 = vlaneseq
        %v5321 = vshrl.u32 %v5320, 7
        %v5322 = vsub.s32 5, %v5321
        %v5323 = vrot.slane %v3579, %v5322
        %v5324 = vlaneseq
        %v5325 = vshrl.u32 %v5324, 7
        %v5326 = vsub.s32 6, %v5325
        %v5327 = vrot.slane %v3579, %v5326
        %v5328 = vlaneseq
        %v5329 = vshrl.u32 %v5328, 7
        %v5330 = vsub.s32 7, %v5329
        %v5331 = vrot.slane %v3579, %v5330
        %v5332 = vlaneseq
        %v5333 = vshrl.u32 %v5332, 7
        %v5334 = vsub.s32 0, %v5333
        %v5335 = vrot.slane %v3581, %v5334
        %v5336 = vlaneseq
        %v5337 = vshrl.u32 %v5336, 7
        %v5338 = vsub.s32 1, %v5337
        %v5339 = vrot.slane %v3581, %v5338
        %v5340 = vlaneseq
        %v5341 = vshrl.u32 %v5340, 7
        %v5342 = vsub.s32 2, %v5341
        %v5343 = vrot.slane %v3581, %v5342
        %v5344 = vlaneseq
        %v5345 = vshrl.u32 %v5344, 7
        %v5346 = vsub.s32 3, %v5345
        %v5347 = vrot.slane %v3581, %v5346
        %v5348 = vlaneseq
        %v5349 = vshrl.u32 %v5348, 7
        %v5350 = vsub.s32 4, %v5349
        %v5351 = vrot.slane %v3581, %v5350
        %v5352 = vlaneseq
        %v5353 = vshrl.u32 %v5352, 7
        %v5354 = vsub.s32 5, %v5353
        %v5355 = vrot.slane %v3581, %v5354
        %v5356 = vlaneseq
        %v5357 = vshrl.u32 %v5356, 7
        %v5358 = vsub.s32 6, %v5357
        %v5359 = vrot.slane %v3581, %v5358
        %v5360 = vlaneseq
        %v5361 = vshrl.u32 %v5360, 7
        %v5362 = vsub.s32 7, %v5361
        %v5363 = vrot.slane %v3581, %v5362
        %v5364 = vlaneseq
        %v5365 = vshrl.u32 %v5364, 7
        %v5366 = vsub.s32 0, %v5365
        %v5367 = vrot.slane %v3583, %v5366
        %v5368 = vlaneseq
        %v5369 = vshrl.u32 %v5368, 7
        %v5370 = vsub.s32 1, %v5369
        %v5371 = vrot.slane %v3583, %v5370
        %v5372 = vlaneseq
        %v5373 = vshrl.u32 %v5372, 7
        %v5374 = vsub.s32 2, %v5373
        %v5375 = vrot.slane %v3583, %v5374
        %v5376 = vlaneseq
        %v5377 = vshrl.u32 %v5376, 7
        %v5378 = vsub.s32 3, %v5377
        %v5379 = vrot.slane %v3583, %v5378
        %v5380 = vlaneseq
        %v5381 = vshrl.u32 %v5380, 7
        %v5382 = vsub.s32 4, %v5381
        %v5383 = vrot.slane %v3583, %v5382
        %v5384 = vlaneseq
        %v5385 = vshrl.u32 %v5384, 7
        %v5386 = vsub.s32 5, %v5385
        %v5387 = vrot.slane %v3583, %v5386
        %v5388 = vlaneseq
        %v5389 = vshrl.u32 %v5388, 7
        %v5390 = vsub.s32 6, %v5389
        %v5391 = vrot.slane %v3583, %v5390
        %v5392 = vlaneseq
        %v5393 = vshrl.u32 %v5392, 7
        %v5394 = vsub.s32 7, %v5393
        %v5395 = vrot.slane %v3583, %v5394
        %v5396 = vlaneseq
        %v5397 = vshrl.u32 %v5396, 7
        %v5398 = vsub.s32 0, %v5397
        %v5399 = vrot.slane %v3585, %v5398
        %v5400 = vlaneseq
        %v5401 = vshrl.u32 %v5400, 7
        %v5402 = vsub.s32 1, %v5401
        %v5403 = vrot.slane %v3585, %v5402
        %v5404 = vlaneseq
        %v5405 = vshrl.u32 %v5404, 7
        %v5406 = vsub.s32 2, %v5405
        %v5407 = vrot.slane %v3585, %v5406
        %v5408 = vlaneseq
        %v5409 = vshrl.u32 %v5408, 7
        %v5410 = vsub.s32 3, %v5409
        %v5411 = vrot.slane %v3585, %v5410
        %v5412 = vlaneseq
        %v5413 = vshrl.u32 %v5412, 7
        %v5414 = vsub.s32 4, %v5413
        %v5415 = vrot.slane %v3585, %v5414
        %v5416 = vlaneseq
        %v5417 = vshrl.u32 %v5416, 7
        %v5418 = vsub.s32 5, %v5417
        %v5419 = vrot.slane %v3585, %v5418
        %v5420 = vlaneseq
        %v5421 = vshrl.u32 %v5420, 7
        %v5422 = vsub.s32 6, %v5421
        %v5423 = vrot.slane %v3585, %v5422
        %v5424 = vlaneseq
        %v5425 = vshrl.u32 %v5424, 7
        %v5426 = vsub.s32 7, %v5425
        %v5427 = vrot.slane %v3585, %v5426
        %v5428 = vlaneseq
        %v5429 = vshrl.u32 %v5428, 7
        %v5430 = vsub.s32 0, %v5429
        %v5431 = vrot.slane %v3587, %v5430
        %v5432 = vlaneseq
        %v5433 = vshrl.u32 %v5432, 7
        %v5434 = vsub.s32 1, %v5433
        %v5435 = vrot.slane %v3587, %v5434
        %v5436 = vlaneseq
        %v5437 = vshrl.u32 %v5436, 7
        %v5438 = vsub.s32 2, %v5437
        %v5439 = vrot.slane %v3587, %v5438
        %v5440 = vlaneseq
        %v5441 = vshrl.u32 %v5440, 7
        %v5442 = vsub.s32 3, %v5441
        %v5443 = vrot.slane %v3587, %v5442
        %v5444 = vlaneseq
        %v5445 = vshrl.u32 %v5444, 7
        %v5446 = vsub.s32 4, %v5445
        %v5447 = vrot.slane %v3587, %v5446
        %v5448 = vlaneseq
        %v5449 = vshrl.u32 %v5448, 7
        %v5450 = vsub.s32 5, %v5449
        %v5451 = vrot.slane %v3587, %v5450
        %v5452 = vlaneseq
        %v5453 = vshrl.u32 %v5452, 7
        %v5454 = vsub.s32 6, %v5453
        %v5455 = vrot.slane %v3587, %v5454
        %v5456 = vlaneseq
        %v5457 = vshrl.u32 %v5456, 7
        %v5458 = vsub.s32 7, %v5457
        %v5459 = vrot.slane %v3587, %v5458
        %v5460 = vlaneseq
        %v5461 = vshrl.u32 %v5460, 7
        %v5462 = vsub.s32 0, %v5461
        %v5463 = vrot.slane %v3589, %v5462
        %v5464 = vlaneseq
        %v5465 = vshrl.u32 %v5464, 7
        %v5466 = vsub.s32 1, %v5465
        %v5467 = vrot.slane %v3589, %v5466
        %v5468 = vlaneseq
        %v5469 = vshrl.u32 %v5468, 7
        %v5470 = vsub.s32 2, %v5469
        %v5471 = vrot.slane %v3589, %v5470
        %v5472 = vlaneseq
        %v5473 = vshrl.u32 %v5472, 7
        %v5474 = vsub.s32 3, %v5473
        %v5475 = vrot.slane %v3589, %v5474
        %v5476 = vlaneseq
        %v5477 = vshrl.u32 %v5476, 7
        %v5478 = vsub.s32 4, %v5477
        %v5479 = vrot.slane %v3589, %v5478
        %v5480 = vlaneseq
        %v5481 = vshrl.u32 %v5480, 7
        %v5482 = vsub.s32 5, %v5481
        %v5483 = vrot.slane %v3589, %v5482
        %v5484 = vlaneseq
        %v5485 = vshrl.u32 %v5484, 7
        %v5486 = vsub.s32 6, %v5485
        %v5487 = vrot.slane %v3589, %v5486
        %v5488 = vlaneseq
        %v5489 = vshrl.u32 %v5488, 7
        %v5490 = vsub.s32 7, %v5489
        %v5491 = vrot.slane %v3589, %v5490
        %v5492 = vlaneseq
        %v5493 = vshrl.u32 %v5492, 7
        %v5494 = vsub.s32 0, %v5493
        %v5495 = vrot.slane %v3591, %v5494
        %v5496 = vlaneseq
        %v5497 = vshrl.u32 %v5496, 7
        %v5498 = vsub.s32 1, %v5497
        %v5499 = vrot.slane %v3591, %v5498
        %v5500 = vlaneseq
        %v5501 = vshrl.u32 %v5500, 7
        %v5502 = vsub.s32 2, %v5501
        %v5503 = vrot.slane %v3591, %v5502
        %v5504 = vlaneseq
        %v5505 = vshrl.u32 %v5504, 7
        %v5506 = vsub.s32 3, %v5505
        %v5507 = vrot.slane %v3591, %v5506
        %v5508 = vlaneseq
        %v5509 = vshrl.u32 %v5508, 7
        %v5510 = vsub.s32 4, %v5509
        %v5511 = vrot.slane %v3591, %v5510
        %v5512 = vlaneseq
        %v5513 = vshrl.u32 %v5512, 7
        %v5514 = vsub.s32 5, %v5513
        %v5515 = vrot.slane %v3591, %v5514
        %v5516 = vlaneseq
        %v5517 = vshrl.u32 %v5516, 7
        %v5518 = vsub.s32 6, %v5517
        %v5519 = vrot.slane %v3591, %v5518
        %v5520 = vlaneseq
        %v5521 = vshrl.u32 %v5520, 7
        %v5522 = vsub.s32 7, %v5521
        %v5523 = vrot.slane %v3591, %v5522
        %v5524 = vlaneseq
        %v5525 = vshrl.u32 %v5524, 7
        %v5526 = vsub.s32 0, %v5525
        %v5527 = vrot.slane %v3593, %v5526
        %v5528 = vlaneseq
        %v5529 = vshrl.u32 %v5528, 7
        %v5530 = vsub.s32 1, %v5529
        %v5531 = vrot.slane %v3593, %v5530
        %v5532 = vlaneseq
        %v5533 = vshrl.u32 %v5532, 7
        %v5534 = vsub.s32 2, %v5533
        %v5535 = vrot.slane %v3593, %v5534
        %v5536 = vlaneseq
        %v5537 = vshrl.u32 %v5536, 7
        %v5538 = vsub.s32 3, %v5537
        %v5539 = vrot.slane %v3593, %v5538
        %v5540 = vlaneseq
        %v5541 = vshrl.u32 %v5540, 7
        %v5542 = vsub.s32 4, %v5541
        %v5543 = vrot.slane %v3593, %v5542
        %v5544 = vlaneseq
        %v5545 = vshrl.u32 %v5544, 7
        %v5546 = vsub.s32 5, %v5545
        %v5547 = vrot.slane %v3593, %v5546
        %v5548 = vlaneseq
        %v5549 = vshrl.u32 %v5548, 7
        %v5550 = vsub.s32 6, %v5549
        %v5551 = vrot.slane %v3593, %v5550
        %v5552 = vlaneseq
        %v5553 = vshrl.u32 %v5552, 7
        %v5554 = vsub.s32 7, %v5553
        %v5555 = vrot.slane %v3593, %v5554
        %v5556 = vlaneseq
        %v5557 = vshrl.u32 %v5556, 7
        %v5558 = vsub.s32 0, %v5557
        %v5559 = vrot.slane %v3595, %v5558
        %v5560 = vlaneseq
        %v5561 = vshrl.u32 %v5560, 7
        %v5562 = vsub.s32 1, %v5561
        %v5563 = vrot.slane %v3595, %v5562
        %v5564 = vlaneseq
        %v5565 = vshrl.u32 %v5564, 7
        %v5566 = vsub.s32 2, %v5565
        %v5567 = vrot.slane %v3595, %v5566
        %v5568 = vlaneseq
        %v5569 = vshrl.u32 %v5568, 7
        %v5570 = vsub.s32 3, %v5569
        %v5571 = vrot.slane %v3595, %v5570
        %v5572 = vlaneseq
        %v5573 = vshrl.u32 %v5572, 7
        %v5574 = vsub.s32 4, %v5573
        %v5575 = vrot.slane %v3595, %v5574
        %v5576 = vlaneseq
        %v5577 = vshrl.u32 %v5576, 7
        %v5578 = vsub.s32 5, %v5577
        %v5579 = vrot.slane %v3595, %v5578
        %v5580 = vlaneseq
        %v5581 = vshrl.u32 %v5580, 7
        %v5582 = vsub.s32 6, %v5581
        %v5583 = vrot.slane %v3595, %v5582
        %v5584 = vlaneseq
        %v5585 = vshrl.u32 %v5584, 7
        %v5586 = vsub.s32 7, %v5585
        %v5587 = vrot.slane %v3595, %v5586
        %v5588 = vlaneseq
        %v5589 = vshrl.u32 %v5588, 7
        %v5590 = vsub.s32 0, %v5589
        %v5591 = vrot.slane %v3597, %v5590
        %v5592 = vlaneseq
        %v5593 = vshrl.u32 %v5592, 7
        %v5594 = vsub.s32 1, %v5593
        %v5595 = vrot.slane %v3597, %v5594
        %v5596 = vlaneseq
        %v5597 = vshrl.u32 %v5596, 7
        %v5598 = vsub.s32 2, %v5597
        %v5599 = vrot.slane %v3597, %v5598
        %v5600 = vlaneseq
        %v5601 = vshrl.u32 %v5600, 7
        %v5602 = vsub.s32 3, %v5601
        %v5603 = vrot.slane %v3597, %v5602
        %v5604 = vlaneseq
        %v5605 = vshrl.u32 %v5604, 7
        %v5606 = vsub.s32 4, %v5605
        %v5607 = vrot.slane %v3597, %v5606
        %v5608 = vlaneseq
        %v5609 = vshrl.u32 %v5608, 7
        %v5610 = vsub.s32 5, %v5609
        %v5611 = vrot.slane %v3597, %v5610
        %v5612 = vlaneseq
        %v5613 = vshrl.u32 %v5612, 7
        %v5614 = vsub.s32 6, %v5613
        %v5615 = vrot.slane %v3597, %v5614
        %v5616 = vlaneseq
        %v5617 = vshrl.u32 %v5616, 7
        %v5618 = vsub.s32 7, %v5617
        %v5619 = vrot.slane %v3597, %v5618
        %v5620 = vlaneseq
        %v5621 = vshrl.u32 %v5620, 7
        %v5622 = vsub.s32 0, %v5621
        %v5623 = vrot.slane %v3599, %v5622
        %v5624 = vlaneseq
        %v5625 = vshrl.u32 %v5624, 7
        %v5626 = vsub.s32 1, %v5625
        %v5627 = vrot.slane %v3599, %v5626
        %v5628 = vlaneseq
        %v5629 = vshrl.u32 %v5628, 7
        %v5630 = vsub.s32 2, %v5629
        %v5631 = vrot.slane %v3599, %v5630
        %v5632 = vlaneseq
        %v5633 = vshrl.u32 %v5632, 7
        %v5634 = vsub.s32 3, %v5633
        %v5635 = vrot.slane %v3599, %v5634
        %v5636 = vlaneseq
        %v5637 = vshrl.u32 %v5636, 7
        %v5638 = vsub.s32 4, %v5637
        %v5639 = vrot.slane %v3599, %v5638
        %v5640 = vlaneseq
        %v5641 = vshrl.u32 %v5640, 7
        %v5642 = vsub.s32 5, %v5641
        %v5643 = vrot.slane %v3599, %v5642
        %v5644 = vlaneseq
        %v5645 = vshrl.u32 %v5644, 7
        %v5646 = vsub.s32 6, %v5645
        %v5647 = vrot.slane %v3599, %v5646
        %v5648 = vlaneseq
        %v5649 = vshrl.u32 %v5648, 7
        %v5650 = vsub.s32 7, %v5649
        %v5651 = vrot.slane %v3599, %v5650
        %v5652 = vlaneseq
        %v5653 = vshrl.u32 %v5652, 7
        %v5654 = vsub.s32 0, %v5653
        %v5655 = vrot.slane %v3601, %v5654
        %v5656 = vlaneseq
        %v5657 = vshrl.u32 %v5656, 7
        %v5658 = vsub.s32 1, %v5657
        %v5659 = vrot.slane %v3601, %v5658
        %v5660 = vlaneseq
        %v5661 = vshrl.u32 %v5660, 7
        %v5662 = vsub.s32 2, %v5661
        %v5663 = vrot.slane %v3601, %v5662
        %v5664 = vlaneseq
        %v5665 = vshrl.u32 %v5664, 7
        %v5666 = vsub.s32 3, %v5665
        %v5667 = vrot.slane %v3601, %v5666
        %v5668 = vlaneseq
        %v5669 = vshrl.u32 %v5668, 7
        %v5670 = vsub.s32 4, %v5669
        %v5671 = vrot.slane %v3601, %v5670
        %v5672 = vlaneseq
        %v5673 = vshrl.u32 %v5672, 7
        %v5674 = vsub.s32 5, %v5673
        %v5675 = vrot.slane %v3601, %v5674
        %v5676 = vlaneseq
        %v5677 = vshrl.u32 %v5676, 7
        %v5678 = vsub.s32 6, %v5677
        %v5679 = vrot.slane %v3601, %v5678
        %v5680 = vlaneseq
        %v5681 = vshrl.u32 %v5680, 7
        %v5682 = vsub.s32 7, %v5681
        %v5683 = vrot.slane %v3601, %v5682
        %v5684 = vlaneseq
        %v5685 = vshrl.u32 %v5684, 7
        %v5686 = vsub.s32 0, %v5685
        %v5687 = vrot.slane %v3603, %v5686
        %v5688 = vlaneseq
        %v5689 = vshrl.u32 %v5688, 7
        %v5690 = vsub.s32 1, %v5689
        %v5691 = vrot.slane %v3603, %v5690
        %v5692 = vlaneseq
        %v5693 = vshrl.u32 %v5692, 7
        %v5694 = vsub.s32 2, %v5693
        %v5695 = vrot.slane %v3603, %v5694
        %v5696 = vlaneseq
        %v5697 = vshrl.u32 %v5696, 7
        %v5698 = vsub.s32 3, %v5697
        %v5699 = vrot.slane %v3603, %v5698
        %v5700 = vlaneseq
        %v5701 = vshrl.u32 %v5700, 7
        %v5702 = vsub.s32 4, %v5701
        %v5703 = vrot.slane %v3603, %v5702
        %v5704 = vlaneseq
        %v5705 = vshrl.u32 %v5704, 7
        %v5706 = vsub.s32 5, %v5705
        %v5707 = vrot.slane %v3603, %v5706
        %v5708 = vlaneseq
        %v5709 = vshrl.u32 %v5708, 7
        %v5710 = vsub.s32 6, %v5709
        %v5711 = vrot.slane %v3603, %v5710
        %v5712 = vlaneseq
        %v5713 = vshrl.u32 %v5712, 7
        %v5714 = vsub.s32 7, %v5713
        %v5715 = vrot.slane %v3603, %v5714
        %v5716 = vcombine.low %v3671, %v3675
        %v5717 = vcombine.low %v3679, %v3683
        %v5718 = vcombine.low %v3687, %v3691
        %v5719 = vcombine.low %v3695, %v3699
        %v5721 = vunpack.c.l.s4 1966171168
        %v5722 = vunpack.c.0.s8 %v5721
        %v5723 = vlaneseq
        %v5724 = vshrl.u32 %v5723, 7
        %v5725 = vsub.s32 %v5722, %v5724
        %v5726 = vrot.slane %v5716, %v5725
        %v5728 = vunpack.c.l.s4 1966171168
        %v5729 = vunpack.c.0.s8 %v5728
        %v5730 = vlaneseq
        %v5731 = vshrl.u32 %v5730, 7
        %v5732 = vsub.s32 %v5729, %v5731
        %v5733 = vrot.slane %v5717, %v5732
        %v5735 = vunpack.c.l.s4 1966171168
        %v5736 = vunpack.c.0.s8 %v5735
        %v5737 = vlaneseq
        %v5738 = vshrl.u32 %v5737, 7
        %v5739 = vsub.s32 %v5736, %v5738
        %v5740 = vrot.slane %v5718, %v5739
        %v5742 = vunpack.c.l.s4 1966171168
        %v5743 = vunpack.c.0.s8 %v5742
        %v5744 = vlaneseq
        %v5745 = vshrl.u32 %v5744, 7
        %v5746 = vsub.s32 %v5743, %v5745
        %v5747 = vrot.slane %v5719, %v5746
        %v5748 = vcombine.low %v5726, %v5733
        %v5749 = vcombine.low %v5740, %v5747
        %v5751 = vunpack.c.l.s4 1966171168
        %v5752 = vunpack.c.0.s8 %v5751
        %v5753 = vlaneseq
        %v5754 = vshrl.u32 %v5753, 7
        %v5755 = vsub.s32 %v5752, %v5754
        %v5756 = vrot.slane %v5748, %v5755
        %v5758 = vunpack.c.l.s4 1966171168
        %v5759 = vunpack.c.0.s8 %v5758
        %v5760 = vlaneseq
        %v5761 = vshrl.u32 %v5760, 7
        %v5762 = vsub.s32 %v5759, %v5761
        %v5763 = vrot.slane %v5749, %v5762
        %v5764 = vcombine.low %v5756, %v5763
        %v5765 = vcombine.low %v3703, %v3707
        %v5766 = vcombine.low %v3711, %v3715
        %v5767 = vcombine.low %v3719, %v3723
        %v5768 = vcombine.low %v3727, %v3731
        %v5770 = vunpack.c.l.s4 1966171168
        %v5771 = vunpack.c.0.s8 %v5770
        %v5772 = vlaneseq
        %v5773 = vshrl.u32 %v5772, 7
        %v5774 = vsub.s32 %v5771, %v5773
        %v5775 = vrot.slane %v5765, %v5774
        %v5777 = vunpack.c.l.s4 1966171168
        %v5778 = vunpack.c.0.s8 %v5777
        %v5779 = vlaneseq
        %v5780 = vshrl.u32 %v5779, 7
        %v5781 = vsub.s32 %v5778, %v5780
        %v5782 = vrot.slane %v5766, %v5781
        %v5784 = vunpack.c.l.s4 1966171168
        %v5785 = vunpack.c.0.s8 %v5784
        %v5786 = vlaneseq
        %v5787 = vshrl.u32 %v5786, 7
        %v5788 = vsub.s32 %v5785, %v5787
        %v5789 = vrot.slane %v5767, %v5788
        %v5791 = vunpack.c.l.s4 1966171168
        %v5792 = vunpack.c.0.s8 %v5791
        %v5793 = vlaneseq
        %v5794 = vshrl.u32 %v5793, 7
        %v5795 = vsub.s32 %v5792, %v5794
        %v5796 = vrot.slane %v5768, %v5795
        %v5797 = vcombine.low %v5775, %v5782
        %v5798 = vcombine.low %v5789, %v5796
        %v5800 = vunpack.c.l.s4 1966171168
        %v5801 = vunpack.c.0.s8 %v5800
        %v5802 = vlaneseq
        %v5803 = vshrl.u32 %v5802, 7
        %v5804 = vsub.s32 %v5801, %v5803
        %v5805 = vrot.slane %v5797, %v5804
        %v5807 = vunpack.c.l.s4 1966171168
        %v5808 = vunpack.c.0.s8 %v5807
        %v5809 = vlaneseq
        %v5810 = vshrl.u32 %v5809, 7
        %v5811 = vsub.s32 %v5808, %v5810
        %v5812 = vrot.slane %v5798, %v5811
        %v5813 = vcombine.low %v5805, %v5812
        %v5814 = vcombine.low %v3735, %v3739
        %v5815 = vcombine.low %v3743, %v3747
        %v5816 = vcombine.low %v3751, %v3755
        %v5817 = vcombine.low %v3759, %v3763
        %v5819 = vunpack.c.l.s4 1966171168
        %v5820 = vunpack.c.0.s8 %v5819
        %v5821 = vlaneseq
        %v5822 = vshrl.u32 %v5821, 7
        %v5823 = vsub.s32 %v5820, %v5822
        %v5824 = vrot.slane %v5814, %v5823
        %v5826 = vunpack.c.l.s4 1966171168
        %v5827 = vunpack.c.0.s8 %v5826
        %v5828 = vlaneseq
        %v5829 = vshrl.u32 %v5828, 7
        %v5830 = vsub.s32 %v5827, %v5829
        %v5831 = vrot.slane %v5815, %v5830
        %v5833 = vunpack.c.l.s4 1966171168
        %v5834 = vunpack.c.0.s8 %v5833
        %v5835 = vlaneseq
        %v5836 = vshrl.u32 %v5835, 7
        %v5837 = vsub.s32 %v5834, %v5836
        %v5838 = vrot.slane %v5816, %v5837
        %v5840 = vunpack.c.l.s4 1966171168
        %v5841 = vunpack.c.0.s8 %v5840
        %v5842 = vlaneseq
        %v5843 = vshrl.u32 %v5842, 7
        %v5844 = vsub.s32 %v5841, %v5843
        %v5845 = vrot.slane %v5817, %v5844
        %v5846 = vcombine.low %v5824, %v5831
        %v5847 = vcombine.low %v5838, %v5845
        %v5849 = vunpack.c.l.s4 1966171168
        %v5850 = vunpack.c.0.s8 %v5849
        %v5851 = vlaneseq
        %v5852 = vshrl.u32 %v5851, 7
        %v5853 = vsub.s32 %v5850, %v5852
        %v5854 = vrot.slane %v5846, %v5853
        %v5856 = vunpack.c.l.s4 1966171168
        %v5857 = vunpack.c.0.s8 %v5856
        %v5858 = vlaneseq
        %v5859 = vshrl.u32 %v5858, 7
        %v5860 = vsub.s32 %v5857, %v5859
        %v5861 = vrot.slane %v5847, %v5860
        %v5862 = vcombine.low %v5854, %v5861
        %v5863 = vcombine.low %v3767, %v3771
        %v5864 = vcombine.low %v3775, %v3779
        %v5865 = vcombine.low %v3783, %v3787
        %v5866 = vcombine.low %v3791, %v3795
        %v5868 = vunpack.c.l.s4 1966171168
        %v5869 = vunpack.c.0.s8 %v5868
        %v5870 = vlaneseq
        %v5871 = vshrl.u32 %v5870, 7
        %v5872 = vsub.s32 %v5869, %v5871
        %v5873 = vrot.slane %v5863, %v5872
        %v5875 = vunpack.c.l.s4 1966171168
        %v5876 = vunpack.c.0.s8 %v5875
        %v5877 = vlaneseq
        %v5878 = vshrl.u32 %v5877, 7
        %v5879 = vsub.s32 %v5876, %v5878
        %v5880 = vrot.slane %v5864, %v5879
        %v5882 = vunpack.c.l.s4 1966171168
        %v5883 = vunpack.c.0.s8 %v5882
        %v5884 = vlaneseq
        %v5885 = vshrl.u32 %v5884, 7
        %v5886 = vsub.s32 %v5883, %v5885
        %v5887 = vrot.slane %v5865, %v5886
        %v5889 = vunpack.c.l.s4 1966171168
        %v5890 = vunpack.c.0.s8 %v5889
        %v5891 = vlaneseq
        %v5892 = vshrl.u32 %v5891, 7
        %v5893 = vsub.s32 %v5890, %v5892
        %v5894 = vrot.slane %v5866, %v5893
        %v5895 = vcombine.low %v5873, %v5880
        %v5896 = vcombine.low %v5887, %v5894
        %v5898 = vunpack.c.l.s4 1966171168
        %v5899 = vunpack.c.0.s8 %v5898
        %v5900 = vlaneseq
        %v5901 = vshrl.u32 %v5900, 7
        %v5902 = vsub.s32 %v5899, %v5901
        %v5903 = vrot.slane %v5895, %v5902
        %v5905 = vunpack.c.l.s4 1966171168
        %v5906 = vunpack.c.0.s8 %v5905
        %v5907 = vlaneseq
        %v5908 = vshrl.u32 %v5907, 7
        %v5909 = vsub.s32 %v5906, %v5908
        %v5910 = vrot.slane %v5896, %v5909
        %v5911 = vcombine.low %v5903, %v5910
        %v5912 = vcombine.low %v3799, %v3803
        %v5913 = vcombine.low %v3807, %v3811
        %v5914 = vcombine.low %v3815, %v3819
        %v5915 = vcombine.low %v3823, %v3827
        %v5917 = vunpack.c.l.s4 1966171168
        %v5918 = vunpack.c.0.s8 %v5917
        %v5919 = vlaneseq
        %v5920 = vshrl.u32 %v5919, 7
        %v5921 = vsub.s32 %v5918, %v5920
        %v5922 = vrot.slane %v5912, %v5921
        %v5924 = vunpack.c.l.s4 1966171168
        %v5925 = vunpack.c.0.s8 %v5924
        %v5926 = vlaneseq
        %v5927 = vshrl.u32 %v5926, 7
        %v5928 = vsub.s32 %v5925, %v5927
        %v5929 = vrot.slane %v5913, %v5928
        %v5931 = vunpack.c.l.s4 1966171168
        %v5932 = vunpack.c.0.s8 %v5931
        %v5933 = vlaneseq
        %v5934 = vshrl.u32 %v5933, 7
        %v5935 = vsub.s32 %v5932, %v5934
        %v5936 = vrot.slane %v5914, %v5935
        %v5938 = vunpack.c.l.s4 1966171168
        %v5939 = vunpack.c.0.s8 %v5938
        %v5940 = vlaneseq
        %v5941 = vshrl.u32 %v5940, 7
        %v5942 = vsub.s32 %v5939, %v5941
        %v5943 = vrot.slane %v5915, %v5942
        %v5944 = vcombine.low %v5922, %v5929
        %v5945 = vcombine.low %v5936, %v5943
        %v5947 = vunpack.c.l.s4 1966171168
        %v5948 = vunpack.c.0.s8 %v5947
        %v5949 = vlaneseq
        %v5950 = vshrl.u32 %v5949, 7
        %v5951 = vsub.s32 %v5948, %v5950
        %v5952 = vrot.slane %v5944, %v5951
        %v5954 = vunpack.c.l.s4 1966171168
        %v5955 = vunpack.c.0.s8 %v5954
        %v5956 = vlaneseq
        %v5957 = vshrl.u32 %v5956, 7
        %v5958 = vsub.s32 %v5955, %v5957
        %v5959 = vrot.slane %v5945, %v5958
        %v5960 = vcombine.low %v5952, %v5959
        %v5961 = vcombine.low %v3831, %v3835
        %v5962 = vcombine.low %v3839, %v3843
        %v5963 = vcombine.low %v3847, %v3851
        %v5964 = vcombine.low %v3855, %v3859
        %v5966 = vunpack.c.l.s4 1966171168
        %v5967 = vunpack.c.0.s8 %v5966
        %v5968 = vlaneseq
        %v5969 = vshrl.u32 %v5968, 7
        %v5970 = vsub.s32 %v5967, %v5969
        %v5971 = vrot.slane %v5961, %v5970
        %v5973 = vunpack.c.l.s4 1966171168
        %v5974 = vunpack.c.0.s8 %v5973
        %v5975 = vlaneseq
        %v5976 = vshrl.u32 %v5975, 7
        %v5977 = vsub.s32 %v5974, %v5976
        %v5978 = vrot.slane %v5962, %v5977
        %v5980 = vunpack.c.l.s4 1966171168
        %v5981 = vunpack.c.0.s8 %v5980
        %v5982 = vlaneseq
        %v5983 = vshrl.u32 %v5982, 7
        %v5984 = vsub.s32 %v5981, %v5983
        %v5985 = vrot.slane %v5963, %v5984
        %v5987 = vunpack.c.l.s4 1966171168
        %v5988 = vunpack.c.0.s8 %v5987
        %v5989 = vlaneseq
        %v5990 = vshrl.u32 %v5989, 7
        %v5991 = vsub.s32 %v5988, %v5990
        %v5992 = vrot.slane %v5964, %v5991
        %v5993 = vcombine.low %v5971, %v5978
        %v5994 = vcombine.low %v5985, %v5992
        %v5996 = vunpack.c.l.s4 1966171168
        %v5997 = vunpack.c.0.s8 %v5996
        %v5998 = vlaneseq
        %v5999 = vshrl.u32 %v5998, 7
        %v6000 = vsub.s32 %v5997, %v5999
        %v6001 = vrot.slane %v5993, %v6000
        %v6003 = vunpack.c.l.s4 1966171168
        %v6004 = vunpack.c.0.s8 %v6003
        %v6005 = vlaneseq
        %v6006 = vshrl.u32 %v6005, 7
        %v6007 = vsub.s32 %v6004, %v6006
        %v6008 = vrot.slane %v5994, %v6007
        %v6009 = vcombine.low %v6001, %v6008
        %v6010 = vcombine.low %v3863, %v3867
        %v6011 = vcombine.low %v3871, %v3875
        %v6012 = vcombine.low %v3879, %v3883
        %v6013 = vcombine.low %v3887, %v3891
        %v6015 = vunpack.c.l.s4 1966171168
        %v6016 = vunpack.c.0.s8 %v6015
        %v6017 = vlaneseq
        %v6018 = vshrl.u32 %v6017, 7
        %v6019 = vsub.s32 %v6016, %v6018
        %v6020 = vrot.slane %v6010, %v6019
        %v6022 = vunpack.c.l.s4 1966171168
        %v6023 = vunpack.c.0.s8 %v6022
        %v6024 = vlaneseq
        %v6025 = vshrl.u32 %v6024, 7
        %v6026 = vsub.s32 %v6023, %v6025
        %v6027 = vrot.slane %v6011, %v6026
        %v6029 = vunpack.c.l.s4 1966171168
        %v6030 = vunpack.c.0.s8 %v6029
        %v6031 = vlaneseq
        %v6032 = vshrl.u32 %v6031, 7
        %v6033 = vsub.s32 %v6030, %v6032
        %v6034 = vrot.slane %v6012, %v6033
        %v6036 = vunpack.c.l.s4 1966171168
        %v6037 = vunpack.c.0.s8 %v6036
        %v6038 = vlaneseq
        %v6039 = vshrl.u32 %v6038, 7
        %v6040 = vsub.s32 %v6037, %v6039
        %v6041 = vrot.slane %v6013, %v6040
        %v6042 = vcombine.low %v6020, %v6027
        %v6043 = vcombine.low %v6034, %v6041
        %v6045 = vunpack.c.l.s4 1966171168
        %v6046 = vunpack.c.0.s8 %v6045
        %v6047 = vlaneseq
        %v6048 = vshrl.u32 %v6047, 7
        %v6049 = vsub.s32 %v6046, %v6048
        %v6050 = vrot.slane %v6042, %v6049
        %v6052 = vunpack.c.l.s4 1966171168
        %v6053 = vunpack.c.0.s8 %v6052
        %v6054 = vlaneseq
        %v6055 = vshrl.u32 %v6054, 7
        %v6056 = vsub.s32 %v6053, %v6055
        %v6057 = vrot.slane %v6043, %v6056
        %v6058 = vcombine.low %v6050, %v6057
        %v6059 = vcombine.low %v3895, %v3899
        %v6060 = vcombine.low %v3903, %v3907
        %v6061 = vcombine.low %v3911, %v3915
        %v6062 = vcombine.low %v3919, %v3923
        %v6064 = vunpack.c.l.s4 1966171168
        %v6065 = vunpack.c.0.s8 %v6064
        %v6066 = vlaneseq
        %v6067 = vshrl.u32 %v6066, 7
        %v6068 = vsub.s32 %v6065, %v6067
        %v6069 = vrot.slane %v6059, %v6068
        %v6071 = vunpack.c.l.s4 1966171168
        %v6072 = vunpack.c.0.s8 %v6071
        %v6073 = vlaneseq
        %v6074 = vshrl.u32 %v6073, 7
        %v6075 = vsub.s32 %v6072, %v6074
        %v6076 = vrot.slane %v6060, %v6075
        %v6078 = vunpack.c.l.s4 1966171168
        %v6079 = vunpack.c.0.s8 %v6078
        %v6080 = vlaneseq
        %v6081 = vshrl.u32 %v6080, 7
        %v6082 = vsub.s32 %v6079, %v6081
        %v6083 = vrot.slane %v6061, %v6082
        %v6085 = vunpack.c.l.s4 1966171168
        %v6086 = vunpack.c.0.s8 %v6085
        %v6087 = vlaneseq
        %v6088 = vshrl.u32 %v6087, 7
        %v6089 = vsub.s32 %v6086, %v6088
        %v6090 = vrot.slane %v6062, %v6089
        %v6091 = vcombine.low %v6069, %v6076
        %v6092 = vcombine.low %v6083, %v6090
        %v6094 = vunpack.c.l.s4 1966171168
        %v6095 = vunpack.c.0.s8 %v6094
        %v6096 = vlaneseq
        %v6097 = vshrl.u32 %v6096, 7
        %v6098 = vsub.s32 %v6095, %v6097
        %v6099 = vrot.slane %v6091, %v6098
        %v6101 = vunpack.c.l.s4 1966171168
        %v6102 = vunpack.c.0.s8 %v6101
        %v6103 = vlaneseq
        %v6104 = vshrl.u32 %v6103, 7
        %v6105 = vsub.s32 %v6102, %v6104
        %v6106 = vrot.slane %v6092, %v6105
        %v6107 = vcombine.low %v6099, %v6106
        %v6108 = vcombine.low %v3927, %v3931
        %v6109 = vcombine.low %v3935, %v3939
        %v6110 = vcombine.low %v3943, %v3947
        %v6111 = vcombine.low %v3951, %v3955
        %v6113 = vunpack.c.l.s4 1966171168
        %v6114 = vunpack.c.0.s8 %v6113
        %v6115 = vlaneseq
        %v6116 = vshrl.u32 %v6115, 7
        %v6117 = vsub.s32 %v6114, %v6116
        %v6118 = vrot.slane %v6108, %v6117
        %v6120 = vunpack.c.l.s4 1966171168
        %v6121 = vunpack.c.0.s8 %v6120
        %v6122 = vlaneseq
        %v6123 = vshrl.u32 %v6122, 7
        %v6124 = vsub.s32 %v6121, %v6123
        %v6125 = vrot.slane %v6109, %v6124
        %v6127 = vunpack.c.l.s4 1966171168
        %v6128 = vunpack.c.0.s8 %v6127
        %v6129 = vlaneseq
        %v6130 = vshrl.u32 %v6129, 7
        %v6131 = vsub.s32 %v6128, %v6130
        %v6132 = vrot.slane %v6110, %v6131
        %v6134 = vunpack.c.l.s4 1966171168
        %v6135 = vunpack.c.0.s8 %v6134
        %v6136 = vlaneseq
        %v6137 = vshrl.u32 %v6136, 7
        %v6138 = vsub.s32 %v6135, %v6137
        %v6139 = vrot.slane %v6111, %v6138
        %v6140 = vcombine.low %v6118, %v6125
        %v6141 = vcombine.low %v6132, %v6139
        %v6143 = vunpack.c.l.s4 1966171168
        %v6144 = vunpack.c.0.s8 %v6143
        %v6145 = vlaneseq
        %v6146 = vshrl.u32 %v6145, 7
        %v6147 = vsub.s32 %v6144, %v6146
        %v6148 = vrot.slane %v6140, %v6147
        %v6150 = vunpack.c.l.s4 1966171168
        %v6151 = vunpack.c.0.s8 %v6150
        %v6152 = vlaneseq
        %v6153 = vshrl.u32 %v6152, 7
        %v6154 = vsub.s32 %v6151, %v6153
        %v6155 = vrot.slane %v6141, %v6154
        %v6156 = vcombine.low %v6148, %v6155
        %v6157 = vcombine.low %v3959, %v3963
        %v6158 = vcombine.low %v3967, %v3971
        %v6159 = vcombine.low %v3975, %v3979
        %v6160 = vcombine.low %v3983, %v3987
        %v6162 = vunpack.c.l.s4 1966171168
        %v6163 = vunpack.c.0.s8 %v6162
        %v6164 = vlaneseq
        %v6165 = vshrl.u32 %v6164, 7
        %v6166 = vsub.s32 %v6163, %v6165
        %v6167 = vrot.slane %v6157, %v6166
        %v6169 = vunpack.c.l.s4 1966171168
        %v6170 = vunpack.c.0.s8 %v6169
        %v6171 = vlaneseq
        %v6172 = vshrl.u32 %v6171, 7
        %v6173 = vsub.s32 %v6170, %v6172
        %v6174 = vrot.slane %v6158, %v6173
        %v6176 = vunpack.c.l.s4 1966171168
        %v6177 = vunpack.c.0.s8 %v6176
        %v6178 = vlaneseq
        %v6179 = vshrl.u32 %v6178, 7
        %v6180 = vsub.s32 %v6177, %v6179
        %v6181 = vrot.slane %v6159, %v6180
        %v6183 = vunpack.c.l.s4 1966171168
        %v6184 = vunpack.c.0.s8 %v6183
        %v6185 = vlaneseq
        %v6186 = vshrl.u32 %v6185, 7
        %v6187 = vsub.s32 %v6184, %v6186
        %v6188 = vrot.slane %v6160, %v6187
        %v6189 = vcombine.low %v6167, %v6174
        %v6190 = vcombine.low %v6181, %v6188
        %v6192 = vunpack.c.l.s4 1966171168
        %v6193 = vunpack.c.0.s8 %v6192
        %v6194 = vlaneseq
        %v6195 = vshrl.u32 %v6194, 7
        %v6196 = vsub.s32 %v6193, %v6195
        %v6197 = vrot.slane %v6189, %v6196
        %v6199 = vunpack.c.l.s4 1966171168
        %v6200 = vunpack.c.0.s8 %v6199
        %v6201 = vlaneseq
        %v6202 = vshrl.u32 %v6201, 7
        %v6203 = vsub.s32 %v6200, %v6202
        %v6204 = vrot.slane %v6190, %v6203
        %v6205 = vcombine.low %v6197, %v6204
        %v6206 = vcombine.low %v3991, %v3995
        %v6207 = vcombine.low %v3999, %v4003
        %v6208 = vcombine.low %v4007, %v4011
        %v6209 = vcombine.low %v4015, %v4019
        %v6211 = vunpack.c.l.s4 1966171168
        %v6212 = vunpack.c.0.s8 %v6211
        %v6213 = vlaneseq
        %v6214 = vshrl.u32 %v6213, 7
        %v6215 = vsub.s32 %v6212, %v6214
        %v6216 = vrot.slane %v6206, %v6215
        %v6218 = vunpack.c.l.s4 1966171168
        %v6219 = vunpack.c.0.s8 %v6218
        %v6220 = vlaneseq
        %v6221 = vshrl.u32 %v6220, 7
        %v6222 = vsub.s32 %v6219, %v6221
        %v6223 = vrot.slane %v6207, %v6222
        %v6225 = vunpack.c.l.s4 1966171168
        %v6226 = vunpack.c.0.s8 %v6225
        %v6227 = vlaneseq
        %v6228 = vshrl.u32 %v6227, 7
        %v6229 = vsub.s32 %v6226, %v6228
        %v6230 = vrot.slane %v6208, %v6229
        %v6232 = vunpack.c.l.s4 1966171168
        %v6233 = vunpack.c.0.s8 %v6232
        %v6234 = vlaneseq
        %v6235 = vshrl.u32 %v6234, 7
        %v6236 = vsub.s32 %v6233, %v6235
        %v6237 = vrot.slane %v6209, %v6236
        %v6238 = vcombine.low %v6216, %v6223
        %v6239 = vcombine.low %v6230, %v6237
        %v6241 = vunpack.c.l.s4 1966171168
        %v6242 = vunpack.c.0.s8 %v6241
        %v6243 = vlaneseq
        %v6244 = vshrl.u32 %v6243, 7
        %v6245 = vsub.s32 %v6242, %v6244
        %v6246 = vrot.slane %v6238, %v6245
        %v6248 = vunpack.c.l.s4 1966171168
        %v6249 = vunpack.c.0.s8 %v6248
        %v6250 = vlaneseq
        %v6251 = vshrl.u32 %v6250, 7
        %v6252 = vsub.s32 %v6249, %v6251
        %v6253 = vrot.slane %v6239, %v6252
        %v6254 = vcombine.low %v6246, %v6253
        %v6255 = vcombine.low %v4023, %v4027
        %v6256 = vcombine.low %v4031, %v4035
        %v6257 = vcombine.low %v4039, %v4043
        %v6258 = vcombine.low %v4047, %v4051
        %v6260 = vunpack.c.l.s4 1966171168
        %v6261 = vunpack.c.0.s8 %v6260
        %v6262 = vlaneseq
        %v6263 = vshrl.u32 %v6262, 7
        %v6264 = vsub.s32 %v6261, %v6263
        %v6265 = vrot.slane %v6255, %v6264
        %v6267 = vunpack.c.l.s4 1966171168
        %v6268 = vunpack.c.0.s8 %v6267
        %v6269 = vlaneseq
        %v6270 = vshrl.u32 %v6269, 7
        %v6271 = vsub.s32 %v6268, %v6270
        %v6272 = vrot.slane %v6256, %v6271
        %v6274 = vunpack.c.l.s4 1966171168
        %v6275 = vunpack.c.0.s8 %v6274
        %v6276 = vlaneseq
        %v6277 = vshrl.u32 %v6276, 7
        %v6278 = vsub.s32 %v6275, %v6277
        %v6279 = vrot.slane %v6257, %v6278
        %v6281 = vunpack.c.l.s4 1966171168
        %v6282 = vunpack.c.0.s8 %v6281
        %v6283 = vlaneseq
        %v6284 = vshrl.u32 %v6283, 7
        %v6285 = vsub.s32 %v6282, %v6284
        %v6286 = vrot.slane %v6258, %v6285
        %v6287 = vcombine.low %v6265, %v6272
        %v6288 = vcombine.low %v6279, %v6286
        %v6290 = vunpack.c.l.s4 1966171168
        %v6291 = vunpack.c.0.s8 %v6290
        %v6292 = vlaneseq
        %v6293 = vshrl.u32 %v6292, 7
        %v6294 = vsub.s32 %v6291, %v6293
        %v6295 = vrot.slane %v6287, %v6294
        %v6297 = vunpack.c.l.s4 1966171168
        %v6298 = vunpack.c.0.s8 %v6297
        %v6299 = vlaneseq
        %v6300 = vshrl.u32 %v6299, 7
        %v6301 = vsub.s32 %v6298, %v6300
        %v6302 = vrot.slane %v6288, %v6301
        %v6303 = vcombine.low %v6295, %v6302
        %v6304 = vcombine.low %v4055, %v4059
        %v6305 = vcombine.low %v4063, %v4067
        %v6306 = vcombine.low %v4071, %v4075
        %v6307 = vcombine.low %v4079, %v4083
        %v6309 = vunpack.c.l.s4 1966171168
        %v6310 = vunpack.c.0.s8 %v6309
        %v6311 = vlaneseq
        %v6312 = vshrl.u32 %v6311, 7
        %v6313 = vsub.s32 %v6310, %v6312
        %v6314 = vrot.slane %v6304, %v6313
        %v6316 = vunpack.c.l.s4 1966171168
        %v6317 = vunpack.c.0.s8 %v6316
        %v6318 = vlaneseq
        %v6319 = vshrl.u32 %v6318, 7
        %v6320 = vsub.s32 %v6317, %v6319
        %v6321 = vrot.slane %v6305, %v6320
        %v6323 = vunpack.c.l.s4 1966171168
        %v6324 = vunpack.c.0.s8 %v6323
        %v6325 = vlaneseq
        %v6326 = vshrl.u32 %v6325, 7
        %v6327 = vsub.s32 %v6324, %v6326
        %v6328 = vrot.slane %v6306, %v6327
        %v6330 = vunpack.c.l.s4 1966171168
        %v6331 = vunpack.c.0.s8 %v6330
        %v6332 = vlaneseq
        %v6333 = vshrl.u32 %v6332, 7
        %v6334 = vsub.s32 %v6331, %v6333
        %v6335 = vrot.slane %v6307, %v6334
        %v6336 = vcombine.low %v6314, %v6321
        %v6337 = vcombine.low %v6328, %v6335
        %v6339 = vunpack.c.l.s4 1966171168
        %v6340 = vunpack.c.0.s8 %v6339
        %v6341 = vlaneseq
        %v6342 = vshrl.u32 %v6341, 7
        %v6343 = vsub.s32 %v6340, %v6342
        %v6344 = vrot.slane %v6336, %v6343
        %v6346 = vunpack.c.l.s4 1966171168
        %v6347 = vunpack.c.0.s8 %v6346
        %v6348 = vlaneseq
        %v6349 = vshrl.u32 %v6348, 7
        %v6350 = vsub.s32 %v6347, %v6349
        %v6351 = vrot.slane %v6337, %v6350
        %v6352 = vcombine.low %v6344, %v6351
        %v6353 = vcombine.low %v4087, %v4091
        %v6354 = vcombine.low %v4095, %v4099
        %v6355 = vcombine.low %v4103, %v4107
        %v6356 = vcombine.low %v4111, %v4115
        %v6358 = vunpack.c.l.s4 1966171168
        %v6359 = vunpack.c.0.s8 %v6358
        %v6360 = vlaneseq
        %v6361 = vshrl.u32 %v6360, 7
        %v6362 = vsub.s32 %v6359, %v6361
        %v6363 = vrot.slane %v6353, %v6362
        %v6365 = vunpack.c.l.s4 1966171168
        %v6366 = vunpack.c.0.s8 %v6365
        %v6367 = vlaneseq
        %v6368 = vshrl.u32 %v6367, 7
        %v6369 = vsub.s32 %v6366, %v6368
        %v6370 = vrot.slane %v6354, %v6369
        %v6372 = vunpack.c.l.s4 1966171168
        %v6373 = vunpack.c.0.s8 %v6372
        %v6374 = vlaneseq
        %v6375 = vshrl.u32 %v6374, 7
        %v6376 = vsub.s32 %v6373, %v6375
        %v6377 = vrot.slane %v6355, %v6376
        %v6379 = vunpack.c.l.s4 1966171168
        %v6380 = vunpack.c.0.s8 %v6379
        %v6381 = vlaneseq
        %v6382 = vshrl.u32 %v6381, 7
        %v6383 = vsub.s32 %v6380, %v6382
        %v6384 = vrot.slane %v6356, %v6383
        %v6385 = vcombine.low %v6363, %v6370
        %v6386 = vcombine.low %v6377, %v6384
        %v6388 = vunpack.c.l.s4 1966171168
        %v6389 = vunpack.c.0.s8 %v6388
        %v6390 = vlaneseq
        %v6391 = vshrl.u32 %v6390, 7
        %v6392 = vsub.s32 %v6389, %v6391
        %v6393 = vrot.slane %v6385, %v6392
        %v6395 = vunpack.c.l.s4 1966171168
        %v6396 = vunpack.c.0.s8 %v6395
        %v6397 = vlaneseq
        %v6398 = vshrl.u32 %v6397, 7
        %v6399 = vsub.s32 %v6396, %v6398
        %v6400 = vrot.slane %v6386, %v6399
        %v6401 = vcombine.low %v6393, %v6400
        %v6402 = vcombine.low %v4119, %v4123
        %v6403 = vcombine.low %v4127, %v4131
        %v6404 = vcombine.low %v4135, %v4139
        %v6405 = vcombine.low %v4143, %v4147
        %v6407 = vunpack.c.l.s4 1966171168
        %v6408 = vunpack.c.0.s8 %v6407
        %v6409 = vlaneseq
        %v6410 = vshrl.u32 %v6409, 7
        %v6411 = vsub.s32 %v6408, %v6410
        %v6412 = vrot.slane %v6402, %v6411
        %v6414 = vunpack.c.l.s4 1966171168
        %v6415 = vunpack.c.0.s8 %v6414
        %v6416 = vlaneseq
        %v6417 = vshrl.u32 %v6416, 7
        %v6418 = vsub.s32 %v6415, %v6417
        %v6419 = vrot.slane %v6403, %v6418
        %v6421 = vunpack.c.l.s4 1966171168
        %v6422 = vunpack.c.0.s8 %v6421
        %v6423 = vlaneseq
        %v6424 = vshrl.u32 %v6423, 7
        %v6425 = vsub.s32 %v6422, %v6424
        %v6426 = vrot.slane %v6404, %v6425
        %v6428 = vunpack.c.l.s4 1966171168
        %v6429 = vunpack.c.0.s8 %v6428
        %v6430 = vlaneseq
        %v6431 = vshrl.u32 %v6430, 7
        %v6432 = vsub.s32 %v6429, %v6431
        %v6433 = vrot.slane %v6405, %v6432
        %v6434 = vcombine.low %v6412, %v6419
        %v6435 = vcombine.low %v6426, %v6433
        %v6437 = vunpack.c.l.s4 1966171168
        %v6438 = vunpack.c.0.s8 %v6437
        %v6439 = vlaneseq
        %v6440 = vshrl.u32 %v6439, 7
        %v6441 = vsub.s32 %v6438, %v6440
        %v6442 = vrot.slane %v6434, %v6441
        %v6444 = vunpack.c.l.s4 1966171168
        %v6445 = vunpack.c.0.s8 %v6444
        %v6446 = vlaneseq
        %v6447 = vshrl.u32 %v6446, 7
        %v6448 = vsub.s32 %v6445, %v6447
        %v6449 = vrot.slane %v6435, %v6448
        %v6450 = vcombine.low %v6442, %v6449
        %v6451 = vcombine.low %v4151, %v4155
        %v6452 = vcombine.low %v4159, %v4163
        %v6453 = vcombine.low %v4167, %v4171
        %v6454 = vcombine.low %v4175, %v4179
        %v6456 = vunpack.c.l.s4 1966171168
        %v6457 = vunpack.c.0.s8 %v6456
        %v6458 = vlaneseq
        %v6459 = vshrl.u32 %v6458, 7
        %v6460 = vsub.s32 %v6457, %v6459
        %v6461 = vrot.slane %v6451, %v6460
        %v6463 = vunpack.c.l.s4 1966171168
        %v6464 = vunpack.c.0.s8 %v6463
        %v6465 = vlaneseq
        %v6466 = vshrl.u32 %v6465, 7
        %v6467 = vsub.s32 %v6464, %v6466
        %v6468 = vrot.slane %v6452, %v6467
        %v6470 = vunpack.c.l.s4 1966171168
        %v6471 = vunpack.c.0.s8 %v6470
        %v6472 = vlaneseq
        %v6473 = vshrl.u32 %v6472, 7
        %v6474 = vsub.s32 %v6471, %v6473
        %v6475 = vrot.slane %v6453, %v6474
        %v6477 = vunpack.c.l.s4 1966171168
        %v6478 = vunpack.c.0.s8 %v6477
        %v6479 = vlaneseq
        %v6480 = vshrl.u32 %v6479, 7
        %v6481 = vsub.s32 %v6478, %v6480
        %v6482 = vrot.slane %v6454, %v6481
        %v6483 = vcombine.low %v6461, %v6468
        %v6484 = vcombine.low %v6475, %v6482
        %v6486 = vunpack.c.l.s4 1966171168
        %v6487 = vunpack.c.0.s8 %v6486
        %v6488 = vlaneseq
        %v6489 = vshrl.u32 %v6488, 7
        %v6490 = vsub.s32 %v6487, %v6489
        %v6491 = vrot.slane %v6483, %v6490
        %v6493 = vunpack.c.l.s4 1966171168
        %v6494 = vunpack.c.0.s8 %v6493
        %v6495 = vlaneseq
        %v6496 = vshrl.u32 %v6495, 7
        %v6497 = vsub.s32 %v6494, %v6496
        %v6498 = vrot.slane %v6484, %v6497
        %v6499 = vcombine.low %v6491, %v6498
        %v6500 = vcombine.low %v4183, %v4187
        %v6501 = vcombine.low %v4191, %v4195
        %v6502 = vcombine.low %v4199, %v4203
        %v6503 = vcombine.low %v4207, %v4211
        %v6505 = vunpack.c.l.s4 1966171168
        %v6506 = vunpack.c.0.s8 %v6505
        %v6507 = vlaneseq
        %v6508 = vshrl.u32 %v6507, 7
        %v6509 = vsub.s32 %v6506, %v6508
        %v6510 = vrot.slane %v6500, %v6509
        %v6512 = vunpack.c.l.s4 1966171168
        %v6513 = vunpack.c.0.s8 %v6512
        %v6514 = vlaneseq
        %v6515 = vshrl.u32 %v6514, 7
        %v6516 = vsub.s32 %v6513, %v6515
        %v6517 = vrot.slane %v6501, %v6516
        %v6519 = vunpack.c.l.s4 1966171168
        %v6520 = vunpack.c.0.s8 %v6519
        %v6521 = vlaneseq
        %v6522 = vshrl.u32 %v6521, 7
        %v6523 = vsub.s32 %v6520, %v6522
        %v6524 = vrot.slane %v6502, %v6523
        %v6526 = vunpack.c.l.s4 1966171168
        %v6527 = vunpack.c.0.s8 %v6526
        %v6528 = vlaneseq
        %v6529 = vshrl.u32 %v6528, 7
        %v6530 = vsub.s32 %v6527, %v6529
        %v6531 = vrot.slane %v6503, %v6530
        %v6532 = vcombine.low %v6510, %v6517
        %v6533 = vcombine.low %v6524, %v6531
        %v6535 = vunpack.c.l.s4 1966171168
        %v6536 = vunpack.c.0.s8 %v6535
        %v6537 = vlaneseq
        %v6538 = vshrl.u32 %v6537, 7
        %v6539 = vsub.s32 %v6536, %v6538
        %v6540 = vrot.slane %v6532, %v6539
        %v6542 = vunpack.c.l.s4 1966171168
        %v6543 = vunpack.c.0.s8 %v6542
        %v6544 = vlaneseq
        %v6545 = vshrl.u32 %v6544, 7
        %v6546 = vsub.s32 %v6543, %v6545
        %v6547 = vrot.slane %v6533, %v6546
        %v6548 = vcombine.low %v6540, %v6547
        %v6549 = vcombine.low %v4215, %v4219
        %v6550 = vcombine.low %v4223, %v4227
        %v6551 = vcombine.low %v4231, %v4235
        %v6552 = vcombine.low %v4239, %v4243
        %v6554 = vunpack.c.l.s4 1966171168
        %v6555 = vunpack.c.0.s8 %v6554
        %v6556 = vlaneseq
        %v6557 = vshrl.u32 %v6556, 7
        %v6558 = vsub.s32 %v6555, %v6557
        %v6559 = vrot.slane %v6549, %v6558
        %v6561 = vunpack.c.l.s4 1966171168
        %v6562 = vunpack.c.0.s8 %v6561
        %v6563 = vlaneseq
        %v6564 = vshrl.u32 %v6563, 7
        %v6565 = vsub.s32 %v6562, %v6564
        %v6566 = vrot.slane %v6550, %v6565
        %v6568 = vunpack.c.l.s4 1966171168
        %v6569 = vunpack.c.0.s8 %v6568
        %v6570 = vlaneseq
        %v6571 = vshrl.u32 %v6570, 7
        %v6572 = vsub.s32 %v6569, %v6571
        %v6573 = vrot.slane %v6551, %v6572
        %v6575 = vunpack.c.l.s4 1966171168
        %v6576 = vunpack.c.0.s8 %v6575
        %v6577 = vlaneseq
        %v6578 = vshrl.u32 %v6577, 7
        %v6579 = vsub.s32 %v6576, %v6578
        %v6580 = vrot.slane %v6552, %v6579
        %v6581 = vcombine.low %v6559, %v6566
        %v6582 = vcombine.low %v6573, %v6580
        %v6584 = vunpack.c.l.s4 1966171168
        %v6585 = vunpack.c.0.s8 %v6584
        %v6586 = vlaneseq
        %v6587 = vshrl.u32 %v6586, 7
        %v6588 = vsub.s32 %v6585, %v6587
        %v6589 = vrot.slane %v6581, %v6588
        %v6591 = vunpack.c.l.s4 1966171168
        %v6592 = vunpack.c.0.s8 %v6591
        %v6593 = vlaneseq
        %v6594 = vshrl.u32 %v6593, 7
        %v6595 = vsub.s32 %v6592, %v6594
        %v6596 = vrot.slane %v6582, %v6595
        %v6597 = vcombine.low %v6589, %v6596
        %v6598 = vcombine.low %v4247, %v4251
        %v6599 = vcombine.low %v4255, %v4259
        %v6600 = vcombine.low %v4263, %v4267
        %v6601 = vcombine.low %v4271, %v4275
        %v6603 = vunpack.c.l.s4 1966171168
        %v6604 = vunpack.c.0.s8 %v6603
        %v6605 = vlaneseq
        %v6606 = vshrl.u32 %v6605, 7
        %v6607 = vsub.s32 %v6604, %v6606
        %v6608 = vrot.slane %v6598, %v6607
        %v6610 = vunpack.c.l.s4 1966171168
        %v6611 = vunpack.c.0.s8 %v6610
        %v6612 = vlaneseq
        %v6613 = vshrl.u32 %v6612, 7
        %v6614 = vsub.s32 %v6611, %v6613
        %v6615 = vrot.slane %v6599, %v6614
        %v6617 = vunpack.c.l.s4 1966171168
        %v6618 = vunpack.c.0.s8 %v6617
        %v6619 = vlaneseq
        %v6620 = vshrl.u32 %v6619, 7
        %v6621 = vsub.s32 %v6618, %v6620
        %v6622 = vrot.slane %v6600, %v6621
        %v6624 = vunpack.c.l.s4 1966171168
        %v6625 = vunpack.c.0.s8 %v6624
        %v6626 = vlaneseq
        %v6627 = vshrl.u32 %v6626, 7
        %v6628 = vsub.s32 %v6625, %v6627
        %v6629 = vrot.slane %v6601, %v6628
        %v6630 = vcombine.low %v6608, %v6615
        %v6631 = vcombine.low %v6622, %v6629
        %v6633 = vunpack.c.l.s4 1966171168
        %v6634 = vunpack.c.0.s8 %v6633
        %v6635 = vlaneseq
        %v6636 = vshrl.u32 %v6635, 7
        %v6637 = vsub.s32 %v6634, %v6636
        %v6638 = vrot.slane %v6630, %v6637
        %v6640 = vunpack.c.l.s4 1966171168
        %v6641 = vunpack.c.0.s8 %v6640
        %v6642 = vlaneseq
        %v6643 = vshrl.u32 %v6642, 7
        %v6644 = vsub.s32 %v6641, %v6643
        %v6645 = vrot.slane %v6631, %v6644
        %v6646 = vcombine.low %v6638, %v6645
        %v6647 = vcombine.low %v4279, %v4283
        %v6648 = vcombine.low %v4287, %v4291
        %v6649 = vcombine.low %v4295, %v4299
        %v6650 = vcombine.low %v4303, %v4307
        %v6652 = vunpack.c.l.s4 1966171168
        %v6653 = vunpack.c.0.s8 %v6652
        %v6654 = vlaneseq
        %v6655 = vshrl.u32 %v6654, 7
        %v6656 = vsub.s32 %v6653, %v6655
        %v6657 = vrot.slane %v6647, %v6656
        %v6659 = vunpack.c.l.s4 1966171168
        %v6660 = vunpack.c.0.s8 %v6659
        %v6661 = vlaneseq
        %v6662 = vshrl.u32 %v6661, 7
        %v6663 = vsub.s32 %v6660, %v6662
        %v6664 = vrot.slane %v6648, %v6663
        %v6666 = vunpack.c.l.s4 1966171168
        %v6667 = vunpack.c.0.s8 %v6666
        %v6668 = vlaneseq
        %v6669 = vshrl.u32 %v6668, 7
        %v6670 = vsub.s32 %v6667, %v6669
        %v6671 = vrot.slane %v6649, %v6670
        %v6673 = vunpack.c.l.s4 1966171168
        %v6674 = vunpack.c.0.s8 %v6673
        %v6675 = vlaneseq
        %v6676 = vshrl.u32 %v6675, 7
        %v6677 = vsub.s32 %v6674, %v6676
        %v6678 = vrot.slane %v6650, %v6677
        %v6679 = vcombine.low %v6657, %v6664
        %v6680 = vcombine.low %v6671, %v6678
        %v6682 = vunpack.c.l.s4 1966171168
        %v6683 = vunpack.c.0.s8 %v6682
        %v6684 = vlaneseq
        %v6685 = vshrl.u32 %v6684, 7
        %v6686 = vsub.s32 %v6683, %v6685
        %v6687 = vrot.slane %v6679, %v6686
        %v6689 = vunpack.c.l.s4 1966171168
        %v6690 = vunpack.c.0.s8 %v6689
        %v6691 = vlaneseq
        %v6692 = vshrl.u32 %v6691, 7
        %v6693 = vsub.s32 %v6690, %v6692
        %v6694 = vrot.slane %v6680, %v6693
        %v6695 = vcombine.low %v6687, %v6694
        %v6696 = vcombine.low %v4311, %v4315
        %v6697 = vcombine.low %v4319, %v4323
        %v6698 = vcombine.low %v4327, %v4331
        %v6699 = vcombine.low %v4335, %v4339
        %v6701 = vunpack.c.l.s4 1966171168
        %v6702 = vunpack.c.0.s8 %v6701
        %v6703 = vlaneseq
        %v6704 = vshrl.u32 %v6703, 7
        %v6705 = vsub.s32 %v6702, %v6704
        %v6706 = vrot.slane %v6696, %v6705
        %v6708 = vunpack.c.l.s4 1966171168
        %v6709 = vunpack.c.0.s8 %v6708
        %v6710 = vlaneseq
        %v6711 = vshrl.u32 %v6710, 7
        %v6712 = vsub.s32 %v6709, %v6711
        %v6713 = vrot.slane %v6697, %v6712
        %v6715 = vunpack.c.l.s4 1966171168
        %v6716 = vunpack.c.0.s8 %v6715
        %v6717 = vlaneseq
        %v6718 = vshrl.u32 %v6717, 7
        %v6719 = vsub.s32 %v6716, %v6718
        %v6720 = vrot.slane %v6698, %v6719
        %v6722 = vunpack.c.l.s4 1966171168
        %v6723 = vunpack.c.0.s8 %v6722
        %v6724 = vlaneseq
        %v6725 = vshrl.u32 %v6724, 7
        %v6726 = vsub.s32 %v6723, %v6725
        %v6727 = vrot.slane %v6699, %v6726
        %v6728 = vcombine.low %v6706, %v6713
        %v6729 = vcombine.low %v6720, %v6727
        %v6731 = vunpack.c.l.s4 1966171168
        %v6732 = vunpack.c.0.s8 %v6731
        %v6733 = vlaneseq
        %v6734 = vshrl.u32 %v6733, 7
        %v6735 = vsub.s32 %v6732, %v6734
        %v6736 = vrot.slane %v6728, %v6735
        %v6738 = vunpack.c.l.s4 1966171168
        %v6739 = vunpack.c.0.s8 %v6738
        %v6740 = vlaneseq
        %v6741 = vshrl.u32 %v6740, 7
        %v6742 = vsub.s32 %v6739, %v6741
        %v6743 = vrot.slane %v6729, %v6742
        %v6744 = vcombine.low %v6736, %v6743
        %v6745 = vcombine.low %v4343, %v4347
        %v6746 = vcombine.low %v4351, %v4355
        %v6747 = vcombine.low %v4359, %v4363
        %v6748 = vcombine.low %v4367, %v4371
        %v6750 = vunpack.c.l.s4 1966171168
        %v6751 = vunpack.c.0.s8 %v6750
        %v6752 = vlaneseq
        %v6753 = vshrl.u32 %v6752, 7
        %v6754 = vsub.s32 %v6751, %v6753
        %v6755 = vrot.slane %v6745, %v6754
        %v6757 = vunpack.c.l.s4 1966171168
        %v6758 = vunpack.c.0.s8 %v6757
        %v6759 = vlaneseq
        %v6760 = vshrl.u32 %v6759, 7
        %v6761 = vsub.s32 %v6758, %v6760
        %v6762 = vrot.slane %v6746, %v6761
        %v6764 = vunpack.c.l.s4 1966171168
        %v6765 = vunpack.c.0.s8 %v6764
        %v6766 = vlaneseq
        %v6767 = vshrl.u32 %v6766, 7
        %v6768 = vsub.s32 %v6765, %v6767
        %v6769 = vrot.slane %v6747, %v6768
        %v6771 = vunpack.c.l.s4 1966171168
        %v6772 = vunpack.c.0.s8 %v6771
        %v6773 = vlaneseq
        %v6774 = vshrl.u32 %v6773, 7
        %v6775 = vsub.s32 %v6772, %v6774
        %v6776 = vrot.slane %v6748, %v6775
        %v6777 = vcombine.low %v6755, %v6762
        %v6778 = vcombine.low %v6769, %v6776
        %v6780 = vunpack.c.l.s4 1966171168
        %v6781 = vunpack.c.0.s8 %v6780
        %v6782 = vlaneseq
        %v6783 = vshrl.u32 %v6782, 7
        %v6784 = vsub.s32 %v6781, %v6783
        %v6785 = vrot.slane %v6777, %v6784
        %v6787 = vunpack.c.l.s4 1966171168
        %v6788 = vunpack.c.0.s8 %v6787
        %v6789 = vlaneseq
        %v6790 = vshrl.u32 %v6789, 7
        %v6791 = vsub.s32 %v6788, %v6790
        %v6792 = vrot.slane %v6778, %v6791
        %v6793 = vcombine.low %v6785, %v6792
        %v6794 = vcombine.low %v4375, %v4379
        %v6795 = vcombine.low %v4383, %v4387
        %v6796 = vcombine.low %v4391, %v4395
        %v6797 = vcombine.low %v4399, %v4403
        %v6799 = vunpack.c.l.s4 1966171168
        %v6800 = vunpack.c.0.s8 %v6799
        %v6801 = vlaneseq
        %v6802 = vshrl.u32 %v6801, 7
        %v6803 = vsub.s32 %v6800, %v6802
        %v6804 = vrot.slane %v6794, %v6803
        %v6806 = vunpack.c.l.s4 1966171168
        %v6807 = vunpack.c.0.s8 %v6806
        %v6808 = vlaneseq
        %v6809 = vshrl.u32 %v6808, 7
        %v6810 = vsub.s32 %v6807, %v6809
        %v6811 = vrot.slane %v6795, %v6810
        %v6813 = vunpack.c.l.s4 1966171168
        %v6814 = vunpack.c.0.s8 %v6813
        %v6815 = vlaneseq
        %v6816 = vshrl.u32 %v6815, 7
        %v6817 = vsub.s32 %v6814, %v6816
        %v6818 = vrot.slane %v6796, %v6817
        %v6820 = vunpack.c.l.s4 1966171168
        %v6821 = vunpack.c.0.s8 %v6820
        %v6822 = vlaneseq
        %v6823 = vshrl.u32 %v6822, 7
        %v6824 = vsub.s32 %v6821, %v6823
        %v6825 = vrot.slane %v6797, %v6824
        %v6826 = vcombine.low %v6804, %v6811
        %v6827 = vcombine.low %v6818, %v6825
        %v6829 = vunpack.c.l.s4 1966171168
        %v6830 = vunpack.c.0.s8 %v6829
        %v6831 = vlaneseq
        %v6832 = vshrl.u32 %v6831, 7
        %v6833 = vsub.s32 %v6830, %v6832
        %v6834 = vrot.slane %v6826, %v6833
        %v6836 = vunpack.c.l.s4 1966171168
        %v6837 = vunpack.c.0.s8 %v6836
        %v6838 = vlaneseq
        %v6839 = vshrl.u32 %v6838, 7
        %v6840 = vsub.s32 %v6837, %v6839
        %v6841 = vrot.slane %v6827, %v6840
        %v6842 = vcombine.low %v6834, %v6841
        %v6843 = vcombine.low %v4407, %v4411
        %v6844 = vcombine.low %v4415, %v4419
        %v6845 = vcombine.low %v4423, %v4427
        %v6846 = vcombine.low %v4431, %v4435
        %v6848 = vunpack.c.l.s4 1966171168
        %v6849 = vunpack.c.0.s8 %v6848
        %v6850 = vlaneseq
        %v6851 = vshrl.u32 %v6850, 7
        %v6852 = vsub.s32 %v6849, %v6851
        %v6853 = vrot.slane %v6843, %v6852
        %v6855 = vunpack.c.l.s4 1966171168
        %v6856 = vunpack.c.0.s8 %v6855
        %v6857 = vlaneseq
        %v6858 = vshrl.u32 %v6857, 7
        %v6859 = vsub.s32 %v6856, %v6858
        %v6860 = vrot.slane %v6844, %v6859
        %v6862 = vunpack.c.l.s4 1966171168
        %v6863 = vunpack.c.0.s8 %v6862
        %v6864 = vlaneseq
        %v6865 = vshrl.u32 %v6864, 7
        %v6866 = vsub.s32 %v6863, %v6865
        %v6867 = vrot.slane %v6845, %v6866
        %v6869 = vunpack.c.l.s4 1966171168
        %v6870 = vunpack.c.0.s8 %v6869
        %v6871 = vlaneseq
        %v6872 = vshrl.u32 %v6871, 7
        %v6873 = vsub.s32 %v6870, %v6872
        %v6874 = vrot.slane %v6846, %v6873
        %v6875 = vcombine.low %v6853, %v6860
        %v6876 = vcombine.low %v6867, %v6874
        %v6878 = vunpack.c.l.s4 1966171168
        %v6879 = vunpack.c.0.s8 %v6878
        %v6880 = vlaneseq
        %v6881 = vshrl.u32 %v6880, 7
        %v6882 = vsub.s32 %v6879, %v6881
        %v6883 = vrot.slane %v6875, %v6882
        %v6885 = vunpack.c.l.s4 1966171168
        %v6886 = vunpack.c.0.s8 %v6885
        %v6887 = vlaneseq
        %v6888 = vshrl.u32 %v6887, 7
        %v6889 = vsub.s32 %v6886, %v6888
        %v6890 = vrot.slane %v6876, %v6889
        %v6891 = vcombine.low %v6883, %v6890
        %v6892 = vcombine.low %v4439, %v4443
        %v6893 = vcombine.low %v4447, %v4451
        %v6894 = vcombine.low %v4455, %v4459
        %v6895 = vcombine.low %v4463, %v4467
        %v6897 = vunpack.c.l.s4 1966171168
        %v6898 = vunpack.c.0.s8 %v6897
        %v6899 = vlaneseq
        %v6900 = vshrl.u32 %v6899, 7
        %v6901 = vsub.s32 %v6898, %v6900
        %v6902 = vrot.slane %v6892, %v6901
        %v6904 = vunpack.c.l.s4 1966171168
        %v6905 = vunpack.c.0.s8 %v6904
        %v6906 = vlaneseq
        %v6907 = vshrl.u32 %v6906, 7
        %v6908 = vsub.s32 %v6905, %v6907
        %v6909 = vrot.slane %v6893, %v6908
        %v6911 = vunpack.c.l.s4 1966171168
        %v6912 = vunpack.c.0.s8 %v6911
        %v6913 = vlaneseq
        %v6914 = vshrl.u32 %v6913, 7
        %v6915 = vsub.s32 %v6912, %v6914
        %v6916 = vrot.slane %v6894, %v6915
        %v6918 = vunpack.c.l.s4 1966171168
        %v6919 = vunpack.c.0.s8 %v6918
        %v6920 = vlaneseq
        %v6921 = vshrl.u32 %v6920, 7
        %v6922 = vsub.s32 %v6919, %v6921
        %v6923 = vrot.slane %v6895, %v6922
        %v6924 = vcombine.low %v6902, %v6909
        %v6925 = vcombine.low %v6916, %v6923
        %v6927 = vunpack.c.l.s4 1966171168
        %v6928 = vunpack.c.0.s8 %v6927
        %v6929 = vlaneseq
        %v6930 = vshrl.u32 %v6929, 7
        %v6931 = vsub.s32 %v6928, %v6930
        %v6932 = vrot.slane %v6924, %v6931
        %v6934 = vunpack.c.l.s4 1966171168
        %v6935 = vunpack.c.0.s8 %v6934
        %v6936 = vlaneseq
        %v6937 = vshrl.u32 %v6936, 7
        %v6938 = vsub.s32 %v6935, %v6937
        %v6939 = vrot.slane %v6925, %v6938
        %v6940 = vcombine.low %v6932, %v6939
        %v6941 = vcombine.low %v4471, %v4475
        %v6942 = vcombine.low %v4479, %v4483
        %v6943 = vcombine.low %v4487, %v4491
        %v6944 = vcombine.low %v4495, %v4499
        %v6946 = vunpack.c.l.s4 1966171168
        %v6947 = vunpack.c.0.s8 %v6946
        %v6948 = vlaneseq
        %v6949 = vshrl.u32 %v6948, 7
        %v6950 = vsub.s32 %v6947, %v6949
        %v6951 = vrot.slane %v6941, %v6950
        %v6953 = vunpack.c.l.s4 1966171168
        %v6954 = vunpack.c.0.s8 %v6953
        %v6955 = vlaneseq
        %v6956 = vshrl.u32 %v6955, 7
        %v6957 = vsub.s32 %v6954, %v6956
        %v6958 = vrot.slane %v6942, %v6957
        %v6960 = vunpack.c.l.s4 1966171168
        %v6961 = vunpack.c.0.s8 %v6960
        %v6962 = vlaneseq
        %v6963 = vshrl.u32 %v6962, 7
        %v6964 = vsub.s32 %v6961, %v6963
        %v6965 = vrot.slane %v6943, %v6964
        %v6967 = vunpack.c.l.s4 1966171168
        %v6968 = vunpack.c.0.s8 %v6967
        %v6969 = vlaneseq
        %v6970 = vshrl.u32 %v6969, 7
        %v6971 = vsub.s32 %v6968, %v6970
        %v6972 = vrot.slane %v6944, %v6971
        %v6973 = vcombine.low %v6951, %v6958
        %v6974 = vcombine.low %v6965, %v6972
        %v6976 = vunpack.c.l.s4 1966171168
        %v6977 = vunpack.c.0.s8 %v6976
        %v6978 = vlaneseq
        %v6979 = vshrl.u32 %v6978, 7
        %v6980 = vsub.s32 %v6977, %v6979
        %v6981 = vrot.slane %v6973, %v6980
        %v6983 = vunpack.c.l.s4 1966171168
        %v6984 = vunpack.c.0.s8 %v6983
        %v6985 = vlaneseq
        %v6986 = vshrl.u32 %v6985, 7
        %v6987 = vsub.s32 %v6984, %v6986
        %v6988 = vrot.slane %v6974, %v6987
        %v6989 = vcombine.low %v6981, %v6988
        %v6990 = vcombine.low %v4503, %v4507
        %v6991 = vcombine.low %v4511, %v4515
        %v6992 = vcombine.low %v4519, %v4523
        %v6993 = vcombine.low %v4527, %v4531
        %v6995 = vunpack.c.l.s4 1966171168
        %v6996 = vunpack.c.0.s8 %v6995
        %v6997 = vlaneseq
        %v6998 = vshrl.u32 %v6997, 7
        %v6999 = vsub.s32 %v6996, %v6998
        %v7000 = vrot.slane %v6990, %v6999
        %v7002 = vunpack.c.l.s4 1966171168
        %v7003 = vunpack.c.0.s8 %v7002
        %v7004 = vlaneseq
        %v7005 = vshrl.u32 %v7004, 7
        %v7006 = vsub.s32 %v7003, %v7005
        %v7007 = vrot.slane %v6991, %v7006
        %v7009 = vunpack.c.l.s4 1966171168
        %v7010 = vunpack.c.0.s8 %v7009
        %v7011 = vlaneseq
        %v7012 = vshrl.u32 %v7011, 7
        %v7013 = vsub.s32 %v7010, %v7012
        %v7014 = vrot.slane %v6992, %v7013
        %v7016 = vunpack.c.l.s4 1966171168
        %v7017 = vunpack.c.0.s8 %v7016
        %v7018 = vlaneseq
        %v7019 = vshrl.u32 %v7018, 7
        %v7020 = vsub.s32 %v7017, %v7019
        %v7021 = vrot.slane %v6993, %v7020
        %v7022 = vcombine.low %v7000, %v7007
        %v7023 = vcombine.low %v7014, %v7021
        %v7025 = vunpack.c.l.s4 1966171168
        %v7026 = vunpack.c.0.s8 %v7025
        %v7027 = vlaneseq
        %v7028 = vshrl.u32 %v7027, 7
        %v7029 = vsub.s32 %v7026, %v7028
        %v7030 = vrot.slane %v7022, %v7029
        %v7032 = vunpack.c.l.s4 1966171168
        %v7033 = vunpack.c.0.s8 %v7032
        %v7034 = vlaneseq
        %v7035 = vshrl.u32 %v7034, 7
        %v7036 = vsub.s32 %v7033, %v7035
        %v7037 = vrot.slane %v7023, %v7036
        %v7038 = vcombine.low %v7030, %v7037
        %v7039 = vcombine.low %v4535, %v4539
        %v7040 = vcombine.low %v4543, %v4547
        %v7041 = vcombine.low %v4551, %v4555
        %v7042 = vcombine.low %v4559, %v4563
        %v7044 = vunpack.c.l.s4 1966171168
        %v7045 = vunpack.c.0.s8 %v7044
        %v7046 = vlaneseq
        %v7047 = vshrl.u32 %v7046, 7
        %v7048 = vsub.s32 %v7045, %v7047
        %v7049 = vrot.slane %v7039, %v7048
        %v7051 = vunpack.c.l.s4 1966171168
        %v7052 = vunpack.c.0.s8 %v7051
        %v7053 = vlaneseq
        %v7054 = vshrl.u32 %v7053, 7
        %v7055 = vsub.s32 %v7052, %v7054
        %v7056 = vrot.slane %v7040, %v7055
        %v7058 = vunpack.c.l.s4 1966171168
        %v7059 = vunpack.c.0.s8 %v7058
        %v7060 = vlaneseq
        %v7061 = vshrl.u32 %v7060, 7
        %v7062 = vsub.s32 %v7059, %v7061
        %v7063 = vrot.slane %v7041, %v7062
        %v7065 = vunpack.c.l.s4 1966171168
        %v7066 = vunpack.c.0.s8 %v7065
        %v7067 = vlaneseq
        %v7068 = vshrl.u32 %v7067, 7
        %v7069 = vsub.s32 %v7066, %v7068
        %v7070 = vrot.slane %v7042, %v7069
        %v7071 = vcombine.low %v7049, %v7056
        %v7072 = vcombine.low %v7063, %v7070
        %v7074 = vunpack.c.l.s4 1966171168
        %v7075 = vunpack.c.0.s8 %v7074
        %v7076 = vlaneseq
        %v7077 = vshrl.u32 %v7076, 7
        %v7078 = vsub.s32 %v7075, %v7077
        %v7079 = vrot.slane %v7071, %v7078
        %v7081 = vunpack.c.l.s4 1966171168
        %v7082 = vunpack.c.0.s8 %v7081
        %v7083 = vlaneseq
        %v7084 = vshrl.u32 %v7083, 7
        %v7085 = vsub.s32 %v7082, %v7084
        %v7086 = vrot.slane %v7072, %v7085
        %v7087 = vcombine.low %v7079, %v7086
        %v7088 = vcombine.low %v4567, %v4571
        %v7089 = vcombine.low %v4575, %v4579
        %v7090 = vcombine.low %v4583, %v4587
        %v7091 = vcombine.low %v4591, %v4595
        %v7093 = vunpack.c.l.s4 1966171168
        %v7094 = vunpack.c.0.s8 %v7093
        %v7095 = vlaneseq
        %v7096 = vshrl.u32 %v7095, 7
        %v7097 = vsub.s32 %v7094, %v7096
        %v7098 = vrot.slane %v7088, %v7097
        %v7100 = vunpack.c.l.s4 1966171168
        %v7101 = vunpack.c.0.s8 %v7100
        %v7102 = vlaneseq
        %v7103 = vshrl.u32 %v7102, 7
        %v7104 = vsub.s32 %v7101, %v7103
        %v7105 = vrot.slane %v7089, %v7104
        %v7107 = vunpack.c.l.s4 1966171168
        %v7108 = vunpack.c.0.s8 %v7107
        %v7109 = vlaneseq
        %v7110 = vshrl.u32 %v7109, 7
        %v7111 = vsub.s32 %v7108, %v7110
        %v7112 = vrot.slane %v7090, %v7111
        %v7114 = vunpack.c.l.s4 1966171168
        %v7115 = vunpack.c.0.s8 %v7114
        %v7116 = vlaneseq
        %v7117 = vshrl.u32 %v7116, 7
        %v7118 = vsub.s32 %v7115, %v7117
        %v7119 = vrot.slane %v7091, %v7118
        %v7120 = vcombine.low %v7098, %v7105
        %v7121 = vcombine.low %v7112, %v7119
        %v7123 = vunpack.c.l.s4 1966171168
        %v7124 = vunpack.c.0.s8 %v7123
        %v7125 = vlaneseq
        %v7126 = vshrl.u32 %v7125, 7
        %v7127 = vsub.s32 %v7124, %v7126
        %v7128 = vrot.slane %v7120, %v7127
        %v7130 = vunpack.c.l.s4 1966171168
        %v7131 = vunpack.c.0.s8 %v7130
        %v7132 = vlaneseq
        %v7133 = vshrl.u32 %v7132, 7
        %v7134 = vsub.s32 %v7131, %v7133
        %v7135 = vrot.slane %v7121, %v7134
        %v7136 = vcombine.low %v7128, %v7135
        %v7137 = vcombine.low %v4599, %v4603
        %v7138 = vcombine.low %v4607, %v4611
        %v7139 = vcombine.low %v4615, %v4619
        %v7140 = vcombine.low %v4623, %v4627
        %v7142 = vunpack.c.l.s4 1966171168
        %v7143 = vunpack.c.0.s8 %v7142
        %v7144 = vlaneseq
        %v7145 = vshrl.u32 %v7144, 7
        %v7146 = vsub.s32 %v7143, %v7145
        %v7147 = vrot.slane %v7137, %v7146
        %v7149 = vunpack.c.l.s4 1966171168
        %v7150 = vunpack.c.0.s8 %v7149
        %v7151 = vlaneseq
        %v7152 = vshrl.u32 %v7151, 7
        %v7153 = vsub.s32 %v7150, %v7152
        %v7154 = vrot.slane %v7138, %v7153
        %v7156 = vunpack.c.l.s4 1966171168
        %v7157 = vunpack.c.0.s8 %v7156
        %v7158 = vlaneseq
        %v7159 = vshrl.u32 %v7158, 7
        %v7160 = vsub.s32 %v7157, %v7159
        %v7161 = vrot.slane %v7139, %v7160
        %v7163 = vunpack.c.l.s4 1966171168
        %v7164 = vunpack.c.0.s8 %v7163
        %v7165 = vlaneseq
        %v7166 = vshrl.u32 %v7165, 7
        %v7167 = vsub.s32 %v7164, %v7166
        %v7168 = vrot.slane %v7140, %v7167
        %v7169 = vcombine.low %v7147, %v7154
        %v7170 = vcombine.low %v7161, %v7168
        %v7172 = vunpack.c.l.s4 1966171168
        %v7173 = vunpack.c.0.s8 %v7172
        %v7174 = vlaneseq
        %v7175 = vshrl.u32 %v7174, 7
        %v7176 = vsub.s32 %v7173, %v7175
        %v7177 = vrot.slane %v7169, %v7176
        %v7179 = vunpack.c.l.s4 1966171168
        %v7180 = vunpack.c.0.s8 %v7179
        %v7181 = vlaneseq
        %v7182 = vshrl.u32 %v7181, 7
        %v7183 = vsub.s32 %v7180, %v7182
        %v7184 = vrot.slane %v7170, %v7183
        %v7185 = vcombine.low %v7177, %v7184
        %v7186 = vcombine.low %v4631, %v4635
        %v7187 = vcombine.low %v4639, %v4643
        %v7188 = vcombine.low %v4647, %v4651
        %v7189 = vcombine.low %v4655, %v4659
        %v7191 = vunpack.c.l.s4 1966171168
        %v7192 = vunpack.c.0.s8 %v7191
        %v7193 = vlaneseq
        %v7194 = vshrl.u32 %v7193, 7
        %v7195 = vsub.s32 %v7192, %v7194
        %v7196 = vrot.slane %v7186, %v7195
        %v7198 = vunpack.c.l.s4 1966171168
        %v7199 = vunpack.c.0.s8 %v7198
        %v7200 = vlaneseq
        %v7201 = vshrl.u32 %v7200, 7
        %v7202 = vsub.s32 %v7199, %v7201
        %v7203 = vrot.slane %v7187, %v7202
        %v7205 = vunpack.c.l.s4 1966171168
        %v7206 = vunpack.c.0.s8 %v7205
        %v7207 = vlaneseq
        %v7208 = vshrl.u32 %v7207, 7
        %v7209 = vsub.s32 %v7206, %v7208
        %v7210 = vrot.slane %v7188, %v7209
        %v7212 = vunpack.c.l.s4 1966171168
        %v7213 = vunpack.c.0.s8 %v7212
        %v7214 = vlaneseq
        %v7215 = vshrl.u32 %v7214, 7
        %v7216 = vsub.s32 %v7213, %v7215
        %v7217 = vrot.slane %v7189, %v7216
        %v7218 = vcombine.low %v7196, %v7203
        %v7219 = vcombine.low %v7210, %v7217
        %v7221 = vunpack.c.l.s4 1966171168
        %v7222 = vunpack.c.0.s8 %v7221
        %v7223 = vlaneseq
        %v7224 = vshrl.u32 %v7223, 7
        %v7225 = vsub.s32 %v7222, %v7224
        %v7226 = vrot.slane %v7218, %v7225
        %v7228 = vunpack.c.l.s4 1966171168
        %v7229 = vunpack.c.0.s8 %v7228
        %v7230 = vlaneseq
        %v7231 = vshrl.u32 %v7230, 7
        %v7232 = vsub.s32 %v7229, %v7231
        %v7233 = vrot.slane %v7219, %v7232
        %v7234 = vcombine.low %v7226, %v7233
        %v7235 = vcombine.low %v4663, %v4667
        %v7236 = vcombine.low %v4671, %v4675
        %v7237 = vcombine.low %v4679, %v4683
        %v7238 = vcombine.low %v4687, %v4691
        %v7240 = vunpack.c.l.s4 1966171168
        %v7241 = vunpack.c.0.s8 %v7240
        %v7242 = vlaneseq
        %v7243 = vshrl.u32 %v7242, 7
        %v7244 = vsub.s32 %v7241, %v7243
        %v7245 = vrot.slane %v7235, %v7244
        %v7247 = vunpack.c.l.s4 1966171168
        %v7248 = vunpack.c.0.s8 %v7247
        %v7249 = vlaneseq
        %v7250 = vshrl.u32 %v7249, 7
        %v7251 = vsub.s32 %v7248, %v7250
        %v7252 = vrot.slane %v7236, %v7251
        %v7254 = vunpack.c.l.s4 1966171168
        %v7255 = vunpack.c.0.s8 %v7254
        %v7256 = vlaneseq
        %v7257 = vshrl.u32 %v7256, 7
        %v7258 = vsub.s32 %v7255, %v7257
        %v7259 = vrot.slane %v7237, %v7258
        %v7261 = vunpack.c.l.s4 1966171168
        %v7262 = vunpack.c.0.s8 %v7261
        %v7263 = vlaneseq
        %v7264 = vshrl.u32 %v7263, 7
        %v7265 = vsub.s32 %v7262, %v7264
        %v7266 = vrot.slane %v7238, %v7265
        %v7267 = vcombine.low %v7245, %v7252
        %v7268 = vcombine.low %v7259, %v7266
        %v7270 = vunpack.c.l.s4 1966171168
        %v7271 = vunpack.c.0.s8 %v7270
        %v7272 = vlaneseq
        %v7273 = vshrl.u32 %v7272, 7
        %v7274 = vsub.s32 %v7271, %v7273
        %v7275 = vrot.slane %v7267, %v7274
        %v7277 = vunpack.c.l.s4 1966171168
        %v7278 = vunpack.c.0.s8 %v7277
        %v7279 = vlaneseq
        %v7280 = vshrl.u32 %v7279, 7
        %v7281 = vsub.s32 %v7278, %v7280
        %v7282 = vrot.slane %v7268, %v7281
        %v7283 = vcombine.low %v7275, %v7282
        %v7284 = vcombine.low %v4695, %v4699
        %v7285 = vcombine.low %v4703, %v4707
        %v7286 = vcombine.low %v4711, %v4715
        %v7287 = vcombine.low %v4719, %v4723
        %v7289 = vunpack.c.l.s4 1966171168
        %v7290 = vunpack.c.0.s8 %v7289
        %v7291 = vlaneseq
        %v7292 = vshrl.u32 %v7291, 7
        %v7293 = vsub.s32 %v7290, %v7292
        %v7294 = vrot.slane %v7284, %v7293
        %v7296 = vunpack.c.l.s4 1966171168
        %v7297 = vunpack.c.0.s8 %v7296
        %v7298 = vlaneseq
        %v7299 = vshrl.u32 %v7298, 7
        %v7300 = vsub.s32 %v7297, %v7299
        %v7301 = vrot.slane %v7285, %v7300
        %v7303 = vunpack.c.l.s4 1966171168
        %v7304 = vunpack.c.0.s8 %v7303
        %v7305 = vlaneseq
        %v7306 = vshrl.u32 %v7305, 7
        %v7307 = vsub.s32 %v7304, %v7306
        %v7308 = vrot.slane %v7286, %v7307
        %v7310 = vunpack.c.l.s4 1966171168
        %v7311 = vunpack.c.0.s8 %v7310
        %v7312 = vlaneseq
        %v7313 = vshrl.u32 %v7312, 7
        %v7314 = vsub.s32 %v7311, %v7313
        %v7315 = vrot.slane %v7287, %v7314
        %v7316 = vcombine.low %v7294, %v7301
        %v7317 = vcombine.low %v7308, %v7315
        %v7319 = vunpack.c.l.s4 1966171168
        %v7320 = vunpack.c.0.s8 %v7319
        %v7321 = vlaneseq
        %v7322 = vshrl.u32 %v7321, 7
        %v7323 = vsub.s32 %v7320, %v7322
        %v7324 = vrot.slane %v7316, %v7323
        %v7326 = vunpack.c.l.s4 1966171168
        %v7327 = vunpack.c.0.s8 %v7326
        %v7328 = vlaneseq
        %v7329 = vshrl.u32 %v7328, 7
        %v7330 = vsub.s32 %v7327, %v7329
        %v7331 = vrot.slane %v7317, %v7330
        %v7332 = vcombine.low %v7324, %v7331
        %v7333 = vcombine.low %v4727, %v4731
        %v7334 = vcombine.low %v4735, %v4739
        %v7335 = vcombine.low %v4743, %v4747
        %v7336 = vcombine.low %v4751, %v4755
        %v7338 = vunpack.c.l.s4 1966171168
        %v7339 = vunpack.c.0.s8 %v7338
        %v7340 = vlaneseq
        %v7341 = vshrl.u32 %v7340, 7
        %v7342 = vsub.s32 %v7339, %v7341
        %v7343 = vrot.slane %v7333, %v7342
        %v7345 = vunpack.c.l.s4 1966171168
        %v7346 = vunpack.c.0.s8 %v7345
        %v7347 = vlaneseq
        %v7348 = vshrl.u32 %v7347, 7
        %v7349 = vsub.s32 %v7346, %v7348
        %v7350 = vrot.slane %v7334, %v7349
        %v7352 = vunpack.c.l.s4 1966171168
        %v7353 = vunpack.c.0.s8 %v7352
        %v7354 = vlaneseq
        %v7355 = vshrl.u32 %v7354, 7
        %v7356 = vsub.s32 %v7353, %v7355
        %v7357 = vrot.slane %v7335, %v7356
        %v7359 = vunpack.c.l.s4 1966171168
        %v7360 = vunpack.c.0.s8 %v7359
        %v7361 = vlaneseq
        %v7362 = vshrl.u32 %v7361, 7
        %v7363 = vsub.s32 %v7360, %v7362
        %v7364 = vrot.slane %v7336, %v7363
        %v7365 = vcombine.low %v7343, %v7350
        %v7366 = vcombine.low %v7357, %v7364
        %v7368 = vunpack.c.l.s4 1966171168
        %v7369 = vunpack.c.0.s8 %v7368
        %v7370 = vlaneseq
        %v7371 = vshrl.u32 %v7370, 7
        %v7372 = vsub.s32 %v7369, %v7371
        %v7373 = vrot.slane %v7365, %v7372
        %v7375 = vunpack.c.l.s4 1966171168
        %v7376 = vunpack.c.0.s8 %v7375
        %v7377 = vlaneseq
        %v7378 = vshrl.u32 %v7377, 7
        %v7379 = vsub.s32 %v7376, %v7378
        %v7380 = vrot.slane %v7366, %v7379
        %v7381 = vcombine.low %v7373, %v7380
        %v7382 = vcombine.low %v4759, %v4763
        %v7383 = vcombine.low %v4767, %v4771
        %v7384 = vcombine.low %v4775, %v4779
        %v7385 = vcombine.low %v4783, %v4787
        %v7387 = vunpack.c.l.s4 1966171168
        %v7388 = vunpack.c.0.s8 %v7387
        %v7389 = vlaneseq
        %v7390 = vshrl.u32 %v7389, 7
        %v7391 = vsub.s32 %v7388, %v7390
        %v7392 = vrot.slane %v7382, %v7391
        %v7394 = vunpack.c.l.s4 1966171168
        %v7395 = vunpack.c.0.s8 %v7394
        %v7396 = vlaneseq
        %v7397 = vshrl.u32 %v7396, 7
        %v7398 = vsub.s32 %v7395, %v7397
        %v7399 = vrot.slane %v7383, %v7398
        %v7401 = vunpack.c.l.s4 1966171168
        %v7402 = vunpack.c.0.s8 %v7401
        %v7403 = vlaneseq
        %v7404 = vshrl.u32 %v7403, 7
        %v7405 = vsub.s32 %v7402, %v7404
        %v7406 = vrot.slane %v7384, %v7405
        %v7408 = vunpack.c.l.s4 1966171168
        %v7409 = vunpack.c.0.s8 %v7408
        %v7410 = vlaneseq
        %v7411 = vshrl.u32 %v7410, 7
        %v7412 = vsub.s32 %v7409, %v7411
        %v7413 = vrot.slane %v7385, %v7412
        %v7414 = vcombine.low %v7392, %v7399
        %v7415 = vcombine.low %v7406, %v7413
        %v7417 = vunpack.c.l.s4 1966171168
        %v7418 = vunpack.c.0.s8 %v7417
        %v7419 = vlaneseq
        %v7420 = vshrl.u32 %v7419, 7
        %v7421 = vsub.s32 %v7418, %v7420
        %v7422 = vrot.slane %v7414, %v7421
        %v7424 = vunpack.c.l.s4 1966171168
        %v7425 = vunpack.c.0.s8 %v7424
        %v7426 = vlaneseq
        %v7427 = vshrl.u32 %v7426, 7
        %v7428 = vsub.s32 %v7425, %v7427
        %v7429 = vrot.slane %v7415, %v7428
        %v7430 = vcombine.low %v7422, %v7429
        %v7431 = vcombine.low %v4791, %v4795
        %v7432 = vcombine.low %v4799, %v4803
        %v7433 = vcombine.low %v4807, %v4811
        %v7434 = vcombine.low %v4815, %v4819
        %v7436 = vunpack.c.l.s4 1966171168
        %v7437 = vunpack.c.0.s8 %v7436
        %v7438 = vlaneseq
        %v7439 = vshrl.u32 %v7438, 7
        %v7440 = vsub.s32 %v7437, %v7439
        %v7441 = vrot.slane %v7431, %v7440
        %v7443 = vunpack.c.l.s4 1966171168
        %v7444 = vunpack.c.0.s8 %v7443
        %v7445 = vlaneseq
        %v7446 = vshrl.u32 %v7445, 7
        %v7447 = vsub.s32 %v7444, %v7446
        %v7448 = vrot.slane %v7432, %v7447
        %v7450 = vunpack.c.l.s4 1966171168
        %v7451 = vunpack.c.0.s8 %v7450
        %v7452 = vlaneseq
        %v7453 = vshrl.u32 %v7452, 7
        %v7454 = vsub.s32 %v7451, %v7453
        %v7455 = vrot.slane %v7433, %v7454
        %v7457 = vunpack.c.l.s4 1966171168
        %v7458 = vunpack.c.0.s8 %v7457
        %v7459 = vlaneseq
        %v7460 = vshrl.u32 %v7459, 7
        %v7461 = vsub.s32 %v7458, %v7460
        %v7462 = vrot.slane %v7434, %v7461
        %v7463 = vcombine.low %v7441, %v7448
        %v7464 = vcombine.low %v7455, %v7462
        %v7466 = vunpack.c.l.s4 1966171168
        %v7467 = vunpack.c.0.s8 %v7466
        %v7468 = vlaneseq
        %v7469 = vshrl.u32 %v7468, 7
        %v7470 = vsub.s32 %v7467, %v7469
        %v7471 = vrot.slane %v7463, %v7470
        %v7473 = vunpack.c.l.s4 1966171168
        %v7474 = vunpack.c.0.s8 %v7473
        %v7475 = vlaneseq
        %v7476 = vshrl.u32 %v7475, 7
        %v7477 = vsub.s32 %v7474, %v7476
        %v7478 = vrot.slane %v7464, %v7477
        %v7479 = vcombine.low %v7471, %v7478
        %v7480 = vcombine.low %v4823, %v4827
        %v7481 = vcombine.low %v4831, %v4835
        %v7482 = vcombine.low %v4839, %v4843
        %v7483 = vcombine.low %v4847, %v4851
        %v7485 = vunpack.c.l.s4 1966171168
        %v7486 = vunpack.c.0.s8 %v7485
        %v7487 = vlaneseq
        %v7488 = vshrl.u32 %v7487, 7
        %v7489 = vsub.s32 %v7486, %v7488
        %v7490 = vrot.slane %v7480, %v7489
        %v7492 = vunpack.c.l.s4 1966171168
        %v7493 = vunpack.c.0.s8 %v7492
        %v7494 = vlaneseq
        %v7495 = vshrl.u32 %v7494, 7
        %v7496 = vsub.s32 %v7493, %v7495
        %v7497 = vrot.slane %v7481, %v7496
        %v7499 = vunpack.c.l.s4 1966171168
        %v7500 = vunpack.c.0.s8 %v7499
        %v7501 = vlaneseq
        %v7502 = vshrl.u32 %v7501, 7
        %v7503 = vsub.s32 %v7500, %v7502
        %v7504 = vrot.slane %v7482, %v7503
        %v7506 = vunpack.c.l.s4 1966171168
        %v7507 = vunpack.c.0.s8 %v7506
        %v7508 = vlaneseq
        %v7509 = vshrl.u32 %v7508, 7
        %v7510 = vsub.s32 %v7507, %v7509
        %v7511 = vrot.slane %v7483, %v7510
        %v7512 = vcombine.low %v7490, %v7497
        %v7513 = vcombine.low %v7504, %v7511
        %v7515 = vunpack.c.l.s4 1966171168
        %v7516 = vunpack.c.0.s8 %v7515
        %v7517 = vlaneseq
        %v7518 = vshrl.u32 %v7517, 7
        %v7519 = vsub.s32 %v7516, %v7518
        %v7520 = vrot.slane %v7512, %v7519
        %v7522 = vunpack.c.l.s4 1966171168
        %v7523 = vunpack.c.0.s8 %v7522
        %v7524 = vlaneseq
        %v7525 = vshrl.u32 %v7524, 7
        %v7526 = vsub.s32 %v7523, %v7525
        %v7527 = vrot.slane %v7513, %v7526
        %v7528 = vcombine.low %v7520, %v7527
        %v7529 = vcombine.low %v4855, %v4859
        %v7530 = vcombine.low %v4863, %v4867
        %v7531 = vcombine.low %v4871, %v4875
        %v7532 = vcombine.low %v4879, %v4883
        %v7534 = vunpack.c.l.s4 1966171168
        %v7535 = vunpack.c.0.s8 %v7534
        %v7536 = vlaneseq
        %v7537 = vshrl.u32 %v7536, 7
        %v7538 = vsub.s32 %v7535, %v7537
        %v7539 = vrot.slane %v7529, %v7538
        %v7541 = vunpack.c.l.s4 1966171168
        %v7542 = vunpack.c.0.s8 %v7541
        %v7543 = vlaneseq
        %v7544 = vshrl.u32 %v7543, 7
        %v7545 = vsub.s32 %v7542, %v7544
        %v7546 = vrot.slane %v7530, %v7545
        %v7548 = vunpack.c.l.s4 1966171168
        %v7549 = vunpack.c.0.s8 %v7548
        %v7550 = vlaneseq
        %v7551 = vshrl.u32 %v7550, 7
        %v7552 = vsub.s32 %v7549, %v7551
        %v7553 = vrot.slane %v7531, %v7552
        %v7555 = vunpack.c.l.s4 1966171168
        %v7556 = vunpack.c.0.s8 %v7555
        %v7557 = vlaneseq
        %v7558 = vshrl.u32 %v7557, 7
        %v7559 = vsub.s32 %v7556, %v7558
        %v7560 = vrot.slane %v7532, %v7559
        %v7561 = vcombine.low %v7539, %v7546
        %v7562 = vcombine.low %v7553, %v7560
        %v7564 = vunpack.c.l.s4 1966171168
        %v7565 = vunpack.c.0.s8 %v7564
        %v7566 = vlaneseq
        %v7567 = vshrl.u32 %v7566, 7
        %v7568 = vsub.s32 %v7565, %v7567
        %v7569 = vrot.slane %v7561, %v7568
        %v7571 = vunpack.c.l.s4 1966171168
        %v7572 = vunpack.c.0.s8 %v7571
        %v7573 = vlaneseq
        %v7574 = vshrl.u32 %v7573, 7
        %v7575 = vsub.s32 %v7572, %v7574
        %v7576 = vrot.slane %v7562, %v7575
        %v7577 = vcombine.low %v7569, %v7576
        %v7578 = vcombine.low %v4887, %v4891
        %v7579 = vcombine.low %v4895, %v4899
        %v7580 = vcombine.low %v4903, %v4907
        %v7581 = vcombine.low %v4911, %v4915
        %v7583 = vunpack.c.l.s4 1966171168
        %v7584 = vunpack.c.0.s8 %v7583
        %v7585 = vlaneseq
        %v7586 = vshrl.u32 %v7585, 7
        %v7587 = vsub.s32 %v7584, %v7586
        %v7588 = vrot.slane %v7578, %v7587
        %v7590 = vunpack.c.l.s4 1966171168
        %v7591 = vunpack.c.0.s8 %v7590
        %v7592 = vlaneseq
        %v7593 = vshrl.u32 %v7592, 7
        %v7594 = vsub.s32 %v7591, %v7593
        %v7595 = vrot.slane %v7579, %v7594
        %v7597 = vunpack.c.l.s4 1966171168
        %v7598 = vunpack.c.0.s8 %v7597
        %v7599 = vlaneseq
        %v7600 = vshrl.u32 %v7599, 7
        %v7601 = vsub.s32 %v7598, %v7600
        %v7602 = vrot.slane %v7580, %v7601
        %v7604 = vunpack.c.l.s4 1966171168
        %v7605 = vunpack.c.0.s8 %v7604
        %v7606 = vlaneseq
        %v7607 = vshrl.u32 %v7606, 7
        %v7608 = vsub.s32 %v7605, %v7607
        %v7609 = vrot.slane %v7581, %v7608
        %v7610 = vcombine.low %v7588, %v7595
        %v7611 = vcombine.low %v7602, %v7609
        %v7613 = vunpack.c.l.s4 1966171168
        %v7614 = vunpack.c.0.s8 %v7613
        %v7615 = vlaneseq
        %v7616 = vshrl.u32 %v7615, 7
        %v7617 = vsub.s32 %v7614, %v7616
        %v7618 = vrot.slane %v7610, %v7617
        %v7620 = vunpack.c.l.s4 1966171168
        %v7621 = vunpack.c.0.s8 %v7620
        %v7622 = vlaneseq
        %v7623 = vshrl.u32 %v7622, 7
        %v7624 = vsub.s32 %v7621, %v7623
        %v7625 = vrot.slane %v7611, %v7624
        %v7626 = vcombine.low %v7618, %v7625
        %v7627 = vcombine.low %v4919, %v4923
        %v7628 = vcombine.low %v4927, %v4931
        %v7629 = vcombine.low %v4935, %v4939
        %v7630 = vcombine.low %v4943, %v4947
        %v7632 = vunpack.c.l.s4 1966171168
        %v7633 = vunpack.c.0.s8 %v7632
        %v7634 = vlaneseq
        %v7635 = vshrl.u32 %v7634, 7
        %v7636 = vsub.s32 %v7633, %v7635
        %v7637 = vrot.slane %v7627, %v7636
        %v7639 = vunpack.c.l.s4 1966171168
        %v7640 = vunpack.c.0.s8 %v7639
        %v7641 = vlaneseq
        %v7642 = vshrl.u32 %v7641, 7
        %v7643 = vsub.s32 %v7640, %v7642
        %v7644 = vrot.slane %v7628, %v7643
        %v7646 = vunpack.c.l.s4 1966171168
        %v7647 = vunpack.c.0.s8 %v7646
        %v7648 = vlaneseq
        %v7649 = vshrl.u32 %v7648, 7
        %v7650 = vsub.s32 %v7647, %v7649
        %v7651 = vrot.slane %v7629, %v7650
        %v7653 = vunpack.c.l.s4 1966171168
        %v7654 = vunpack.c.0.s8 %v7653
        %v7655 = vlaneseq
        %v7656 = vshrl.u32 %v7655, 7
        %v7657 = vsub.s32 %v7654, %v7656
        %v7658 = vrot.slane %v7630, %v7657
        %v7659 = vcombine.low %v7637, %v7644
        %v7660 = vcombine.low %v7651, %v7658
        %v7662 = vunpack.c.l.s4 1966171168
        %v7663 = vunpack.c.0.s8 %v7662
        %v7664 = vlaneseq
        %v7665 = vshrl.u32 %v7664, 7
        %v7666 = vsub.s32 %v7663, %v7665
        %v7667 = vrot.slane %v7659, %v7666
        %v7669 = vunpack.c.l.s4 1966171168
        %v7670 = vunpack.c.0.s8 %v7669
        %v7671 = vlaneseq
        %v7672 = vshrl.u32 %v7671, 7
        %v7673 = vsub.s32 %v7670, %v7672
        %v7674 = vrot.slane %v7660, %v7673
        %v7675 = vcombine.low %v7667, %v7674
        %v7676 = vcombine.low %v4951, %v4955
        %v7677 = vcombine.low %v4959, %v4963
        %v7678 = vcombine.low %v4967, %v4971
        %v7679 = vcombine.low %v4975, %v4979
        %v7681 = vunpack.c.l.s4 1966171168
        %v7682 = vunpack.c.0.s8 %v7681
        %v7683 = vlaneseq
        %v7684 = vshrl.u32 %v7683, 7
        %v7685 = vsub.s32 %v7682, %v7684
        %v7686 = vrot.slane %v7676, %v7685
        %v7688 = vunpack.c.l.s4 1966171168
        %v7689 = vunpack.c.0.s8 %v7688
        %v7690 = vlaneseq
        %v7691 = vshrl.u32 %v7690, 7
        %v7692 = vsub.s32 %v7689, %v7691
        %v7693 = vrot.slane %v7677, %v7692
        %v7695 = vunpack.c.l.s4 1966171168
        %v7696 = vunpack.c.0.s8 %v7695
        %v7697 = vlaneseq
        %v7698 = vshrl.u32 %v7697, 7
        %v7699 = vsub.s32 %v7696, %v7698
        %v7700 = vrot.slane %v7678, %v7699
        %v7702 = vunpack.c.l.s4 1966171168
        %v7703 = vunpack.c.0.s8 %v7702
        %v7704 = vlaneseq
        %v7705 = vshrl.u32 %v7704, 7
        %v7706 = vsub.s32 %v7703, %v7705
        %v7707 = vrot.slane %v7679, %v7706
        %v7708 = vcombine.low %v7686, %v7693
        %v7709 = vcombine.low %v7700, %v7707
        %v7711 = vunpack.c.l.s4 1966171168
        %v7712 = vunpack.c.0.s8 %v7711
        %v7713 = vlaneseq
        %v7714 = vshrl.u32 %v7713, 7
        %v7715 = vsub.s32 %v7712, %v7714
        %v7716 = vrot.slane %v7708, %v7715
        %v7718 = vunpack.c.l.s4 1966171168
        %v7719 = vunpack.c.0.s8 %v7718
        %v7720 = vlaneseq
        %v7721 = vshrl.u32 %v7720, 7
        %v7722 = vsub.s32 %v7719, %v7721
        %v7723 = vrot.slane %v7709, %v7722
        %v7724 = vcombine.low %v7716, %v7723
        %v7725 = vcombine.low %v4983, %v4987
        %v7726 = vcombine.low %v4991, %v4995
        %v7727 = vcombine.low %v4999, %v5003
        %v7728 = vcombine.low %v5007, %v5011
        %v7730 = vunpack.c.l.s4 1966171168
        %v7731 = vunpack.c.0.s8 %v7730
        %v7732 = vlaneseq
        %v7733 = vshrl.u32 %v7732, 7
        %v7734 = vsub.s32 %v7731, %v7733
        %v7735 = vrot.slane %v7725, %v7734
        %v7737 = vunpack.c.l.s4 1966171168
        %v7738 = vunpack.c.0.s8 %v7737
        %v7739 = vlaneseq
        %v7740 = vshrl.u32 %v7739, 7
        %v7741 = vsub.s32 %v7738, %v7740
        %v7742 = vrot.slane %v7726, %v7741
        %v7744 = vunpack.c.l.s4 1966171168
        %v7745 = vunpack.c.0.s8 %v7744
        %v7746 = vlaneseq
        %v7747 = vshrl.u32 %v7746, 7
        %v7748 = vsub.s32 %v7745, %v7747
        %v7749 = vrot.slane %v7727, %v7748
        %v7751 = vunpack.c.l.s4 1966171168
        %v7752 = vunpack.c.0.s8 %v7751
        %v7753 = vlaneseq
        %v7754 = vshrl.u32 %v7753, 7
        %v7755 = vsub.s32 %v7752, %v7754
        %v7756 = vrot.slane %v7728, %v7755
        %v7757 = vcombine.low %v7735, %v7742
        %v7758 = vcombine.low %v7749, %v7756
        %v7760 = vunpack.c.l.s4 1966171168
        %v7761 = vunpack.c.0.s8 %v7760
        %v7762 = vlaneseq
        %v7763 = vshrl.u32 %v7762, 7
        %v7764 = vsub.s32 %v7761, %v7763
        %v7765 = vrot.slane %v7757, %v7764
        %v7767 = vunpack.c.l.s4 1966171168
        %v7768 = vunpack.c.0.s8 %v7767
        %v7769 = vlaneseq
        %v7770 = vshrl.u32 %v7769, 7
        %v7771 = vsub.s32 %v7768, %v7770
        %v7772 = vrot.slane %v7758, %v7771
        %v7773 = vcombine.low %v7765, %v7772
        %v7774 = vcombine.low %v5015, %v5019
        %v7775 = vcombine.low %v5023, %v5027
        %v7776 = vcombine.low %v5031, %v5035
        %v7777 = vcombine.low %v5039, %v5043
        %v7779 = vunpack.c.l.s4 1966171168
        %v7780 = vunpack.c.0.s8 %v7779
        %v7781 = vlaneseq
        %v7782 = vshrl.u32 %v7781, 7
        %v7783 = vsub.s32 %v7780, %v7782
        %v7784 = vrot.slane %v7774, %v7783
        %v7786 = vunpack.c.l.s4 1966171168
        %v7787 = vunpack.c.0.s8 %v7786
        %v7788 = vlaneseq
        %v7789 = vshrl.u32 %v7788, 7
        %v7790 = vsub.s32 %v7787, %v7789
        %v7791 = vrot.slane %v7775, %v7790
        %v7793 = vunpack.c.l.s4 1966171168
        %v7794 = vunpack.c.0.s8 %v7793
        %v7795 = vlaneseq
        %v7796 = vshrl.u32 %v7795, 7
        %v7797 = vsub.s32 %v7794, %v7796
        %v7798 = vrot.slane %v7776, %v7797
        %v7800 = vunpack.c.l.s4 1966171168
        %v7801 = vunpack.c.0.s8 %v7800
        %v7802 = vlaneseq
        %v7803 = vshrl.u32 %v7802, 7
        %v7804 = vsub.s32 %v7801, %v7803
        %v7805 = vrot.slane %v7777, %v7804
        %v7806 = vcombine.low %v7784, %v7791
        %v7807 = vcombine.low %v7798, %v7805
        %v7809 = vunpack.c.l.s4 1966171168
        %v7810 = vunpack.c.0.s8 %v7809
        %v7811 = vlaneseq
        %v7812 = vshrl.u32 %v7811, 7
        %v7813 = vsub.s32 %v7810, %v7812
        %v7814 = vrot.slane %v7806, %v7813
        %v7816 = vunpack.c.l.s4 1966171168
        %v7817 = vunpack.c.0.s8 %v7816
        %v7818 = vlaneseq
        %v7819 = vshrl.u32 %v7818, 7
        %v7820 = vsub.s32 %v7817, %v7819
        %v7821 = vrot.slane %v7807, %v7820
        %v7822 = vcombine.low %v7814, %v7821
        %v7823 = vcombine.low %v5047, %v5051
        %v7824 = vcombine.low %v5055, %v5059
        %v7825 = vcombine.low %v5063, %v5067
        %v7826 = vcombine.low %v5071, %v5075
        %v7828 = vunpack.c.l.s4 1966171168
        %v7829 = vunpack.c.0.s8 %v7828
        %v7830 = vlaneseq
        %v7831 = vshrl.u32 %v7830, 7
        %v7832 = vsub.s32 %v7829, %v7831
        %v7833 = vrot.slane %v7823, %v7832
        %v7835 = vunpack.c.l.s4 1966171168
        %v7836 = vunpack.c.0.s8 %v7835
        %v7837 = vlaneseq
        %v7838 = vshrl.u32 %v7837, 7
        %v7839 = vsub.s32 %v7836, %v7838
        %v7840 = vrot.slane %v7824, %v7839
        %v7842 = vunpack.c.l.s4 1966171168
        %v7843 = vunpack.c.0.s8 %v7842
        %v7844 = vlaneseq
        %v7845 = vshrl.u32 %v7844, 7
        %v7846 = vsub.s32 %v7843, %v7845
        %v7847 = vrot.slane %v7825, %v7846
        %v7849 = vunpack.c.l.s4 1966171168
        %v7850 = vunpack.c.0.s8 %v7849
        %v7851 = vlaneseq
        %v7852 = vshrl.u32 %v7851, 7
        %v7853 = vsub.s32 %v7850, %v7852
        %v7854 = vrot.slane %v7826, %v7853
        %v7855 = vcombine.low %v7833, %v7840
        %v7856 = vcombine.low %v7847, %v7854
        %v7858 = vunpack.c.l.s4 1966171168
        %v7859 = vunpack.c.0.s8 %v7858
        %v7860 = vlaneseq
        %v7861 = vshrl.u32 %v7860, 7
        %v7862 = vsub.s32 %v7859, %v7861
        %v7863 = vrot.slane %v7855, %v7862
        %v7865 = vunpack.c.l.s4 1966171168
        %v7866 = vunpack.c.0.s8 %v7865
        %v7867 = vlaneseq
        %v7868 = vshrl.u32 %v7867, 7
        %v7869 = vsub.s32 %v7866, %v7868
        %v7870 = vrot.slane %v7856, %v7869
        %v7871 = vcombine.low %v7863, %v7870
        %v7872 = vcombine.low %v5079, %v5083
        %v7873 = vcombine.low %v5087, %v5091
        %v7874 = vcombine.low %v5095, %v5099
        %v7875 = vcombine.low %v5103, %v5107
        %v7877 = vunpack.c.l.s4 1966171168
        %v7878 = vunpack.c.0.s8 %v7877
        %v7879 = vlaneseq
        %v7880 = vshrl.u32 %v7879, 7
        %v7881 = vsub.s32 %v7878, %v7880
        %v7882 = vrot.slane %v7872, %v7881
        %v7884 = vunpack.c.l.s4 1966171168
        %v7885 = vunpack.c.0.s8 %v7884
        %v7886 = vlaneseq
        %v7887 = vshrl.u32 %v7886, 7
        %v7888 = vsub.s32 %v7885, %v7887
        %v7889 = vrot.slane %v7873, %v7888
        %v7891 = vunpack.c.l.s4 1966171168
        %v7892 = vunpack.c.0.s8 %v7891
        %v7893 = vlaneseq
        %v7894 = vshrl.u32 %v7893, 7
        %v7895 = vsub.s32 %v7892, %v7894
        %v7896 = vrot.slane %v7874, %v7895
        %v7898 = vunpack.c.l.s4 1966171168
        %v7899 = vunpack.c.0.s8 %v7898
        %v7900 = vlaneseq
        %v7901 = vshrl.u32 %v7900, 7
        %v7902 = vsub.s32 %v7899, %v7901
        %v7903 = vrot.slane %v7875, %v7902
        %v7904 = vcombine.low %v7882, %v7889
        %v7905 = vcombine.low %v7896, %v7903
        %v7907 = vunpack.c.l.s4 1966171168
        %v7908 = vunpack.c.0.s8 %v7907
        %v7909 = vlaneseq
        %v7910 = vshrl.u32 %v7909, 7
        %v7911 = vsub.s32 %v7908, %v7910
        %v7912 = vrot.slane %v7904, %v7911
        %v7914 = vunpack.c.l.s4 1966171168
        %v7915 = vunpack.c.0.s8 %v7914
        %v7916 = vlaneseq
        %v7917 = vshrl.u32 %v7916, 7
        %v7918 = vsub.s32 %v7915, %v7917
        %v7919 = vrot.slane %v7905, %v7918
        %v7920 = vcombine.low %v7912, %v7919
        %v7921 = vcombine.low %v5111, %v5115
        %v7922 = vcombine.low %v5119, %v5123
        %v7923 = vcombine.low %v5127, %v5131
        %v7924 = vcombine.low %v5135, %v5139
        %v7926 = vunpack.c.l.s4 1966171168
        %v7927 = vunpack.c.0.s8 %v7926
        %v7928 = vlaneseq
        %v7929 = vshrl.u32 %v7928, 7
        %v7930 = vsub.s32 %v7927, %v7929
        %v7931 = vrot.slane %v7921, %v7930
        %v7933 = vunpack.c.l.s4 1966171168
        %v7934 = vunpack.c.0.s8 %v7933
        %v7935 = vlaneseq
        %v7936 = vshrl.u32 %v7935, 7
        %v7937 = vsub.s32 %v7934, %v7936
        %v7938 = vrot.slane %v7922, %v7937
        %v7940 = vunpack.c.l.s4 1966171168
        %v7941 = vunpack.c.0.s8 %v7940
        %v7942 = vlaneseq
        %v7943 = vshrl.u32 %v7942, 7
        %v7944 = vsub.s32 %v7941, %v7943
        %v7945 = vrot.slane %v7923, %v7944
        %v7947 = vunpack.c.l.s4 1966171168
        %v7948 = vunpack.c.0.s8 %v7947
        %v7949 = vlaneseq
        %v7950 = vshrl.u32 %v7949, 7
        %v7951 = vsub.s32 %v7948, %v7950
        %v7952 = vrot.slane %v7924, %v7951
        %v7953 = vcombine.low %v7931, %v7938
        %v7954 = vcombine.low %v7945, %v7952
        %v7956 = vunpack.c.l.s4 1966171168
        %v7957 = vunpack.c.0.s8 %v7956
        %v7958 = vlaneseq
        %v7959 = vshrl.u32 %v7958, 7
        %v7960 = vsub.s32 %v7957, %v7959
        %v7961 = vrot.slane %v7953, %v7960
        %v7963 = vunpack.c.l.s4 1966171168
        %v7964 = vunpack.c.0.s8 %v7963
        %v7965 = vlaneseq
        %v7966 = vshrl.u32 %v7965, 7
        %v7967 = vsub.s32 %v7964, %v7966
        %v7968 = vrot.slane %v7954, %v7967
        %v7969 = vcombine.low %v7961, %v7968
        %v7970 = vcombine.low %v5143, %v5147
        %v7971 = vcombine.low %v5151, %v5155
        %v7972 = vcombine.low %v5159, %v5163
        %v7973 = vcombine.low %v5167, %v5171
        %v7975 = vunpack.c.l.s4 1966171168
        %v7976 = vunpack.c.0.s8 %v7975
        %v7977 = vlaneseq
        %v7978 = vshrl.u32 %v7977, 7
        %v7979 = vsub.s32 %v7976, %v7978
        %v7980 = vrot.slane %v7970, %v7979
        %v7982 = vunpack.c.l.s4 1966171168
        %v7983 = vunpack.c.0.s8 %v7982
        %v7984 = vlaneseq
        %v7985 = vshrl.u32 %v7984, 7
        %v7986 = vsub.s32 %v7983, %v7985
        %v7987 = vrot.slane %v7971, %v7986
        %v7989 = vunpack.c.l.s4 1966171168
        %v7990 = vunpack.c.0.s8 %v7989
        %v7991 = vlaneseq
        %v7992 = vshrl.u32 %v7991, 7
        %v7993 = vsub.s32 %v7990, %v7992
        %v7994 = vrot.slane %v7972, %v7993
        %v7996 = vunpack.c.l.s4 1966171168
        %v7997 = vunpack.c.0.s8 %v7996
        %v7998 = vlaneseq
        %v7999 = vshrl.u32 %v7998, 7
        %v8000 = vsub.s32 %v7997, %v7999
        %v8001 = vrot.slane %v7973, %v8000
        %v8002 = vcombine.low %v7980, %v7987
        %v8003 = vcombine.low %v7994, %v8001
        %v8005 = vunpack.c.l.s4 1966171168
        %v8006 = vunpack.c.0.s8 %v8005
        %v8007 = vlaneseq
        %v8008 = vshrl.u32 %v8007, 7
        %v8009 = vsub.s32 %v8006, %v8008
        %v8010 = vrot.slane %v8002, %v8009
        %v8012 = vunpack.c.l.s4 1966171168
        %v8013 = vunpack.c.0.s8 %v8012
        %v8014 = vlaneseq
        %v8015 = vshrl.u32 %v8014, 7
        %v8016 = vsub.s32 %v8013, %v8015
        %v8017 = vrot.slane %v8003, %v8016
        %v8018 = vcombine.low %v8010, %v8017
        %v8019 = vcombine.low %v5175, %v5179
        %v8020 = vcombine.low %v5183, %v5187
        %v8021 = vcombine.low %v5191, %v5195
        %v8022 = vcombine.low %v5199, %v5203
        %v8024 = vunpack.c.l.s4 1966171168
        %v8025 = vunpack.c.0.s8 %v8024
        %v8026 = vlaneseq
        %v8027 = vshrl.u32 %v8026, 7
        %v8028 = vsub.s32 %v8025, %v8027
        %v8029 = vrot.slane %v8019, %v8028
        %v8031 = vunpack.c.l.s4 1966171168
        %v8032 = vunpack.c.0.s8 %v8031
        %v8033 = vlaneseq
        %v8034 = vshrl.u32 %v8033, 7
        %v8035 = vsub.s32 %v8032, %v8034
        %v8036 = vrot.slane %v8020, %v8035
        %v8038 = vunpack.c.l.s4 1966171168
        %v8039 = vunpack.c.0.s8 %v8038
        %v8040 = vlaneseq
        %v8041 = vshrl.u32 %v8040, 7
        %v8042 = vsub.s32 %v8039, %v8041
        %v8043 = vrot.slane %v8021, %v8042
        %v8045 = vunpack.c.l.s4 1966171168
        %v8046 = vunpack.c.0.s8 %v8045
        %v8047 = vlaneseq
        %v8048 = vshrl.u32 %v8047, 7
        %v8049 = vsub.s32 %v8046, %v8048
        %v8050 = vrot.slane %v8022, %v8049
        %v8051 = vcombine.low %v8029, %v8036
        %v8052 = vcombine.low %v8043, %v8050
        %v8054 = vunpack.c.l.s4 1966171168
        %v8055 = vunpack.c.0.s8 %v8054
        %v8056 = vlaneseq
        %v8057 = vshrl.u32 %v8056, 7
        %v8058 = vsub.s32 %v8055, %v8057
        %v8059 = vrot.slane %v8051, %v8058
        %v8061 = vunpack.c.l.s4 1966171168
        %v8062 = vunpack.c.0.s8 %v8061
        %v8063 = vlaneseq
        %v8064 = vshrl.u32 %v8063, 7
        %v8065 = vsub.s32 %v8062, %v8064
        %v8066 = vrot.slane %v8052, %v8065
        %v8067 = vcombine.low %v8059, %v8066
        %v8068 = vcombine.low %v5207, %v5211
        %v8069 = vcombine.low %v5215, %v5219
        %v8070 = vcombine.low %v5223, %v5227
        %v8071 = vcombine.low %v5231, %v5235
        %v8073 = vunpack.c.l.s4 1966171168
        %v8074 = vunpack.c.0.s8 %v8073
        %v8075 = vlaneseq
        %v8076 = vshrl.u32 %v8075, 7
        %v8077 = vsub.s32 %v8074, %v8076
        %v8078 = vrot.slane %v8068, %v8077
        %v8080 = vunpack.c.l.s4 1966171168
        %v8081 = vunpack.c.0.s8 %v8080
        %v8082 = vlaneseq
        %v8083 = vshrl.u32 %v8082, 7
        %v8084 = vsub.s32 %v8081, %v8083
        %v8085 = vrot.slane %v8069, %v8084
        %v8087 = vunpack.c.l.s4 1966171168
        %v8088 = vunpack.c.0.s8 %v8087
        %v8089 = vlaneseq
        %v8090 = vshrl.u32 %v8089, 7
        %v8091 = vsub.s32 %v8088, %v8090
        %v8092 = vrot.slane %v8070, %v8091
        %v8094 = vunpack.c.l.s4 1966171168
        %v8095 = vunpack.c.0.s8 %v8094
        %v8096 = vlaneseq
        %v8097 = vshrl.u32 %v8096, 7
        %v8098 = vsub.s32 %v8095, %v8097
        %v8099 = vrot.slane %v8071, %v8098
        %v8100 = vcombine.low %v8078, %v8085
        %v8101 = vcombine.low %v8092, %v8099
        %v8103 = vunpack.c.l.s4 1966171168
        %v8104 = vunpack.c.0.s8 %v8103
        %v8105 = vlaneseq
        %v8106 = vshrl.u32 %v8105, 7
        %v8107 = vsub.s32 %v8104, %v8106
        %v8108 = vrot.slane %v8100, %v8107
        %v8110 = vunpack.c.l.s4 1966171168
        %v8111 = vunpack.c.0.s8 %v8110
        %v8112 = vlaneseq
        %v8113 = vshrl.u32 %v8112, 7
        %v8114 = vsub.s32 %v8111, %v8113
        %v8115 = vrot.slane %v8101, %v8114
        %v8116 = vcombine.low %v8108, %v8115
        %v8117 = vcombine.low %v5239, %v5243
        %v8118 = vcombine.low %v5247, %v5251
        %v8119 = vcombine.low %v5255, %v5259
        %v8120 = vcombine.low %v5263, %v5267
        %v8122 = vunpack.c.l.s4 1966171168
        %v8123 = vunpack.c.0.s8 %v8122
        %v8124 = vlaneseq
        %v8125 = vshrl.u32 %v8124, 7
        %v8126 = vsub.s32 %v8123, %v8125
        %v8127 = vrot.slane %v8117, %v8126
        %v8129 = vunpack.c.l.s4 1966171168
        %v8130 = vunpack.c.0.s8 %v8129
        %v8131 = vlaneseq
        %v8132 = vshrl.u32 %v8131, 7
        %v8133 = vsub.s32 %v8130, %v8132
        %v8134 = vrot.slane %v8118, %v8133
        %v8136 = vunpack.c.l.s4 1966171168
        %v8137 = vunpack.c.0.s8 %v8136
        %v8138 = vlaneseq
        %v8139 = vshrl.u32 %v8138, 7
        %v8140 = vsub.s32 %v8137, %v8139
        %v8141 = vrot.slane %v8119, %v8140
        %v8143 = vunpack.c.l.s4 1966171168
        %v8144 = vunpack.c.0.s8 %v8143
        %v8145 = vlaneseq
        %v8146 = vshrl.u32 %v8145, 7
        %v8147 = vsub.s32 %v8144, %v8146
        %v8148 = vrot.slane %v8120, %v8147
        %v8149 = vcombine.low %v8127, %v8134
        %v8150 = vcombine.low %v8141, %v8148
        %v8152 = vunpack.c.l.s4 1966171168
        %v8153 = vunpack.c.0.s8 %v8152
        %v8154 = vlaneseq
        %v8155 = vshrl.u32 %v8154, 7
        %v8156 = vsub.s32 %v8153, %v8155
        %v8157 = vrot.slane %v8149, %v8156
        %v8159 = vunpack.c.l.s4 1966171168
        %v8160 = vunpack.c.0.s8 %v8159
        %v8161 = vlaneseq
        %v8162 = vshrl.u32 %v8161, 7
        %v8163 = vsub.s32 %v8160, %v8162
        %v8164 = vrot.slane %v8150, %v8163
        %v8165 = vcombine.low %v8157, %v8164
        %v8166 = vcombine.low %v5271, %v5275
        %v8167 = vcombine.low %v5279, %v5283
        %v8168 = vcombine.low %v5287, %v5291
        %v8169 = vcombine.low %v5295, %v5299
        %v8171 = vunpack.c.l.s4 1966171168
        %v8172 = vunpack.c.0.s8 %v8171
        %v8173 = vlaneseq
        %v8174 = vshrl.u32 %v8173, 7
        %v8175 = vsub.s32 %v8172, %v8174
        %v8176 = vrot.slane %v8166, %v8175
        %v8178 = vunpack.c.l.s4 1966171168
        %v8179 = vunpack.c.0.s8 %v8178
        %v8180 = vlaneseq
        %v8181 = vshrl.u32 %v8180, 7
        %v8182 = vsub.s32 %v8179, %v8181
        %v8183 = vrot.slane %v8167, %v8182
        %v8185 = vunpack.c.l.s4 1966171168
        %v8186 = vunpack.c.0.s8 %v8185
        %v8187 = vlaneseq
        %v8188 = vshrl.u32 %v8187, 7
        %v8189 = vsub.s32 %v8186, %v8188
        %v8190 = vrot.slane %v8168, %v8189
        %v8192 = vunpack.c.l.s4 1966171168
        %v8193 = vunpack.c.0.s8 %v8192
        %v8194 = vlaneseq
        %v8195 = vshrl.u32 %v8194, 7
        %v8196 = vsub.s32 %v8193, %v8195
        %v8197 = vrot.slane %v8169, %v8196
        %v8198 = vcombine.low %v8176, %v8183
        %v8199 = vcombine.low %v8190, %v8197
        %v8201 = vunpack.c.l.s4 1966171168
        %v8202 = vunpack.c.0.s8 %v8201
        %v8203 = vlaneseq
        %v8204 = vshrl.u32 %v8203, 7
        %v8205 = vsub.s32 %v8202, %v8204
        %v8206 = vrot.slane %v8198, %v8205
        %v8208 = vunpack.c.l.s4 1966171168
        %v8209 = vunpack.c.0.s8 %v8208
        %v8210 = vlaneseq
        %v8211 = vshrl.u32 %v8210, 7
        %v8212 = vsub.s32 %v8209, %v8211
        %v8213 = vrot.slane %v8199, %v8212
        %v8214 = vcombine.low %v8206, %v8213
        %v8215 = vcombine.low %v5303, %v5307
        %v8216 = vcombine.low %v5311, %v5315
        %v8217 = vcombine.low %v5319, %v5323
        %v8218 = vcombine.low %v5327, %v5331
        %v8220 = vunpack.c.l.s4 1966171168
        %v8221 = vunpack.c.0.s8 %v8220
        %v8222 = vlaneseq
        %v8223 = vshrl.u32 %v8222, 7
        %v8224 = vsub.s32 %v8221, %v8223
        %v8225 = vrot.slane %v8215, %v8224
        %v8227 = vunpack.c.l.s4 1966171168
        %v8228 = vunpack.c.0.s8 %v8227
        %v8229 = vlaneseq
        %v8230 = vshrl.u32 %v8229, 7
        %v8231 = vsub.s32 %v8228, %v8230
        %v8232 = vrot.slane %v8216, %v8231
        %v8234 = vunpack.c.l.s4 1966171168
        %v8235 = vunpack.c.0.s8 %v8234
        %v8236 = vlaneseq
        %v8237 = vshrl.u32 %v8236, 7
        %v8238 = vsub.s32 %v8235, %v8237
        %v8239 = vrot.slane %v8217, %v8238
        %v8241 = vunpack.c.l.s4 1966171168
        %v8242 = vunpack.c.0.s8 %v8241
        %v8243 = vlaneseq
        %v8244 = vshrl.u32 %v8243, 7
        %v8245 = vsub.s32 %v8242, %v8244
        %v8246 = vrot.slane %v8218, %v8245
        %v8247 = vcombine.low %v8225, %v8232
        %v8248 = vcombine.low %v8239, %v8246
        %v8250 = vunpack.c.l.s4 1966171168
        %v8251 = vunpack.c.0.s8 %v8250
        %v8252 = vlaneseq
        %v8253 = vshrl.u32 %v8252, 7
        %v8254 = vsub.s32 %v8251, %v8253
        %v8255 = vrot.slane %v8247, %v8254
        %v8257 = vunpack.c.l.s4 1966171168
        %v8258 = vunpack.c.0.s8 %v8257
        %v8259 = vlaneseq
        %v8260 = vshrl.u32 %v8259, 7
        %v8261 = vsub.s32 %v8258, %v8260
        %v8262 = vrot.slane %v8248, %v8261
        %v8263 = vcombine.low %v8255, %v8262
        %v8264 = vcombine.low %v5335, %v5339
        %v8265 = vcombine.low %v5343, %v5347
        %v8266 = vcombine.low %v5351, %v5355
        %v8267 = vcombine.low %v5359, %v5363
        %v8269 = vunpack.c.l.s4 1966171168
        %v8270 = vunpack.c.0.s8 %v8269
        %v8271 = vlaneseq
        %v8272 = vshrl.u32 %v8271, 7
        %v8273 = vsub.s32 %v8270, %v8272
        %v8274 = vrot.slane %v8264, %v8273
        %v8276 = vunpack.c.l.s4 1966171168
        %v8277 = vunpack.c.0.s8 %v8276
        %v8278 = vlaneseq
        %v8279 = vshrl.u32 %v8278, 7
        %v8280 = vsub.s32 %v8277, %v8279
        %v8281 = vrot.slane %v8265, %v8280
        %v8283 = vunpack.c.l.s4 1966171168
        %v8284 = vunpack.c.0.s8 %v8283
        %v8285 = vlaneseq
        %v8286 = vshrl.u32 %v8285, 7
        %v8287 = vsub.s32 %v8284, %v8286
        %v8288 = vrot.slane %v8266, %v8287
        %v8290 = vunpack.c.l.s4 1966171168
        %v8291 = vunpack.c.0.s8 %v8290
        %v8292 = vlaneseq
        %v8293 = vshrl.u32 %v8292, 7
        %v8294 = vsub.s32 %v8291, %v8293
        %v8295 = vrot.slane %v8267, %v8294
        %v8296 = vcombine.low %v8274, %v8281
        %v8297 = vcombine.low %v8288, %v8295
        %v8299 = vunpack.c.l.s4 1966171168
        %v8300 = vunpack.c.0.s8 %v8299
        %v8301 = vlaneseq
        %v8302 = vshrl.u32 %v8301, 7
        %v8303 = vsub.s32 %v8300, %v8302
        %v8304 = vrot.slane %v8296, %v8303
        %v8306 = vunpack.c.l.s4 1966171168
        %v8307 = vunpack.c.0.s8 %v8306
        %v8308 = vlaneseq
        %v8309 = vshrl.u32 %v8308, 7
        %v8310 = vsub.s32 %v8307, %v8309
        %v8311 = vrot.slane %v8297, %v8310
        %v8312 = vcombine.low %v8304, %v8311
        %v8313 = vcombine.low %v5367, %v5371
        %v8314 = vcombine.low %v5375, %v5379
        %v8315 = vcombine.low %v5383, %v5387
        %v8316 = vcombine.low %v5391, %v5395
        %v8318 = vunpack.c.l.s4 1966171168
        %v8319 = vunpack.c.0.s8 %v8318
        %v8320 = vlaneseq
        %v8321 = vshrl.u32 %v8320, 7
        %v8322 = vsub.s32 %v8319, %v8321
        %v8323 = vrot.slane %v8313, %v8322
        %v8325 = vunpack.c.l.s4 1966171168
        %v8326 = vunpack.c.0.s8 %v8325
        %v8327 = vlaneseq
        %v8328 = vshrl.u32 %v8327, 7
        %v8329 = vsub.s32 %v8326, %v8328
        %v8330 = vrot.slane %v8314, %v8329
        %v8332 = vunpack.c.l.s4 1966171168
        %v8333 = vunpack.c.0.s8 %v8332
        %v8334 = vlaneseq
        %v8335 = vshrl.u32 %v8334, 7
        %v8336 = vsub.s32 %v8333, %v8335
        %v8337 = vrot.slane %v8315, %v8336
        %v8339 = vunpack.c.l.s4 1966171168
        %v8340 = vunpack.c.0.s8 %v8339
        %v8341 = vlaneseq
        %v8342 = vshrl.u32 %v8341, 7
        %v8343 = vsub.s32 %v8340, %v8342
        %v8344 = vrot.slane %v8316, %v8343
        %v8345 = vcombine.low %v8323, %v8330
        %v8346 = vcombine.low %v8337, %v8344
        %v8348 = vunpack.c.l.s4 1966171168
        %v8349 = vunpack.c.0.s8 %v8348
        %v8350 = vlaneseq
        %v8351 = vshrl.u32 %v8350, 7
        %v8352 = vsub.s32 %v8349, %v8351
        %v8353 = vrot.slane %v8345, %v8352
        %v8355 = vunpack.c.l.s4 1966171168
        %v8356 = vunpack.c.0.s8 %v8355
        %v8357 = vlaneseq
        %v8358 = vshrl.u32 %v8357, 7
        %v8359 = vsub.s32 %v8356, %v8358
        %v8360 = vrot.slane %v8346, %v8359
        %v8361 = vcombine.low %v8353, %v8360
        %v8362 = vcombine.low %v5399, %v5403
        %v8363 = vcombine.low %v5407, %v5411
        %v8364 = vcombine.low %v5415, %v5419
        %v8365 = vcombine.low %v5423, %v5427
        %v8367 = vunpack.c.l.s4 1966171168
        %v8368 = vunpack.c.0.s8 %v8367
        %v8369 = vlaneseq
        %v8370 = vshrl.u32 %v8369, 7
        %v8371 = vsub.s32 %v8368, %v8370
        %v8372 = vrot.slane %v8362, %v8371
        %v8374 = vunpack.c.l.s4 1966171168
        %v8375 = vunpack.c.0.s8 %v8374
        %v8376 = vlaneseq
        %v8377 = vshrl.u32 %v8376, 7
        %v8378 = vsub.s32 %v8375, %v8377
        %v8379 = vrot.slane %v8363, %v8378
        %v8381 = vunpack.c.l.s4 1966171168
        %v8382 = vunpack.c.0.s8 %v8381
        %v8383 = vlaneseq
        %v8384 = vshrl.u32 %v8383, 7
        %v8385 = vsub.s32 %v8382, %v8384
        %v8386 = vrot.slane %v8364, %v8385
        %v8388 = vunpack.c.l.s4 1966171168
        %v8389 = vunpack.c.0.s8 %v8388
        %v8390 = vlaneseq
        %v8391 = vshrl.u32 %v8390, 7
        %v8392 = vsub.s32 %v8389, %v8391
        %v8393 = vrot.slane %v8365, %v8392
        %v8394 = vcombine.low %v8372, %v8379
        %v8395 = vcombine.low %v8386, %v8393
        %v8397 = vunpack.c.l.s4 1966171168
        %v8398 = vunpack.c.0.s8 %v8397
        %v8399 = vlaneseq
        %v8400 = vshrl.u32 %v8399, 7
        %v8401 = vsub.s32 %v8398, %v8400
        %v8402 = vrot.slane %v8394, %v8401
        %v8404 = vunpack.c.l.s4 1966171168
        %v8405 = vunpack.c.0.s8 %v8404
        %v8406 = vlaneseq
        %v8407 = vshrl.u32 %v8406, 7
        %v8408 = vsub.s32 %v8405, %v8407
        %v8409 = vrot.slane %v8395, %v8408
        %v8410 = vcombine.low %v8402, %v8409
        %v8411 = vcombine.low %v5431, %v5435
        %v8412 = vcombine.low %v5439, %v5443
        %v8413 = vcombine.low %v5447, %v5451
        %v8414 = vcombine.low %v5455, %v5459
        %v8416 = vunpack.c.l.s4 1966171168
        %v8417 = vunpack.c.0.s8 %v8416
        %v8418 = vlaneseq
        %v8419 = vshrl.u32 %v8418, 7
        %v8420 = vsub.s32 %v8417, %v8419
        %v8421 = vrot.slane %v8411, %v8420
        %v8423 = vunpack.c.l.s4 1966171168
        %v8424 = vunpack.c.0.s8 %v8423
        %v8425 = vlaneseq
        %v8426 = vshrl.u32 %v8425, 7
        %v8427 = vsub.s32 %v8424, %v8426
        %v8428 = vrot.slane %v8412, %v8427
        %v8430 = vunpack.c.l.s4 1966171168
        %v8431 = vunpack.c.0.s8 %v8430
        %v8432 = vlaneseq
        %v8433 = vshrl.u32 %v8432, 7
        %v8434 = vsub.s32 %v8431, %v8433
        %v8435 = vrot.slane %v8413, %v8434
        %v8437 = vunpack.c.l.s4 1966171168
        %v8438 = vunpack.c.0.s8 %v8437
        %v8439 = vlaneseq
        %v8440 = vshrl.u32 %v8439, 7
        %v8441 = vsub.s32 %v8438, %v8440
        %v8442 = vrot.slane %v8414, %v8441
        %v8443 = vcombine.low %v8421, %v8428
        %v8444 = vcombine.low %v8435, %v8442
        %v8446 = vunpack.c.l.s4 1966171168
        %v8447 = vunpack.c.0.s8 %v8446
        %v8448 = vlaneseq
        %v8449 = vshrl.u32 %v8448, 7
        %v8450 = vsub.s32 %v8447, %v8449
        %v8451 = vrot.slane %v8443, %v8450
        %v8453 = vunpack.c.l.s4 1966171168
        %v8454 = vunpack.c.0.s8 %v8453
        %v8455 = vlaneseq
        %v8456 = vshrl.u32 %v8455, 7
        %v8457 = vsub.s32 %v8454, %v8456
        %v8458 = vrot.slane %v8444, %v8457
        %v8459 = vcombine.low %v8451, %v8458
        %v8460 = vcombine.low %v5463, %v5467
        %v8461 = vcombine.low %v5471, %v5475
        %v8462 = vcombine.low %v5479, %v5483
        %v8463 = vcombine.low %v5487, %v5491
        %v8465 = vunpack.c.l.s4 1966171168
        %v8466 = vunpack.c.0.s8 %v8465
        %v8467 = vlaneseq
        %v8468 = vshrl.u32 %v8467, 7
        %v8469 = vsub.s32 %v8466, %v8468
        %v8470 = vrot.slane %v8460, %v8469
        %v8472 = vunpack.c.l.s4 1966171168
        %v8473 = vunpack.c.0.s8 %v8472
        %v8474 = vlaneseq
        %v8475 = vshrl.u32 %v8474, 7
        %v8476 = vsub.s32 %v8473, %v8475
        %v8477 = vrot.slane %v8461, %v8476
        %v8479 = vunpack.c.l.s4 1966171168
        %v8480 = vunpack.c.0.s8 %v8479
        %v8481 = vlaneseq
        %v8482 = vshrl.u32 %v8481, 7
        %v8483 = vsub.s32 %v8480, %v8482
        %v8484 = vrot.slane %v8462, %v8483
        %v8486 = vunpack.c.l.s4 1966171168
        %v8487 = vunpack.c.0.s8 %v8486
        %v8488 = vlaneseq
        %v8489 = vshrl.u32 %v8488, 7
        %v8490 = vsub.s32 %v8487, %v8489
        %v8491 = vrot.slane %v8463, %v8490
        %v8492 = vcombine.low %v8470, %v8477
        %v8493 = vcombine.low %v8484, %v8491
        %v8495 = vunpack.c.l.s4 1966171168
        %v8496 = vunpack.c.0.s8 %v8495
        %v8497 = vlaneseq
        %v8498 = vshrl.u32 %v8497, 7
        %v8499 = vsub.s32 %v8496, %v8498
        %v8500 = vrot.slane %v8492, %v8499
        %v8502 = vunpack.c.l.s4 1966171168
        %v8503 = vunpack.c.0.s8 %v8502
        %v8504 = vlaneseq
        %v8505 = vshrl.u32 %v8504, 7
        %v8506 = vsub.s32 %v8503, %v8505
        %v8507 = vrot.slane %v8493, %v8506
        %v8508 = vcombine.low %v8500, %v8507
        %v8509 = vcombine.low %v5495, %v5499
        %v8510 = vcombine.low %v5503, %v5507
        %v8511 = vcombine.low %v5511, %v5515
        %v8512 = vcombine.low %v5519, %v5523
        %v8514 = vunpack.c.l.s4 1966171168
        %v8515 = vunpack.c.0.s8 %v8514
        %v8516 = vlaneseq
        %v8517 = vshrl.u32 %v8516, 7
        %v8518 = vsub.s32 %v8515, %v8517
        %v8519 = vrot.slane %v8509, %v8518
        %v8521 = vunpack.c.l.s4 1966171168
        %v8522 = vunpack.c.0.s8 %v8521
        %v8523 = vlaneseq
        %v8524 = vshrl.u32 %v8523, 7
        %v8525 = vsub.s32 %v8522, %v8524
        %v8526 = vrot.slane %v8510, %v8525
        %v8528 = vunpack.c.l.s4 1966171168
        %v8529 = vunpack.c.0.s8 %v8528
        %v8530 = vlaneseq
        %v8531 = vshrl.u32 %v8530, 7
        %v8532 = vsub.s32 %v8529, %v8531
        %v8533 = vrot.slane %v8511, %v8532
        %v8535 = vunpack.c.l.s4 1966171168
        %v8536 = vunpack.c.0.s8 %v8535
        %v8537 = vlaneseq
        %v8538 = vshrl.u32 %v8537, 7
        %v8539 = vsub.s32 %v8536, %v8538
        %v8540 = vrot.slane %v8512, %v8539
        %v8541 = vcombine.low %v8519, %v8526
        %v8542 = vcombine.low %v8533, %v8540
        %v8544 = vunpack.c.l.s4 1966171168
        %v8545 = vunpack.c.0.s8 %v8544
        %v8546 = vlaneseq
        %v8547 = vshrl.u32 %v8546, 7
        %v8548 = vsub.s32 %v8545, %v8547
        %v8549 = vrot.slane %v8541, %v8548
        %v8551 = vunpack.c.l.s4 1966171168
        %v8552 = vunpack.c.0.s8 %v8551
        %v8553 = vlaneseq
        %v8554 = vshrl.u32 %v8553, 7
        %v8555 = vsub.s32 %v8552, %v8554
        %v8556 = vrot.slane %v8542, %v8555
        %v8557 = vcombine.low %v8549, %v8556
        %v8558 = vcombine.low %v5527, %v5531
        %v8559 = vcombine.low %v5535, %v5539
        %v8560 = vcombine.low %v5543, %v5547
        %v8561 = vcombine.low %v5551, %v5555
        %v8563 = vunpack.c.l.s4 1966171168
        %v8564 = vunpack.c.0.s8 %v8563
        %v8565 = vlaneseq
        %v8566 = vshrl.u32 %v8565, 7
        %v8567 = vsub.s32 %v8564, %v8566
        %v8568 = vrot.slane %v8558, %v8567
        %v8570 = vunpack.c.l.s4 1966171168
        %v8571 = vunpack.c.0.s8 %v8570
        %v8572 = vlaneseq
        %v8573 = vshrl.u32 %v8572, 7
        %v8574 = vsub.s32 %v8571, %v8573
        %v8575 = vrot.slane %v8559, %v8574
        %v8577 = vunpack.c.l.s4 1966171168
        %v8578 = vunpack.c.0.s8 %v8577
        %v8579 = vlaneseq
        %v8580 = vshrl.u32 %v8579, 7
        %v8581 = vsub.s32 %v8578, %v8580
        %v8582 = vrot.slane %v8560, %v8581
        %v8584 = vunpack.c.l.s4 1966171168
        %v8585 = vunpack.c.0.s8 %v8584
        %v8586 = vlaneseq
        %v8587 = vshrl.u32 %v8586, 7
        %v8588 = vsub.s32 %v8585, %v8587
        %v8589 = vrot.slane %v8561, %v8588
        %v8590 = vcombine.low %v8568, %v8575
        %v8591 = vcombine.low %v8582, %v8589
        %v8593 = vunpack.c.l.s4 1966171168
        %v8594 = vunpack.c.0.s8 %v8593
        %v8595 = vlaneseq
        %v8596 = vshrl.u32 %v8595, 7
        %v8597 = vsub.s32 %v8594, %v8596
        %v8598 = vrot.slane %v8590, %v8597
        %v8600 = vunpack.c.l.s4 1966171168
        %v8601 = vunpack.c.0.s8 %v8600
        %v8602 = vlaneseq
        %v8603 = vshrl.u32 %v8602, 7
        %v8604 = vsub.s32 %v8601, %v8603
        %v8605 = vrot.slane %v8591, %v8604
        %v8606 = vcombine.low %v8598, %v8605
        %v8607 = vcombine.low %v5559, %v5563
        %v8608 = vcombine.low %v5567, %v5571
        %v8609 = vcombine.low %v5575, %v5579
        %v8610 = vcombine.low %v5583, %v5587
        %v8612 = vunpack.c.l.s4 1966171168
        %v8613 = vunpack.c.0.s8 %v8612
        %v8614 = vlaneseq
        %v8615 = vshrl.u32 %v8614, 7
        %v8616 = vsub.s32 %v8613, %v8615
        %v8617 = vrot.slane %v8607, %v8616
        %v8619 = vunpack.c.l.s4 1966171168
        %v8620 = vunpack.c.0.s8 %v8619
        %v8621 = vlaneseq
        %v8622 = vshrl.u32 %v8621, 7
        %v8623 = vsub.s32 %v8620, %v8622
        %v8624 = vrot.slane %v8608, %v8623
        %v8626 = vunpack.c.l.s4 1966171168
        %v8627 = vunpack.c.0.s8 %v8626
        %v8628 = vlaneseq
        %v8629 = vshrl.u32 %v8628, 7
        %v8630 = vsub.s32 %v8627, %v8629
        %v8631 = vrot.slane %v8609, %v8630
        %v8633 = vunpack.c.l.s4 1966171168
        %v8634 = vunpack.c.0.s8 %v8633
        %v8635 = vlaneseq
        %v8636 = vshrl.u32 %v8635, 7
        %v8637 = vsub.s32 %v8634, %v8636
        %v8638 = vrot.slane %v8610, %v8637
        %v8639 = vcombine.low %v8617, %v8624
        %v8640 = vcombine.low %v8631, %v8638
        %v8642 = vunpack.c.l.s4 1966171168
        %v8643 = vunpack.c.0.s8 %v8642
        %v8644 = vlaneseq
        %v8645 = vshrl.u32 %v8644, 7
        %v8646 = vsub.s32 %v8643, %v8645
        %v8647 = vrot.slane %v8639, %v8646
        %v8649 = vunpack.c.l.s4 1966171168
        %v8650 = vunpack.c.0.s8 %v8649
        %v8651 = vlaneseq
        %v8652 = vshrl.u32 %v8651, 7
        %v8653 = vsub.s32 %v8650, %v8652
        %v8654 = vrot.slane %v8640, %v8653
        %v8655 = vcombine.low %v8647, %v8654
        %v8656 = vcombine.low %v5591, %v5595
        %v8657 = vcombine.low %v5599, %v5603
        %v8658 = vcombine.low %v5607, %v5611
        %v8659 = vcombine.low %v5615, %v5619
        %v8661 = vunpack.c.l.s4 1966171168
        %v8662 = vunpack.c.0.s8 %v8661
        %v8663 = vlaneseq
        %v8664 = vshrl.u32 %v8663, 7
        %v8665 = vsub.s32 %v8662, %v8664
        %v8666 = vrot.slane %v8656, %v8665
        %v8668 = vunpack.c.l.s4 1966171168
        %v8669 = vunpack.c.0.s8 %v8668
        %v8670 = vlaneseq
        %v8671 = vshrl.u32 %v8670, 7
        %v8672 = vsub.s32 %v8669, %v8671
        %v8673 = vrot.slane %v8657, %v8672
        %v8675 = vunpack.c.l.s4 1966171168
        %v8676 = vunpack.c.0.s8 %v8675
        %v8677 = vlaneseq
        %v8678 = vshrl.u32 %v8677, 7
        %v8679 = vsub.s32 %v8676, %v8678
        %v8680 = vrot.slane %v8658, %v8679
        %v8682 = vunpack.c.l.s4 1966171168
        %v8683 = vunpack.c.0.s8 %v8682
        %v8684 = vlaneseq
        %v8685 = vshrl.u32 %v8684, 7
        %v8686 = vsub.s32 %v8683, %v8685
        %v8687 = vrot.slane %v8659, %v8686
        %v8688 = vcombine.low %v8666, %v8673
        %v8689 = vcombine.low %v8680, %v8687
        %v8691 = vunpack.c.l.s4 1966171168
        %v8692 = vunpack.c.0.s8 %v8691
        %v8693 = vlaneseq
        %v8694 = vshrl.u32 %v8693, 7
        %v8695 = vsub.s32 %v8692, %v8694
        %v8696 = vrot.slane %v8688, %v8695
        %v8698 = vunpack.c.l.s4 1966171168
        %v8699 = vunpack.c.0.s8 %v8698
        %v8700 = vlaneseq
        %v8701 = vshrl.u32 %v8700, 7
        %v8702 = vsub.s32 %v8699, %v8701
        %v8703 = vrot.slane %v8689, %v8702
        %v8704 = vcombine.low %v8696, %v8703
        %v8705 = vcombine.low %v5623, %v5627
        %v8706 = vcombine.low %v5631, %v5635
        %v8707 = vcombine.low %v5639, %v5643
        %v8708 = vcombine.low %v5647, %v5651
        %v8710 = vunpack.c.l.s4 1966171168
        %v8711 = vunpack.c.0.s8 %v8710
        %v8712 = vlaneseq
        %v8713 = vshrl.u32 %v8712, 7
        %v8714 = vsub.s32 %v8711, %v8713
        %v8715 = vrot.slane %v8705, %v8714
        %v8717 = vunpack.c.l.s4 1966171168
        %v8718 = vunpack.c.0.s8 %v8717
        %v8719 = vlaneseq
        %v8720 = vshrl.u32 %v8719, 7
        %v8721 = vsub.s32 %v8718, %v8720
        %v8722 = vrot.slane %v8706, %v8721
        %v8724 = vunpack.c.l.s4 1966171168
        %v8725 = vunpack.c.0.s8 %v8724
        %v8726 = vlaneseq
        %v8727 = vshrl.u32 %v8726, 7
        %v8728 = vsub.s32 %v8725, %v8727
        %v8729 = vrot.slane %v8707, %v8728
        %v8731 = vunpack.c.l.s4 1966171168
        %v8732 = vunpack.c.0.s8 %v8731
        %v8733 = vlaneseq
        %v8734 = vshrl.u32 %v8733, 7
        %v8735 = vsub.s32 %v8732, %v8734
        %v8736 = vrot.slane %v8708, %v8735
        %v8737 = vcombine.low %v8715, %v8722
        %v8738 = vcombine.low %v8729, %v8736
        %v8740 = vunpack.c.l.s4 1966171168
        %v8741 = vunpack.c.0.s8 %v8740
        %v8742 = vlaneseq
        %v8743 = vshrl.u32 %v8742, 7
        %v8744 = vsub.s32 %v8741, %v8743
        %v8745 = vrot.slane %v8737, %v8744
        %v8747 = vunpack.c.l.s4 1966171168
        %v8748 = vunpack.c.0.s8 %v8747
        %v8749 = vlaneseq
        %v8750 = vshrl.u32 %v8749, 7
        %v8751 = vsub.s32 %v8748, %v8750
        %v8752 = vrot.slane %v8738, %v8751
        %v8753 = vcombine.low %v8745, %v8752
        %v8754 = vcombine.low %v5655, %v5659
        %v8755 = vcombine.low %v5663, %v5667
        %v8756 = vcombine.low %v5671, %v5675
        %v8757 = vcombine.low %v5679, %v5683
        %v8759 = vunpack.c.l.s4 1966171168
        %v8760 = vunpack.c.0.s8 %v8759
        %v8761 = vlaneseq
        %v8762 = vshrl.u32 %v8761, 7
        %v8763 = vsub.s32 %v8760, %v8762
        %v8764 = vrot.slane %v8754, %v8763
        %v8766 = vunpack.c.l.s4 1966171168
        %v8767 = vunpack.c.0.s8 %v8766
        %v8768 = vlaneseq
        %v8769 = vshrl.u32 %v8768, 7
        %v8770 = vsub.s32 %v8767, %v8769
        %v8771 = vrot.slane %v8755, %v8770
        %v8773 = vunpack.c.l.s4 1966171168
        %v8774 = vunpack.c.0.s8 %v8773
        %v8775 = vlaneseq
        %v8776 = vshrl.u32 %v8775, 7
        %v8777 = vsub.s32 %v8774, %v8776
        %v8778 = vrot.slane %v8756, %v8777
        %v8780 = vunpack.c.l.s4 1966171168
        %v8781 = vunpack.c.0.s8 %v8780
        %v8782 = vlaneseq
        %v8783 = vshrl.u32 %v8782, 7
        %v8784 = vsub.s32 %v8781, %v8783
        %v8785 = vrot.slane %v8757, %v8784
        %v8786 = vcombine.low %v8764, %v8771
        %v8787 = vcombine.low %v8778, %v8785
        %v8789 = vunpack.c.l.s4 1966171168
        %v8790 = vunpack.c.0.s8 %v8789
        %v8791 = vlaneseq
        %v8792 = vshrl.u32 %v8791, 7
        %v8793 = vsub.s32 %v8790, %v8792
        %v8794 = vrot.slane %v8786, %v8793
        %v8796 = vunpack.c.l.s4 1966171168
        %v8797 = vunpack.c.0.s8 %v8796
        %v8798 = vlaneseq
        %v8799 = vshrl.u32 %v8798, 7
        %v8800 = vsub.s32 %v8797, %v8799
        %v8801 = vrot.slane %v8787, %v8800
        %v8802 = vcombine.low %v8794, %v8801
        %v8803 = vcombine.low %v5687, %v5691
        %v8804 = vcombine.low %v5695, %v5699
        %v8805 = vcombine.low %v5703, %v5707
        %v8806 = vcombine.low %v5711, %v5715
        %v8808 = vunpack.c.l.s4 1966171168
        %v8809 = vunpack.c.0.s8 %v8808
        %v8810 = vlaneseq
        %v8811 = vshrl.u32 %v8810, 7
        %v8812 = vsub.s32 %v8809, %v8811
        %v8813 = vrot.slane %v8803, %v8812
        %v8815 = vunpack.c.l.s4 1966171168
        %v8816 = vunpack.c.0.s8 %v8815
        %v8817 = vlaneseq
        %v8818 = vshrl.u32 %v8817, 7
        %v8819 = vsub.s32 %v8816, %v8818
        %v8820 = vrot.slane %v8804, %v8819
        %v8822 = vunpack.c.l.s4 1966171168
        %v8823 = vunpack.c.0.s8 %v8822
        %v8824 = vlaneseq
        %v8825 = vshrl.u32 %v8824, 7
        %v8826 = vsub.s32 %v8823, %v8825
        %v8827 = vrot.slane %v8805, %v8826
        %v8829 = vunpack.c.l.s4 1966171168
        %v8830 = vunpack.c.0.s8 %v8829
        %v8831 = vlaneseq
        %v8832 = vshrl.u32 %v8831, 7
        %v8833 = vsub.s32 %v8830, %v8832
        %v8834 = vrot.slane %v8806, %v8833
        %v8835 = vcombine.low %v8813, %v8820
        %v8836 = vcombine.low %v8827, %v8834
        %v8838 = vunpack.c.l.s4 1966171168
        %v8839 = vunpack.c.0.s8 %v8838
        %v8840 = vlaneseq
        %v8841 = vshrl.u32 %v8840, 7
        %v8842 = vsub.s32 %v8839, %v8841
        %v8843 = vrot.slane %v8835, %v8842
        %v8845 = vunpack.c.l.s4 1966171168
        %v8846 = vunpack.c.0.s8 %v8845
        %v8847 = vlaneseq
        %v8848 = vshrl.u32 %v8847, 7
        %v8849 = vsub.s32 %v8846, %v8848
        %v8850 = vrot.slane %v8836, %v8849
        %v8851 = vcombine.low %v8843, %v8850
        %8852 = vset.pattern.permute.xlu0 0
        %8853 = vperm.xlu0 %8852, %v5764
        %v8854 = vpop.permute.xlu0 %8853
        %8855 = vset.pattern.permute.xlu0 0
        %8856 = vperm.xlu0 %8855, %v5813
        %v8857 = vpop.permute.xlu0 %8856
        %8858 = vset.pattern.permute.xlu0 0
        %8859 = vperm.xlu0 %8858, %v5862
        %v8860 = vpop.permute.xlu0 %8859
        %8861 = vset.pattern.permute.xlu0 0
        %8862 = vperm.xlu0 %8861, %v5911
        %v8863 = vpop.permute.xlu0 %8862
        %8864 = vset.pattern.permute.xlu0 0
        %8865 = vperm.xlu0 %8864, %v5960
        %v8866 = vpop.permute.xlu0 %8865
        %8867 = vset.pattern.permute.xlu0 0
        %8868 = vperm.xlu0 %8867, %v6009
        %v8869 = vpop.permute.xlu0 %8868
        %8870 = vset.pattern.permute.xlu0 0
        %8871 = vperm.xlu0 %8870, %v6058
        %v8872 = vpop.permute.xlu0 %8871
        %8873 = vset.pattern.permute.xlu0 0
        %8874 = vperm.xlu0 %8873, %v6107
        %v8875 = vpop.permute.xlu0 %8874
        %8876 = vset.pattern.permute.xlu0 0
        %8877 = vperm.xlu0 %8876, %v6156
        %v8878 = vpop.permute.xlu0 %8877
        %8879 = vset.pattern.permute.xlu0 0
        %8880 = vperm.xlu0 %8879, %v6205
        %v8881 = vpop.permute.xlu0 %8880
        %8882 = vset.pattern.permute.xlu0 0
        %8883 = vperm.xlu0 %8882, %v6254
        %v8884 = vpop.permute.xlu0 %8883
        %8885 = vset.pattern.permute.xlu0 0
        %8886 = vperm.xlu0 %8885, %v6303
        %v8887 = vpop.permute.xlu0 %8886
        %8888 = vset.pattern.permute.xlu0 0
        %8889 = vperm.xlu0 %8888, %v6352
        %v8890 = vpop.permute.xlu0 %8889
        %8891 = vset.pattern.permute.xlu0 0
        %8892 = vperm.xlu0 %8891, %v6401
        %v8893 = vpop.permute.xlu0 %8892
        %8894 = vset.pattern.permute.xlu0 0
        %8895 = vperm.xlu0 %8894, %v6450
        %v8896 = vpop.permute.xlu0 %8895
        %8897 = vset.pattern.permute.xlu0 0
        %8898 = vperm.xlu0 %8897, %v6499
        %v8899 = vpop.permute.xlu0 %8898
        %8900 = vset.pattern.permute.xlu0 0
        %8901 = vperm.xlu0 %8900, %v6548
        %v8902 = vpop.permute.xlu0 %8901
        %8903 = vset.pattern.permute.xlu0 0
        %8904 = vperm.xlu0 %8903, %v6597
        %v8905 = vpop.permute.xlu0 %8904
        %8906 = vset.pattern.permute.xlu0 0
        %8907 = vperm.xlu0 %8906, %v6646
        %v8908 = vpop.permute.xlu0 %8907
        %8909 = vset.pattern.permute.xlu0 0
        %8910 = vperm.xlu0 %8909, %v6695
        %v8911 = vpop.permute.xlu0 %8910
        %8912 = vset.pattern.permute.xlu0 0
        %8913 = vperm.xlu0 %8912, %v6744
        %v8914 = vpop.permute.xlu0 %8913
        %8915 = vset.pattern.permute.xlu0 0
        %8916 = vperm.xlu0 %8915, %v6793
        %v8917 = vpop.permute.xlu0 %8916
        %8918 = vset.pattern.permute.xlu0 0
        %8919 = vperm.xlu0 %8918, %v6842
        %v8920 = vpop.permute.xlu0 %8919
        %8921 = vset.pattern.permute.xlu0 0
        %8922 = vperm.xlu0 %8921, %v6891
        %v8923 = vpop.permute.xlu0 %8922
        %8924 = vset.pattern.permute.xlu0 0
        %8925 = vperm.xlu0 %8924, %v6940
        %v8926 = vpop.permute.xlu0 %8925
        %8927 = vset.pattern.permute.xlu0 0
        %8928 = vperm.xlu0 %8927, %v6989
        %v8929 = vpop.permute.xlu0 %8928
        %8930 = vset.pattern.permute.xlu0 0
        %8931 = vperm.xlu0 %8930, %v7038
        %v8932 = vpop.permute.xlu0 %8931
        %8933 = vset.pattern.permute.xlu0 0
        %8934 = vperm.xlu0 %8933, %v7087
        %v8935 = vpop.permute.xlu0 %8934
        %8936 = vset.pattern.permute.xlu0 0
        %8937 = vperm.xlu0 %8936, %v7136
        %v8938 = vpop.permute.xlu0 %8937
        %8939 = vset.pattern.permute.xlu0 0
        %8940 = vperm.xlu0 %8939, %v7185
        %v8941 = vpop.permute.xlu0 %8940
        %8942 = vset.pattern.permute.xlu0 0
        %8943 = vperm.xlu0 %8942, %v7234
        %v8944 = vpop.permute.xlu0 %8943
        %8945 = vset.pattern.permute.xlu0 0
        %8946 = vperm.xlu0 %8945, %v7283
        %v8947 = vpop.permute.xlu0 %8946
        %8948 = vset.pattern.permute.xlu0 0
        %8949 = vperm.xlu0 %8948, %v7332
        %v8950 = vpop.permute.xlu0 %8949
        %8951 = vset.pattern.permute.xlu0 0
        %8952 = vperm.xlu0 %8951, %v7381
        %v8953 = vpop.permute.xlu0 %8952
        %8954 = vset.pattern.permute.xlu0 0
        %8955 = vperm.xlu0 %8954, %v7430
        %v8956 = vpop.permute.xlu0 %8955
        %8957 = vset.pattern.permute.xlu0 0
        %8958 = vperm.xlu0 %8957, %v7479
        %v8959 = vpop.permute.xlu0 %8958
        %8960 = vset.pattern.permute.xlu0 0
        %8961 = vperm.xlu0 %8960, %v7528
        %v8962 = vpop.permute.xlu0 %8961
        %8963 = vset.pattern.permute.xlu0 0
        %8964 = vperm.xlu0 %8963, %v7577
        %v8965 = vpop.permute.xlu0 %8964
        %8966 = vset.pattern.permute.xlu0 0
        %8967 = vperm.xlu0 %8966, %v7626
        %v8968 = vpop.permute.xlu0 %8967
        %8969 = vset.pattern.permute.xlu0 0
        %8970 = vperm.xlu0 %8969, %v7675
        %v8971 = vpop.permute.xlu0 %8970
        %8972 = vset.pattern.permute.xlu0 0
        %8973 = vperm.xlu0 %8972, %v7724
        %v8974 = vpop.permute.xlu0 %8973
        %8975 = vset.pattern.permute.xlu0 0
        %8976 = vperm.xlu0 %8975, %v7773
        %v8977 = vpop.permute.xlu0 %8976
        %8978 = vset.pattern.permute.xlu0 0
        %8979 = vperm.xlu0 %8978, %v7822
        %v8980 = vpop.permute.xlu0 %8979
        %8981 = vset.pattern.permute.xlu0 0
        %8982 = vperm.xlu0 %8981, %v7871
        %v8983 = vpop.permute.xlu0 %8982
        %8984 = vset.pattern.permute.xlu0 0
        %8985 = vperm.xlu0 %8984, %v7920
        %v8986 = vpop.permute.xlu0 %8985
        %8987 = vset.pattern.permute.xlu0 0
        %8988 = vperm.xlu0 %8987, %v7969
        %v8989 = vpop.permute.xlu0 %8988
        %8990 = vset.pattern.permute.xlu0 0
        %8991 = vperm.xlu0 %8990, %v8018
        %v8992 = vpop.permute.xlu0 %8991
        %8993 = vset.pattern.permute.xlu0 0
        %8994 = vperm.xlu0 %8993, %v8067
        %v8995 = vpop.permute.xlu0 %8994
        %8996 = vset.pattern.permute.xlu0 0
        %8997 = vperm.xlu0 %8996, %v8116
        %v8998 = vpop.permute.xlu0 %8997
        %8999 = vset.pattern.permute.xlu0 0
        %9000 = vperm.xlu0 %8999, %v8165
        %v9001 = vpop.permute.xlu0 %9000
        %9002 = vset.pattern.permute.xlu0 0
        %9003 = vperm.xlu0 %9002, %v8214
        %v9004 = vpop.permute.xlu0 %9003
        %9005 = vset.pattern.permute.xlu0 0
        %9006 = vperm.xlu0 %9005, %v8263
        %v9007 = vpop.permute.xlu0 %9006
        %9008 = vset.pattern.permute.xlu0 0
        %9009 = vperm.xlu0 %9008, %v8312
        %v9010 = vpop.permute.xlu0 %9009
        %9011 = vset.pattern.permute.xlu0 0
        %9012 = vperm.xlu0 %9011, %v8361
        %v9013 = vpop.permute.xlu0 %9012
        %9014 = vset.pattern.permute.xlu0 0
        %9015 = vperm.xlu0 %9014, %v8410
        %v9016 = vpop.permute.xlu0 %9015
        %9017 = vset.pattern.permute.xlu0 0
        %9018 = vperm.xlu0 %9017, %v8459
        %v9019 = vpop.permute.xlu0 %9018
        %9020 = vset.pattern.permute.xlu0 0
        %9021 = vperm.xlu0 %9020, %v8508
        %v9022 = vpop.permute.xlu0 %9021
        %9023 = vset.pattern.permute.xlu0 0
        %9024 = vperm.xlu0 %9023, %v8557
        %v9025 = vpop.permute.xlu0 %9024
        %9026 = vset.pattern.permute.xlu0 0
        %9027 = vperm.xlu0 %9026, %v8606
        %v9028 = vpop.permute.xlu0 %9027
        %9029 = vset.pattern.permute.xlu0 0
        %9030 = vperm.xlu0 %9029, %v8655
        %v9031 = vpop.permute.xlu0 %9030
        %9032 = vset.pattern.permute.xlu0 0
        %9033 = vperm.xlu0 %9032, %v8704
        %v9034 = vpop.permute.xlu0 %9033
        %9035 = vset.pattern.permute.xlu0 0
        %9036 = vperm.xlu0 %9035, %v8753
        %v9037 = vpop.permute.xlu0 %9036
        %9038 = vset.pattern.permute.xlu0 0
        %9039 = vperm.xlu0 %9038, %v8802
        %v9040 = vpop.permute.xlu0 %9039
        %9041 = vset.pattern.permute.xlu0 0
        %9042 = vperm.xlu0 %9041, %v8851
        %v9043 = vpop.permute.xlu0 %9042
        %v9044 = vlaneseq
        %v9045 = vand.u32 %v9044, 127
        %v9046 = vlaneseq
        %v9047 = vshrl.u32 %v9046, 7
        %v9048 = vsub.s32 %v9045, %v9047
        %v9049 = vrot.slane %v8854, %v9048
        %v9050 = vadd.s32 %v9045, 4294967288
        %v9051 = vlaneseq
        %v9052 = vshrl.u32 %v9051, 7
        %v9053 = vsub.s32 %v9050, %v9052
        %v9054 = vrot.slane %v8857, %v9053
        %vm9055 = vcmask 130112
        %v9056 = vsel %vm9055, %v9054, %v9049
        %v9057 = vadd.s32 %v9045, 4294967280
        %v9058 = vlaneseq
        %v9059 = vshrl.u32 %v9058, 7
        %v9060 = vsub.s32 %v9057, %v9059
        %v9061 = vrot.slane %v8860, %v9060
        %vm9062 = vcmask 195712
        %v9063 = vsel %vm9062, %v9061, %v9056
        %v9064 = vadd.s32 %v9045, 4294967272
        %v9065 = vlaneseq
        %v9066 = vshrl.u32 %v9065, 7
        %v9067 = vsub.s32 %v9064, %v9066
        %v9068 = vrot.slane %v8863, %v9067
        %vm9069 = vcmask 261312
        %v9070 = vsel %vm9069, %v9068, %v9063
        %v9071 = vadd.s32 %v9045, 4294967264
        %v9072 = vlaneseq
        %v9073 = vshrl.u32 %v9072, 7
        %v9074 = vsub.s32 %v9071, %v9073
        %v9075 = vrot.slane %v8866, %v9074
        %vm9076 = vcmask 326912
        %v9077 = vsel %vm9076, %v9075, %v9070
        %v9078 = vadd.s32 %v9045, 4294967256
        %v9079 = vlaneseq
        %v9080 = vshrl.u32 %v9079, 7
        %v9081 = vsub.s32 %v9078, %v9080
        %v9082 = vrot.slane %v8869, %v9081
        %vm9083 = vcmask 392512
        %v9084 = vsel %vm9083, %v9082, %v9077
        %v9085 = vadd.s32 %v9045, 4294967248
        %v9086 = vlaneseq
        %v9087 = vshrl.u32 %v9086, 7
        %v9088 = vsub.s32 %v9085, %v9087
        %v9089 = vrot.slane %v8872, %v9088
        %vm9090 = vcmask 458112
        %v9091 = vsel %vm9090, %v9089, %v9084
        %v9092 = vadd.s32 %v9045, 4294967240
        %v9093 = vlaneseq
        %v9094 = vshrl.u32 %v9093, 7
        %v9095 = vsub.s32 %v9092, %v9094
        %v9096 = vrot.slane %v8875, %v9095
        %vm9097 = vcmask 523712
        %v9098 = vsel %vm9097, %v9096, %v9091
        %v9099 = vadd.s32 %v9045, 4294967232
        %v9100 = vlaneseq
        %v9101 = vshrl.u32 %v9100, 7
        %v9102 = vsub.s32 %v9099, %v9101
        %v9103 = vrot.slane %v8878, %v9102
        %vm9104 = vcmask 589312
        %v9105 = vsel %vm9104, %v9103, %v9098
        %v9106 = vadd.s32 %v9045, 4294967224
        %v9107 = vlaneseq
        %v9108 = vshrl.u32 %v9107, 7
        %v9109 = vsub.s32 %v9106, %v9108
        %v9110 = vrot.slane %v8881, %v9109
        %vm9111 = vcmask 654912
        %v9112 = vsel %vm9111, %v9110, %v9105
        %v9113 = vadd.s32 %v9045, 4294967216
        %v9114 = vlaneseq
        %v9115 = vshrl.u32 %v9114, 7
        %v9116 = vsub.s32 %v9113, %v9115
        %v9117 = vrot.slane %v8884, %v9116
        %vm9118 = vcmask 720512
        %v9119 = vsel %vm9118, %v9117, %v9112
        %v9120 = vadd.s32 %v9045, 4294967208
        %v9121 = vlaneseq
        %v9122 = vshrl.u32 %v9121, 7
        %v9123 = vsub.s32 %v9120, %v9122
        %v9124 = vrot.slane %v8887, %v9123
        %vm9125 = vcmask 786112
        %v9126 = vsel %vm9125, %v9124, %v9119
        %v9127 = vadd.s32 %v9045, 4294967200
        %v9128 = vlaneseq
        %v9129 = vshrl.u32 %v9128, 7
        %v9130 = vsub.s32 %v9127, %v9129
        %v9131 = vrot.slane %v8890, %v9130
        %vm9132 = vcmask 851712
        %v9133 = vsel %vm9132, %v9131, %v9126
        %v9134 = vadd.s32 %v9045, 4294967192
        %v9135 = vlaneseq
        %v9136 = vshrl.u32 %v9135, 7
        %v9137 = vsub.s32 %v9134, %v9136
        %v9138 = vrot.slane %v8893, %v9137
        %vm9139 = vcmask 917312
        %v9140 = vsel %vm9139, %v9138, %v9133
        %v9141 = vadd.s32 %v9045, 4294967184
        %v9142 = vlaneseq
        %v9143 = vshrl.u32 %v9142, 7
        %v9144 = vsub.s32 %v9141, %v9143
        %v9145 = vrot.slane %v8896, %v9144
        %vm9146 = vcmask 982912
        %v9147 = vsel %vm9146, %v9145, %v9140
        %v9148 = vadd.s32 %v9045, 4294967176
        %v9149 = vlaneseq
        %v9150 = vshrl.u32 %v9149, 7
        %v9151 = vsub.s32 %v9148, %v9150
        %v9152 = vrot.slane %v8899, %v9151
        %vm9153 = vcmask 1048512
        %v9154 = vsel %vm9153, %v9152, %v9147
        %v9155 = vlaneseq
        %v9156 = vshrl.u32 %v9155, 7
        %v9157 = vsub.s32 %v9045, %v9156
        %v9158 = vrot.slane %v8902, %v9157
        %v9159 = vlaneseq
        %v9160 = vshrl.u32 %v9159, 7
        %v9161 = vsub.s32 %v9050, %v9160
        %v9162 = vrot.slane %v8905, %v9161
        %v9163 = vsel %vm9055, %v9162, %v9158
        %v9164 = vlaneseq
        %v9165 = vshrl.u32 %v9164, 7
        %v9166 = vsub.s32 %v9057, %v9165
        %v9167 = vrot.slane %v8908, %v9166
        %v9168 = vsel %vm9062, %v9167, %v9163
        %v9169 = vlaneseq
        %v9170 = vshrl.u32 %v9169, 7
        %v9171 = vsub.s32 %v9064, %v9170
        %v9172 = vrot.slane %v8911, %v9171
        %v9173 = vsel %vm9069, %v9172, %v9168
        %v9174 = vlaneseq
        %v9175 = vshrl.u32 %v9174, 7
        %v9176 = vsub.s32 %v9071, %v9175
        %v9177 = vrot.slane %v8914, %v9176
        %v9178 = vsel %vm9076, %v9177, %v9173
        %v9179 = vlaneseq
        %v9180 = vshrl.u32 %v9179, 7
        %v9181 = vsub.s32 %v9078, %v9180
        %v9182 = vrot.slane %v8917, %v9181
        %v9183 = vsel %vm9083, %v9182, %v9178
        %v9184 = vlaneseq
        %v9185 = vshrl.u32 %v9184, 7
        %v9186 = vsub.s32 %v9085, %v9185
        %v9187 = vrot.slane %v8920, %v9186
        %v9188 = vsel %vm9090, %v9187, %v9183
        %v9189 = vlaneseq
        %v9190 = vshrl.u32 %v9189, 7
        %v9191 = vsub.s32 %v9092, %v9190
        %v9192 = vrot.slane %v8923, %v9191
        %v9193 = vsel %vm9097, %v9192, %v9188
        %v9194 = vlaneseq
        %v9195 = vshrl.u32 %v9194, 7
        %v9196 = vsub.s32 %v9099, %v9195
        %v9197 = vrot.slane %v8926, %v9196
        %v9198 = vsel %vm9104, %v9197, %v9193
        %v9199 = vlaneseq
        %v9200 = vshrl.u32 %v9199, 7
        %v9201 = vsub.s32 %v9106, %v9200
        %v9202 = vrot.slane %v8929, %v9201
        %v9203 = vsel %vm9111, %v9202, %v9198
        %v9204 = vlaneseq
        %v9205 = vshrl.u32 %v9204, 7
        %v9206 = vsub.s32 %v9113, %v9205
        %v9207 = vrot.slane %v8932, %v9206
        %v9208 = vsel %vm9118, %v9207, %v9203
        %v9209 = vlaneseq
        %v9210 = vshrl.u32 %v9209, 7
        %v9211 = vsub.s32 %v9120, %v9210
        %v9212 = vrot.slane %v8935, %v9211
        %v9213 = vsel %vm9125, %v9212, %v9208
        %v9214 = vlaneseq
        %v9215 = vshrl.u32 %v9214, 7
        %v9216 = vsub.s32 %v9127, %v9215
        %v9217 = vrot.slane %v8938, %v9216
        %v9218 = vsel %vm9132, %v9217, %v9213
        %v9219 = vlaneseq
        %v9220 = vshrl.u32 %v9219, 7
        %v9221 = vsub.s32 %v9134, %v9220
        %v9222 = vrot.slane %v8941, %v9221
        %v9223 = vsel %vm9139, %v9222, %v9218
        %v9224 = vlaneseq
        %v9225 = vshrl.u32 %v9224, 7
        %v9226 = vsub.s32 %v9141, %v9225
        %v9227 = vrot.slane %v8944, %v9226
        %v9228 = vsel %vm9146, %v9227, %v9223
        %v9229 = vlaneseq
        %v9230 = vshrl.u32 %v9229, 7
        %v9231 = vsub.s32 %v9148, %v9230
        %v9232 = vrot.slane %v8947, %v9231
        %v9233 = vsel %vm9153, %v9232, %v9228
        %v9234 = vlaneseq
        %v9235 = vshrl.u32 %v9234, 7
        %v9236 = vsub.s32 %v9045, %v9235
        %v9237 = vrot.slane %v8950, %v9236
        %v9238 = vlaneseq
        %v9239 = vshrl.u32 %v9238, 7
        %v9240 = vsub.s32 %v9050, %v9239
        %v9241 = vrot.slane %v8953, %v9240
        %v9242 = vsel %vm9055, %v9241, %v9237
        %v9243 = vlaneseq
        %v9244 = vshrl.u32 %v9243, 7
        %v9245 = vsub.s32 %v9057, %v9244
        %v9246 = vrot.slane %v8956, %v9245
        %v9247 = vsel %vm9062, %v9246, %v9242
        %v9248 = vlaneseq
        %v9249 = vshrl.u32 %v9248, 7
        %v9250 = vsub.s32 %v9064, %v9249
        %v9251 = vrot.slane %v8959, %v9250
        %v9252 = vsel %vm9069, %v9251, %v9247
        %v9253 = vlaneseq
        %v9254 = vshrl.u32 %v9253, 7
        %v9255 = vsub.s32 %v9071, %v9254
        %v9256 = vrot.slane %v8962, %v9255
        %v9257 = vsel %vm9076, %v9256, %v9252
        %v9258 = vlaneseq
        %v9259 = vshrl.u32 %v9258, 7
        %v9260 = vsub.s32 %v9078, %v9259
        %v9261 = vrot.slane %v8965, %v9260
        %v9262 = vsel %vm9083, %v9261, %v9257
        %v9263 = vlaneseq
        %v9264 = vshrl.u32 %v9263, 7
        %v9265 = vsub.s32 %v9085, %v9264
        %v9266 = vrot.slane %v8968, %v9265
        %v9267 = vsel %vm9090, %v9266, %v9262
        %v9268 = vlaneseq
        %v9269 = vshrl.u32 %v9268, 7
        %v9270 = vsub.s32 %v9092, %v9269
        %v9271 = vrot.slane %v8971, %v9270
        %v9272 = vsel %vm9097, %v9271, %v9267
        %v9273 = vlaneseq
        %v9274 = vshrl.u32 %v9273, 7
        %v9275 = vsub.s32 %v9099, %v9274
        %v9276 = vrot.slane %v8974, %v9275
        %v9277 = vsel %vm9104, %v9276, %v9272
        %v9278 = vlaneseq
        %v9279 = vshrl.u32 %v9278, 7
        %v9280 = vsub.s32 %v9106, %v9279
        %v9281 = vrot.slane %v8977, %v9280
        %v9282 = vsel %vm9111, %v9281, %v9277
        %v9283 = vlaneseq
        %v9284 = vshrl.u32 %v9283, 7
        %v9285 = vsub.s32 %v9113, %v9284
        %v9286 = vrot.slane %v8980, %v9285
        %v9287 = vsel %vm9118, %v9286, %v9282
        %v9288 = vlaneseq
        %v9289 = vshrl.u32 %v9288, 7
        %v9290 = vsub.s32 %v9120, %v9289
        %v9291 = vrot.slane %v8983, %v9290
        %v9292 = vsel %vm9125, %v9291, %v9287
        %v9293 = vlaneseq
        %v9294 = vshrl.u32 %v9293, 7
        %v9295 = vsub.s32 %v9127, %v9294
        %v9296 = vrot.slane %v8986, %v9295
        %v9297 = vsel %vm9132, %v9296, %v9292
        %v9298 = vlaneseq
        %v9299 = vshrl.u32 %v9298, 7
        %v9300 = vsub.s32 %v9134, %v9299
        %v9301 = vrot.slane %v8989, %v9300
        %v9302 = vsel %vm9139, %v9301, %v9297
        %v9303 = vlaneseq
        %v9304 = vshrl.u32 %v9303, 7
        %v9305 = vsub.s32 %v9141, %v9304
        %v9306 = vrot.slane %v8992, %v9305
        %v9307 = vsel %vm9146, %v9306, %v9302
        %v9308 = vlaneseq
        %v9309 = vshrl.u32 %v9308, 7
        %v9310 = vsub.s32 %v9148, %v9309
        %v9311 = vrot.slane %v8995, %v9310
        %v9312 = vsel %vm9153, %v9311, %v9307
        %v9313 = vlaneseq
        %v9314 = vshrl.u32 %v9313, 7
        %v9315 = vsub.s32 %v9045, %v9314
        %v9316 = vrot.slane %v8998, %v9315
        %v9317 = vlaneseq
        %v9318 = vshrl.u32 %v9317, 7
        %v9319 = vsub.s32 %v9050, %v9318
        %v9320 = vrot.slane %v9001, %v9319
        %v9321 = vsel %vm9055, %v9320, %v9316
        %v9322 = vlaneseq
        %v9323 = vshrl.u32 %v9322, 7
        %v9324 = vsub.s32 %v9057, %v9323
        %v9325 = vrot.slane %v9004, %v9324
        %v9326 = vsel %vm9062, %v9325, %v9321
        %v9327 = vlaneseq
        %v9328 = vshrl.u32 %v9327, 7
        %v9329 = vsub.s32 %v9064, %v9328
        %v9330 = vrot.slane %v9007, %v9329
        %v9331 = vsel %vm9069, %v9330, %v9326
        %v9332 = vlaneseq
        %v9333 = vshrl.u32 %v9332, 7
        %v9334 = vsub.s32 %v9071, %v9333
        %v9335 = vrot.slane %v9010, %v9334
        %v9336 = vsel %vm9076, %v9335, %v9331
        %v9337 = vlaneseq
        %v9338 = vshrl.u32 %v9337, 7
        %v9339 = vsub.s32 %v9078, %v9338
        %v9340 = vrot.slane %v9013, %v9339
        %v9341 = vsel %vm9083, %v9340, %v9336
        %v9342 = vlaneseq
        %v9343 = vshrl.u32 %v9342, 7
        %v9344 = vsub.s32 %v9085, %v9343
        %v9345 = vrot.slane %v9016, %v9344
        %v9346 = vsel %vm9090, %v9345, %v9341
        %v9347 = vlaneseq
        %v9348 = vshrl.u32 %v9347, 7
        %v9349 = vsub.s32 %v9092, %v9348
        %v9350 = vrot.slane %v9019, %v9349
        %v9351 = vsel %vm9097, %v9350, %v9346
        %v9352 = vlaneseq
        %v9353 = vshrl.u32 %v9352, 7
        %v9354 = vsub.s32 %v9099, %v9353
        %v9355 = vrot.slane %v9022, %v9354
        %v9356 = vsel %vm9104, %v9355, %v9351
        %v9357 = vlaneseq
        %v9358 = vshrl.u32 %v9357, 7
        %v9359 = vsub.s32 %v9106, %v9358
        %v9360 = vrot.slane %v9025, %v9359
        %v9361 = vsel %vm9111, %v9360, %v9356
        %v9362 = vlaneseq
        %v9363 = vshrl.u32 %v9362, 7
        %v9364 = vsub.s32 %v9113, %v9363
        %v9365 = vrot.slane %v9028, %v9364
        %v9366 = vsel %vm9118, %v9365, %v9361
        %v9367 = vlaneseq
        %v9368 = vshrl.u32 %v9367, 7
        %v9369 = vsub.s32 %v9120, %v9368
        %v9370 = vrot.slane %v9031, %v9369
        %v9371 = vsel %vm9125, %v9370, %v9366
        %v9372 = vlaneseq
        %v9373 = vshrl.u32 %v9372, 7
        %v9374 = vsub.s32 %v9127, %v9373
        %v9375 = vrot.slane %v9034, %v9374
        %v9376 = vsel %vm9132, %v9375, %v9371
        %v9377 = vlaneseq
        %v9378 = vshrl.u32 %v9377, 7
        %v9379 = vsub.s32 %v9134, %v9378
        %v9380 = vrot.slane %v9037, %v9379
        %v9381 = vsel %vm9139, %v9380, %v9376
        %v9382 = vlaneseq
        %v9383 = vshrl.u32 %v9382, 7
        %v9384 = vsub.s32 %v9141, %v9383
        %v9385 = vrot.slane %v9040, %v9384
        %v9386 = vsel %vm9146, %v9385, %v9381
        %v9387 = vlaneseq
        %v9388 = vshrl.u32 %v9387, 7
        %v9389 = vsub.s32 %v9148, %v9388
        %v9390 = vrot.slane %v9043, %v9389
        %v9391 = vsel %vm9153, %v9390, %v9386
        %v9392 = vcombine.low %v9154, %v9233
        %v9393 = vcombine.low %v9312, %v9391
        %v9395 = vunpack.c.l.s4 1966171168
        %v9396 = vunpack.c.0.s8 %v9395
        %v9397 = vlaneseq
        %v9398 = vshrl.u32 %v9397, 7
        %v9399 = vsub.s32 %v9396, %v9398
        %v9400 = vrot.slane %v9392, %v9399
        %v9402 = vunpack.c.l.s4 1966171168
        %v9403 = vunpack.c.0.s8 %v9402
        %v9404 = vlaneseq
        %v9405 = vshrl.u32 %v9404, 7
        %v9406 = vsub.s32 %v9403, %v9405
        %v9407 = vrot.slane %v9393, %v9406
        %v9408 = vcombine.low %v9400, %v9407
        %v9410 = vunpack.c.l.s4 1966171168
        %v9411 = vunpack.c.0.s8 %v9410
        %v9412 = vlaneseq
        %v9413 = vshrl.u32 %v9412, 7
        %v9414 = vsub.s32 %v9411, %v9413
        %v9415 = vrot.slane %v9408, %v9414
        %v9417 = vlaneseq
        %vm9418 = vcmp.ge.s32.totalorder %v9417, 0
        %vm9419 = vcmp.lt.s32.totalorder %v9417, 512
        %vm9420 = vmand %vm9418, %vm9419
        %9421 = vst.msk [vmem:[%s401] sm:$0xf] %vm9420, %v9415
        %s9422 = sand.u32 %s275, 1
        %s9423 = scalar_lea.sflag [#allocation4], %s9422
        %s9424 = sand.u32 %s275, 1
        %s9425 = smul.addr %s9424, 4
        %s9426 = scalar_lea.vmem [#allocation3], %s9425
        // Predicated region
        $region65: #{tpu_custom_call.1} parent=63 // pred_check
          %p9427 = pneg %p285
        $region66: #{tpu_custom_call.1} parent=63 // pred_check_branch
          %9429 = sbr.rel (%p9427) target = $region68
        $region67: #{tpu_custom_call.1} parent=63 // pred_region
          %s9431 = ssub.s32 64, 64
          %9432 = vsyncadd %s9423, %s9431
          %s9433 = smul.addr %s26, 4
          %s9434 = smul.addr %s9433, 16
          %s9435 = scalar_lea.hbm %s11, %s9434
          %s9437 = sshll.u32 %s9426, 4
          %s9438 = int_to_ptr.vmem [resolvable:$true] %s9437
          %9440 = dma.vmem_to_hbm [thread:$0]  %s9438, 64, %s9435, %s9423
        $region68: #{tpu_custom_call.1} parent=63 // pred_fallthru
          _
      $region64: #{tpu_custom_call.1} parent=5 // pred_fallthru
        _
      %p9441 = scmp.le.s32.totalorder 2, %s21
      // Predicated region
      $region69: #{tpu_custom_call.1} parent=5 // pred_check
        %p9442 = pneg %p9441
      $region70: #{tpu_custom_call.1} parent=5 // pred_check_branch
        %9444 = sbr.rel (%p9442) target = $region72
      $region71: #{tpu_custom_call.1} parent=5 // pred_region
        %s9445 = ssub.s32 %s21, 2
        // Predicated region
        $region73: #{tpu_custom_call.1} parent=71 // pred_check
          %p9446 = pneg %p291
        $region74: #{tpu_custom_call.1} parent=71 // pred_check_branch
          %9448 = sbr.rel (%p9446) target = $region76
        $region75: #{tpu_custom_call.1} parent=71 // pred_region
          %s9449 = sand.u32 %s276, 1
          %s9450 = scalar_lea.sflag [#allocation4], %s9449
          %s9451 = sand.u32 %s276, 1
          %s9452 = smul.addr %s9451, 4
          %s9453 = scalar_lea.vmem [#allocation3], %s9452
          %9454 = dma.done %s9450, 64
        $region76: #{tpu_custom_call.1} parent=71 // pred_fallthru
          _
      $region72: #{tpu_custom_call.1} parent=5 // pred_fallthru
        _
    $region6: #{tpu_custom_call.1} parent=1 // loop_footer
      %s25 = sadd.s32 1, %s21
    $region7: #{tpu_custom_call.1} parent=1 // loop_footer_branch
      %20 = sbr.rel target = $region3
    $region8: #{tpu_custom_call.1} parent=1 // loop_exit
      _
    %9455 = vsyncpa [#allocation4], 1
    %s9456 = scalar_lea.sflag [#allocation4], 1
    %9457 = vsyncpa %s9456, 1

</llo_original>
